<compile_context>
chip_gen: v7x
topology: tpu7x:2x2x1
jax: 0.10.0
libtpu: 0.0.40
codegen_flags: <defaults>
</compile_context>

<pallas_src>
import jax
import jax.numpy as jnp
from jax import lax
from jax.experimental import pallas as pl
from jax.experimental.pallas import tpu as pltpu  # noqa: F401  (kept for easy compiler_params tweaks)

IN_DIM = 1024          # projection_MLP(1024, 3)
HIDDEN = 3
HIDDEN_PAD = 8         # hidden dim zero-padded 3 -> 8 (f32 sublane minimum); exact no-op
OUT_DIM = 4000         # projection_MLP out_dim default
OUT_PAD = 4096         # zero-padded to a multiple of 128 for lane-dense layout; exact no-op
BN_EPS = 1e-5          # nn.BatchNorm1d default eps
NORM_EPS = 1e-12       # F.normalize default eps
COS_EPS = 1e-8         # F.cosine_similarity default eps
TEMPERATURE = 2.0

# MXU operand dtype for the two Linear layers (weights stored in HBM in this dtype; activations
# cast once in-kernel).  Accumulation is always f32 via preferred_element_type; BN / normalize /
# loss math stays f32.  Use jnp.float32 here for exact parity with the f32 PyTorch reference.
MATMUL_DTYPE = jnp.bfloat16


def _full_spec(shape):
    nd = len(shape)
    return pl.BlockSpec(shape, lambda *_: (0,) * nd)


def _col_to_row(col):
    """(N, 1) column -> (1, N) row via iota select + sublane reduce (tiny, avoids transpose)."""
    n = col.shape[0]
    ii = lax.broadcasted_iota(jnp.int32, (n, n), 0)
    jj = lax.broadcasted_iota(jnp.int32, (n, n), 1)
    return jnp.sum(jnp.where(ii == jj, col, 0.0), axis=0, keepdims=True)


# ------------------------------ fused SimCLR forward kernel ------------------------------
def _simclr_kernel(x1_ref, x2_ref, w1_ref, b1_ref, g1_ref, be1_ref,
                   w2_ref, b2_ref, g2_ref, be2_ref, out_ref):
    n = x1_ref.shape[0]

    def project(x_view_ref):
        # layer1: Linear(1024, 3) -> BatchNorm1d (training batch stats, biased var) -> ReLU
        x = x_view_ref[...].astype(MATMUL_DTYPE)                              # (N, IN_DIM)
        h = jnp.dot(x, w1_ref[...], preferred_element_type=jnp.float32) + b1_ref[...]
        mu = jnp.mean(h, axis=0, keepdims=True)
        var = jnp.mean((h - mu) * (h - mu), axis=0, keepdims=True)            # biased, as BN training
        h = (h - mu) / jnp.sqrt(var + BN_EPS) * g1_ref[...] + be1_ref[...]
        h = jnp.maximum(h, 0.0)                                               # (N, HIDDEN_PAD)
        # layer2: Linear(3, 4000) -> BatchNorm1d -> ReLU (BN stats are per-feature, so the
        # zero-padded features 4000..4095 stay exactly zero and never affect the loss)
        z = jnp.dot(h.astype(MATMUL_DTYPE), w2_ref[...],
                    preferred_element_type=jnp.float32) + b2_ref[...]         # (N, OUT_PAD)
        mu2 = jnp.mean(z, axis=0, keepdims=True)
        var2 = jnp.mean((z - mu2) * (z - mu2), axis=0, keepdims=True)
        z = (z - mu2) / jnp.sqrt(var2 + BN_EPS) * g2_ref[...] + be2_ref[...]
        return jnp.maximum(z, 0.0)

    dn = (((1,), (1,)), ((), ()))

    def gram_and_sq(z):
        # Only sim rows {0, 1, 2, N-1} are ever read by the torch selection; compute the raw
        # Gram rows for those queries on the UNNORMALIZED z (normalization factors are applied
        # later to the tiny (rows, N) results -> no z1n/z2n materialization).
        g012 = lax.dot_general(z[0:3], z, dn, preferred_element_type=jnp.float32)        # (3, N)
        glast = lax.dot_general(z[n - 1:n], z, dn, preferred_element_type=jnp.float32)   # (1, N)
        sq = jnp.sum(z * z, axis=1, keepdims=True)                                       # (N, 1)
        return g012, glast, sq

    # View 1 then view 2: each (N, OUT_PAD) activation dies immediately after its Gram rows and
    # row sums-of-squares are extracted, keeping peak live vector state ~ one activation.
    g1_012, g1_last, sq1 = gram_and_sq(project(x1_ref))
    g2_012, g2_last, sq2 = gram_and_sq(project(x2_ref))

    # F.normalize(z, dim=1): scale factor 1 / max(||z_i||, 1e-12)
    inv1c = 1.0 / jnp.maximum(jnp.sqrt(sq1), NORM_EPS)                # (N, 1)
    inv2c = 1.0 / jnp.maximum(jnp.sqrt(sq2), NORM_EPS)                # (N, 1)
    inv1r = _col_to_row(inv1c)                                        # (1, N)
    inv2r = _col_to_row(inv2c)                                        # (1, N)

    # representations = cat([z1n, z2n], dim=1): ||rep_i||^2 = ||z1n_i||^2 + ||z2n_i||^2
    rep_norm_c = jnp.sqrt(sq1 * inv1c * inv1c + sq2 * inv2c * inv2c)  # (N, 1)
    rep_norm_r = _col_to_row(rep_norm_c)                              # (1, N)

    # sim[r, j] = (z1_r.z1_j * inv1_r * inv1_j + z2_r.z2_j * inv2_r * inv2_j)
    #             / max(||rep_r|| * ||rep_j||, 1e-8)
    num012 = g1_012 * inv1c[0:3] * inv1r + g2_012 * inv2c[0:3] * inv2r                   # (3, N)
    num_last = g1_last * inv1c[n - 1:n] * inv1r + g2_last * inv2c[n - 1:n] * inv2r       # (1, N)
    sim012 = num012 / jnp.maximum(rep_norm_c[0:3] * rep_norm_r, COS_EPS)                 # (3, N)
    sim_last = num_last / jnp.maximum(rep_norm_c[n - 1:n] * rep_norm_r, COS_EPS)         # (1, N)

    # Gather the 2N positives / 2N negatives with iota masks (no one-hot matmuls).
    two_n = 2 * n
    k = lax.broadcasted_iota(jnp.int32, (two_n, 1), 0)                # (2N, 1)
    jj = lax.broadcasted_iota(jnp.int32, (two_n, n), 1)               # (2N, N)

    # positives[k] = sim[k mod N, N-1] = sim_last[0, k mod N]   (sim is symmetric)
    kmod = jnp.where(k >= n, k - n, k)
    pos = jnp.sum(jnp.where(jj == kmod, sim_last, 0.0), axis=1, keepdims=True)           # (2N, 1)

    # negatives[k] = k-th off-diagonal entry of sim in row-major order (rows 0..2 only, N >= 3)
    r = (k >= (n - 1)).astype(jnp.int32) + (k >= 2 * (n - 1)).astype(jnp.int32)          # row in {0,1,2}
    m = k - r * (n - 1)
    c = m + (m >= r).astype(jnp.int32)                                                    # skip diagonal
    row_pick = (jnp.where(r == 0, sim012[0:1], 0.0)
                + jnp.where(r == 1, sim012[1:2], 0.0)
                + jnp.where(r == 2, sim012[2:3], 0.0))                                    # (2N, N)
    neg = jnp.sum(jnp.where(jj == c, row_pick, 0.0), axis=1, keepdims=True)               # (2N, 1)

    # logits = [positives, negatives] / T ; labels all zero ; cross-entropy(sum) / (2N)
    lp = pos / TEMPERATURE
    lng = neg / TEMPERATURE
    mx = jnp.maximum(lp, lng)
    lse = mx + jnp.log(jnp.exp(lp - mx) + jnp.exp(lng - mx))
    out_ref[...] = jnp.sum(lse - lp, axis=0, keepdims=True) / (2.0 * n)


def simclr_forward(x1, x2, params):
    n = x1.shape[0]
    assert n >= 3, "batch size must be >= 3 (same implicit constraint as the torch code)"
    w1, b1, g1, be1, w2, b2, g2, be2 = params
    out = pl.pallas_call(
        _simclr_kernel,
        out_shape=jax.ShapeDtypeStruct((1, 1), jnp.float32),
        grid=(1,),
        in_specs=[
            _full_spec(x1.shape), _full_spec(x2.shape),
            _full_spec(w1.shape), _full_spec(b1.shape),
            _full_spec(g1.shape), _full_spec(be1.shape),
            _full_spec(w2.shape), _full_spec(b2.shape),
            _full_spec(g2.shape), _full_spec(be2.shape),
        ],
        out_specs=_full_spec((1, 1)),
    )(x1, x2, w1, b1, g1, be1, w2, b2, g2, be2)
    return out[0, 0]


# --------------------------------- deterministic params ---------------------------------
def init_params(key):
    k1, k2, k3, k4 = jax.random.split(key, 4)
    w1 = jax.random.normal(k1, (IN_DIM, HIDDEN), jnp.float32) * 0.02
    b1 = jax.random.normal(k2, (HIDDEN,), jnp.float32) * 0.02
    w2 = jax.random.normal(k3, (HIDDEN, OUT_DIM), jnp.float32) * 0.02
    b2 = jax.random.normal(k4, (OUT_DIM,), jnp.float32) * 0.02
    # Zero padding (hidden 3 -> 8, out 4000 -> 4096) is exact: padded Linear columns have zero
    # weight/bias -> their batch column is all-zero -> BN maps it to 0 -> ReLU keeps 0; padded
    # W2 rows are zero and padded output features are all-zero, contributing nothing to norms,
    # cosine similarities or the loss.  (Zeros are exact in bf16 as well.)
    w1p = jnp.zeros((IN_DIM, HIDDEN_PAD), jnp.float32).at[:, :HIDDEN].set(w1).astype(MATMUL_DTYPE)
    b1p = jnp.zeros((1, HIDDEN_PAD), jnp.float32).at[0, :HIDDEN].set(b1)
    g1p = jnp.ones((1, HIDDEN_PAD), jnp.float32)          # BN affine defaults: gamma = 1
    be1p = jnp.zeros((1, HIDDEN_PAD), jnp.float32)        #                     beta  = 0
    w2p = jnp.zeros((HIDDEN_PAD, OUT_PAD), jnp.float32).at[:HIDDEN, :OUT_DIM].set(w2).astype(MATMUL_DTYPE)
    b2p = jnp.zeros((1, OUT_PAD), jnp.float32).at[0, :OUT_DIM].set(b2)
    g2p = jnp.ones((1, OUT_PAD), jnp.float32)
    be2p = jnp.zeros((1, OUT_PAD), jnp.float32)
    return (w1p, b1p, g1p, be1p, w2p, b2p, g2p, be2p)


if __name__ == "__main__":
    key = jax.random.PRNGKey(0)
    kx1, kx2, kp = jax.random.split(key, 3)
    N = 8                                   # sublane-aligned batch (torch code needs N >= 3)
    x1 = jax.random.normal(kx1, (N, IN_DIM), jnp.float32)
    x2 = jax.random.normal(kx2, (N, IN_DIM), jnp.float32)
    params = init_params(kp)
    loss = simclr_forward(x1, x2, params)
    jax.block_until_ready(loss)
    print("KERNEL_OK")
</pallas_src>

<mosaic_0001>
module attributes {stable_mosaic.version = 11 : i64} {
  func.func @_simclr_kernel(%arg0: i32, %arg1: memref<8x1024xf32, #tpu.memory_space<vmem>>, %arg2: memref<8x1024xf32, #tpu.memory_space<vmem>>, %arg3: memref<1024x8xbf16, #tpu.memory_space<vmem>>, %arg4: memref<1x8xf32, #tpu.memory_space<vmem>>, %arg5: memref<1x8xf32, #tpu.memory_space<vmem>>, %arg6: memref<1x8xf32, #tpu.memory_space<vmem>>, %arg7: memref<8x4096xbf16, #tpu.memory_space<vmem>>, %arg8: memref<1x4096xf32, #tpu.memory_space<vmem>>, %arg9: memref<1x4096xf32, #tpu.memory_space<vmem>>, %arg10: memref<1x4096xf32, #tpu.memory_space<vmem>>, %arg11: memref<1x1xf32, #tpu.memory_space<vmem>>) attributes {dimension_semantics = [#tpu.dimension_semantics<arbitrary>], iteration_bounds = array<i64: 1>, scalar_prefetch = 0 : i64, scratch_operands = 0 : i64, tpu.core_type = #tpu.core_type<tc>, window_params = [{pipeline_mode = #tpu.pipeline_mode<synchronous>, transform_indices = @transform_0, window_bounds = array<i64: 8, 1024>}, {pipeline_mode = #tpu.pipeline_mode<synchronous>, transform_indices = @transform_1, window_bounds = array<i64: 8, 1024>}, {pipeline_mode = #tpu.pipeline_mode<synchronous>, transform_indices = @transform_2, window_bounds = array<i64: 1024, 8>}, {pipeline_mode = #tpu.pipeline_mode<synchronous>, transform_indices = @transform_3, window_bounds = array<i64: 1, 8>}, {pipeline_mode = #tpu.pipeline_mode<synchronous>, transform_indices = @transform_4, window_bounds = array<i64: 1, 8>}, {pipeline_mode = #tpu.pipeline_mode<synchronous>, transform_indices = @transform_5, window_bounds = array<i64: 1, 8>}, {pipeline_mode = #tpu.pipeline_mode<synchronous>, transform_indices = @transform_6, window_bounds = array<i64: 8, 4096>}, {pipeline_mode = #tpu.pipeline_mode<synchronous>, transform_indices = @transform_7, window_bounds = array<i64: 1, 4096>}, {pipeline_mode = #tpu.pipeline_mode<synchronous>, transform_indices = @transform_8, window_bounds = array<i64: 1, 4096>}, {pipeline_mode = #tpu.pipeline_mode<synchronous>, transform_indices = @transform_9, window_bounds = array<i64: 1, 4096>}, {pipeline_mode = #tpu.pipeline_mode<synchronous>, transform_indices = @transform_10, window_bounds = array<i64: 1, 1>}]} {
    %c0 = arith.constant 0 : index
    %c0_0 = arith.constant 0 : index
    %0 = vector.load %arg1[%c0, %c0_0] : memref<8x1024xf32, #tpu.memory_space<vmem>>, vector<8x1024xf32>
    %1 = arith.truncf %0 : vector<8x1024xf32> to vector<8x1024xbf16>
    %c0_1 = arith.constant 0 : index
    %c0_2 = arith.constant 0 : index
    %2 = vector.load %arg3[%c0_1, %c0_2] : memref<1024x8xbf16, #tpu.memory_space<vmem>>, vector<1024x8xbf16>
    %cst = arith.constant dense<0.000000e+00> : vector<8x8xf32>
    %3 = tpu.matmul %1, %2, %cst {dimension_numbers = #tpu.dot_dimension_numbers<[1], [0], [0], [1], [0, 0, 1, 1], [], []>} : vector<8x1024xbf16>, vector<1024x8xbf16>, vector<8x8xf32> -> vector<8x8xf32>
    %c0_3 = arith.constant 0 : index
    %c0_4 = arith.constant 0 : index
    %4 = vector.load %arg4[%c0_3, %c0_4] : memref<1x8xf32, #tpu.memory_space<vmem>>, vector<1x8xf32>
    %5 = vector.broadcast %4 : vector<1x8xf32> to vector<8x8xf32>
    %6 = arith.addf %3, %5 : vector<8x8xf32>
    %cst_5 = arith.constant dense<0.000000e+00> : vector<8xf32>
    %7 = vector.multi_reduction <add>, %6, %cst_5 [0] : vector<8x8xf32> to vector<8xf32>
    %8 = vector.shape_cast %7 : vector<8xf32> to vector<1x8xf32>
    %cst_6 = arith.constant 8.000000e+00 : f32
    %9 = vector.broadcast %cst_6 : f32 to vector<1x8xf32>
    %10 = arith.divf %8, %9 : vector<1x8xf32>
    %11 = vector.broadcast %10 : vector<1x8xf32> to vector<8x8xf32>
    %12 = arith.subf %6, %11 : vector<8x8xf32>
    %13 = vector.broadcast %10 : vector<1x8xf32> to vector<8x8xf32>
    %14 = arith.subf %6, %13 : vector<8x8xf32>
    %15 = arith.mulf %12, %14 : vector<8x8xf32>
    %cst_7 = arith.constant dense<0.000000e+00> : vector<8xf32>
    %16 = vector.multi_reduction <add>, %15, %cst_7 [0] : vector<8x8xf32> to vector<8xf32>
    %17 = vector.shape_cast %16 : vector<8xf32> to vector<1x8xf32>
    %cst_8 = arith.constant 8.000000e+00 : f32
    %18 = vector.broadcast %cst_8 : f32 to vector<1x8xf32>
    %19 = arith.divf %17, %18 : vector<1x8xf32>
    %20 = vector.broadcast %10 : vector<1x8xf32> to vector<8x8xf32>
    %21 = arith.subf %6, %20 : vector<8x8xf32>
    %cst_9 = arith.constant 9.99999974E-6 : f32
    %22 = vector.broadcast %cst_9 : f32 to vector<1x8xf32>
    %23 = arith.addf %19, %22 : vector<1x8xf32>
    %24 = math.sqrt %23 : vector<1x8xf32>
    %25 = vector.broadcast %24 : vector<1x8xf32> to vector<8x8xf32>
    %26 = arith.divf %21, %25 : vector<8x8xf32>
    %c0_10 = arith.constant 0 : index
    %c0_11 = arith.constant 0 : index
    %27 = vector.load %arg5[%c0_10, %c0_11] : memref<1x8xf32, #tpu.memory_space<vmem>>, vector<1x8xf32>
    %28 = vector.broadcast %27 : vector<1x8xf32> to vector<8x8xf32>
    %29 = arith.mulf %26, %28 : vector<8x8xf32>
    %c0_12 = arith.constant 0 : index
    %c0_13 = arith.constant 0 : index
    %30 = vector.load %arg6[%c0_12, %c0_13] : memref<1x8xf32, #tpu.memory_space<vmem>>, vector<1x8xf32>
    %31 = vector.broadcast %30 : vector<1x8xf32> to vector<8x8xf32>
    %32 = arith.addf %29, %31 : vector<8x8xf32>
    %cst_14 = arith.constant 0.000000e+00 : f32
    %33 = vector.broadcast %cst_14 : f32 to vector<8x8xf32>
    %34 = arith.maximumf %32, %33 : vector<8x8xf32>
    %35 = arith.truncf %34 : vector<8x8xf32> to vector<8x8xbf16>
    %c0_15 = arith.constant 0 : index
    %c0_16 = arith.constant 0 : index
    %36 = vector.load %arg7[%c0_15, %c0_16] : memref<8x4096xbf16, #tpu.memory_space<vmem>>, vector<8x4096xbf16>
    %cst_17 = arith.constant dense<0.000000e+00> : vector<8x4096xf32>
    %37 = tpu.matmul %35, %36, %cst_17 {dimension_numbers = #tpu.dot_dimension_numbers<[1], [0], [0], [1], [0, 0, 1, 1], [], []>} : vector<8x8xbf16>, vector<8x4096xbf16>, vector<8x4096xf32> -> vector<8x4096xf32>
    %c0_18 = arith.constant 0 : index
    %c0_19 = arith.constant 0 : index
    %38 = vector.load %arg8[%c0_18, %c0_19] : memref<1x4096xf32, #tpu.memory_space<vmem>>, vector<1x4096xf32>
    %39 = vector.broadcast %38 : vector<1x4096xf32> to vector<8x4096xf32>
    %40 = arith.addf %37, %39 : vector<8x4096xf32>
    %cst_20 = arith.constant dense<0.000000e+00> : vector<4096xf32>
    %41 = vector.multi_reduction <add>, %40, %cst_20 [0] : vector<8x4096xf32> to vector<4096xf32>
    %42 = vector.shape_cast %41 : vector<4096xf32> to vector<1x4096xf32>
    %cst_21 = arith.constant 8.000000e+00 : f32
    %43 = vector.broadcast %cst_21 : f32 to vector<1x4096xf32>
    %44 = arith.divf %42, %43 : vector<1x4096xf32>
    %45 = vector.broadcast %44 : vector<1x4096xf32> to vector<8x4096xf32>
    %46 = arith.subf %40, %45 : vector<8x4096xf32>
    %47 = vector.broadcast %44 : vector<1x4096xf32> to vector<8x4096xf32>
    %48 = arith.subf %40, %47 : vector<8x4096xf32>
    %49 = arith.mulf %46, %48 : vector<8x4096xf32>
    %cst_22 = arith.constant dense<0.000000e+00> : vector<4096xf32>
    %50 = vector.multi_reduction <add>, %49, %cst_22 [0] : vector<8x4096xf32> to vector<4096xf32>
    %51 = vector.shape_cast %50 : vector<4096xf32> to vector<1x4096xf32>
    %cst_23 = arith.constant 8.000000e+00 : f32
    %52 = vector.broadcast %cst_23 : f32 to vector<1x4096xf32>
    %53 = arith.divf %51, %52 : vector<1x4096xf32>
    %54 = vector.broadcast %44 : vector<1x4096xf32> to vector<8x4096xf32>
    %55 = arith.subf %40, %54 : vector<8x4096xf32>
    %cst_24 = arith.constant 9.99999974E-6 : f32
    %56 = vector.broadcast %cst_24 : f32 to vector<1x4096xf32>
    %57 = arith.addf %53, %56 : vector<1x4096xf32>
    %58 = math.sqrt %57 : vector<1x4096xf32>
    %59 = vector.broadcast %58 : vector<1x4096xf32> to vector<8x4096xf32>
    %60 = arith.divf %55, %59 : vector<8x4096xf32>
    %c0_25 = arith.constant 0 : index
    %c0_26 = arith.constant 0 : index
    %61 = vector.load %arg9[%c0_25, %c0_26] : memref<1x4096xf32, #tpu.memory_space<vmem>>, vector<1x4096xf32>
    %62 = vector.broadcast %61 : vector<1x4096xf32> to vector<8x4096xf32>
    %63 = arith.mulf %60, %62 : vector<8x4096xf32>
    %c0_27 = arith.constant 0 : index
    %c0_28 = arith.constant 0 : index
    %64 = vector.load %arg10[%c0_27, %c0_28] : memref<1x4096xf32, #tpu.memory_space<vmem>>, vector<1x4096xf32>
    %65 = vector.broadcast %64 : vector<1x4096xf32> to vector<8x4096xf32>
    %66 = arith.addf %63, %65 : vector<8x4096xf32>
    %cst_29 = arith.constant 0.000000e+00 : f32
    %67 = vector.broadcast %cst_29 : f32 to vector<8x4096xf32>
    %68 = arith.maximumf %66, %67 : vector<8x4096xf32>
    %69 = vector.extract_strided_slice %68 {offsets = [0, 0], sizes = [3, 4096], strides = [1, 1]} : vector<8x4096xf32> to vector<3x4096xf32>
    %cst_30 = arith.constant dense<0.000000e+00> : vector<3x8xf32>
    %70 = tpu.matmul %69, %68, %cst_30 {dimension_numbers = #tpu.dot_dimension_numbers<[1], [1], [0], [0], [0, 0, 1, 0], [], []>} : vector<3x4096xf32>, vector<8x4096xf32>, vector<3x8xf32> -> vector<3x8xf32>
    %71 = vector.extract_strided_slice %68 {offsets = [7, 0], sizes = [1, 4096], strides = [1, 1]} : vector<8x4096xf32> to vector<1x4096xf32>
    %cst_31 = arith.constant dense<0.000000e+00> : vector<1x8xf32>
    %72 = tpu.matmul %71, %68, %cst_31 {dimension_numbers = #tpu.dot_dimension_numbers<[1], [1], [0], [0], [0, 0, 1, 0], [], []>} : vector<1x4096xf32>, vector<8x4096xf32>, vector<1x8xf32> -> vector<1x8xf32>
    %73 = arith.mulf %68, %68 : vector<8x4096xf32>
    %cst_32 = arith.constant dense<0.000000e+00> : vector<8xf32>
    %74 = vector.multi_reduction <add>, %73, %cst_32 [1] : vector<8x4096xf32> to vector<8xf32>
    %75 = vector.shape_cast %74 : vector<8xf32> to vector<8x1xf32>
    %c0_33 = arith.constant 0 : index
    %c0_34 = arith.constant 0 : index
    %76 = vector.load %arg2[%c0_33, %c0_34] : memref<8x1024xf32, #tpu.memory_space<vmem>>, vector<8x1024xf32>
    %77 = arith.truncf %76 : vector<8x1024xf32> to vector<8x1024xbf16>
    %c0_35 = arith.constant 0 : index
    %c0_36 = arith.constant 0 : index
    %78 = vector.load %arg3[%c0_35, %c0_36] : memref<1024x8xbf16, #tpu.memory_space<vmem>>, vector<1024x8xbf16>
    %cst_37 = arith.constant dense<0.000000e+00> : vector<8x8xf32>
    %79 = tpu.matmul %77, %78, %cst_37 {dimension_numbers = #tpu.dot_dimension_numbers<[1], [0], [0], [1], [0, 0, 1, 1], [], []>} : vector<8x1024xbf16>, vector<1024x8xbf16>, vector<8x8xf32> -> vector<8x8xf32>
    %c0_38 = arith.constant 0 : index
    %c0_39 = arith.constant 0 : index
    %80 = vector.load %arg4[%c0_38, %c0_39] : memref<1x8xf32, #tpu.memory_space<vmem>>, vector<1x8xf32>
    %81 = vector.broadcast %80 : vector<1x8xf32> to vector<8x8xf32>
    %82 = arith.addf %79, %81 : vector<8x8xf32>
    %cst_40 = arith.constant dense<0.000000e+00> : vector<8xf32>
    %83 = vector.multi_reduction <add>, %82, %cst_40 [0] : vector<8x8xf32> to vector<8xf32>
    %84 = vector.shape_cast %83 : vector<8xf32> to vector<1x8xf32>
    %cst_41 = arith.constant 8.000000e+00 : f32
    %85 = vector.broadcast %cst_41 : f32 to vector<1x8xf32>
    %86 = arith.divf %84, %85 : vector<1x8xf32>
    %87 = vector.broadcast %86 : vector<1x8xf32> to vector<8x8xf32>
    %88 = arith.subf %82, %87 : vector<8x8xf32>
    %89 = vector.broadcast %86 : vector<1x8xf32> to vector<8x8xf32>
    %90 = arith.subf %82, %89 : vector<8x8xf32>
    %91 = arith.mulf %88, %90 : vector<8x8xf32>
    %cst_42 = arith.constant dense<0.000000e+00> : vector<8xf32>
    %92 = vector.multi_reduction <add>, %91, %cst_42 [0] : vector<8x8xf32> to vector<8xf32>
    %93 = vector.shape_cast %92 : vector<8xf32> to vector<1x8xf32>
    %cst_43 = arith.constant 8.000000e+00 : f32
    %94 = vector.broadcast %cst_43 : f32 to vector<1x8xf32>
    %95 = arith.divf %93, %94 : vector<1x8xf32>
    %96 = vector.broadcast %86 : vector<1x8xf32> to vector<8x8xf32>
    %97 = arith.subf %82, %96 : vector<8x8xf32>
    %cst_44 = arith.constant 9.99999974E-6 : f32
    %98 = vector.broadcast %cst_44 : f32 to vector<1x8xf32>
    %99 = arith.addf %95, %98 : vector<1x8xf32>
    %100 = math.sqrt %99 : vector<1x8xf32>
    %101 = vector.broadcast %100 : vector<1x8xf32> to vector<8x8xf32>
    %102 = arith.divf %97, %101 : vector<8x8xf32>
    %c0_45 = arith.constant 0 : index
    %c0_46 = arith.constant 0 : index
    %103 = vector.load %arg5[%c0_45, %c0_46] : memref<1x8xf32, #tpu.memory_space<vmem>>, vector<1x8xf32>
    %104 = vector.broadcast %103 : vector<1x8xf32> to vector<8x8xf32>
    %105 = arith.mulf %102, %104 : vector<8x8xf32>
    %c0_47 = arith.constant 0 : index
    %c0_48 = arith.constant 0 : index
    %106 = vector.load %arg6[%c0_47, %c0_48] : memref<1x8xf32, #tpu.memory_space<vmem>>, vector<1x8xf32>
    %107 = vector.broadcast %106 : vector<1x8xf32> to vector<8x8xf32>
    %108 = arith.addf %105, %107 : vector<8x8xf32>
    %cst_49 = arith.constant 0.000000e+00 : f32
    %109 = vector.broadcast %cst_49 : f32 to vector<8x8xf32>
    %110 = arith.maximumf %108, %109 : vector<8x8xf32>
    %111 = arith.truncf %110 : vector<8x8xf32> to vector<8x8xbf16>
    %c0_50 = arith.constant 0 : index
    %c0_51 = arith.constant 0 : index
    %112 = vector.load %arg7[%c0_50, %c0_51] : memref<8x4096xbf16, #tpu.memory_space<vmem>>, vector<8x4096xbf16>
    %cst_52 = arith.constant dense<0.000000e+00> : vector<8x4096xf32>
    %113 = tpu.matmul %111, %112, %cst_52 {dimension_numbers = #tpu.dot_dimension_numbers<[1], [0], [0], [1], [0, 0, 1, 1], [], []>} : vector<8x8xbf16>, vector<8x4096xbf16>, vector<8x4096xf32> -> vector<8x4096xf32>
    %c0_53 = arith.constant 0 : index
    %c0_54 = arith.constant 0 : index
    %114 = vector.load %arg8[%c0_53, %c0_54] : memref<1x4096xf32, #tpu.memory_space<vmem>>, vector<1x4096xf32>
    %115 = vector.broadcast %114 : vector<1x4096xf32> to vector<8x4096xf32>
    %116 = arith.addf %113, %115 : vector<8x4096xf32>
    %cst_55 = arith.constant dense<0.000000e+00> : vector<4096xf32>
    %117 = vector.multi_reduction <add>, %116, %cst_55 [0] : vector<8x4096xf32> to vector<4096xf32>
    %118 = vector.shape_cast %117 : vector<4096xf32> to vector<1x4096xf32>
    %cst_56 = arith.constant 8.000000e+00 : f32
    %119 = vector.broadcast %cst_56 : f32 to vector<1x4096xf32>
    %120 = arith.divf %118, %119 : vector<1x4096xf32>
    %121 = vector.broadcast %120 : vector<1x4096xf32> to vector<8x4096xf32>
    %122 = arith.subf %116, %121 : vector<8x4096xf32>
    %123 = vector.broadcast %120 : vector<1x4096xf32> to vector<8x4096xf32>
    %124 = arith.subf %116, %123 : vector<8x4096xf32>
    %125 = arith.mulf %122, %124 : vector<8x4096xf32>
    %cst_57 = arith.constant dense<0.000000e+00> : vector<4096xf32>
    %126 = vector.multi_reduction <add>, %125, %cst_57 [0] : vector<8x4096xf32> to vector<4096xf32>
    %127 = vector.shape_cast %126 : vector<4096xf32> to vector<1x4096xf32>
    %cst_58 = arith.constant 8.000000e+00 : f32
    %128 = vector.broadcast %cst_58 : f32 to vector<1x4096xf32>
    %129 = arith.divf %127, %128 : vector<1x4096xf32>
    %130 = vector.broadcast %120 : vector<1x4096xf32> to vector<8x4096xf32>
    %131 = arith.subf %116, %130 : vector<8x4096xf32>
    %cst_59 = arith.constant 9.99999974E-6 : f32
    %132 = vector.broadcast %cst_59 : f32 to vector<1x4096xf32>
    %133 = arith.addf %129, %132 : vector<1x4096xf32>
    %134 = math.sqrt %133 : vector<1x4096xf32>
    %135 = vector.broadcast %134 : vector<1x4096xf32> to vector<8x4096xf32>
    %136 = arith.divf %131, %135 : vector<8x4096xf32>
    %c0_60 = arith.constant 0 : index
    %c0_61 = arith.constant 0 : index
    %137 = vector.load %arg9[%c0_60, %c0_61] : memref<1x4096xf32, #tpu.memory_space<vmem>>, vector<1x4096xf32>
    %138 = vector.broadcast %137 : vector<1x4096xf32> to vector<8x4096xf32>
    %139 = arith.mulf %136, %138 : vector<8x4096xf32>
    %c0_62 = arith.constant 0 : index
    %c0_63 = arith.constant 0 : index
    %140 = vector.load %arg10[%c0_62, %c0_63] : memref<1x4096xf32, #tpu.memory_space<vmem>>, vector<1x4096xf32>
    %141 = vector.broadcast %140 : vector<1x4096xf32> to vector<8x4096xf32>
    %142 = arith.addf %139, %141 : vector<8x4096xf32>
    %cst_64 = arith.constant 0.000000e+00 : f32
    %143 = vector.broadcast %cst_64 : f32 to vector<8x4096xf32>
    %144 = arith.maximumf %142, %143 : vector<8x4096xf32>
    %145 = vector.extract_strided_slice %144 {offsets = [0, 0], sizes = [3, 4096], strides = [1, 1]} : vector<8x4096xf32> to vector<3x4096xf32>
    %cst_65 = arith.constant dense<0.000000e+00> : vector<3x8xf32>
    %146 = tpu.matmul %145, %144, %cst_65 {dimension_numbers = #tpu.dot_dimension_numbers<[1], [1], [0], [0], [0, 0, 1, 0], [], []>} : vector<3x4096xf32>, vector<8x4096xf32>, vector<3x8xf32> -> vector<3x8xf32>
    %147 = vector.extract_strided_slice %144 {offsets = [7, 0], sizes = [1, 4096], strides = [1, 1]} : vector<8x4096xf32> to vector<1x4096xf32>
    %cst_66 = arith.constant dense<0.000000e+00> : vector<1x8xf32>
    %148 = tpu.matmul %147, %144, %cst_66 {dimension_numbers = #tpu.dot_dimension_numbers<[1], [1], [0], [0], [0, 0, 1, 0], [], []>} : vector<1x4096xf32>, vector<8x4096xf32>, vector<1x8xf32> -> vector<1x8xf32>
    %149 = arith.mulf %144, %144 : vector<8x4096xf32>
    %cst_67 = arith.constant dense<0.000000e+00> : vector<8xf32>
    %150 = vector.multi_reduction <add>, %149, %cst_67 [1] : vector<8x4096xf32> to vector<8xf32>
    %151 = vector.shape_cast %150 : vector<8xf32> to vector<8x1xf32>
    %152 = math.sqrt %75 : vector<8x1xf32>
    %cst_68 = arith.constant 9.99999996E-13 : f32
    %153 = vector.broadcast %cst_68 : f32 to vector<8x1xf32>
    %154 = arith.maximumf %152, %153 : vector<8x1xf32>
    %cst_69 = arith.constant 1.000000e+00 : f32
    %155 = vector.broadcast %cst_69 : f32 to vector<8x1xf32>
    %156 = arith.divf %155, %154 : vector<8x1xf32>
    %157 = math.sqrt %151 : vector<8x1xf32>
    %cst_70 = arith.constant 9.99999996E-13 : f32
    %158 = vector.broadcast %cst_70 : f32 to vector<8x1xf32>
    %159 = arith.maximumf %157, %158 : vector<8x1xf32>
    %cst_71 = arith.constant 1.000000e+00 : f32
    %160 = vector.broadcast %cst_71 : f32 to vector<8x1xf32>
    %161 = arith.divf %160, %159 : vector<8x1xf32>
    %162 = tpu.iota {dimensions = array<i32: 0>} : vector<8x8xi32>
    %163 = tpu.iota {dimensions = array<i32: 1>} : vector<8x8xi32>
    %164 = arith.cmpi eq, %162, %163 : vector<8x8xi32>
    %cst_72 = arith.constant 0.000000e+00 : f32
    %165 = vector.shape_cast %156 : vector<8x1xf32> to vector<8x1xf32>
    %166 = vector.broadcast %165 : vector<8x1xf32> to vector<8x8xf32>
    %167 = vector.broadcast %cst_72 : f32 to vector<8x8xf32>
    %168 = arith.select %164, %166, %167 : vector<8x8xi1>, vector<8x8xf32>
    %cst_73 = arith.constant dense<0.000000e+00> : vector<8xf32>
    %169 = vector.multi_reduction <add>, %168, %cst_73 [0] : vector<8x8xf32> to vector<8xf32>
    %170 = vector.shape_cast %169 : vector<8xf32> to vector<1x8xf32>
    %171 = tpu.iota {dimensions = array<i32: 0>} : vector<8x8xi32>
    %172 = tpu.iota {dimensions = array<i32: 1>} : vector<8x8xi32>
    %173 = arith.cmpi eq, %171, %172 : vector<8x8xi32>
    %cst_74 = arith.constant 0.000000e+00 : f32
    %174 = vector.shape_cast %161 : vector<8x1xf32> to vector<8x1xf32>
    %175 = vector.broadcast %174 : vector<8x1xf32> to vector<8x8xf32>
    %176 = vector.broadcast %cst_74 : f32 to vector<8x8xf32>
    %177 = arith.select %173, %175, %176 : vector<8x8xi1>, vector<8x8xf32>
    %cst_75 = arith.constant dense<0.000000e+00> : vector<8xf32>
    %178 = vector.multi_reduction <add>, %177, %cst_75 [0] : vector<8x8xf32> to vector<8xf32>
    %179 = vector.shape_cast %178 : vector<8xf32> to vector<1x8xf32>
    %180 = arith.mulf %75, %156 : vector<8x1xf32>
    %181 = arith.mulf %180, %156 : vector<8x1xf32>
    %182 = arith.mulf %151, %161 : vector<8x1xf32>
    %183 = arith.mulf %182, %161 : vector<8x1xf32>
    %184 = arith.addf %181, %183 : vector<8x1xf32>
    %185 = math.sqrt %184 : vector<8x1xf32>
    %186 = tpu.iota {dimensions = array<i32: 0>} : vector<8x8xi32>
    %187 = tpu.iota {dimensions = array<i32: 1>} : vector<8x8xi32>
    %188 = arith.cmpi eq, %186, %187 : vector<8x8xi32>
    %cst_76 = arith.constant 0.000000e+00 : f32
    %189 = vector.shape_cast %185 : vector<8x1xf32> to vector<8x1xf32>
    %190 = vector.broadcast %189 : vector<8x1xf32> to vector<8x8xf32>
    %191 = vector.broadcast %cst_76 : f32 to vector<8x8xf32>
    %192 = arith.select %188, %190, %191 : vector<8x8xi1>, vector<8x8xf32>
    %cst_77 = arith.constant dense<0.000000e+00> : vector<8xf32>
    %193 = vector.multi_reduction <add>, %192, %cst_77 [0] : vector<8x8xf32> to vector<8xf32>
    %194 = vector.shape_cast %193 : vector<8xf32> to vector<1x8xf32>
    %195 = vector.extract_strided_slice %156 {offsets = [0, 0], sizes = [3, 1], strides = [1, 1]} : vector<8x1xf32> to vector<3x1xf32>
    %196 = vector.broadcast %195 : vector<3x1xf32> to vector<3x8xf32>
    %197 = arith.mulf %70, %196 : vector<3x8xf32>
    %198 = vector.broadcast %170 : vector<1x8xf32> to vector<3x8xf32>
    %199 = arith.mulf %197, %198 : vector<3x8xf32>
    %200 = vector.extract_strided_slice %161 {offsets = [0, 0], sizes = [3, 1], strides = [1, 1]} : vector<8x1xf32> to vector<3x1xf32>
    %201 = vector.broadcast %200 : vector<3x1xf32> to vector<3x8xf32>
    %202 = arith.mulf %146, %201 : vector<3x8xf32>
    %203 = vector.broadcast %179 : vector<1x8xf32> to vector<3x8xf32>
    %204 = arith.mulf %202, %203 : vector<3x8xf32>
    %205 = arith.addf %199, %204 : vector<3x8xf32>
    %206 = vector.extract_strided_slice %156 {offsets = [7, 0], sizes = [1, 1], strides = [1, 1]} : vector<8x1xf32> to vector<1x1xf32>
    %207 = vector.broadcast %206 : vector<1x1xf32> to vector<1x8xf32>
    %208 = arith.mulf %72, %207 : vector<1x8xf32>
    %209 = arith.mulf %208, %170 : vector<1x8xf32>
    %210 = vector.extract_strided_slice %161 {offsets = [7, 0], sizes = [1, 1], strides = [1, 1]} : vector<8x1xf32> to vector<1x1xf32>
    %211 = vector.broadcast %210 : vector<1x1xf32> to vector<1x8xf32>
    %212 = arith.mulf %148, %211 : vector<1x8xf32>
    %213 = arith.mulf %212, %179 : vector<1x8xf32>
    %214 = arith.addf %209, %213 : vector<1x8xf32>
    %215 = vector.extract_strided_slice %185 {offsets = [0, 0], sizes = [3, 1], strides = [1, 1]} : vector<8x1xf32> to vector<3x1xf32>
    %216 = vector.broadcast %215 : vector<3x1xf32> to vector<3x8xf32>
    %217 = vector.broadcast %194 : vector<1x8xf32> to vector<3x8xf32>
    %218 = arith.mulf %216, %217 : vector<3x8xf32>
    %cst_78 = arith.constant 9.99999993E-9 : f32
    %219 = vector.broadcast %cst_78 : f32 to vector<3x8xf32>
    %220 = arith.maximumf %218, %219 : vector<3x8xf32>
    %221 = arith.divf %205, %220 : vector<3x8xf32>
    %222 = vector.extract_strided_slice %185 {offsets = [7, 0], sizes = [1, 1], strides = [1, 1]} : vector<8x1xf32> to vector<1x1xf32>
    %223 = vector.broadcast %222 : vector<1x1xf32> to vector<1x8xf32>
    %224 = arith.mulf %223, %194 : vector<1x8xf32>
    %cst_79 = arith.constant 9.99999993E-9 : f32
    %225 = vector.broadcast %cst_79 : f32 to vector<1x8xf32>
    %226 = arith.maximumf %224, %225 : vector<1x8xf32>
    %227 = arith.divf %214, %226 : vector<1x8xf32>
    %228 = tpu.iota {dimensions = array<i32: 0>} : vector<16x1xi32>
    %229 = tpu.iota {dimensions = array<i32: 1>} : vector<16x8xi32>
    %c8_i32 = arith.constant 8 : i32
    %230 = vector.broadcast %c8_i32 : i32 to vector<16x1xi32>
    %231 = arith.cmpi sge, %228, %230 : vector<16x1xi32>
    %c8_i32_80 = arith.constant 8 : i32
    %232 = vector.broadcast %c8_i32_80 : i32 to vector<16x1xi32>
    %233 = arith.subi %228, %232 : vector<16x1xi32>
    %234 = arith.select %231, %233, %228 : vector<16x1xi1>, vector<16x1xi32>
    %235 = vector.broadcast %234 : vector<16x1xi32> to vector<16x8xi32>
    %236 = arith.cmpi eq, %229, %235 : vector<16x8xi32>
    %cst_81 = arith.constant 0.000000e+00 : f32
    %237 = vector.shape_cast %227 : vector<1x8xf32> to vector<1x8xf32>
    %238 = vector.broadcast %237 : vector<1x8xf32> to vector<16x8xf32>
    %239 = vector.broadcast %cst_81 : f32 to vector<16x8xf32>
    %240 = arith.select %236, %238, %239 : vector<16x8xi1>, vector<16x8xf32>
    %cst_82 = arith.constant dense<0.000000e+00> : vector<16xf32>
    %241 = vector.multi_reduction <add>, %240, %cst_82 [1] : vector<16x8xf32> to vector<16xf32>
    %242 = vector.shape_cast %241 : vector<16xf32> to vector<16x1xf32>
    %c7_i32 = arith.constant 7 : i32
    %243 = vector.broadcast %c7_i32 : i32 to vector<16x1xi32>
    %244 = arith.cmpi sge, %228, %243 : vector<16x1xi32>
    %245 = arith.extui %244 : vector<16x1xi1> to vector<16x1xi32>
    %c14_i32 = arith.constant 14 : i32
    %246 = vector.broadcast %c14_i32 : i32 to vector<16x1xi32>
    %247 = arith.cmpi sge, %228, %246 : vector<16x1xi32>
    %248 = arith.extui %247 : vector<16x1xi1> to vector<16x1xi32>
    %249 = arith.addi %245, %248 : vector<16x1xi32>
    %c7_i32_83 = arith.constant 7 : i32
    %250 = vector.broadcast %c7_i32_83 : i32 to vector<16x1xi32>
    %251 = arith.muli %249, %250 : vector<16x1xi32>
    %252 = arith.subi %228, %251 : vector<16x1xi32>
    %253 = arith.cmpi sge, %252, %249 : vector<16x1xi32>
    %254 = arith.extui %253 : vector<16x1xi1> to vector<16x1xi32>
    %255 = arith.addi %252, %254 : vector<16x1xi32>
    %c0_i32 = arith.constant 0 : i32
    %256 = vector.broadcast %c0_i32 : i32 to vector<16x1xi32>
    %257 = arith.cmpi eq, %249, %256 : vector<16x1xi32>
    %258 = vector.extract_strided_slice %221 {offsets = [0, 0], sizes = [1, 8], strides = [1, 1]} : vector<3x8xf32> to vector<1x8xf32>
    %cst_84 = arith.constant 0.000000e+00 : f32
    %259 = vector.shape_cast %257 : vector<16x1xi1> to vector<16x1xi1>
    %260 = vector.broadcast %259 : vector<16x1xi1> to vector<16x8xi1>
    %261 = vector.shape_cast %258 : vector<1x8xf32> to vector<1x8xf32>
    %262 = vector.broadcast %261 : vector<1x8xf32> to vector<16x8xf32>
    %263 = vector.broadcast %cst_84 : f32 to vector<16x8xf32>
    %264 = arith.select %260, %262, %263 : vector<16x8xi1>, vector<16x8xf32>
    %c1_i32 = arith.constant 1 : i32
    %265 = vector.broadcast %c1_i32 : i32 to vector<16x1xi32>
    %266 = arith.cmpi eq, %249, %265 : vector<16x1xi32>
    %267 = vector.extract_strided_slice %221 {offsets = [1, 0], sizes = [1, 8], strides = [1, 1]} : vector<3x8xf32> to vector<1x8xf32>
    %cst_85 = arith.constant 0.000000e+00 : f32
    %268 = vector.shape_cast %266 : vector<16x1xi1> to vector<16x1xi1>
    %269 = vector.broadcast %268 : vector<16x1xi1> to vector<16x8xi1>
    %270 = vector.shape_cast %267 : vector<1x8xf32> to vector<1x8xf32>
    %271 = vector.broadcast %270 : vector<1x8xf32> to vector<16x8xf32>
    %272 = vector.broadcast %cst_85 : f32 to vector<16x8xf32>
    %273 = arith.select %269, %271, %272 : vector<16x8xi1>, vector<16x8xf32>
    %274 = arith.addf %264, %273 : vector<16x8xf32>
    %c2_i32 = arith.constant 2 : i32
    %275 = vector.broadcast %c2_i32 : i32 to vector<16x1xi32>
    %276 = arith.cmpi eq, %249, %275 : vector<16x1xi32>
    %277 = vector.extract_strided_slice %221 {offsets = [2, 0], sizes = [1, 8], strides = [1, 1]} : vector<3x8xf32> to vector<1x8xf32>
    %cst_86 = arith.constant 0.000000e+00 : f32
    %278 = vector.shape_cast %276 : vector<16x1xi1> to vector<16x1xi1>
    %279 = vector.broadcast %278 : vector<16x1xi1> to vector<16x8xi1>
    %280 = vector.shape_cast %277 : vector<1x8xf32> to vector<1x8xf32>
    %281 = vector.broadcast %280 : vector<1x8xf32> to vector<16x8xf32>
    %282 = vector.broadcast %cst_86 : f32 to vector<16x8xf32>
    %283 = arith.select %279, %281, %282 : vector<16x8xi1>, vector<16x8xf32>
    %284 = arith.addf %274, %283 : vector<16x8xf32>
    %285 = vector.broadcast %255 : vector<16x1xi32> to vector<16x8xi32>
    %286 = arith.cmpi eq, %229, %285 : vector<16x8xi32>
    %cst_87 = arith.constant 0.000000e+00 : f32
    %287 = vector.broadcast %cst_87 : f32 to vector<16x8xf32>
    %288 = arith.select %286, %284, %287 : vector<16x8xi1>, vector<16x8xf32>
    %cst_88 = arith.constant dense<0.000000e+00> : vector<16xf32>
    %289 = vector.multi_reduction <add>, %288, %cst_88 [1] : vector<16x8xf32> to vector<16xf32>
    %290 = vector.shape_cast %289 : vector<16xf32> to vector<16x1xf32>
    %cst_89 = arith.constant 2.000000e+00 : f32
    %291 = vector.broadcast %cst_89 : f32 to vector<16x1xf32>
    %292 = arith.divf %242, %291 : vector<16x1xf32>
    %cst_90 = arith.constant 2.000000e+00 : f32
    %293 = vector.broadcast %cst_90 : f32 to vector<16x1xf32>
    %294 = arith.divf %290, %293 : vector<16x1xf32>
    %295 = arith.maximumf %292, %294 : vector<16x1xf32>
    %296 = arith.subf %292, %295 : vector<16x1xf32>
    %297 = math.exp %296 : vector<16x1xf32>
    %298 = arith.subf %294, %295 : vector<16x1xf32>
    %299 = math.exp %298 : vector<16x1xf32>
    %300 = arith.addf %297, %299 : vector<16x1xf32>
    %301 = math.log %300 : vector<16x1xf32>
    %302 = arith.addf %295, %301 : vector<16x1xf32>
    %303 = arith.subf %302, %292 : vector<16x1xf32>
    %cst_91 = arith.constant dense<0.000000e+00> : vector<1xf32>
    %304 = vector.multi_reduction <add>, %303, %cst_91 [0] : vector<16x1xf32> to vector<1xf32>
    %305 = vector.shape_cast %304 : vector<1xf32> to vector<1x1xf32>
    %cst_92 = arith.constant 1.600000e+01 : f32
    %306 = vector.broadcast %cst_92 : f32 to vector<1x1xf32>
    %307 = arith.divf %305, %306 : vector<1x1xf32>
    %c0_93 = arith.constant 0 : index
    %c0_94 = arith.constant 0 : index
    %308 = vector.load %arg11[%c0_93, %c0_94] : memref<1x1xf32, #tpu.memory_space<vmem>>, vector<1x1xf32>
    tpu.vector_store %arg11[%c0_93, %c0_94], %307 {strides = array<i32>} : memref<1x1xf32, #tpu.memory_space<vmem>>, vector<1x1xf32>,
    return
  }
  func.func @transform_0(%arg0: i32) -> (i32, i32) {
    %c0_i32 = arith.constant 0 : i32
    %c0_i32_0 = arith.constant 0 : i32
    %c0_i32_1 = arith.constant 0 : i32
    return %c0_i32, %c0_i32_0 : i32, i32
  }
  func.func @transform_1(%arg0: i32) -> (i32, i32) {
    %c0_i32 = arith.constant 0 : i32
    %c0_i32_0 = arith.constant 0 : i32
    %c0_i32_1 = arith.constant 0 : i32
    return %c0_i32, %c0_i32_0 : i32, i32
  }
  func.func @transform_2(%arg0: i32) -> (i32, i32) {
    %c0_i32 = arith.constant 0 : i32
    %c0_i32_0 = arith.constant 0 : i32
    %c0_i32_1 = arith.constant 0 : i32
    return %c0_i32, %c0_i32_0 : i32, i32
  }
  func.func @transform_3(%arg0: i32) -> (i32, i32) {
    %c0_i32 = arith.constant 0 : i32
    %c0_i32_0 = arith.constant 0 : i32
    %c0_i32_1 = arith.constant 0 : i32
    return %c0_i32, %c0_i32_0 : i32, i32
  }
  func.func @transform_4(%arg0: i32) -> (i32, i32) {
    %c0_i32 = arith.constant 0 : i32
    %c0_i32_0 = arith.constant 0 : i32
    %c0_i32_1 = arith.constant 0 : i32
    return %c0_i32, %c0_i32_0 : i32, i32
  }
  func.func @transform_5(%arg0: i32) -> (i32, i32) {
    %c0_i32 = arith.constant 0 : i32
    %c0_i32_0 = arith.constant 0 : i32
    %c0_i32_1 = arith.constant 0 : i32
    return %c0_i32, %c0_i32_0 : i32, i32
  }
  func.func @transform_6(%arg0: i32) -> (i32, i32) {
    %c0_i32 = arith.constant 0 : i32
    %c0_i32_0 = arith.constant 0 : i32
    %c0_i32_1 = arith.constant 0 : i32
    return %c0_i32, %c0_i32_0 : i32, i32
  }
  func.func @transform_7(%arg0: i32) -> (i32, i32) {
    %c0_i32 = arith.constant 0 : i32
    %c0_i32_0 = arith.constant 0 : i32
    %c0_i32_1 = arith.constant 0 : i32
    return %c0_i32, %c0_i32_0 : i32, i32
  }
  func.func @transform_8(%arg0: i32) -> (i32, i32) {
    %c0_i32 = arith.constant 0 : i32
    %c0_i32_0 = arith.constant 0 : i32
    %c0_i32_1 = arith.constant 0 : i32
    return %c0_i32, %c0_i32_0 : i32, i32
  }
  func.func @transform_9(%arg0: i32) -> (i32, i32) {
    %c0_i32 = arith.constant 0 : i32
    %c0_i32_0 = arith.constant 0 : i32
    %c0_i32_1 = arith.constant 0 : i32
    return %c0_i32, %c0_i32_0 : i32, i32
  }
  func.func @transform_10(%arg0: i32) -> (i32, i32) {
    %c0_i32 = arith.constant 0 : i32
    %c0_i32_0 = arith.constant 0 : i32
    %c0_i32_1 = arith.constant 0 : i32
    return %c0_i32, %c0_i32_0 : i32, i32
  }
}

</mosaic_0001>

<llo_original>
// kernel: tpu_custom_call.1
$region0: #{tpu_custom_call.1}
  #allocation0 [shape = 'u32[]', space=smem, size = 0x4, offset = 0x4, fixed_abs, tag = 'smem constant byte address 0x4 - core index']
  #allocation1 [shape = 'u32[144,128]{1,0:T(1,128)}', space=vmem, size = 0x12000, scoped, tag = 'internal scratch']
  %s0 = inlined_call_operand.vmem [shape: f32[8,1024], index: 0, kind: input, shape index: {}]
  %s1 = inlined_call_operand.vmem [shape: f32[8,1024], index: 1, kind: input, shape index: {}]
  %s2 = inlined_call_operand.vmem [shape: bf16[1024,8], index: 2, kind: input, shape index: {}]
  %s3 = inlined_call_operand.vmem [shape: f32[1,8], index: 3, kind: input, shape index: {}]
  %s4 = inlined_call_operand.vmem [shape: f32[1,8], index: 4, kind: input, shape index: {}]
  %s5 = inlined_call_operand.vmem [shape: f32[1,8], index: 5, kind: input, shape index: {}]
  %s6 = inlined_call_operand.vmem [shape: bf16[8,4096], index: 6, kind: input, shape index: {}]
  %s7 = inlined_call_operand.vmem [shape: f32[1,4096], index: 7, kind: input, shape index: {}]
  %s8 = inlined_call_operand.vmem [shape: f32[1,4096], index: 8, kind: input, shape index: {}]
  %s9 = inlined_call_operand.vmem [shape: f32[1,4096], index: 9, kind: input, shape index: {}]
  %s10 = inlined_call_operand.hbm [shape: f32[1,1], index: 10, kind: output, shape index: {}]
  %s11 = sld [smem:[#allocation0]]
  $region50: #{tpu_custom_call.1} parent=0
    _
  %s13 = ssub.s32 1, %s11
  %s14 = scalar_select 0, %s13, %s11
  $region1: #{tpu_custom_call.1} parent=0
    #allocation2 [shape = 'u8[512]{0}', space=vmem, size = 0x400, scoped, tag = 'output window, operand 0, single buffered']
    #allocation3 [shape = 's32[1]{0}', space=sflag, size = 0x4, scoped, tag = 'scoped memory for tpu_custom_call.1']
    %15 = vsyncpa [#allocation3], 0
    // Predicated region
    $region2: #{tpu_custom_call.1} parent=1 // pred_check
      _
    $region3: #{tpu_custom_call.1} parent=1 // pred_check_branch
      %17 = sbr.rel (0) target = $region5
    $region4: #{tpu_custom_call.1} parent=1 // pred_region
      _
    $region5: #{tpu_custom_call.1} parent=1 // pred_fallthru
      _
    // Predicated region
    $region6: #{tpu_custom_call.1} parent=1 // pred_check
      _
    $region7: #{tpu_custom_call.1} parent=1 // pred_check_branch
      %19 = sbr.rel (0) target = $region9
    $region8: #{tpu_custom_call.1} parent=1 // pred_region
      _
    $region9: #{tpu_custom_call.1} parent=1 // pred_fallthru
      _
    // Predicated region
    $region10: #{tpu_custom_call.1} parent=1 // pred_check
      _
    $region11: #{tpu_custom_call.1} parent=1 // pred_check_branch
      %21 = sbr.rel (0) target = $region13
    $region12: #{tpu_custom_call.1} parent=1 // pred_region
      _
    $region13: #{tpu_custom_call.1} parent=1 // pred_fallthru
      _
    // Predicated region
    $region14: #{tpu_custom_call.1} parent=1 // pred_check
      _
    $region15: #{tpu_custom_call.1} parent=1 // pred_check_branch
      %23 = sbr.rel (0) target = $region17
    $region16: #{tpu_custom_call.1} parent=1 // pred_region
      _
    $region17: #{tpu_custom_call.1} parent=1 // pred_fallthru
      _
    // Predicated region
    $region18: #{tpu_custom_call.1} parent=1 // pred_check
      _
    $region19: #{tpu_custom_call.1} parent=1 // pred_check_branch
      %25 = sbr.rel (0) target = $region21
    $region20: #{tpu_custom_call.1} parent=1 // pred_region
      _
    $region21: #{tpu_custom_call.1} parent=1 // pred_fallthru
      _
    // Predicated region
    $region22: #{tpu_custom_call.1} parent=1 // pred_check
      _
    $region23: #{tpu_custom_call.1} parent=1 // pred_check_branch
      %27 = sbr.rel (0) target = $region25
    $region24: #{tpu_custom_call.1} parent=1 // pred_region
      _
    $region25: #{tpu_custom_call.1} parent=1 // pred_fallthru
      _
    // Predicated region
    $region26: #{tpu_custom_call.1} parent=1 // pred_check
      _
    $region27: #{tpu_custom_call.1} parent=1 // pred_check_branch
      %29 = sbr.rel (0) target = $region29
    $region28: #{tpu_custom_call.1} parent=1 // pred_region
      _
    $region29: #{tpu_custom_call.1} parent=1 // pred_fallthru
      _
    // Predicated region
    $region30: #{tpu_custom_call.1} parent=1 // pred_check
      _
    $region31: #{tpu_custom_call.1} parent=1 // pred_check_branch
      %31 = sbr.rel (0) target = $region33
    $region32: #{tpu_custom_call.1} parent=1 // pred_region
      _
    $region33: #{tpu_custom_call.1} parent=1 // pred_fallthru
      _
    // Predicated region
    $region34: #{tpu_custom_call.1} parent=1 // pred_check
      _
    $region35: #{tpu_custom_call.1} parent=1 // pred_check_branch
      %33 = sbr.rel (0) target = $region37
    $region36: #{tpu_custom_call.1} parent=1 // pred_region
      _
    $region37: #{tpu_custom_call.1} parent=1 // pred_fallthru
      _
    // Predicated region
    $region38: #{tpu_custom_call.1} parent=1 // pred_check
      _
    $region39: #{tpu_custom_call.1} parent=1 // pred_check_branch
      %35 = sbr.rel (0) target = $region41
    $region40: #{tpu_custom_call.1} parent=1 // pred_region
      _
    $region41: #{tpu_custom_call.1} parent=1 // pred_fallthru
      _
    %v37 = vld [vmem:[%s0] sm:$0xff]
    %v38 = vld [vmem:[%s0 + $0x8] sm:$0xff]
    %v39 = vld [vmem:[%s0 + $0x10] sm:$0xff]
    %v40 = vld [vmem:[%s0 + $0x18] sm:$0xff]
    %v41 = vld [vmem:[%s0 + $0x20] sm:$0xff]
    %v42 = vld [vmem:[%s0 + $0x28] sm:$0xff]
    %v43 = vld [vmem:[%s0 + $0x30] sm:$0xff]
    %v44 = vld [vmem:[%s0 + $0x38] sm:$0xff]
    %v45 = vpack.c.bf16 %v37, %v37
    %v46 = vpack.c.bf16 %v38, %v38
    %v47 = vpack.c.bf16 %v39, %v39
    %v48 = vpack.c.bf16 %v40, %v40
    %v49 = vpack.c.bf16 %v41, %v41
    %v50 = vpack.c.bf16 %v42, %v42
    %v51 = vpack.c.bf16 %v43, %v43
    %v52 = vpack.c.bf16 %v44, %v44
    %v53 = vld [vmem:[%s2] sm:$0xf]
    %v54 = vld [vmem:[%s2 + $0x4] sm:$0xf]
    %v55 = vld [vmem:[%s2 + $0x8] sm:$0xf]
    %v56 = vld [vmem:[%s2 + $0xc] sm:$0xf]
    %v57 = vld [vmem:[%s2 + $0x10] sm:$0xf]
    %v58 = vld [vmem:[%s2 + $0x14] sm:$0xf]
    %v59 = vld [vmem:[%s2 + $0x18] sm:$0xf]
    %v60 = vld [vmem:[%s2 + $0x1c] sm:$0xf]
    %v61 = vld [vmem:[%s2 + $0x20] sm:$0xf]
    %v62 = vld [vmem:[%s2 + $0x24] sm:$0xf]
    %v63 = vld [vmem:[%s2 + $0x28] sm:$0xf]
    %v64 = vld [vmem:[%s2 + $0x2c] sm:$0xf]
    %v65 = vld [vmem:[%s2 + $0x30] sm:$0xf]
    %v66 = vld [vmem:[%s2 + $0x34] sm:$0xf]
    %v67 = vld [vmem:[%s2 + $0x38] sm:$0xf]
    %v68 = vld [vmem:[%s2 + $0x3c] sm:$0xf]
    %v69 = vld [vmem:[%s2 + $0x40] sm:$0xf]
    %v70 = vld [vmem:[%s2 + $0x44] sm:$0xf]
    %v71 = vld [vmem:[%s2 + $0x48] sm:$0xf]
    %v72 = vld [vmem:[%s2 + $0x4c] sm:$0xf]
    %v73 = vld [vmem:[%s2 + $0x50] sm:$0xf]
    %v74 = vld [vmem:[%s2 + $0x54] sm:$0xf]
    %v75 = vld [vmem:[%s2 + $0x58] sm:$0xf]
    %v76 = vld [vmem:[%s2 + $0x5c] sm:$0xf]
    %v77 = vld [vmem:[%s2 + $0x60] sm:$0xf]
    %v78 = vld [vmem:[%s2 + $0x64] sm:$0xf]
    %v79 = vld [vmem:[%s2 + $0x68] sm:$0xf]
    %v80 = vld [vmem:[%s2 + $0x6c] sm:$0xf]
    %v81 = vld [vmem:[%s2 + $0x70] sm:$0xf]
    %v82 = vld [vmem:[%s2 + $0x74] sm:$0xf]
    %v83 = vld [vmem:[%s2 + $0x78] sm:$0xf]
    %v84 = vld [vmem:[%s2 + $0x7c] sm:$0xf]
    %v85 = vld [vmem:[%s2 + $0x80] sm:$0xf]
    %v86 = vld [vmem:[%s2 + $0x84] sm:$0xf]
    %v87 = vld [vmem:[%s2 + $0x88] sm:$0xf]
    %v88 = vld [vmem:[%s2 + $0x8c] sm:$0xf]
    %v89 = vld [vmem:[%s2 + $0x90] sm:$0xf]
    %v90 = vld [vmem:[%s2 + $0x94] sm:$0xf]
    %v91 = vld [vmem:[%s2 + $0x98] sm:$0xf]
    %v92 = vld [vmem:[%s2 + $0x9c] sm:$0xf]
    %v93 = vld [vmem:[%s2 + $0xa0] sm:$0xf]
    %v94 = vld [vmem:[%s2 + $0xa4] sm:$0xf]
    %v95 = vld [vmem:[%s2 + $0xa8] sm:$0xf]
    %v96 = vld [vmem:[%s2 + $0xac] sm:$0xf]
    %v97 = vld [vmem:[%s2 + $0xb0] sm:$0xf]
    %v98 = vld [vmem:[%s2 + $0xb4] sm:$0xf]
    %v99 = vld [vmem:[%s2 + $0xb8] sm:$0xf]
    %v100 = vld [vmem:[%s2 + $0xbc] sm:$0xf]
    %v101 = vld [vmem:[%s2 + $0xc0] sm:$0xf]
    %v102 = vld [vmem:[%s2 + $0xc4] sm:$0xf]
    %v103 = vld [vmem:[%s2 + $0xc8] sm:$0xf]
    %v104 = vld [vmem:[%s2 + $0xcc] sm:$0xf]
    %v105 = vld [vmem:[%s2 + $0xd0] sm:$0xf]
    %v106 = vld [vmem:[%s2 + $0xd4] sm:$0xf]
    %v107 = vld [vmem:[%s2 + $0xd8] sm:$0xf]
    %v108 = vld [vmem:[%s2 + $0xdc] sm:$0xf]
    %v109 = vld [vmem:[%s2 + $0xe0] sm:$0xf]
    %v110 = vld [vmem:[%s2 + $0xe4] sm:$0xf]
    %v111 = vld [vmem:[%s2 + $0xe8] sm:$0xf]
    %v112 = vld [vmem:[%s2 + $0xec] sm:$0xf]
    %v113 = vld [vmem:[%s2 + $0xf0] sm:$0xf]
    %v114 = vld [vmem:[%s2 + $0xf4] sm:$0xf]
    %v115 = vld [vmem:[%s2 + $0xf8] sm:$0xf]
    %v116 = vld [vmem:[%s2 + $0xfc] sm:$0xf]
    %v117 = vld [vmem:[%s2 + $0x100] sm:$0xf]
    %v118 = vld [vmem:[%s2 + $0x104] sm:$0xf]
    %v119 = vld [vmem:[%s2 + $0x108] sm:$0xf]
    %v120 = vld [vmem:[%s2 + $0x10c] sm:$0xf]
    %v121 = vld [vmem:[%s2 + $0x110] sm:$0xf]
    %v122 = vld [vmem:[%s2 + $0x114] sm:$0xf]
    %v123 = vld [vmem:[%s2 + $0x118] sm:$0xf]
    %v124 = vld [vmem:[%s2 + $0x11c] sm:$0xf]
    %v125 = vld [vmem:[%s2 + $0x120] sm:$0xf]
    %v126 = vld [vmem:[%s2 + $0x124] sm:$0xf]
    %v127 = vld [vmem:[%s2 + $0x128] sm:$0xf]
    %v128 = vld [vmem:[%s2 + $0x12c] sm:$0xf]
    %v129 = vld [vmem:[%s2 + $0x130] sm:$0xf]
    %v130 = vld [vmem:[%s2 + $0x134] sm:$0xf]
    %v131 = vld [vmem:[%s2 + $0x138] sm:$0xf]
    %v132 = vld [vmem:[%s2 + $0x13c] sm:$0xf]
    %v133 = vld [vmem:[%s2 + $0x140] sm:$0xf]
    %v134 = vld [vmem:[%s2 + $0x144] sm:$0xf]
    %v135 = vld [vmem:[%s2 + $0x148] sm:$0xf]
    %v136 = vld [vmem:[%s2 + $0x14c] sm:$0xf]
    %v137 = vld [vmem:[%s2 + $0x150] sm:$0xf]
    %v138 = vld [vmem:[%s2 + $0x154] sm:$0xf]
    %v139 = vld [vmem:[%s2 + $0x158] sm:$0xf]
    %v140 = vld [vmem:[%s2 + $0x15c] sm:$0xf]
    %v141 = vld [vmem:[%s2 + $0x160] sm:$0xf]
    %v142 = vld [vmem:[%s2 + $0x164] sm:$0xf]
    %v143 = vld [vmem:[%s2 + $0x168] sm:$0xf]
    %v144 = vld [vmem:[%s2 + $0x16c] sm:$0xf]
    %v145 = vld [vmem:[%s2 + $0x170] sm:$0xf]
    %v146 = vld [vmem:[%s2 + $0x174] sm:$0xf]
    %v147 = vld [vmem:[%s2 + $0x178] sm:$0xf]
    %v148 = vld [vmem:[%s2 + $0x17c] sm:$0xf]
    %v149 = vld [vmem:[%s2 + $0x180] sm:$0xf]
    %v150 = vld [vmem:[%s2 + $0x184] sm:$0xf]
    %v151 = vld [vmem:[%s2 + $0x188] sm:$0xf]
    %v152 = vld [vmem:[%s2 + $0x18c] sm:$0xf]
    %v153 = vld [vmem:[%s2 + $0x190] sm:$0xf]
    %v154 = vld [vmem:[%s2 + $0x194] sm:$0xf]
    %v155 = vld [vmem:[%s2 + $0x198] sm:$0xf]
    %v156 = vld [vmem:[%s2 + $0x19c] sm:$0xf]
    %v157 = vld [vmem:[%s2 + $0x1a0] sm:$0xf]
    %v158 = vld [vmem:[%s2 + $0x1a4] sm:$0xf]
    %v159 = vld [vmem:[%s2 + $0x1a8] sm:$0xf]
    %v160 = vld [vmem:[%s2 + $0x1ac] sm:$0xf]
    %v161 = vld [vmem:[%s2 + $0x1b0] sm:$0xf]
    %v162 = vld [vmem:[%s2 + $0x1b4] sm:$0xf]
    %v163 = vld [vmem:[%s2 + $0x1b8] sm:$0xf]
    %v164 = vld [vmem:[%s2 + $0x1bc] sm:$0xf]
    %v165 = vld [vmem:[%s2 + $0x1c0] sm:$0xf]
    %v166 = vld [vmem:[%s2 + $0x1c4] sm:$0xf]
    %v167 = vld [vmem:[%s2 + $0x1c8] sm:$0xf]
    %v168 = vld [vmem:[%s2 + $0x1cc] sm:$0xf]
    %v169 = vld [vmem:[%s2 + $0x1d0] sm:$0xf]
    %v170 = vld [vmem:[%s2 + $0x1d4] sm:$0xf]
    %v171 = vld [vmem:[%s2 + $0x1d8] sm:$0xf]
    %v172 = vld [vmem:[%s2 + $0x1dc] sm:$0xf]
    %v173 = vld [vmem:[%s2 + $0x1e0] sm:$0xf]
    %v174 = vld [vmem:[%s2 + $0x1e4] sm:$0xf]
    %v175 = vld [vmem:[%s2 + $0x1e8] sm:$0xf]
    %v176 = vld [vmem:[%s2 + $0x1ec] sm:$0xf]
    %v177 = vld [vmem:[%s2 + $0x1f0] sm:$0xf]
    %v178 = vld [vmem:[%s2 + $0x1f4] sm:$0xf]
    %v179 = vld [vmem:[%s2 + $0x1f8] sm:$0xf]
    %v180 = vld [vmem:[%s2 + $0x1fc] sm:$0xf]
    %v181 = vld [vmem:[%s3] sm:$0x1]
    %v183 = vlaneseq
    %v184 = vshrl.u32 %v183, 7
    %v185 = vsub.s32 0, %v184
    %v186 = vrot.slane %v181, %v185
    %v316 = vunpack.c.l.b16 %v53
    %v317 = vunpack.c.l.b16 %v54
    %v318 = vunpack.c.l.b16 %v55
    %v319 = vunpack.c.l.b16 %v56
    %v320 = vunpack.c.l.b16 %v57
    %v321 = vunpack.c.l.b16 %v58
    %v322 = vunpack.c.l.b16 %v59
    %v323 = vunpack.c.l.b16 %v60
    %v324 = vunpack.c.l.b16 %v61
    %v325 = vunpack.c.l.b16 %v62
    %v326 = vunpack.c.l.b16 %v63
    %v327 = vunpack.c.l.b16 %v64
    %v328 = vunpack.c.l.b16 %v65
    %v329 = vunpack.c.l.b16 %v66
    %v330 = vunpack.c.l.b16 %v67
    %v331 = vunpack.c.l.b16 %v68
    %v332 = vunpack.c.l.b16 %v69
    %v333 = vunpack.c.l.b16 %v70
    %v334 = vunpack.c.l.b16 %v71
    %v335 = vunpack.c.l.b16 %v72
    %v336 = vunpack.c.l.b16 %v73
    %v337 = vunpack.c.l.b16 %v74
    %v338 = vunpack.c.l.b16 %v75
    %v339 = vunpack.c.l.b16 %v76
    %v340 = vunpack.c.l.b16 %v77
    %v341 = vunpack.c.l.b16 %v78
    %v342 = vunpack.c.l.b16 %v79
    %v343 = vunpack.c.l.b16 %v80
    %v344 = vunpack.c.l.b16 %v81
    %v345 = vunpack.c.l.b16 %v82
    %v346 = vunpack.c.l.b16 %v83
    %v347 = vunpack.c.l.b16 %v84
    %v348 = vunpack.c.l.b16 %v85
    %v349 = vunpack.c.l.b16 %v86
    %v350 = vunpack.c.l.b16 %v87
    %v351 = vunpack.c.l.b16 %v88
    %v352 = vunpack.c.l.b16 %v89
    %v353 = vunpack.c.l.b16 %v90
    %v354 = vunpack.c.l.b16 %v91
    %v355 = vunpack.c.l.b16 %v92
    %v356 = vunpack.c.l.b16 %v93
    %v357 = vunpack.c.l.b16 %v94
    %v358 = vunpack.c.l.b16 %v95
    %v359 = vunpack.c.l.b16 %v96
    %v360 = vunpack.c.l.b16 %v97
    %v361 = vunpack.c.l.b16 %v98
    %v362 = vunpack.c.l.b16 %v99
    %v363 = vunpack.c.l.b16 %v100
    %v364 = vunpack.c.l.b16 %v101
    %v365 = vunpack.c.l.b16 %v102
    %v366 = vunpack.c.l.b16 %v103
    %v367 = vunpack.c.l.b16 %v104
    %v368 = vunpack.c.l.b16 %v105
    %v369 = vunpack.c.l.b16 %v106
    %v370 = vunpack.c.l.b16 %v107
    %v371 = vunpack.c.l.b16 %v108
    %v372 = vunpack.c.l.b16 %v109
    %v373 = vunpack.c.l.b16 %v110
    %v374 = vunpack.c.l.b16 %v111
    %v375 = vunpack.c.l.b16 %v112
    %v376 = vunpack.c.l.b16 %v113
    %v377 = vunpack.c.l.b16 %v114
    %v378 = vunpack.c.l.b16 %v115
    %v379 = vunpack.c.l.b16 %v116
    %v380 = vunpack.c.l.b16 %v117
    %v381 = vunpack.c.l.b16 %v118
    %v382 = vunpack.c.l.b16 %v119
    %v383 = vunpack.c.l.b16 %v120
    %v384 = vunpack.c.l.b16 %v121
    %v385 = vunpack.c.l.b16 %v122
    %v386 = vunpack.c.l.b16 %v123
    %v387 = vunpack.c.l.b16 %v124
    %v388 = vunpack.c.l.b16 %v125
    %v389 = vunpack.c.l.b16 %v126
    %v390 = vunpack.c.l.b16 %v127
    %v391 = vunpack.c.l.b16 %v128
    %v392 = vunpack.c.l.b16 %v129
    %v393 = vunpack.c.l.b16 %v130
    %v394 = vunpack.c.l.b16 %v131
    %v395 = vunpack.c.l.b16 %v132
    %v396 = vunpack.c.l.b16 %v133
    %v397 = vunpack.c.l.b16 %v134
    %v398 = vunpack.c.l.b16 %v135
    %v399 = vunpack.c.l.b16 %v136
    %v400 = vunpack.c.l.b16 %v137
    %v401 = vunpack.c.l.b16 %v138
    %v402 = vunpack.c.l.b16 %v139
    %v403 = vunpack.c.l.b16 %v140
    %v404 = vunpack.c.l.b16 %v141
    %v405 = vunpack.c.l.b16 %v142
    %v406 = vunpack.c.l.b16 %v143
    %v407 = vunpack.c.l.b16 %v144
    %v408 = vunpack.c.l.b16 %v145
    %v409 = vunpack.c.l.b16 %v146
    %v410 = vunpack.c.l.b16 %v147
    %v411 = vunpack.c.l.b16 %v148
    %v412 = vunpack.c.l.b16 %v149
    %v413 = vunpack.c.l.b16 %v150
    %v414 = vunpack.c.l.b16 %v151
    %v415 = vunpack.c.l.b16 %v152
    %v416 = vunpack.c.l.b16 %v153
    %v417 = vunpack.c.l.b16 %v154
    %v418 = vunpack.c.l.b16 %v155
    %v419 = vunpack.c.l.b16 %v156
    %v420 = vunpack.c.l.b16 %v157
    %v421 = vunpack.c.l.b16 %v158
    %v422 = vunpack.c.l.b16 %v159
    %v423 = vunpack.c.l.b16 %v160
    %v424 = vunpack.c.l.b16 %v161
    %v425 = vunpack.c.l.b16 %v162
    %v426 = vunpack.c.l.b16 %v163
    %v427 = vunpack.c.l.b16 %v164
    %v428 = vunpack.c.l.b16 %v165
    %v429 = vunpack.c.l.b16 %v166
    %v430 = vunpack.c.l.b16 %v167
    %v431 = vunpack.c.l.b16 %v168
    %v432 = vunpack.c.l.b16 %v169
    %v433 = vunpack.c.l.b16 %v170
    %v434 = vunpack.c.l.b16 %v171
    %v435 = vunpack.c.l.b16 %v172
    %v436 = vunpack.c.l.b16 %v173
    %v437 = vunpack.c.l.b16 %v174
    %v438 = vunpack.c.l.b16 %v175
    %v439 = vunpack.c.l.b16 %v176
    %v440 = vunpack.c.l.b16 %v177
    %v441 = vunpack.c.l.b16 %v178
    %v442 = vunpack.c.l.b16 %v179
    %v443 = vunpack.c.l.b16 %v180
    %v444 = vpack.c.b16 %v317, %v316
    %v445 = vpack.c.b16 %v319, %v318
    %v446 = vpack.c.b16 %v321, %v320
    %v447 = vpack.c.b16 %v323, %v322
    %v448 = vpack.c.b16 %v325, %v324
    %v449 = vpack.c.b16 %v327, %v326
    %v450 = vpack.c.b16 %v329, %v328
    %v451 = vpack.c.b16 %v331, %v330
    %v452 = vpack.c.b16 %v333, %v332
    %v453 = vpack.c.b16 %v335, %v334
    %v454 = vpack.c.b16 %v337, %v336
    %v455 = vpack.c.b16 %v339, %v338
    %v456 = vpack.c.b16 %v341, %v340
    %v457 = vpack.c.b16 %v343, %v342
    %v458 = vpack.c.b16 %v345, %v344
    %v459 = vpack.c.b16 %v347, %v346
    %v460 = vpack.c.b16 %v349, %v348
    %v461 = vpack.c.b16 %v351, %v350
    %v462 = vpack.c.b16 %v353, %v352
    %v463 = vpack.c.b16 %v355, %v354
    %v464 = vpack.c.b16 %v357, %v356
    %v465 = vpack.c.b16 %v359, %v358
    %v466 = vpack.c.b16 %v361, %v360
    %v467 = vpack.c.b16 %v363, %v362
    %v468 = vpack.c.b16 %v365, %v364
    %v469 = vpack.c.b16 %v367, %v366
    %v470 = vpack.c.b16 %v369, %v368
    %v471 = vpack.c.b16 %v371, %v370
    %v472 = vpack.c.b16 %v373, %v372
    %v473 = vpack.c.b16 %v375, %v374
    %v474 = vpack.c.b16 %v377, %v376
    %v475 = vpack.c.b16 %v379, %v378
    %v476 = vpack.c.b16 %v381, %v380
    %v477 = vpack.c.b16 %v383, %v382
    %v478 = vpack.c.b16 %v385, %v384
    %v479 = vpack.c.b16 %v387, %v386
    %v480 = vpack.c.b16 %v389, %v388
    %v481 = vpack.c.b16 %v391, %v390
    %v482 = vpack.c.b16 %v393, %v392
    %v483 = vpack.c.b16 %v395, %v394
    %v484 = vpack.c.b16 %v397, %v396
    %v485 = vpack.c.b16 %v399, %v398
    %v486 = vpack.c.b16 %v401, %v400
    %v487 = vpack.c.b16 %v403, %v402
    %v488 = vpack.c.b16 %v405, %v404
    %v489 = vpack.c.b16 %v407, %v406
    %v490 = vpack.c.b16 %v409, %v408
    %v491 = vpack.c.b16 %v411, %v410
    %v492 = vpack.c.b16 %v413, %v412
    %v493 = vpack.c.b16 %v415, %v414
    %v494 = vpack.c.b16 %v417, %v416
    %v495 = vpack.c.b16 %v419, %v418
    %v496 = vpack.c.b16 %v421, %v420
    %v497 = vpack.c.b16 %v423, %v422
    %v498 = vpack.c.b16 %v425, %v424
    %v499 = vpack.c.b16 %v427, %v426
    %v500 = vpack.c.b16 %v429, %v428
    %v501 = vpack.c.b16 %v431, %v430
    %v502 = vpack.c.b16 %v433, %v432
    %v503 = vpack.c.b16 %v435, %v434
    %v504 = vpack.c.b16 %v437, %v436
    %v505 = vpack.c.b16 %v439, %v438
    %v506 = vpack.c.b16 %v441, %v440
    %v507 = vpack.c.b16 %v443, %v442
    %572 = vmatprep.subr.bf16.mxu0 0
    %573 = vmatpush1.bf16.msra.mxu0 %v444
    %574 = vmatprep.subr.bf16.mxu0 0
    %575 = vmatpush1.bf16.msra.mxu0 %v445
    %576 = vmatprep.subr.bf16.mxu0 0
    %577 = vmatpush1.bf16.msra.mxu0 %v446
    %578 = vmatprep.subr.bf16.mxu0 0
    %579 = vmatpush1.bf16.msra.mxu0 %v447
    %580 = vmatprep.subr.bf16.mxu0 0
    %581 = vmatpush1.bf16.msra.mxu0 %v448
    %582 = vmatprep.subr.bf16.mxu0 0
    %583 = vmatpush1.bf16.msra.mxu0 %v449
    %584 = vmatprep.subr.bf16.mxu0 0
    %585 = vmatpush1.bf16.msra.mxu0 %v450
    %586 = vmatprep.subr.bf16.mxu0 0
    %587 = vmatpush1.bf16.msra.mxu0 %v451
    %588 = vmatprep.subr.bf16.mxu0 0
    %589 = vmatpush1.bf16.msra.mxu0 %v452
    %590 = vmatprep.subr.bf16.mxu0 0
    %591 = vmatpush1.bf16.msra.mxu0 %v453
    %592 = vmatprep.subr.bf16.mxu0 0
    %593 = vmatpush1.bf16.msra.mxu0 %v454
    %594 = vmatprep.subr.bf16.mxu0 0
    %595 = vmatpush1.bf16.msra.mxu0 %v455
    %596 = vmatprep.subr.bf16.mxu0 0
    %597 = vmatpush1.bf16.msra.mxu0 %v456
    %598 = vmatprep.subr.bf16.mxu0 0
    %599 = vmatpush1.bf16.msra.mxu0 %v457
    %600 = vmatprep.subr.bf16.mxu0 0
    %601 = vmatpush1.bf16.msra.mxu0 %v458
    %602 = vmatprep.subr.bf16.mxu0 0
    %603 = vmatpush1.bf16.msra.mxu0 %v459
    %604 = vmatprep.mubr.bf16.mxu0 %v46
    %605 = vmatmul.mubr.bf16.gmra.mrb[0].mxu0 %v45
    %v606 = vpop.f32.mrb[0].mxu0
    %v607 = vadd.f32 %v186, %v606
    %v608 = vpop.f32.mrb[0].mxu0
    %v609 = vpop.f32.mrb[0].mxu0
    %v610 = vpop.f32.mrb[0].mxu0
    %611 = vdwg.mxu0
    %612 = vmatprep.subr.bf16.mxu0 0
    %613 = vmatpush1.bf16.msra.mxu0 %v460
    %614 = vmatprep.subr.bf16.mxu0 0
    %615 = vmatpush1.bf16.msra.mxu0 %v461
    %616 = vmatprep.subr.bf16.mxu0 0
    %617 = vmatpush1.bf16.msra.mxu0 %v462
    %618 = vmatprep.subr.bf16.mxu0 0
    %619 = vmatpush1.bf16.msra.mxu0 %v463
    %620 = vmatprep.subr.bf16.mxu0 0
    %621 = vmatpush1.bf16.msra.mxu0 %v464
    %622 = vmatprep.subr.bf16.mxu0 0
    %623 = vmatpush1.bf16.msra.mxu0 %v465
    %624 = vmatprep.subr.bf16.mxu0 0
    %625 = vmatpush1.bf16.msra.mxu0 %v466
    %626 = vmatprep.subr.bf16.mxu0 0
    %627 = vmatpush1.bf16.msra.mxu0 %v467
    %628 = vmatprep.subr.bf16.mxu0 0
    %629 = vmatpush1.bf16.msra.mxu0 %v468
    %630 = vmatprep.subr.bf16.mxu0 0
    %631 = vmatpush1.bf16.msra.mxu0 %v469
    %632 = vmatprep.subr.bf16.mxu0 0
    %633 = vmatpush1.bf16.msra.mxu0 %v470
    %634 = vmatprep.subr.bf16.mxu0 0
    %635 = vmatpush1.bf16.msra.mxu0 %v471
    %636 = vmatprep.subr.bf16.mxu0 0
    %637 = vmatpush1.bf16.msra.mxu0 %v472
    %638 = vmatprep.subr.bf16.mxu0 0
    %639 = vmatpush1.bf16.msra.mxu0 %v473
    %640 = vmatprep.subr.bf16.mxu0 0
    %641 = vmatpush1.bf16.msra.mxu0 %v474
    %642 = vmatprep.subr.bf16.mxu0 0
    %643 = vmatpush1.bf16.msra.mxu0 %v475
    %644 = vmatprep.mubr.bf16.mxu0 %v48
    %645 = vmatmul.mubr.bf16.gmra.mrb[0].mxu0 %v47
    %v646 = vpop.f32.mrb[0].mxu0
    %v647 = vadd.f32 %v607, %v646
    %v648 = vpop.f32.mrb[0].mxu0
    %v649 = vpop.f32.mrb[0].mxu0
    %v650 = vpop.f32.mrb[0].mxu0
    %651 = vdwg.mxu0
    %652 = vmatprep.subr.bf16.mxu0 0
    %653 = vmatpush1.bf16.msra.mxu0 %v476
    %654 = vmatprep.subr.bf16.mxu0 0
    %655 = vmatpush1.bf16.msra.mxu0 %v477
    %656 = vmatprep.subr.bf16.mxu0 0
    %657 = vmatpush1.bf16.msra.mxu0 %v478
    %658 = vmatprep.subr.bf16.mxu0 0
    %659 = vmatpush1.bf16.msra.mxu0 %v479
    %660 = vmatprep.subr.bf16.mxu0 0
    %661 = vmatpush1.bf16.msra.mxu0 %v480
    %662 = vmatprep.subr.bf16.mxu0 0
    %663 = vmatpush1.bf16.msra.mxu0 %v481
    %664 = vmatprep.subr.bf16.mxu0 0
    %665 = vmatpush1.bf16.msra.mxu0 %v482
    %666 = vmatprep.subr.bf16.mxu0 0
    %667 = vmatpush1.bf16.msra.mxu0 %v483
    %668 = vmatprep.subr.bf16.mxu0 0
    %669 = vmatpush1.bf16.msra.mxu0 %v484
    %670 = vmatprep.subr.bf16.mxu0 0
    %671 = vmatpush1.bf16.msra.mxu0 %v485
    %672 = vmatprep.subr.bf16.mxu0 0
    %673 = vmatpush1.bf16.msra.mxu0 %v486
    %674 = vmatprep.subr.bf16.mxu0 0
    %675 = vmatpush1.bf16.msra.mxu0 %v487
    %676 = vmatprep.subr.bf16.mxu0 0
    %677 = vmatpush1.bf16.msra.mxu0 %v488
    %678 = vmatprep.subr.bf16.mxu0 0
    %679 = vmatpush1.bf16.msra.mxu0 %v489
    %680 = vmatprep.subr.bf16.mxu0 0
    %681 = vmatpush1.bf16.msra.mxu0 %v490
    %682 = vmatprep.subr.bf16.mxu0 0
    %683 = vmatpush1.bf16.msra.mxu0 %v491
    %684 = vmatprep.mubr.bf16.mxu0 %v50
    %685 = vmatmul.mubr.bf16.gmra.mrb[0].mxu0 %v49
    %v686 = vpop.f32.mrb[0].mxu0
    %v687 = vadd.f32 %v647, %v686
    %v688 = vpop.f32.mrb[0].mxu0
    %v689 = vpop.f32.mrb[0].mxu0
    %v690 = vpop.f32.mrb[0].mxu0
    %691 = vdwg.mxu0
    %692 = vmatprep.subr.bf16.mxu0 0
    %693 = vmatpush1.bf16.msra.mxu0 %v492
    %694 = vmatprep.subr.bf16.mxu0 0
    %695 = vmatpush1.bf16.msra.mxu0 %v493
    %696 = vmatprep.subr.bf16.mxu0 0
    %697 = vmatpush1.bf16.msra.mxu0 %v494
    %698 = vmatprep.subr.bf16.mxu0 0
    %699 = vmatpush1.bf16.msra.mxu0 %v495
    %700 = vmatprep.subr.bf16.mxu0 0
    %701 = vmatpush1.bf16.msra.mxu0 %v496
    %702 = vmatprep.subr.bf16.mxu0 0
    %703 = vmatpush1.bf16.msra.mxu0 %v497
    %704 = vmatprep.subr.bf16.mxu0 0
    %705 = vmatpush1.bf16.msra.mxu0 %v498
    %706 = vmatprep.subr.bf16.mxu0 0
    %707 = vmatpush1.bf16.msra.mxu0 %v499
    %708 = vmatprep.subr.bf16.mxu0 0
    %709 = vmatpush1.bf16.msra.mxu0 %v500
    %710 = vmatprep.subr.bf16.mxu0 0
    %711 = vmatpush1.bf16.msra.mxu0 %v501
    %712 = vmatprep.subr.bf16.mxu0 0
    %713 = vmatpush1.bf16.msra.mxu0 %v502
    %714 = vmatprep.subr.bf16.mxu0 0
    %715 = vmatpush1.bf16.msra.mxu0 %v503
    %716 = vmatprep.subr.bf16.mxu0 0
    %717 = vmatpush1.bf16.msra.mxu0 %v504
    %718 = vmatprep.subr.bf16.mxu0 0
    %719 = vmatpush1.bf16.msra.mxu0 %v505
    %720 = vmatprep.subr.bf16.mxu0 0
    %721 = vmatpush1.bf16.msra.mxu0 %v506
    %722 = vmatprep.subr.bf16.mxu0 0
    %723 = vmatpush1.bf16.msra.mxu0 %v507
    %724 = vmatprep.mubr.bf16.mxu0 %v52
    %725 = vmatmul.mubr.bf16.gmra.mrb[0].mxu0 %v51
    %v726 = vpop.f32.mrb[0].mxu0
    %v727 = vadd.f32 %v687, %v726
    %v728 = vpop.f32.mrb[0].mxu0
    %v729 = vpop.f32.mrb[0].mxu0
    %v730 = vpop.f32.mrb[0].mxu0
    %731 = vdwg.mxu0
    %vm732 = vcmask 64512
    %v733 = vsel %vm732, %v727, 0.0
    %v734 = vrot.slane %v733, 4
    %v735 = vadd.f32 %v733, %v734
    %v736 = vrot.slane %v735, 2
    %v737 = vadd.f32 %v735, %v736
    %v738 = vrot.slane %v737, 1
    %v739 = vadd.f32 %v737, %v738
    %v740 = vrcp.pop 8.0
    %v741 = vmul.f32 %v739, %v740
    %v742 = vsub.f32 %v727, %v741
    %v743 = vmul.f32 %v742, %v742
    %v744 = vsel %vm732, %v743, 0.0
    %v745 = vrot.slane %v744, 4
    %v746 = vadd.f32 %v744, %v745
    %v747 = vrot.slane %v746, 2
    %v748 = vadd.f32 %v746, %v747
    %v749 = vrot.slane %v748, 1
    %v750 = vadd.f32 %v748, %v749
    %v751 = vmul.f32 %v750, %v740
    %v752 = vadd.f32 %v751, 1e-05
    %v753 = vrsqrt.pop %v752
    %v754 = vmul.f32 %v752, %v753
    %vm755 = vcmp.eq.f32.partialorder %v752, inf
    %v756 = vsel %vm755, %v752, %v754
    %vm757 = vcmp.eq.f32.partialorder %v752, 0.0
    %v758 = vand.u32 %v752, 2147483648
    %v759 = vsel %vm757, %v758, %v756
    %v760 = vrcp.pop %v759
    %v761 = vmul.f32 %v742, %v760
    %v762 = vld [vmem:[%s4] sm:$0x1]
    %v764 = vlaneseq
    %v765 = vshrl.u32 %v764, 7
    %v766 = vsub.s32 0, %v765
    %v767 = vrot.slane %v762, %v766
    %v769 = vmul.f32 %v761, %v767
    %v770 = vld [vmem:[%s5] sm:$0x1]
    %v772 = vlaneseq
    %v773 = vshrl.u32 %v772, 7
    %v774 = vsub.s32 0, %v773
    %v775 = vrot.slane %v770, %v774
    %v777 = vadd.f32 %v769, %v775
    %v778 = vmax.f32 %v777, 0.0
    %v779 = vpack.c.bf16 %v778, %v778
    %v780 = vld [vmem:[%s6] sm:$0xff]
    %v781 = vld [vmem:[%s6 + $0x8] sm:$0xff]
    %v782 = vld [vmem:[%s6 + $0x10] sm:$0xff]
    %v783 = vld [vmem:[%s6 + $0x18] sm:$0xff]
    %v784 = vld [vmem:[%s6 + $0x20] sm:$0xff]
    %v785 = vld [vmem:[%s6 + $0x28] sm:$0xff]
    %v786 = vld [vmem:[%s6 + $0x30] sm:$0xff]
    %v787 = vld [vmem:[%s6 + $0x38] sm:$0xff]
    %v788 = vld [vmem:[%s6 + $0x40] sm:$0xff]
    %v789 = vld [vmem:[%s6 + $0x48] sm:$0xff]
    %v790 = vld [vmem:[%s6 + $0x50] sm:$0xff]
    %v791 = vld [vmem:[%s6 + $0x58] sm:$0xff]
    %v792 = vld [vmem:[%s6 + $0x60] sm:$0xff]
    %v793 = vld [vmem:[%s6 + $0x68] sm:$0xff]
    %v794 = vld [vmem:[%s6 + $0x70] sm:$0xff]
    %v795 = vld [vmem:[%s6 + $0x78] sm:$0xff]
    %v796 = vld [vmem:[%s7] sm:$0xff]
    %v797 = vld [vmem:[%s7 + $0x8] sm:$0xff]
    %v798 = vld [vmem:[%s7 + $0x10] sm:$0xff]
    %v799 = vld [vmem:[%s7 + $0x18] sm:$0xff]
    %v804 = vlaneseq
    %v805 = vshrl.u32 %v804, 7
    %v806 = vsub.s32 0, %v805
    %v807 = vrot.slane %v796, %v806
    %v808 = vlaneseq
    %v809 = vshrl.u32 %v808, 7
    %v810 = vsub.s32 1, %v809
    %v811 = vrot.slane %v796, %v810
    %v812 = vlaneseq
    %v813 = vshrl.u32 %v812, 7
    %v814 = vsub.s32 2, %v813
    %v815 = vrot.slane %v796, %v814
    %v816 = vlaneseq
    %v817 = vshrl.u32 %v816, 7
    %v818 = vsub.s32 3, %v817
    %v819 = vrot.slane %v796, %v818
    %v820 = vlaneseq
    %v821 = vshrl.u32 %v820, 7
    %v822 = vsub.s32 4, %v821
    %v823 = vrot.slane %v796, %v822
    %v824 = vlaneseq
    %v825 = vshrl.u32 %v824, 7
    %v826 = vsub.s32 5, %v825
    %v827 = vrot.slane %v796, %v826
    %v828 = vlaneseq
    %v829 = vshrl.u32 %v828, 7
    %v830 = vsub.s32 6, %v829
    %v831 = vrot.slane %v796, %v830
    %v832 = vlaneseq
    %v833 = vshrl.u32 %v832, 7
    %v834 = vsub.s32 7, %v833
    %v835 = vrot.slane %v796, %v834
    %v836 = vlaneseq
    %v837 = vshrl.u32 %v836, 7
    %v838 = vsub.s32 0, %v837
    %v839 = vrot.slane %v797, %v838
    %v840 = vlaneseq
    %v841 = vshrl.u32 %v840, 7
    %v842 = vsub.s32 1, %v841
    %v843 = vrot.slane %v797, %v842
    %v844 = vlaneseq
    %v845 = vshrl.u32 %v844, 7
    %v846 = vsub.s32 2, %v845
    %v847 = vrot.slane %v797, %v846
    %v848 = vlaneseq
    %v849 = vshrl.u32 %v848, 7
    %v850 = vsub.s32 3, %v849
    %v851 = vrot.slane %v797, %v850
    %v852 = vlaneseq
    %v853 = vshrl.u32 %v852, 7
    %v854 = vsub.s32 4, %v853
    %v855 = vrot.slane %v797, %v854
    %v856 = vlaneseq
    %v857 = vshrl.u32 %v856, 7
    %v858 = vsub.s32 5, %v857
    %v859 = vrot.slane %v797, %v858
    %v860 = vlaneseq
    %v861 = vshrl.u32 %v860, 7
    %v862 = vsub.s32 6, %v861
    %v863 = vrot.slane %v797, %v862
    %v864 = vlaneseq
    %v865 = vshrl.u32 %v864, 7
    %v866 = vsub.s32 7, %v865
    %v867 = vrot.slane %v797, %v866
    %v868 = vlaneseq
    %v869 = vshrl.u32 %v868, 7
    %v870 = vsub.s32 0, %v869
    %v871 = vrot.slane %v798, %v870
    %v872 = vlaneseq
    %v873 = vshrl.u32 %v872, 7
    %v874 = vsub.s32 1, %v873
    %v875 = vrot.slane %v798, %v874
    %v876 = vlaneseq
    %v877 = vshrl.u32 %v876, 7
    %v878 = vsub.s32 2, %v877
    %v879 = vrot.slane %v798, %v878
    %v880 = vlaneseq
    %v881 = vshrl.u32 %v880, 7
    %v882 = vsub.s32 3, %v881
    %v883 = vrot.slane %v798, %v882
    %v884 = vlaneseq
    %v885 = vshrl.u32 %v884, 7
    %v886 = vsub.s32 4, %v885
    %v887 = vrot.slane %v798, %v886
    %v888 = vlaneseq
    %v889 = vshrl.u32 %v888, 7
    %v890 = vsub.s32 5, %v889
    %v891 = vrot.slane %v798, %v890
    %v892 = vlaneseq
    %v893 = vshrl.u32 %v892, 7
    %v894 = vsub.s32 6, %v893
    %v895 = vrot.slane %v798, %v894
    %v896 = vlaneseq
    %v897 = vshrl.u32 %v896, 7
    %v898 = vsub.s32 7, %v897
    %v899 = vrot.slane %v798, %v898
    %v900 = vlaneseq
    %v901 = vshrl.u32 %v900, 7
    %v902 = vsub.s32 0, %v901
    %v903 = vrot.slane %v799, %v902
    %v904 = vlaneseq
    %v905 = vshrl.u32 %v904, 7
    %v906 = vsub.s32 1, %v905
    %v907 = vrot.slane %v799, %v906
    %v908 = vlaneseq
    %v909 = vshrl.u32 %v908, 7
    %v910 = vsub.s32 2, %v909
    %v911 = vrot.slane %v799, %v910
    %v912 = vlaneseq
    %v913 = vshrl.u32 %v912, 7
    %v914 = vsub.s32 3, %v913
    %v915 = vrot.slane %v799, %v914
    %v916 = vlaneseq
    %v917 = vshrl.u32 %v916, 7
    %v918 = vsub.s32 4, %v917
    %v919 = vrot.slane %v799, %v918
    %v920 = vlaneseq
    %v921 = vshrl.u32 %v920, 7
    %v922 = vsub.s32 5, %v921
    %v923 = vrot.slane %v799, %v922
    %v924 = vlaneseq
    %v925 = vshrl.u32 %v924, 7
    %v926 = vsub.s32 6, %v925
    %v927 = vrot.slane %v799, %v926
    %v928 = vlaneseq
    %v929 = vshrl.u32 %v928, 7
    %v930 = vsub.s32 7, %v929
    %v931 = vrot.slane %v799, %v930
    %v980 = vunpack.c.l.b16 %v780
    %v981 = vunpack.c.h.b16 %v780
    %v982 = vunpack.c.l.b16 %v781
    %v983 = vunpack.c.h.b16 %v781
    %v984 = vunpack.c.l.b16 %v782
    %v985 = vunpack.c.h.b16 %v782
    %v986 = vunpack.c.l.b16 %v783
    %v987 = vunpack.c.h.b16 %v783
    %v988 = vunpack.c.l.b16 %v784
    %v989 = vunpack.c.h.b16 %v784
    %v990 = vunpack.c.l.b16 %v785
    %v991 = vunpack.c.h.b16 %v785
    %v992 = vunpack.c.l.b16 %v786
    %v993 = vunpack.c.h.b16 %v786
    %v994 = vunpack.c.l.b16 %v787
    %v995 = vunpack.c.h.b16 %v787
    %v996 = vunpack.c.l.b16 %v788
    %v997 = vunpack.c.h.b16 %v788
    %v998 = vunpack.c.l.b16 %v789
    %v999 = vunpack.c.h.b16 %v789
    %v1000 = vunpack.c.l.b16 %v790
    %v1001 = vunpack.c.h.b16 %v790
    %v1002 = vunpack.c.l.b16 %v791
    %v1003 = vunpack.c.h.b16 %v791
    %v1004 = vunpack.c.l.b16 %v792
    %v1005 = vunpack.c.h.b16 %v792
    %v1006 = vunpack.c.l.b16 %v793
    %v1007 = vunpack.c.h.b16 %v793
    %v1008 = vunpack.c.l.b16 %v794
    %v1009 = vunpack.c.h.b16 %v794
    %v1010 = vunpack.c.l.b16 %v795
    %v1011 = vunpack.c.h.b16 %v795
    %v1012 = vpack.c.b16 %v980, %v980
    %v1013 = vpack.c.b16 %v981, %v981
    %v1014 = vpack.c.b16 %v982, %v982
    %v1015 = vpack.c.b16 %v983, %v983
    %v1016 = vpack.c.b16 %v984, %v984
    %v1017 = vpack.c.b16 %v985, %v985
    %v1018 = vpack.c.b16 %v986, %v986
    %v1019 = vpack.c.b16 %v987, %v987
    %v1020 = vpack.c.b16 %v988, %v988
    %v1021 = vpack.c.b16 %v989, %v989
    %v1022 = vpack.c.b16 %v990, %v990
    %v1023 = vpack.c.b16 %v991, %v991
    %v1024 = vpack.c.b16 %v992, %v992
    %v1025 = vpack.c.b16 %v993, %v993
    %v1026 = vpack.c.b16 %v994, %v994
    %v1027 = vpack.c.b16 %v995, %v995
    %v1028 = vpack.c.b16 %v996, %v996
    %v1029 = vpack.c.b16 %v997, %v997
    %v1030 = vpack.c.b16 %v998, %v998
    %v1031 = vpack.c.b16 %v999, %v999
    %v1032 = vpack.c.b16 %v1000, %v1000
    %v1033 = vpack.c.b16 %v1001, %v1001
    %v1034 = vpack.c.b16 %v1002, %v1002
    %v1035 = vpack.c.b16 %v1003, %v1003
    %v1036 = vpack.c.b16 %v1004, %v1004
    %v1037 = vpack.c.b16 %v1005, %v1005
    %v1038 = vpack.c.b16 %v1006, %v1006
    %v1039 = vpack.c.b16 %v1007, %v1007
    %v1040 = vpack.c.b16 %v1008, %v1008
    %v1041 = vpack.c.b16 %v1009, %v1009
    %v1042 = vpack.c.b16 %v1010, %v1010
    %v1043 = vpack.c.b16 %v1011, %v1011
    %v1045 = vsel %vm732, %v779, 0
    %vm1047 = vcmask 1043456
    %v1049 = vsel %vm1047, %v1012, 0
    %v1052 = vsel %vm1047, %v1013, 0
    %v1055 = vsel %vm1047, %v1014, 0
    %v1058 = vsel %vm1047, %v1015, 0
    %v1061 = vsel %vm1047, %v1016, 0
    %v1064 = vsel %vm1047, %v1017, 0
    %v1067 = vsel %vm1047, %v1018, 0
    %v1070 = vsel %vm1047, %v1019, 0
    %v1073 = vsel %vm1047, %v1020, 0
    %v1076 = vsel %vm1047, %v1021, 0
    %v1079 = vsel %vm1047, %v1022, 0
    %v1082 = vsel %vm1047, %v1023, 0
    %v1085 = vsel %vm1047, %v1024, 0
    %v1088 = vsel %vm1047, %v1025, 0
    %v1091 = vsel %vm1047, %v1026, 0
    %v1094 = vsel %vm1047, %v1027, 0
    %v1097 = vsel %vm1047, %v1028, 0
    %v1100 = vsel %vm1047, %v1029, 0
    %v1103 = vsel %vm1047, %v1030, 0
    %v1106 = vsel %vm1047, %v1031, 0
    %v1109 = vsel %vm1047, %v1032, 0
    %v1112 = vsel %vm1047, %v1033, 0
    %v1115 = vsel %vm1047, %v1034, 0
    %v1118 = vsel %vm1047, %v1035, 0
    %v1121 = vsel %vm1047, %v1036, 0
    %v1124 = vsel %vm1047, %v1037, 0
    %v1127 = vsel %vm1047, %v1038, 0
    %v1130 = vsel %vm1047, %v1039, 0
    %v1133 = vsel %vm1047, %v1040, 0
    %v1136 = vsel %vm1047, %v1041, 0
    %v1139 = vsel %vm1047, %v1042, 0
    %v1142 = vsel %vm1047, %v1043, 0
    %1144 = vmatprep.subr.bf16.mxu0 %v1052
    %1145 = vmatpush1.bf16.msra.mxu0 %v1049
    %1146 = vmatprep.subr.bf16.mxu0 0
    %1147 = vmatpush1.bf16.msra.mxu0 0
    %1148 = vmatprep.subr.bf16.mxu0 0
    %1149 = vmatpush1.bf16.msra.mxu0 0
    %1150 = vmatprep.subr.bf16.mxu0 0
    %1151 = vmatpush1.bf16.msra.mxu0 0
    %1152 = vmatprep.subr.bf16.mxu0 0
    %1153 = vmatpush1.bf16.msra.mxu0 0
    %1154 = vmatprep.subr.bf16.mxu0 0
    %1155 = vmatpush1.bf16.msra.mxu0 0
    %1156 = vmatprep.subr.bf16.mxu0 0
    %1157 = vmatpush1.bf16.msra.mxu0 0
    %1158 = vmatprep.subr.bf16.mxu0 0
    %1159 = vmatpush1.bf16.msra.mxu0 0
    %1160 = vmatprep.subr.bf16.mxu0 0
    %1161 = vmatpush1.bf16.msra.mxu0 0
    %1162 = vmatprep.subr.bf16.mxu0 0
    %1163 = vmatpush1.bf16.msra.mxu0 0
    %1164 = vmatprep.subr.bf16.mxu0 0
    %1165 = vmatpush1.bf16.msra.mxu0 0
    %1166 = vmatprep.subr.bf16.mxu0 0
    %1167 = vmatpush1.bf16.msra.mxu0 0
    %1168 = vmatprep.subr.bf16.mxu0 0
    %1169 = vmatpush1.bf16.msra.mxu0 0
    %1170 = vmatprep.subr.bf16.mxu0 0
    %1171 = vmatpush1.bf16.msra.mxu0 0
    %1172 = vmatprep.subr.bf16.mxu0 0
    %1173 = vmatpush1.bf16.msra.mxu0 0
    %1174 = vmatprep.subr.bf16.mxu0 0
    %1175 = vmatpush1.bf16.msra.mxu0 0
    %1176 = vmatprep.mubr.bf16.mxu0 0
    %1177 = vmatmul.mubr.bf16.gmra.mrb[0].mxu0 %v1045
    %v1178 = vpop.f32.mrb[0].mxu0
    %v1179 = vadd.f32 %v807, %v1178
    %v1180 = vpop.f32.mrb[0].mxu0
    %v1181 = vadd.f32 %v811, %v1180
    %v1182 = vpop.f32.mrb[0].mxu0
    %v1183 = vpop.f32.mrb[0].mxu0
    %1184 = vdwg.mxu0
    %1185 = vmatprep.subr.bf16.mxu0 %v1058
    %1186 = vmatpush1.bf16.msra.mxu0 %v1055
    %1187 = vmatprep.subr.bf16.mxu0 0
    %1188 = vmatpush1.bf16.msra.mxu0 0
    %1189 = vmatprep.subr.bf16.mxu0 0
    %1190 = vmatpush1.bf16.msra.mxu0 0
    %1191 = vmatprep.subr.bf16.mxu0 0
    %1192 = vmatpush1.bf16.msra.mxu0 0
    %1193 = vmatprep.subr.bf16.mxu0 0
    %1194 = vmatpush1.bf16.msra.mxu0 0
    %1195 = vmatprep.subr.bf16.mxu0 0
    %1196 = vmatpush1.bf16.msra.mxu0 0
    %1197 = vmatprep.subr.bf16.mxu0 0
    %1198 = vmatpush1.bf16.msra.mxu0 0
    %1199 = vmatprep.subr.bf16.mxu0 0
    %1200 = vmatpush1.bf16.msra.mxu0 0
    %1201 = vmatprep.subr.bf16.mxu0 0
    %1202 = vmatpush1.bf16.msra.mxu0 0
    %1203 = vmatprep.subr.bf16.mxu0 0
    %1204 = vmatpush1.bf16.msra.mxu0 0
    %1205 = vmatprep.subr.bf16.mxu0 0
    %1206 = vmatpush1.bf16.msra.mxu0 0
    %1207 = vmatprep.subr.bf16.mxu0 0
    %1208 = vmatpush1.bf16.msra.mxu0 0
    %1209 = vmatprep.subr.bf16.mxu0 0
    %1210 = vmatpush1.bf16.msra.mxu0 0
    %1211 = vmatprep.subr.bf16.mxu0 0
    %1212 = vmatpush1.bf16.msra.mxu0 0
    %1213 = vmatprep.subr.bf16.mxu0 0
    %1214 = vmatpush1.bf16.msra.mxu0 0
    %1215 = vmatprep.subr.bf16.mxu0 0
    %1216 = vmatpush1.bf16.msra.mxu0 0
    %1217 = vmatprep.mubr.bf16.mxu0 0
    %1218 = vmatmul.mubr.bf16.gmra.mrb[0].mxu0 %v1045
    %v1219 = vpop.f32.mrb[0].mxu0
    %v1220 = vadd.f32 %v815, %v1219
    %v1221 = vpop.f32.mrb[0].mxu0
    %v1222 = vadd.f32 %v819, %v1221
    %v1223 = vpop.f32.mrb[0].mxu0
    %v1224 = vpop.f32.mrb[0].mxu0
    %1225 = vdwg.mxu0
    %1226 = vmatprep.subr.bf16.mxu0 %v1064
    %1227 = vmatpush1.bf16.msra.mxu0 %v1061
    %1228 = vmatprep.subr.bf16.mxu0 0
    %1229 = vmatpush1.bf16.msra.mxu0 0
    %1230 = vmatprep.subr.bf16.mxu0 0
    %1231 = vmatpush1.bf16.msra.mxu0 0
    %1232 = vmatprep.subr.bf16.mxu0 0
    %1233 = vmatpush1.bf16.msra.mxu0 0
    %1234 = vmatprep.subr.bf16.mxu0 0
    %1235 = vmatpush1.bf16.msra.mxu0 0
    %1236 = vmatprep.subr.bf16.mxu0 0
    %1237 = vmatpush1.bf16.msra.mxu0 0
    %1238 = vmatprep.subr.bf16.mxu0 0
    %1239 = vmatpush1.bf16.msra.mxu0 0
    %1240 = vmatprep.subr.bf16.mxu0 0
    %1241 = vmatpush1.bf16.msra.mxu0 0
    %1242 = vmatprep.subr.bf16.mxu0 0
    %1243 = vmatpush1.bf16.msra.mxu0 0
    %1244 = vmatprep.subr.bf16.mxu0 0
    %1245 = vmatpush1.bf16.msra.mxu0 0
    %1246 = vmatprep.subr.bf16.mxu0 0
    %1247 = vmatpush1.bf16.msra.mxu0 0
    %1248 = vmatprep.subr.bf16.mxu0 0
    %1249 = vmatpush1.bf16.msra.mxu0 0
    %1250 = vmatprep.subr.bf16.mxu0 0
    %1251 = vmatpush1.bf16.msra.mxu0 0
    %1252 = vmatprep.subr.bf16.mxu0 0
    %1253 = vmatpush1.bf16.msra.mxu0 0
    %1254 = vmatprep.subr.bf16.mxu0 0
    %1255 = vmatpush1.bf16.msra.mxu0 0
    %1256 = vmatprep.subr.bf16.mxu0 0
    %1257 = vmatpush1.bf16.msra.mxu0 0
    %1258 = vmatprep.mubr.bf16.mxu0 0
    %1259 = vmatmul.mubr.bf16.gmra.mrb[0].mxu0 %v1045
    %v1260 = vpop.f32.mrb[0].mxu0
    %v1261 = vadd.f32 %v823, %v1260
    %v1262 = vpop.f32.mrb[0].mxu0
    %v1263 = vadd.f32 %v827, %v1262
    %v1264 = vpop.f32.mrb[0].mxu0
    %v1265 = vpop.f32.mrb[0].mxu0
    %1266 = vdwg.mxu0
    %1267 = vmatprep.subr.bf16.mxu0 %v1070
    %1268 = vmatpush1.bf16.msra.mxu0 %v1067
    %1269 = vmatprep.subr.bf16.mxu0 0
    %1270 = vmatpush1.bf16.msra.mxu0 0
    %1271 = vmatprep.subr.bf16.mxu0 0
    %1272 = vmatpush1.bf16.msra.mxu0 0
    %1273 = vmatprep.subr.bf16.mxu0 0
    %1274 = vmatpush1.bf16.msra.mxu0 0
    %1275 = vmatprep.subr.bf16.mxu0 0
    %1276 = vmatpush1.bf16.msra.mxu0 0
    %1277 = vmatprep.subr.bf16.mxu0 0
    %1278 = vmatpush1.bf16.msra.mxu0 0
    %1279 = vmatprep.subr.bf16.mxu0 0
    %1280 = vmatpush1.bf16.msra.mxu0 0
    %1281 = vmatprep.subr.bf16.mxu0 0
    %1282 = vmatpush1.bf16.msra.mxu0 0
    %1283 = vmatprep.subr.bf16.mxu0 0
    %1284 = vmatpush1.bf16.msra.mxu0 0
    %1285 = vmatprep.subr.bf16.mxu0 0
    %1286 = vmatpush1.bf16.msra.mxu0 0
    %1287 = vmatprep.subr.bf16.mxu0 0
    %1288 = vmatpush1.bf16.msra.mxu0 0
    %1289 = vmatprep.subr.bf16.mxu0 0
    %1290 = vmatpush1.bf16.msra.mxu0 0
    %1291 = vmatprep.subr.bf16.mxu0 0
    %1292 = vmatpush1.bf16.msra.mxu0 0
    %1293 = vmatprep.subr.bf16.mxu0 0
    %1294 = vmatpush1.bf16.msra.mxu0 0
    %1295 = vmatprep.subr.bf16.mxu0 0
    %1296 = vmatpush1.bf16.msra.mxu0 0
    %1297 = vmatprep.subr.bf16.mxu0 0
    %1298 = vmatpush1.bf16.msra.mxu0 0
    %1299 = vmatprep.mubr.bf16.mxu0 0
    %1300 = vmatmul.mubr.bf16.gmra.mrb[0].mxu0 %v1045
    %v1301 = vpop.f32.mrb[0].mxu0
    %v1302 = vadd.f32 %v831, %v1301
    %v1303 = vpop.f32.mrb[0].mxu0
    %v1304 = vadd.f32 %v835, %v1303
    %v1305 = vpop.f32.mrb[0].mxu0
    %v1306 = vpop.f32.mrb[0].mxu0
    %1307 = vdwg.mxu0
    %1308 = vmatprep.subr.bf16.mxu0 %v1076
    %1309 = vmatpush1.bf16.msra.mxu0 %v1073
    %1310 = vmatprep.subr.bf16.mxu0 0
    %1311 = vmatpush1.bf16.msra.mxu0 0
    %1312 = vmatprep.subr.bf16.mxu0 0
    %1313 = vmatpush1.bf16.msra.mxu0 0
    %1314 = vmatprep.subr.bf16.mxu0 0
    %1315 = vmatpush1.bf16.msra.mxu0 0
    %1316 = vmatprep.subr.bf16.mxu0 0
    %1317 = vmatpush1.bf16.msra.mxu0 0
    %1318 = vmatprep.subr.bf16.mxu0 0
    %1319 = vmatpush1.bf16.msra.mxu0 0
    %1320 = vmatprep.subr.bf16.mxu0 0
    %1321 = vmatpush1.bf16.msra.mxu0 0
    %1322 = vmatprep.subr.bf16.mxu0 0
    %1323 = vmatpush1.bf16.msra.mxu0 0
    %1324 = vmatprep.subr.bf16.mxu0 0
    %1325 = vmatpush1.bf16.msra.mxu0 0
    %1326 = vmatprep.subr.bf16.mxu0 0
    %1327 = vmatpush1.bf16.msra.mxu0 0
    %1328 = vmatprep.subr.bf16.mxu0 0
    %1329 = vmatpush1.bf16.msra.mxu0 0
    %1330 = vmatprep.subr.bf16.mxu0 0
    %1331 = vmatpush1.bf16.msra.mxu0 0
    %1332 = vmatprep.subr.bf16.mxu0 0
    %1333 = vmatpush1.bf16.msra.mxu0 0
    %1334 = vmatprep.subr.bf16.mxu0 0
    %1335 = vmatpush1.bf16.msra.mxu0 0
    %1336 = vmatprep.subr.bf16.mxu0 0
    %1337 = vmatpush1.bf16.msra.mxu0 0
    %1338 = vmatprep.subr.bf16.mxu0 0
    %1339 = vmatpush1.bf16.msra.mxu0 0
    %1340 = vmatprep.mubr.bf16.mxu0 0
    %1341 = vmatmul.mubr.bf16.gmra.mrb[0].mxu0 %v1045
    %v1342 = vpop.f32.mrb[0].mxu0
    %v1343 = vadd.f32 %v839, %v1342
    %v1344 = vpop.f32.mrb[0].mxu0
    %v1345 = vadd.f32 %v843, %v1344
    %v1346 = vpop.f32.mrb[0].mxu0
    %v1347 = vpop.f32.mrb[0].mxu0
    %1348 = vdwg.mxu0
    %1349 = vmatprep.subr.bf16.mxu0 %v1082
    %1350 = vmatpush1.bf16.msra.mxu0 %v1079
    %1351 = vmatprep.subr.bf16.mxu0 0
    %1352 = vmatpush1.bf16.msra.mxu0 0
    %1353 = vmatprep.subr.bf16.mxu0 0
    %1354 = vmatpush1.bf16.msra.mxu0 0
    %1355 = vmatprep.subr.bf16.mxu0 0
    %1356 = vmatpush1.bf16.msra.mxu0 0
    %1357 = vmatprep.subr.bf16.mxu0 0
    %1358 = vmatpush1.bf16.msra.mxu0 0
    %1359 = vmatprep.subr.bf16.mxu0 0
    %1360 = vmatpush1.bf16.msra.mxu0 0
    %1361 = vmatprep.subr.bf16.mxu0 0
    %1362 = vmatpush1.bf16.msra.mxu0 0
    %1363 = vmatprep.subr.bf16.mxu0 0
    %1364 = vmatpush1.bf16.msra.mxu0 0
    %1365 = vmatprep.subr.bf16.mxu0 0
    %1366 = vmatpush1.bf16.msra.mxu0 0
    %1367 = vmatprep.subr.bf16.mxu0 0
    %1368 = vmatpush1.bf16.msra.mxu0 0
    %1369 = vmatprep.subr.bf16.mxu0 0
    %1370 = vmatpush1.bf16.msra.mxu0 0
    %1371 = vmatprep.subr.bf16.mxu0 0
    %1372 = vmatpush1.bf16.msra.mxu0 0
    %1373 = vmatprep.subr.bf16.mxu0 0
    %1374 = vmatpush1.bf16.msra.mxu0 0
    %1375 = vmatprep.subr.bf16.mxu0 0
    %1376 = vmatpush1.bf16.msra.mxu0 0
    %1377 = vmatprep.subr.bf16.mxu0 0
    %1378 = vmatpush1.bf16.msra.mxu0 0
    %1379 = vmatprep.subr.bf16.mxu0 0
    %1380 = vmatpush1.bf16.msra.mxu0 0
    %1381 = vmatprep.mubr.bf16.mxu0 0
    %1382 = vmatmul.mubr.bf16.gmra.mrb[0].mxu0 %v1045
    %v1383 = vpop.f32.mrb[0].mxu0
    %v1384 = vadd.f32 %v847, %v1383
    %v1385 = vpop.f32.mrb[0].mxu0
    %v1386 = vadd.f32 %v851, %v1385
    %v1387 = vpop.f32.mrb[0].mxu0
    %v1388 = vpop.f32.mrb[0].mxu0
    %1389 = vdwg.mxu0
    %1390 = vmatprep.subr.bf16.mxu0 %v1088
    %1391 = vmatpush1.bf16.msra.mxu0 %v1085
    %1392 = vmatprep.subr.bf16.mxu0 0
    %1393 = vmatpush1.bf16.msra.mxu0 0
    %1394 = vmatprep.subr.bf16.mxu0 0
    %1395 = vmatpush1.bf16.msra.mxu0 0
    %1396 = vmatprep.subr.bf16.mxu0 0
    %1397 = vmatpush1.bf16.msra.mxu0 0
    %1398 = vmatprep.subr.bf16.mxu0 0
    %1399 = vmatpush1.bf16.msra.mxu0 0
    %1400 = vmatprep.subr.bf16.mxu0 0
    %1401 = vmatpush1.bf16.msra.mxu0 0
    %1402 = vmatprep.subr.bf16.mxu0 0
    %1403 = vmatpush1.bf16.msra.mxu0 0
    %1404 = vmatprep.subr.bf16.mxu0 0
    %1405 = vmatpush1.bf16.msra.mxu0 0
    %1406 = vmatprep.subr.bf16.mxu0 0
    %1407 = vmatpush1.bf16.msra.mxu0 0
    %1408 = vmatprep.subr.bf16.mxu0 0
    %1409 = vmatpush1.bf16.msra.mxu0 0
    %1410 = vmatprep.subr.bf16.mxu0 0
    %1411 = vmatpush1.bf16.msra.mxu0 0
    %1412 = vmatprep.subr.bf16.mxu0 0
    %1413 = vmatpush1.bf16.msra.mxu0 0
    %1414 = vmatprep.subr.bf16.mxu0 0
    %1415 = vmatpush1.bf16.msra.mxu0 0
    %1416 = vmatprep.subr.bf16.mxu0 0
    %1417 = vmatpush1.bf16.msra.mxu0 0
    %1418 = vmatprep.subr.bf16.mxu0 0
    %1419 = vmatpush1.bf16.msra.mxu0 0
    %1420 = vmatprep.subr.bf16.mxu0 0
    %1421 = vmatpush1.bf16.msra.mxu0 0
    %1422 = vmatprep.mubr.bf16.mxu0 0
    %1423 = vmatmul.mubr.bf16.gmra.mrb[0].mxu0 %v1045
    %v1424 = vpop.f32.mrb[0].mxu0
    %v1425 = vadd.f32 %v855, %v1424
    %v1426 = vpop.f32.mrb[0].mxu0
    %v1427 = vadd.f32 %v859, %v1426
    %v1428 = vpop.f32.mrb[0].mxu0
    %v1429 = vpop.f32.mrb[0].mxu0
    %1430 = vdwg.mxu0
    %1431 = vmatprep.subr.bf16.mxu0 %v1094
    %1432 = vmatpush1.bf16.msra.mxu0 %v1091
    %1433 = vmatprep.subr.bf16.mxu0 0
    %1434 = vmatpush1.bf16.msra.mxu0 0
    %1435 = vmatprep.subr.bf16.mxu0 0
    %1436 = vmatpush1.bf16.msra.mxu0 0
    %1437 = vmatprep.subr.bf16.mxu0 0
    %1438 = vmatpush1.bf16.msra.mxu0 0
    %1439 = vmatprep.subr.bf16.mxu0 0
    %1440 = vmatpush1.bf16.msra.mxu0 0
    %1441 = vmatprep.subr.bf16.mxu0 0
    %1442 = vmatpush1.bf16.msra.mxu0 0
    %1443 = vmatprep.subr.bf16.mxu0 0
    %1444 = vmatpush1.bf16.msra.mxu0 0
    %1445 = vmatprep.subr.bf16.mxu0 0
    %1446 = vmatpush1.bf16.msra.mxu0 0
    %1447 = vmatprep.subr.bf16.mxu0 0
    %1448 = vmatpush1.bf16.msra.mxu0 0
    %1449 = vmatprep.subr.bf16.mxu0 0
    %1450 = vmatpush1.bf16.msra.mxu0 0
    %1451 = vmatprep.subr.bf16.mxu0 0
    %1452 = vmatpush1.bf16.msra.mxu0 0
    %1453 = vmatprep.subr.bf16.mxu0 0
    %1454 = vmatpush1.bf16.msra.mxu0 0
    %1455 = vmatprep.subr.bf16.mxu0 0
    %1456 = vmatpush1.bf16.msra.mxu0 0
    %1457 = vmatprep.subr.bf16.mxu0 0
    %1458 = vmatpush1.bf16.msra.mxu0 0
    %1459 = vmatprep.subr.bf16.mxu0 0
    %1460 = vmatpush1.bf16.msra.mxu0 0
    %1461 = vmatprep.subr.bf16.mxu0 0
    %1462 = vmatpush1.bf16.msra.mxu0 0
    %1463 = vmatprep.mubr.bf16.mxu0 0
    %1464 = vmatmul.mubr.bf16.gmra.mrb[0].mxu0 %v1045
    %v1465 = vpop.f32.mrb[0].mxu0
    %v1466 = vadd.f32 %v863, %v1465
    %v1467 = vpop.f32.mrb[0].mxu0
    %v1468 = vadd.f32 %v867, %v1467
    %v1469 = vpop.f32.mrb[0].mxu0
    %v1470 = vpop.f32.mrb[0].mxu0
    %1471 = vdwg.mxu0
    %1472 = vmatprep.subr.bf16.mxu0 %v1100
    %1473 = vmatpush1.bf16.msra.mxu0 %v1097
    %1474 = vmatprep.subr.bf16.mxu0 0
    %1475 = vmatpush1.bf16.msra.mxu0 0
    %1476 = vmatprep.subr.bf16.mxu0 0
    %1477 = vmatpush1.bf16.msra.mxu0 0
    %1478 = vmatprep.subr.bf16.mxu0 0
    %1479 = vmatpush1.bf16.msra.mxu0 0
    %1480 = vmatprep.subr.bf16.mxu0 0
    %1481 = vmatpush1.bf16.msra.mxu0 0
    %1482 = vmatprep.subr.bf16.mxu0 0
    %1483 = vmatpush1.bf16.msra.mxu0 0
    %1484 = vmatprep.subr.bf16.mxu0 0
    %1485 = vmatpush1.bf16.msra.mxu0 0
    %1486 = vmatprep.subr.bf16.mxu0 0
    %1487 = vmatpush1.bf16.msra.mxu0 0
    %1488 = vmatprep.subr.bf16.mxu0 0
    %1489 = vmatpush1.bf16.msra.mxu0 0
    %1490 = vmatprep.subr.bf16.mxu0 0
    %1491 = vmatpush1.bf16.msra.mxu0 0
    %1492 = vmatprep.subr.bf16.mxu0 0
    %1493 = vmatpush1.bf16.msra.mxu0 0
    %1494 = vmatprep.subr.bf16.mxu0 0
    %1495 = vmatpush1.bf16.msra.mxu0 0
    %1496 = vmatprep.subr.bf16.mxu0 0
    %1497 = vmatpush1.bf16.msra.mxu0 0
    %1498 = vmatprep.subr.bf16.mxu0 0
    %1499 = vmatpush1.bf16.msra.mxu0 0
    %1500 = vmatprep.subr.bf16.mxu0 0
    %1501 = vmatpush1.bf16.msra.mxu0 0
    %1502 = vmatprep.subr.bf16.mxu0 0
    %1503 = vmatpush1.bf16.msra.mxu0 0
    %1504 = vmatprep.mubr.bf16.mxu0 0
    %1505 = vmatmul.mubr.bf16.gmra.mrb[0].mxu0 %v1045
    %v1506 = vpop.f32.mrb[0].mxu0
    %v1507 = vadd.f32 %v871, %v1506
    %v1508 = vpop.f32.mrb[0].mxu0
    %v1509 = vadd.f32 %v875, %v1508
    %v1510 = vpop.f32.mrb[0].mxu0
    %v1511 = vpop.f32.mrb[0].mxu0
    %1512 = vdwg.mxu0
    %1513 = vmatprep.subr.bf16.mxu0 %v1106
    %1514 = vmatpush1.bf16.msra.mxu0 %v1103
    %1515 = vmatprep.subr.bf16.mxu0 0
    %1516 = vmatpush1.bf16.msra.mxu0 0
    %1517 = vmatprep.subr.bf16.mxu0 0
    %1518 = vmatpush1.bf16.msra.mxu0 0
    %1519 = vmatprep.subr.bf16.mxu0 0
    %1520 = vmatpush1.bf16.msra.mxu0 0
    %1521 = vmatprep.subr.bf16.mxu0 0
    %1522 = vmatpush1.bf16.msra.mxu0 0
    %1523 = vmatprep.subr.bf16.mxu0 0
    %1524 = vmatpush1.bf16.msra.mxu0 0
    %1525 = vmatprep.subr.bf16.mxu0 0
    %1526 = vmatpush1.bf16.msra.mxu0 0
    %1527 = vmatprep.subr.bf16.mxu0 0
    %1528 = vmatpush1.bf16.msra.mxu0 0
    %1529 = vmatprep.subr.bf16.mxu0 0
    %1530 = vmatpush1.bf16.msra.mxu0 0
    %1531 = vmatprep.subr.bf16.mxu0 0
    %1532 = vmatpush1.bf16.msra.mxu0 0
    %1533 = vmatprep.subr.bf16.mxu0 0
    %1534 = vmatpush1.bf16.msra.mxu0 0
    %1535 = vmatprep.subr.bf16.mxu0 0
    %1536 = vmatpush1.bf16.msra.mxu0 0
    %1537 = vmatprep.subr.bf16.mxu0 0
    %1538 = vmatpush1.bf16.msra.mxu0 0
    %1539 = vmatprep.subr.bf16.mxu0 0
    %1540 = vmatpush1.bf16.msra.mxu0 0
    %1541 = vmatprep.subr.bf16.mxu0 0
    %1542 = vmatpush1.bf16.msra.mxu0 0
    %1543 = vmatprep.subr.bf16.mxu0 0
    %1544 = vmatpush1.bf16.msra.mxu0 0
    %1545 = vmatprep.mubr.bf16.mxu0 0
    %1546 = vmatmul.mubr.bf16.gmra.mrb[0].mxu0 %v1045
    %v1547 = vpop.f32.mrb[0].mxu0
    %v1548 = vadd.f32 %v879, %v1547
    %v1549 = vpop.f32.mrb[0].mxu0
    %v1550 = vadd.f32 %v883, %v1549
    %v1551 = vpop.f32.mrb[0].mxu0
    %v1552 = vpop.f32.mrb[0].mxu0
    %1553 = vdwg.mxu0
    %1554 = vmatprep.subr.bf16.mxu0 %v1112
    %1555 = vmatpush1.bf16.msra.mxu0 %v1109
    %1556 = vmatprep.subr.bf16.mxu0 0
    %1557 = vmatpush1.bf16.msra.mxu0 0
    %1558 = vmatprep.subr.bf16.mxu0 0
    %1559 = vmatpush1.bf16.msra.mxu0 0
    %1560 = vmatprep.subr.bf16.mxu0 0
    %1561 = vmatpush1.bf16.msra.mxu0 0
    %1562 = vmatprep.subr.bf16.mxu0 0
    %1563 = vmatpush1.bf16.msra.mxu0 0
    %1564 = vmatprep.subr.bf16.mxu0 0
    %1565 = vmatpush1.bf16.msra.mxu0 0
    %1566 = vmatprep.subr.bf16.mxu0 0
    %1567 = vmatpush1.bf16.msra.mxu0 0
    %1568 = vmatprep.subr.bf16.mxu0 0
    %1569 = vmatpush1.bf16.msra.mxu0 0
    %1570 = vmatprep.subr.bf16.mxu0 0
    %1571 = vmatpush1.bf16.msra.mxu0 0
    %1572 = vmatprep.subr.bf16.mxu0 0
    %1573 = vmatpush1.bf16.msra.mxu0 0
    %1574 = vmatprep.subr.bf16.mxu0 0
    %1575 = vmatpush1.bf16.msra.mxu0 0
    %1576 = vmatprep.subr.bf16.mxu0 0
    %1577 = vmatpush1.bf16.msra.mxu0 0
    %1578 = vmatprep.subr.bf16.mxu0 0
    %1579 = vmatpush1.bf16.msra.mxu0 0
    %1580 = vmatprep.subr.bf16.mxu0 0
    %1581 = vmatpush1.bf16.msra.mxu0 0
    %1582 = vmatprep.subr.bf16.mxu0 0
    %1583 = vmatpush1.bf16.msra.mxu0 0
    %1584 = vmatprep.subr.bf16.mxu0 0
    %1585 = vmatpush1.bf16.msra.mxu0 0
    %1586 = vmatprep.mubr.bf16.mxu0 0
    %1587 = vmatmul.mubr.bf16.gmra.mrb[0].mxu0 %v1045
    %v1588 = vpop.f32.mrb[0].mxu0
    %v1589 = vadd.f32 %v887, %v1588
    %v1590 = vpop.f32.mrb[0].mxu0
    %v1591 = vadd.f32 %v891, %v1590
    %v1592 = vpop.f32.mrb[0].mxu0
    %v1593 = vpop.f32.mrb[0].mxu0
    %1594 = vdwg.mxu0
    %1595 = vmatprep.subr.bf16.mxu0 %v1118
    %1596 = vmatpush1.bf16.msra.mxu0 %v1115
    %1597 = vmatprep.subr.bf16.mxu0 0
    %1598 = vmatpush1.bf16.msra.mxu0 0
    %1599 = vmatprep.subr.bf16.mxu0 0
    %1600 = vmatpush1.bf16.msra.mxu0 0
    %1601 = vmatprep.subr.bf16.mxu0 0
    %1602 = vmatpush1.bf16.msra.mxu0 0
    %1603 = vmatprep.subr.bf16.mxu0 0
    %1604 = vmatpush1.bf16.msra.mxu0 0
    %1605 = vmatprep.subr.bf16.mxu0 0
    %1606 = vmatpush1.bf16.msra.mxu0 0
    %1607 = vmatprep.subr.bf16.mxu0 0
    %1608 = vmatpush1.bf16.msra.mxu0 0
    %1609 = vmatprep.subr.bf16.mxu0 0
    %1610 = vmatpush1.bf16.msra.mxu0 0
    %1611 = vmatprep.subr.bf16.mxu0 0
    %1612 = vmatpush1.bf16.msra.mxu0 0
    %1613 = vmatprep.subr.bf16.mxu0 0
    %1614 = vmatpush1.bf16.msra.mxu0 0
    %1615 = vmatprep.subr.bf16.mxu0 0
    %1616 = vmatpush1.bf16.msra.mxu0 0
    %1617 = vmatprep.subr.bf16.mxu0 0
    %1618 = vmatpush1.bf16.msra.mxu0 0
    %1619 = vmatprep.subr.bf16.mxu0 0
    %1620 = vmatpush1.bf16.msra.mxu0 0
    %1621 = vmatprep.subr.bf16.mxu0 0
    %1622 = vmatpush1.bf16.msra.mxu0 0
    %1623 = vmatprep.subr.bf16.mxu0 0
    %1624 = vmatpush1.bf16.msra.mxu0 0
    %1625 = vmatprep.subr.bf16.mxu0 0
    %1626 = vmatpush1.bf16.msra.mxu0 0
    %1627 = vmatprep.mubr.bf16.mxu0 0
    %1628 = vmatmul.mubr.bf16.gmra.mrb[0].mxu0 %v1045
    %v1629 = vpop.f32.mrb[0].mxu0
    %v1630 = vadd.f32 %v895, %v1629
    %v1631 = vpop.f32.mrb[0].mxu0
    %v1632 = vadd.f32 %v899, %v1631
    %v1633 = vpop.f32.mrb[0].mxu0
    %v1634 = vpop.f32.mrb[0].mxu0
    %1635 = vdwg.mxu0
    %1636 = vmatprep.subr.bf16.mxu0 %v1124
    %1637 = vmatpush1.bf16.msra.mxu0 %v1121
    %1638 = vmatprep.subr.bf16.mxu0 0
    %1639 = vmatpush1.bf16.msra.mxu0 0
    %1640 = vmatprep.subr.bf16.mxu0 0
    %1641 = vmatpush1.bf16.msra.mxu0 0
    %1642 = vmatprep.subr.bf16.mxu0 0
    %1643 = vmatpush1.bf16.msra.mxu0 0
    %1644 = vmatprep.subr.bf16.mxu0 0
    %1645 = vmatpush1.bf16.msra.mxu0 0
    %1646 = vmatprep.subr.bf16.mxu0 0
    %1647 = vmatpush1.bf16.msra.mxu0 0
    %1648 = vmatprep.subr.bf16.mxu0 0
    %1649 = vmatpush1.bf16.msra.mxu0 0
    %1650 = vmatprep.subr.bf16.mxu0 0
    %1651 = vmatpush1.bf16.msra.mxu0 0
    %1652 = vmatprep.subr.bf16.mxu0 0
    %1653 = vmatpush1.bf16.msra.mxu0 0
    %1654 = vmatprep.subr.bf16.mxu0 0
    %1655 = vmatpush1.bf16.msra.mxu0 0
    %1656 = vmatprep.subr.bf16.mxu0 0
    %1657 = vmatpush1.bf16.msra.mxu0 0
    %1658 = vmatprep.subr.bf16.mxu0 0
    %1659 = vmatpush1.bf16.msra.mxu0 0
    %1660 = vmatprep.subr.bf16.mxu0 0
    %1661 = vmatpush1.bf16.msra.mxu0 0
    %1662 = vmatprep.subr.bf16.mxu0 0
    %1663 = vmatpush1.bf16.msra.mxu0 0
    %1664 = vmatprep.subr.bf16.mxu0 0
    %1665 = vmatpush1.bf16.msra.mxu0 0
    %1666 = vmatprep.subr.bf16.mxu0 0
    %1667 = vmatpush1.bf16.msra.mxu0 0
    %1668 = vmatprep.mubr.bf16.mxu0 0
    %1669 = vmatmul.mubr.bf16.gmra.mrb[0].mxu0 %v1045
    %v1670 = vpop.f32.mrb[0].mxu0
    %v1671 = vadd.f32 %v903, %v1670
    %v1672 = vpop.f32.mrb[0].mxu0
    %v1673 = vadd.f32 %v907, %v1672
    %v1674 = vpop.f32.mrb[0].mxu0
    %v1675 = vpop.f32.mrb[0].mxu0
    %1676 = vdwg.mxu0
    %1677 = vmatprep.subr.bf16.mxu0 %v1130
    %1678 = vmatpush1.bf16.msra.mxu0 %v1127
    %1679 = vmatprep.subr.bf16.mxu0 0
    %1680 = vmatpush1.bf16.msra.mxu0 0
    %1681 = vmatprep.subr.bf16.mxu0 0
    %1682 = vmatpush1.bf16.msra.mxu0 0
    %1683 = vmatprep.subr.bf16.mxu0 0
    %1684 = vmatpush1.bf16.msra.mxu0 0
    %1685 = vmatprep.subr.bf16.mxu0 0
    %1686 = vmatpush1.bf16.msra.mxu0 0
    %1687 = vmatprep.subr.bf16.mxu0 0
    %1688 = vmatpush1.bf16.msra.mxu0 0
    %1689 = vmatprep.subr.bf16.mxu0 0
    %1690 = vmatpush1.bf16.msra.mxu0 0
    %1691 = vmatprep.subr.bf16.mxu0 0
    %1692 = vmatpush1.bf16.msra.mxu0 0
    %1693 = vmatprep.subr.bf16.mxu0 0
    %1694 = vmatpush1.bf16.msra.mxu0 0
    %1695 = vmatprep.subr.bf16.mxu0 0
    %1696 = vmatpush1.bf16.msra.mxu0 0
    %1697 = vmatprep.subr.bf16.mxu0 0
    %1698 = vmatpush1.bf16.msra.mxu0 0
    %1699 = vmatprep.subr.bf16.mxu0 0
    %1700 = vmatpush1.bf16.msra.mxu0 0
    %1701 = vmatprep.subr.bf16.mxu0 0
    %1702 = vmatpush1.bf16.msra.mxu0 0
    %1703 = vmatprep.subr.bf16.mxu0 0
    %1704 = vmatpush1.bf16.msra.mxu0 0
    %1705 = vmatprep.subr.bf16.mxu0 0
    %1706 = vmatpush1.bf16.msra.mxu0 0
    %1707 = vmatprep.subr.bf16.mxu0 0
    %1708 = vmatpush1.bf16.msra.mxu0 0
    %1709 = vmatprep.mubr.bf16.mxu0 0
    %1710 = vmatmul.mubr.bf16.gmra.mrb[0].mxu0 %v1045
    %v1711 = vpop.f32.mrb[0].mxu0
    %v1712 = vadd.f32 %v911, %v1711
    %v1713 = vpop.f32.mrb[0].mxu0
    %v1714 = vadd.f32 %v915, %v1713
    %v1715 = vpop.f32.mrb[0].mxu0
    %v1716 = vpop.f32.mrb[0].mxu0
    %1717 = vdwg.mxu0
    %1718 = vmatprep.subr.bf16.mxu0 %v1136
    %1719 = vmatpush1.bf16.msra.mxu0 %v1133
    %1720 = vmatprep.subr.bf16.mxu0 0
    %1721 = vmatpush1.bf16.msra.mxu0 0
    %1722 = vmatprep.subr.bf16.mxu0 0
    %1723 = vmatpush1.bf16.msra.mxu0 0
    %1724 = vmatprep.subr.bf16.mxu0 0
    %1725 = vmatpush1.bf16.msra.mxu0 0
    %1726 = vmatprep.subr.bf16.mxu0 0
    %1727 = vmatpush1.bf16.msra.mxu0 0
    %1728 = vmatprep.subr.bf16.mxu0 0
    %1729 = vmatpush1.bf16.msra.mxu0 0
    %1730 = vmatprep.subr.bf16.mxu0 0
    %1731 = vmatpush1.bf16.msra.mxu0 0
    %1732 = vmatprep.subr.bf16.mxu0 0
    %1733 = vmatpush1.bf16.msra.mxu0 0
    %1734 = vmatprep.subr.bf16.mxu0 0
    %1735 = vmatpush1.bf16.msra.mxu0 0
    %1736 = vmatprep.subr.bf16.mxu0 0
    %1737 = vmatpush1.bf16.msra.mxu0 0
    %1738 = vmatprep.subr.bf16.mxu0 0
    %1739 = vmatpush1.bf16.msra.mxu0 0
    %1740 = vmatprep.subr.bf16.mxu0 0
    %1741 = vmatpush1.bf16.msra.mxu0 0
    %1742 = vmatprep.subr.bf16.mxu0 0
    %1743 = vmatpush1.bf16.msra.mxu0 0
    %1744 = vmatprep.subr.bf16.mxu0 0
    %1745 = vmatpush1.bf16.msra.mxu0 0
    %1746 = vmatprep.subr.bf16.mxu0 0
    %1747 = vmatpush1.bf16.msra.mxu0 0
    %1748 = vmatprep.subr.bf16.mxu0 0
    %1749 = vmatpush1.bf16.msra.mxu0 0
    %1750 = vmatprep.mubr.bf16.mxu0 0
    %1751 = vmatmul.mubr.bf16.gmra.mrb[0].mxu0 %v1045
    %v1752 = vpop.f32.mrb[0].mxu0
    %v1753 = vadd.f32 %v919, %v1752
    %v1754 = vpop.f32.mrb[0].mxu0
    %v1755 = vadd.f32 %v923, %v1754
    %v1756 = vpop.f32.mrb[0].mxu0
    %v1757 = vpop.f32.mrb[0].mxu0
    %1758 = vdwg.mxu0
    %1759 = vmatprep.subr.bf16.mxu0 %v1142
    %1760 = vmatpush1.bf16.msra.mxu0 %v1139
    %1761 = vmatprep.subr.bf16.mxu0 0
    %1762 = vmatpush1.bf16.msra.mxu0 0
    %1763 = vmatprep.subr.bf16.mxu0 0
    %1764 = vmatpush1.bf16.msra.mxu0 0
    %1765 = vmatprep.subr.bf16.mxu0 0
    %1766 = vmatpush1.bf16.msra.mxu0 0
    %1767 = vmatprep.subr.bf16.mxu0 0
    %1768 = vmatpush1.bf16.msra.mxu0 0
    %1769 = vmatprep.subr.bf16.mxu0 0
    %1770 = vmatpush1.bf16.msra.mxu0 0
    %1771 = vmatprep.subr.bf16.mxu0 0
    %1772 = vmatpush1.bf16.msra.mxu0 0
    %1773 = vmatprep.subr.bf16.mxu0 0
    %1774 = vmatpush1.bf16.msra.mxu0 0
    %1775 = vmatprep.subr.bf16.mxu0 0
    %1776 = vmatpush1.bf16.msra.mxu0 0
    %1777 = vmatprep.subr.bf16.mxu0 0
    %1778 = vmatpush1.bf16.msra.mxu0 0
    %1779 = vmatprep.subr.bf16.mxu0 0
    %1780 = vmatpush1.bf16.msra.mxu0 0
    %1781 = vmatprep.subr.bf16.mxu0 0
    %1782 = vmatpush1.bf16.msra.mxu0 0
    %1783 = vmatprep.subr.bf16.mxu0 0
    %1784 = vmatpush1.bf16.msra.mxu0 0
    %1785 = vmatprep.subr.bf16.mxu0 0
    %1786 = vmatpush1.bf16.msra.mxu0 0
    %1787 = vmatprep.subr.bf16.mxu0 0
    %1788 = vmatpush1.bf16.msra.mxu0 0
    %1789 = vmatprep.subr.bf16.mxu0 0
    %1790 = vmatpush1.bf16.msra.mxu0 0
    %1791 = vmatprep.mubr.bf16.mxu0 0
    %1792 = vmatmul.mubr.bf16.gmra.mrb[0].mxu0 %v1045
    %v1793 = vpop.f32.mrb[0].mxu0
    %v1794 = vadd.f32 %v927, %v1793
    %v1795 = vpop.f32.mrb[0].mxu0
    %v1796 = vadd.f32 %v931, %v1795
    %v1797 = vpop.f32.mrb[0].mxu0
    %v1798 = vpop.f32.mrb[0].mxu0
    %1799 = vdwg.mxu0
    %v1800 = vrot.slane %v1179, 4
    %v1801 = vadd.f32 %v1179, %v1800
    %v1802 = vrot.slane %v1801, 2
    %v1803 = vadd.f32 %v1801, %v1802
    %v1804 = vrot.slane %v1803, 1
    %v1805 = vadd.f32 %v1803, %v1804
    %v1806 = vrot.slane %v1181, 4
    %v1807 = vadd.f32 %v1181, %v1806
    %v1808 = vrot.slane %v1807, 2
    %v1809 = vadd.f32 %v1807, %v1808
    %v1810 = vrot.slane %v1809, 1
    %v1811 = vadd.f32 %v1809, %v1810
    %v1812 = vrot.slane %v1220, 4
    %v1813 = vadd.f32 %v1220, %v1812
    %v1814 = vrot.slane %v1813, 2
    %v1815 = vadd.f32 %v1813, %v1814
    %v1816 = vrot.slane %v1815, 1
    %v1817 = vadd.f32 %v1815, %v1816
    %v1818 = vrot.slane %v1222, 4
    %v1819 = vadd.f32 %v1222, %v1818
    %v1820 = vrot.slane %v1819, 2
    %v1821 = vadd.f32 %v1819, %v1820
    %v1822 = vrot.slane %v1821, 1
    %v1823 = vadd.f32 %v1821, %v1822
    %v1824 = vrot.slane %v1261, 4
    %v1825 = vadd.f32 %v1261, %v1824
    %v1826 = vrot.slane %v1825, 2
    %v1827 = vadd.f32 %v1825, %v1826
    %v1828 = vrot.slane %v1827, 1
    %v1829 = vadd.f32 %v1827, %v1828
    %v1830 = vrot.slane %v1263, 4
    %v1831 = vadd.f32 %v1263, %v1830
    %v1832 = vrot.slane %v1831, 2
    %v1833 = vadd.f32 %v1831, %v1832
    %v1834 = vrot.slane %v1833, 1
    %v1835 = vadd.f32 %v1833, %v1834
    %v1836 = vrot.slane %v1302, 4
    %v1837 = vadd.f32 %v1302, %v1836
    %v1838 = vrot.slane %v1837, 2
    %v1839 = vadd.f32 %v1837, %v1838
    %v1840 = vrot.slane %v1839, 1
    %v1841 = vadd.f32 %v1839, %v1840
    %v1842 = vrot.slane %v1304, 4
    %v1843 = vadd.f32 %v1304, %v1842
    %v1844 = vrot.slane %v1843, 2
    %v1845 = vadd.f32 %v1843, %v1844
    %v1846 = vrot.slane %v1845, 1
    %v1847 = vadd.f32 %v1845, %v1846
    %v1848 = vrot.slane %v1343, 4
    %v1849 = vadd.f32 %v1343, %v1848
    %v1850 = vrot.slane %v1849, 2
    %v1851 = vadd.f32 %v1849, %v1850
    %v1852 = vrot.slane %v1851, 1
    %v1853 = vadd.f32 %v1851, %v1852
    %v1854 = vrot.slane %v1345, 4
    %v1855 = vadd.f32 %v1345, %v1854
    %v1856 = vrot.slane %v1855, 2
    %v1857 = vadd.f32 %v1855, %v1856
    %v1858 = vrot.slane %v1857, 1
    %v1859 = vadd.f32 %v1857, %v1858
    %v1860 = vrot.slane %v1384, 4
    %v1861 = vadd.f32 %v1384, %v1860
    %v1862 = vrot.slane %v1861, 2
    %v1863 = vadd.f32 %v1861, %v1862
    %v1864 = vrot.slane %v1863, 1
    %v1865 = vadd.f32 %v1863, %v1864
    %v1866 = vrot.slane %v1386, 4
    %v1867 = vadd.f32 %v1386, %v1866
    %v1868 = vrot.slane %v1867, 2
    %v1869 = vadd.f32 %v1867, %v1868
    %v1870 = vrot.slane %v1869, 1
    %v1871 = vadd.f32 %v1869, %v1870
    %v1872 = vrot.slane %v1425, 4
    %v1873 = vadd.f32 %v1425, %v1872
    %v1874 = vrot.slane %v1873, 2
    %v1875 = vadd.f32 %v1873, %v1874
    %v1876 = vrot.slane %v1875, 1
    %v1877 = vadd.f32 %v1875, %v1876
    %v1878 = vrot.slane %v1427, 4
    %v1879 = vadd.f32 %v1427, %v1878
    %v1880 = vrot.slane %v1879, 2
    %v1881 = vadd.f32 %v1879, %v1880
    %v1882 = vrot.slane %v1881, 1
    %v1883 = vadd.f32 %v1881, %v1882
    %v1884 = vrot.slane %v1466, 4
    %v1885 = vadd.f32 %v1466, %v1884
    %v1886 = vrot.slane %v1885, 2
    %v1887 = vadd.f32 %v1885, %v1886
    %v1888 = vrot.slane %v1887, 1
    %v1889 = vadd.f32 %v1887, %v1888
    %v1890 = vrot.slane %v1468, 4
    %v1891 = vadd.f32 %v1468, %v1890
    %v1892 = vrot.slane %v1891, 2
    %v1893 = vadd.f32 %v1891, %v1892
    %v1894 = vrot.slane %v1893, 1
    %v1895 = vadd.f32 %v1893, %v1894
    %v1896 = vrot.slane %v1507, 4
    %v1897 = vadd.f32 %v1507, %v1896
    %v1898 = vrot.slane %v1897, 2
    %v1899 = vadd.f32 %v1897, %v1898
    %v1900 = vrot.slane %v1899, 1
    %v1901 = vadd.f32 %v1899, %v1900
    %v1902 = vrot.slane %v1509, 4
    %v1903 = vadd.f32 %v1509, %v1902
    %v1904 = vrot.slane %v1903, 2
    %v1905 = vadd.f32 %v1903, %v1904
    %v1906 = vrot.slane %v1905, 1
    %v1907 = vadd.f32 %v1905, %v1906
    %v1908 = vrot.slane %v1548, 4
    %v1909 = vadd.f32 %v1548, %v1908
    %v1910 = vrot.slane %v1909, 2
    %v1911 = vadd.f32 %v1909, %v1910
    %v1912 = vrot.slane %v1911, 1
    %v1913 = vadd.f32 %v1911, %v1912
    %v1914 = vrot.slane %v1550, 4
    %v1915 = vadd.f32 %v1550, %v1914
    %v1916 = vrot.slane %v1915, 2
    %v1917 = vadd.f32 %v1915, %v1916
    %v1918 = vrot.slane %v1917, 1
    %v1919 = vadd.f32 %v1917, %v1918
    %v1920 = vrot.slane %v1589, 4
    %v1921 = vadd.f32 %v1589, %v1920
    %v1922 = vrot.slane %v1921, 2
    %v1923 = vadd.f32 %v1921, %v1922
    %v1924 = vrot.slane %v1923, 1
    %v1925 = vadd.f32 %v1923, %v1924
    %v1926 = vrot.slane %v1591, 4
    %v1927 = vadd.f32 %v1591, %v1926
    %v1928 = vrot.slane %v1927, 2
    %v1929 = vadd.f32 %v1927, %v1928
    %v1930 = vrot.slane %v1929, 1
    %v1931 = vadd.f32 %v1929, %v1930
    %v1932 = vrot.slane %v1630, 4
    %v1933 = vadd.f32 %v1630, %v1932
    %v1934 = vrot.slane %v1933, 2
    %v1935 = vadd.f32 %v1933, %v1934
    %v1936 = vrot.slane %v1935, 1
    %v1937 = vadd.f32 %v1935, %v1936
    %v1938 = vrot.slane %v1632, 4
    %v1939 = vadd.f32 %v1632, %v1938
    %v1940 = vrot.slane %v1939, 2
    %v1941 = vadd.f32 %v1939, %v1940
    %v1942 = vrot.slane %v1941, 1
    %v1943 = vadd.f32 %v1941, %v1942
    %v1944 = vrot.slane %v1671, 4
    %v1945 = vadd.f32 %v1671, %v1944
    %v1946 = vrot.slane %v1945, 2
    %v1947 = vadd.f32 %v1945, %v1946
    %v1948 = vrot.slane %v1947, 1
    %v1949 = vadd.f32 %v1947, %v1948
    %v1950 = vrot.slane %v1673, 4
    %v1951 = vadd.f32 %v1673, %v1950
    %v1952 = vrot.slane %v1951, 2
    %v1953 = vadd.f32 %v1951, %v1952
    %v1954 = vrot.slane %v1953, 1
    %v1955 = vadd.f32 %v1953, %v1954
    %v1956 = vrot.slane %v1712, 4
    %v1957 = vadd.f32 %v1712, %v1956
    %v1958 = vrot.slane %v1957, 2
    %v1959 = vadd.f32 %v1957, %v1958
    %v1960 = vrot.slane %v1959, 1
    %v1961 = vadd.f32 %v1959, %v1960
    %v1962 = vrot.slane %v1714, 4
    %v1963 = vadd.f32 %v1714, %v1962
    %v1964 = vrot.slane %v1963, 2
    %v1965 = vadd.f32 %v1963, %v1964
    %v1966 = vrot.slane %v1965, 1
    %v1967 = vadd.f32 %v1965, %v1966
    %v1968 = vrot.slane %v1753, 4
    %v1969 = vadd.f32 %v1753, %v1968
    %v1970 = vrot.slane %v1969, 2
    %v1971 = vadd.f32 %v1969, %v1970
    %v1972 = vrot.slane %v1971, 1
    %v1973 = vadd.f32 %v1971, %v1972
    %v1974 = vrot.slane %v1755, 4
    %v1975 = vadd.f32 %v1755, %v1974
    %v1976 = vrot.slane %v1975, 2
    %v1977 = vadd.f32 %v1975, %v1976
    %v1978 = vrot.slane %v1977, 1
    %v1979 = vadd.f32 %v1977, %v1978
    %v1980 = vrot.slane %v1794, 4
    %v1981 = vadd.f32 %v1794, %v1980
    %v1982 = vrot.slane %v1981, 2
    %v1983 = vadd.f32 %v1981, %v1982
    %v1984 = vrot.slane %v1983, 1
    %v1985 = vadd.f32 %v1983, %v1984
    %v1986 = vrot.slane %v1796, 4
    %v1987 = vadd.f32 %v1796, %v1986
    %v1988 = vrot.slane %v1987, 2
    %v1989 = vadd.f32 %v1987, %v1988
    %v1990 = vrot.slane %v1989, 1
    %v1991 = vadd.f32 %v1989, %v1990
    %v1992 = vmul.f32 %v1805, %v740
    %v1993 = vmul.f32 %v1811, %v740
    %v1994 = vmul.f32 %v1817, %v740
    %v1995 = vmul.f32 %v1823, %v740
    %v1996 = vmul.f32 %v1829, %v740
    %v1997 = vmul.f32 %v1835, %v740
    %v1998 = vmul.f32 %v1841, %v740
    %v1999 = vmul.f32 %v1847, %v740
    %v2000 = vmul.f32 %v1853, %v740
    %v2001 = vmul.f32 %v1859, %v740
    %v2002 = vmul.f32 %v1865, %v740
    %v2003 = vmul.f32 %v1871, %v740
    %v2004 = vmul.f32 %v1877, %v740
    %v2005 = vmul.f32 %v1883, %v740
    %v2006 = vmul.f32 %v1889, %v740
    %v2007 = vmul.f32 %v1895, %v740
    %v2008 = vmul.f32 %v1901, %v740
    %v2009 = vmul.f32 %v1907, %v740
    %v2010 = vmul.f32 %v1913, %v740
    %v2011 = vmul.f32 %v1919, %v740
    %v2012 = vmul.f32 %v1925, %v740
    %v2013 = vmul.f32 %v1931, %v740
    %v2014 = vmul.f32 %v1937, %v740
    %v2015 = vmul.f32 %v1943, %v740
    %v2016 = vmul.f32 %v1949, %v740
    %v2017 = vmul.f32 %v1955, %v740
    %v2018 = vmul.f32 %v1961, %v740
    %v2019 = vmul.f32 %v1967, %v740
    %v2020 = vmul.f32 %v1973, %v740
    %v2021 = vmul.f32 %v1979, %v740
    %v2022 = vmul.f32 %v1985, %v740
    %v2023 = vmul.f32 %v1991, %v740
    %v2024 = vsub.f32 %v1179, %v1992
    %v2025 = vsub.f32 %v1181, %v1993
    %v2026 = vsub.f32 %v1220, %v1994
    %v2027 = vsub.f32 %v1222, %v1995
    %v2028 = vsub.f32 %v1261, %v1996
    %v2029 = vsub.f32 %v1263, %v1997
    %v2030 = vsub.f32 %v1302, %v1998
    %v2031 = vsub.f32 %v1304, %v1999
    %v2032 = vsub.f32 %v1343, %v2000
    %v2033 = vsub.f32 %v1345, %v2001
    %v2034 = vsub.f32 %v1384, %v2002
    %v2035 = vsub.f32 %v1386, %v2003
    %v2036 = vsub.f32 %v1425, %v2004
    %v2037 = vsub.f32 %v1427, %v2005
    %v2038 = vsub.f32 %v1466, %v2006
    %v2039 = vsub.f32 %v1468, %v2007
    %v2040 = vsub.f32 %v1507, %v2008
    %v2041 = vsub.f32 %v1509, %v2009
    %v2042 = vsub.f32 %v1548, %v2010
    %v2043 = vsub.f32 %v1550, %v2011
    %v2044 = vsub.f32 %v1589, %v2012
    %v2045 = vsub.f32 %v1591, %v2013
    %v2046 = vsub.f32 %v1630, %v2014
    %v2047 = vsub.f32 %v1632, %v2015
    %v2048 = vsub.f32 %v1671, %v2016
    %v2049 = vsub.f32 %v1673, %v2017
    %v2050 = vsub.f32 %v1712, %v2018
    %v2051 = vsub.f32 %v1714, %v2019
    %v2052 = vsub.f32 %v1753, %v2020
    %v2053 = vsub.f32 %v1755, %v2021
    %v2054 = vsub.f32 %v1794, %v2022
    %v2055 = vsub.f32 %v1796, %v2023
    %v2056 = vmul.f32 %v2024, %v2024
    %v2057 = vmul.f32 %v2025, %v2025
    %v2058 = vmul.f32 %v2026, %v2026
    %v2059 = vmul.f32 %v2027, %v2027
    %v2060 = vmul.f32 %v2028, %v2028
    %v2061 = vmul.f32 %v2029, %v2029
    %v2062 = vmul.f32 %v2030, %v2030
    %v2063 = vmul.f32 %v2031, %v2031
    %v2064 = vmul.f32 %v2032, %v2032
    %v2065 = vmul.f32 %v2033, %v2033
    %v2066 = vmul.f32 %v2034, %v2034
    %v2067 = vmul.f32 %v2035, %v2035
    %v2068 = vmul.f32 %v2036, %v2036
    %v2069 = vmul.f32 %v2037, %v2037
    %v2070 = vmul.f32 %v2038, %v2038
    %v2071 = vmul.f32 %v2039, %v2039
    %v2072 = vmul.f32 %v2040, %v2040
    %v2073 = vmul.f32 %v2041, %v2041
    %v2074 = vmul.f32 %v2042, %v2042
    %v2075 = vmul.f32 %v2043, %v2043
    %v2076 = vmul.f32 %v2044, %v2044
    %v2077 = vmul.f32 %v2045, %v2045
    %v2078 = vmul.f32 %v2046, %v2046
    %v2079 = vmul.f32 %v2047, %v2047
    %v2080 = vmul.f32 %v2048, %v2048
    %v2081 = vmul.f32 %v2049, %v2049
    %v2082 = vmul.f32 %v2050, %v2050
    %v2083 = vmul.f32 %v2051, %v2051
    %v2084 = vmul.f32 %v2052, %v2052
    %v2085 = vmul.f32 %v2053, %v2053
    %v2086 = vmul.f32 %v2054, %v2054
    %v2087 = vmul.f32 %v2055, %v2055
    %v2088 = vrot.slane %v2056, 4
    %v2089 = vadd.f32 %v2056, %v2088
    %v2090 = vrot.slane %v2089, 2
    %v2091 = vadd.f32 %v2089, %v2090
    %v2092 = vrot.slane %v2091, 1
    %v2093 = vadd.f32 %v2091, %v2092
    %v2094 = vrot.slane %v2057, 4
    %v2095 = vadd.f32 %v2057, %v2094
    %v2096 = vrot.slane %v2095, 2
    %v2097 = vadd.f32 %v2095, %v2096
    %v2098 = vrot.slane %v2097, 1
    %v2099 = vadd.f32 %v2097, %v2098
    %v2100 = vrot.slane %v2058, 4
    %v2101 = vadd.f32 %v2058, %v2100
    %v2102 = vrot.slane %v2101, 2
    %v2103 = vadd.f32 %v2101, %v2102
    %v2104 = vrot.slane %v2103, 1
    %v2105 = vadd.f32 %v2103, %v2104
    %v2106 = vrot.slane %v2059, 4
    %v2107 = vadd.f32 %v2059, %v2106
    %v2108 = vrot.slane %v2107, 2
    %v2109 = vadd.f32 %v2107, %v2108
    %v2110 = vrot.slane %v2109, 1
    %v2111 = vadd.f32 %v2109, %v2110
    %v2112 = vrot.slane %v2060, 4
    %v2113 = vadd.f32 %v2060, %v2112
    %v2114 = vrot.slane %v2113, 2
    %v2115 = vadd.f32 %v2113, %v2114
    %v2116 = vrot.slane %v2115, 1
    %v2117 = vadd.f32 %v2115, %v2116
    %v2118 = vrot.slane %v2061, 4
    %v2119 = vadd.f32 %v2061, %v2118
    %v2120 = vrot.slane %v2119, 2
    %v2121 = vadd.f32 %v2119, %v2120
    %v2122 = vrot.slane %v2121, 1
    %v2123 = vadd.f32 %v2121, %v2122
    %v2124 = vrot.slane %v2062, 4
    %v2125 = vadd.f32 %v2062, %v2124
    %v2126 = vrot.slane %v2125, 2
    %v2127 = vadd.f32 %v2125, %v2126
    %v2128 = vrot.slane %v2127, 1
    %v2129 = vadd.f32 %v2127, %v2128
    %v2130 = vrot.slane %v2063, 4
    %v2131 = vadd.f32 %v2063, %v2130
    %v2132 = vrot.slane %v2131, 2
    %v2133 = vadd.f32 %v2131, %v2132
    %v2134 = vrot.slane %v2133, 1
    %v2135 = vadd.f32 %v2133, %v2134
    %v2136 = vrot.slane %v2064, 4
    %v2137 = vadd.f32 %v2064, %v2136
    %v2138 = vrot.slane %v2137, 2
    %v2139 = vadd.f32 %v2137, %v2138
    %v2140 = vrot.slane %v2139, 1
    %v2141 = vadd.f32 %v2139, %v2140
    %v2142 = vrot.slane %v2065, 4
    %v2143 = vadd.f32 %v2065, %v2142
    %v2144 = vrot.slane %v2143, 2
    %v2145 = vadd.f32 %v2143, %v2144
    %v2146 = vrot.slane %v2145, 1
    %v2147 = vadd.f32 %v2145, %v2146
    %v2148 = vrot.slane %v2066, 4
    %v2149 = vadd.f32 %v2066, %v2148
    %v2150 = vrot.slane %v2149, 2
    %v2151 = vadd.f32 %v2149, %v2150
    %v2152 = vrot.slane %v2151, 1
    %v2153 = vadd.f32 %v2151, %v2152
    %v2154 = vrot.slane %v2067, 4
    %v2155 = vadd.f32 %v2067, %v2154
    %v2156 = vrot.slane %v2155, 2
    %v2157 = vadd.f32 %v2155, %v2156
    %v2158 = vrot.slane %v2157, 1
    %v2159 = vadd.f32 %v2157, %v2158
    %v2160 = vrot.slane %v2068, 4
    %v2161 = vadd.f32 %v2068, %v2160
    %v2162 = vrot.slane %v2161, 2
    %v2163 = vadd.f32 %v2161, %v2162
    %v2164 = vrot.slane %v2163, 1
    %v2165 = vadd.f32 %v2163, %v2164
    %v2166 = vrot.slane %v2069, 4
    %v2167 = vadd.f32 %v2069, %v2166
    %v2168 = vrot.slane %v2167, 2
    %v2169 = vadd.f32 %v2167, %v2168
    %v2170 = vrot.slane %v2169, 1
    %v2171 = vadd.f32 %v2169, %v2170
    %v2172 = vrot.slane %v2070, 4
    %v2173 = vadd.f32 %v2070, %v2172
    %v2174 = vrot.slane %v2173, 2
    %v2175 = vadd.f32 %v2173, %v2174
    %v2176 = vrot.slane %v2175, 1
    %v2177 = vadd.f32 %v2175, %v2176
    %v2178 = vrot.slane %v2071, 4
    %v2179 = vadd.f32 %v2071, %v2178
    %v2180 = vrot.slane %v2179, 2
    %v2181 = vadd.f32 %v2179, %v2180
    %v2182 = vrot.slane %v2181, 1
    %v2183 = vadd.f32 %v2181, %v2182
    %v2184 = vrot.slane %v2072, 4
    %v2185 = vadd.f32 %v2072, %v2184
    %v2186 = vrot.slane %v2185, 2
    %v2187 = vadd.f32 %v2185, %v2186
    %v2188 = vrot.slane %v2187, 1
    %v2189 = vadd.f32 %v2187, %v2188
    %v2190 = vrot.slane %v2073, 4
    %v2191 = vadd.f32 %v2073, %v2190
    %v2192 = vrot.slane %v2191, 2
    %v2193 = vadd.f32 %v2191, %v2192
    %v2194 = vrot.slane %v2193, 1
    %v2195 = vadd.f32 %v2193, %v2194
    %v2196 = vrot.slane %v2074, 4
    %v2197 = vadd.f32 %v2074, %v2196
    %v2198 = vrot.slane %v2197, 2
    %v2199 = vadd.f32 %v2197, %v2198
    %v2200 = vrot.slane %v2199, 1
    %v2201 = vadd.f32 %v2199, %v2200
    %v2202 = vrot.slane %v2075, 4
    %v2203 = vadd.f32 %v2075, %v2202
    %v2204 = vrot.slane %v2203, 2
    %v2205 = vadd.f32 %v2203, %v2204
    %v2206 = vrot.slane %v2205, 1
    %v2207 = vadd.f32 %v2205, %v2206
    %v2208 = vrot.slane %v2076, 4
    %v2209 = vadd.f32 %v2076, %v2208
    %v2210 = vrot.slane %v2209, 2
    %v2211 = vadd.f32 %v2209, %v2210
    %v2212 = vrot.slane %v2211, 1
    %v2213 = vadd.f32 %v2211, %v2212
    %v2214 = vrot.slane %v2077, 4
    %v2215 = vadd.f32 %v2077, %v2214
    %v2216 = vrot.slane %v2215, 2
    %v2217 = vadd.f32 %v2215, %v2216
    %v2218 = vrot.slane %v2217, 1
    %v2219 = vadd.f32 %v2217, %v2218
    %v2220 = vrot.slane %v2078, 4
    %v2221 = vadd.f32 %v2078, %v2220
    %v2222 = vrot.slane %v2221, 2
    %v2223 = vadd.f32 %v2221, %v2222
    %v2224 = vrot.slane %v2223, 1
    %v2225 = vadd.f32 %v2223, %v2224
    %v2226 = vrot.slane %v2079, 4
    %v2227 = vadd.f32 %v2079, %v2226
    %v2228 = vrot.slane %v2227, 2
    %v2229 = vadd.f32 %v2227, %v2228
    %v2230 = vrot.slane %v2229, 1
    %v2231 = vadd.f32 %v2229, %v2230
    %v2232 = vrot.slane %v2080, 4
    %v2233 = vadd.f32 %v2080, %v2232
    %v2234 = vrot.slane %v2233, 2
    %v2235 = vadd.f32 %v2233, %v2234
    %v2236 = vrot.slane %v2235, 1
    %v2237 = vadd.f32 %v2235, %v2236
    %v2238 = vrot.slane %v2081, 4
    %v2239 = vadd.f32 %v2081, %v2238
    %v2240 = vrot.slane %v2239, 2
    %v2241 = vadd.f32 %v2239, %v2240
    %v2242 = vrot.slane %v2241, 1
    %v2243 = vadd.f32 %v2241, %v2242
    %v2244 = vrot.slane %v2082, 4
    %v2245 = vadd.f32 %v2082, %v2244
    %v2246 = vrot.slane %v2245, 2
    %v2247 = vadd.f32 %v2245, %v2246
    %v2248 = vrot.slane %v2247, 1
    %v2249 = vadd.f32 %v2247, %v2248
    %v2250 = vrot.slane %v2083, 4
    %v2251 = vadd.f32 %v2083, %v2250
    %v2252 = vrot.slane %v2251, 2
    %v2253 = vadd.f32 %v2251, %v2252
    %v2254 = vrot.slane %v2253, 1
    %v2255 = vadd.f32 %v2253, %v2254
    %v2256 = vrot.slane %v2084, 4
    %v2257 = vadd.f32 %v2084, %v2256
    %v2258 = vrot.slane %v2257, 2
    %v2259 = vadd.f32 %v2257, %v2258
    %v2260 = vrot.slane %v2259, 1
    %v2261 = vadd.f32 %v2259, %v2260
    %v2262 = vrot.slane %v2085, 4
    %v2263 = vadd.f32 %v2085, %v2262
    %v2264 = vrot.slane %v2263, 2
    %v2265 = vadd.f32 %v2263, %v2264
    %v2266 = vrot.slane %v2265, 1
    %v2267 = vadd.f32 %v2265, %v2266
    %v2268 = vrot.slane %v2086, 4
    %v2269 = vadd.f32 %v2086, %v2268
    %v2270 = vrot.slane %v2269, 2
    %v2271 = vadd.f32 %v2269, %v2270
    %v2272 = vrot.slane %v2271, 1
    %v2273 = vadd.f32 %v2271, %v2272
    %v2274 = vrot.slane %v2087, 4
    %v2275 = vadd.f32 %v2087, %v2274
    %v2276 = vrot.slane %v2275, 2
    %v2277 = vadd.f32 %v2275, %v2276
    %v2278 = vrot.slane %v2277, 1
    %v2279 = vadd.f32 %v2277, %v2278
    %v2280 = vmul.f32 %v2093, %v740
    %v2281 = vmul.f32 %v2099, %v740
    %v2282 = vmul.f32 %v2105, %v740
    %v2283 = vmul.f32 %v2111, %v740
    %v2284 = vmul.f32 %v2117, %v740
    %v2285 = vmul.f32 %v2123, %v740
    %v2286 = vmul.f32 %v2129, %v740
    %v2287 = vmul.f32 %v2135, %v740
    %v2288 = vmul.f32 %v2141, %v740
    %v2289 = vmul.f32 %v2147, %v740
    %v2290 = vmul.f32 %v2153, %v740
    %v2291 = vmul.f32 %v2159, %v740
    %v2292 = vmul.f32 %v2165, %v740
    %v2293 = vmul.f32 %v2171, %v740
    %v2294 = vmul.f32 %v2177, %v740
    %v2295 = vmul.f32 %v2183, %v740
    %v2296 = vmul.f32 %v2189, %v740
    %v2297 = vmul.f32 %v2195, %v740
    %v2298 = vmul.f32 %v2201, %v740
    %v2299 = vmul.f32 %v2207, %v740
    %v2300 = vmul.f32 %v2213, %v740
    %v2301 = vmul.f32 %v2219, %v740
    %v2302 = vmul.f32 %v2225, %v740
    %v2303 = vmul.f32 %v2231, %v740
    %v2304 = vmul.f32 %v2237, %v740
    %v2305 = vmul.f32 %v2243, %v740
    %v2306 = vmul.f32 %v2249, %v740
    %v2307 = vmul.f32 %v2255, %v740
    %v2308 = vmul.f32 %v2261, %v740
    %v2309 = vmul.f32 %v2267, %v740
    %v2310 = vmul.f32 %v2273, %v740
    %v2311 = vmul.f32 %v2279, %v740
    %v2312 = vadd.f32 %v2280, 1e-05
    %v2313 = vadd.f32 %v2281, 1e-05
    %v2314 = vadd.f32 %v2282, 1e-05
    %v2315 = vadd.f32 %v2283, 1e-05
    %v2316 = vadd.f32 %v2284, 1e-05
    %v2317 = vadd.f32 %v2285, 1e-05
    %v2318 = vadd.f32 %v2286, 1e-05
    %v2319 = vadd.f32 %v2287, 1e-05
    %v2320 = vadd.f32 %v2288, 1e-05
    %v2321 = vadd.f32 %v2289, 1e-05
    %v2322 = vadd.f32 %v2290, 1e-05
    %v2323 = vadd.f32 %v2291, 1e-05
    %v2324 = vadd.f32 %v2292, 1e-05
    %v2325 = vadd.f32 %v2293, 1e-05
    %v2326 = vadd.f32 %v2294, 1e-05
    %v2327 = vadd.f32 %v2295, 1e-05
    %v2328 = vadd.f32 %v2296, 1e-05
    %v2329 = vadd.f32 %v2297, 1e-05
    %v2330 = vadd.f32 %v2298, 1e-05
    %v2331 = vadd.f32 %v2299, 1e-05
    %v2332 = vadd.f32 %v2300, 1e-05
    %v2333 = vadd.f32 %v2301, 1e-05
    %v2334 = vadd.f32 %v2302, 1e-05
    %v2335 = vadd.f32 %v2303, 1e-05
    %v2336 = vadd.f32 %v2304, 1e-05
    %v2337 = vadd.f32 %v2305, 1e-05
    %v2338 = vadd.f32 %v2306, 1e-05
    %v2339 = vadd.f32 %v2307, 1e-05
    %v2340 = vadd.f32 %v2308, 1e-05
    %v2341 = vadd.f32 %v2309, 1e-05
    %v2342 = vadd.f32 %v2310, 1e-05
    %v2343 = vadd.f32 %v2311, 1e-05
    %v2344 = vrsqrt.pop %v2312
    %v2345 = vmul.f32 %v2312, %v2344
    %vm2346 = vcmp.eq.f32.partialorder %v2312, inf
    %v2347 = vsel %vm2346, %v2312, %v2345
    %vm2348 = vcmp.eq.f32.partialorder %v2312, 0.0
    %v2349 = vand.u32 %v2312, 2147483648
    %v2350 = vsel %vm2348, %v2349, %v2347
    %v2351 = vrsqrt.pop %v2313
    %v2352 = vmul.f32 %v2313, %v2351
    %vm2353 = vcmp.eq.f32.partialorder %v2313, inf
    %v2354 = vsel %vm2353, %v2313, %v2352
    %vm2355 = vcmp.eq.f32.partialorder %v2313, 0.0
    %v2356 = vand.u32 %v2313, 2147483648
    %v2357 = vsel %vm2355, %v2356, %v2354
    %v2358 = vrsqrt.pop %v2314
    %v2359 = vmul.f32 %v2314, %v2358
    %vm2360 = vcmp.eq.f32.partialorder %v2314, inf
    %v2361 = vsel %vm2360, %v2314, %v2359
    %vm2362 = vcmp.eq.f32.partialorder %v2314, 0.0
    %v2363 = vand.u32 %v2314, 2147483648
    %v2364 = vsel %vm2362, %v2363, %v2361
    %v2365 = vrsqrt.pop %v2315
    %v2366 = vmul.f32 %v2315, %v2365
    %vm2367 = vcmp.eq.f32.partialorder %v2315, inf
    %v2368 = vsel %vm2367, %v2315, %v2366
    %vm2369 = vcmp.eq.f32.partialorder %v2315, 0.0
    %v2370 = vand.u32 %v2315, 2147483648
    %v2371 = vsel %vm2369, %v2370, %v2368
    %v2372 = vrsqrt.pop %v2316
    %v2373 = vmul.f32 %v2316, %v2372
    %vm2374 = vcmp.eq.f32.partialorder %v2316, inf
    %v2375 = vsel %vm2374, %v2316, %v2373
    %vm2376 = vcmp.eq.f32.partialorder %v2316, 0.0
    %v2377 = vand.u32 %v2316, 2147483648
    %v2378 = vsel %vm2376, %v2377, %v2375
    %v2379 = vrsqrt.pop %v2317
    %v2380 = vmul.f32 %v2317, %v2379
    %vm2381 = vcmp.eq.f32.partialorder %v2317, inf
    %v2382 = vsel %vm2381, %v2317, %v2380
    %vm2383 = vcmp.eq.f32.partialorder %v2317, 0.0
    %v2384 = vand.u32 %v2317, 2147483648
    %v2385 = vsel %vm2383, %v2384, %v2382
    %v2386 = vrsqrt.pop %v2318
    %v2387 = vmul.f32 %v2318, %v2386
    %vm2388 = vcmp.eq.f32.partialorder %v2318, inf
    %v2389 = vsel %vm2388, %v2318, %v2387
    %vm2390 = vcmp.eq.f32.partialorder %v2318, 0.0
    %v2391 = vand.u32 %v2318, 2147483648
    %v2392 = vsel %vm2390, %v2391, %v2389
    %v2393 = vrsqrt.pop %v2319
    %v2394 = vmul.f32 %v2319, %v2393
    %vm2395 = vcmp.eq.f32.partialorder %v2319, inf
    %v2396 = vsel %vm2395, %v2319, %v2394
    %vm2397 = vcmp.eq.f32.partialorder %v2319, 0.0
    %v2398 = vand.u32 %v2319, 2147483648
    %v2399 = vsel %vm2397, %v2398, %v2396
    %v2400 = vrsqrt.pop %v2320
    %v2401 = vmul.f32 %v2320, %v2400
    %vm2402 = vcmp.eq.f32.partialorder %v2320, inf
    %v2403 = vsel %vm2402, %v2320, %v2401
    %vm2404 = vcmp.eq.f32.partialorder %v2320, 0.0
    %v2405 = vand.u32 %v2320, 2147483648
    %v2406 = vsel %vm2404, %v2405, %v2403
    %v2407 = vrsqrt.pop %v2321
    %v2408 = vmul.f32 %v2321, %v2407
    %vm2409 = vcmp.eq.f32.partialorder %v2321, inf
    %v2410 = vsel %vm2409, %v2321, %v2408
    %vm2411 = vcmp.eq.f32.partialorder %v2321, 0.0
    %v2412 = vand.u32 %v2321, 2147483648
    %v2413 = vsel %vm2411, %v2412, %v2410
    %v2414 = vrsqrt.pop %v2322
    %v2415 = vmul.f32 %v2322, %v2414
    %vm2416 = vcmp.eq.f32.partialorder %v2322, inf
    %v2417 = vsel %vm2416, %v2322, %v2415
    %vm2418 = vcmp.eq.f32.partialorder %v2322, 0.0
    %v2419 = vand.u32 %v2322, 2147483648
    %v2420 = vsel %vm2418, %v2419, %v2417
    %v2421 = vrsqrt.pop %v2323
    %v2422 = vmul.f32 %v2323, %v2421
    %vm2423 = vcmp.eq.f32.partialorder %v2323, inf
    %v2424 = vsel %vm2423, %v2323, %v2422
    %vm2425 = vcmp.eq.f32.partialorder %v2323, 0.0
    %v2426 = vand.u32 %v2323, 2147483648
    %v2427 = vsel %vm2425, %v2426, %v2424
    %v2428 = vrsqrt.pop %v2324
    %v2429 = vmul.f32 %v2324, %v2428
    %vm2430 = vcmp.eq.f32.partialorder %v2324, inf
    %v2431 = vsel %vm2430, %v2324, %v2429
    %vm2432 = vcmp.eq.f32.partialorder %v2324, 0.0
    %v2433 = vand.u32 %v2324, 2147483648
    %v2434 = vsel %vm2432, %v2433, %v2431
    %v2435 = vrsqrt.pop %v2325
    %v2436 = vmul.f32 %v2325, %v2435
    %vm2437 = vcmp.eq.f32.partialorder %v2325, inf
    %v2438 = vsel %vm2437, %v2325, %v2436
    %vm2439 = vcmp.eq.f32.partialorder %v2325, 0.0
    %v2440 = vand.u32 %v2325, 2147483648
    %v2441 = vsel %vm2439, %v2440, %v2438
    %v2442 = vrsqrt.pop %v2326
    %v2443 = vmul.f32 %v2326, %v2442
    %vm2444 = vcmp.eq.f32.partialorder %v2326, inf
    %v2445 = vsel %vm2444, %v2326, %v2443
    %vm2446 = vcmp.eq.f32.partialorder %v2326, 0.0
    %v2447 = vand.u32 %v2326, 2147483648
    %v2448 = vsel %vm2446, %v2447, %v2445
    %v2449 = vrsqrt.pop %v2327
    %v2450 = vmul.f32 %v2327, %v2449
    %vm2451 = vcmp.eq.f32.partialorder %v2327, inf
    %v2452 = vsel %vm2451, %v2327, %v2450
    %vm2453 = vcmp.eq.f32.partialorder %v2327, 0.0
    %v2454 = vand.u32 %v2327, 2147483648
    %v2455 = vsel %vm2453, %v2454, %v2452
    %v2456 = vrsqrt.pop %v2328
    %v2457 = vmul.f32 %v2328, %v2456
    %vm2458 = vcmp.eq.f32.partialorder %v2328, inf
    %v2459 = vsel %vm2458, %v2328, %v2457
    %vm2460 = vcmp.eq.f32.partialorder %v2328, 0.0
    %v2461 = vand.u32 %v2328, 2147483648
    %v2462 = vsel %vm2460, %v2461, %v2459
    %v2463 = vrsqrt.pop %v2329
    %v2464 = vmul.f32 %v2329, %v2463
    %vm2465 = vcmp.eq.f32.partialorder %v2329, inf
    %v2466 = vsel %vm2465, %v2329, %v2464
    %vm2467 = vcmp.eq.f32.partialorder %v2329, 0.0
    %v2468 = vand.u32 %v2329, 2147483648
    %v2469 = vsel %vm2467, %v2468, %v2466
    %v2470 = vrsqrt.pop %v2330
    %v2471 = vmul.f32 %v2330, %v2470
    %vm2472 = vcmp.eq.f32.partialorder %v2330, inf
    %v2473 = vsel %vm2472, %v2330, %v2471
    %vm2474 = vcmp.eq.f32.partialorder %v2330, 0.0
    %v2475 = vand.u32 %v2330, 2147483648
    %v2476 = vsel %vm2474, %v2475, %v2473
    %v2477 = vrsqrt.pop %v2331
    %v2478 = vmul.f32 %v2331, %v2477
    %vm2479 = vcmp.eq.f32.partialorder %v2331, inf
    %v2480 = vsel %vm2479, %v2331, %v2478
    %vm2481 = vcmp.eq.f32.partialorder %v2331, 0.0
    %v2482 = vand.u32 %v2331, 2147483648
    %v2483 = vsel %vm2481, %v2482, %v2480
    %v2484 = vrsqrt.pop %v2332
    %v2485 = vmul.f32 %v2332, %v2484
    %vm2486 = vcmp.eq.f32.partialorder %v2332, inf
    %v2487 = vsel %vm2486, %v2332, %v2485
    %vm2488 = vcmp.eq.f32.partialorder %v2332, 0.0
    %v2489 = vand.u32 %v2332, 2147483648
    %v2490 = vsel %vm2488, %v2489, %v2487
    %v2491 = vrsqrt.pop %v2333
    %v2492 = vmul.f32 %v2333, %v2491
    %vm2493 = vcmp.eq.f32.partialorder %v2333, inf
    %v2494 = vsel %vm2493, %v2333, %v2492
    %vm2495 = vcmp.eq.f32.partialorder %v2333, 0.0
    %v2496 = vand.u32 %v2333, 2147483648
    %v2497 = vsel %vm2495, %v2496, %v2494
    %v2498 = vrsqrt.pop %v2334
    %v2499 = vmul.f32 %v2334, %v2498
    %vm2500 = vcmp.eq.f32.partialorder %v2334, inf
    %v2501 = vsel %vm2500, %v2334, %v2499
    %vm2502 = vcmp.eq.f32.partialorder %v2334, 0.0
    %v2503 = vand.u32 %v2334, 2147483648
    %v2504 = vsel %vm2502, %v2503, %v2501
    %v2505 = vrsqrt.pop %v2335
    %v2506 = vmul.f32 %v2335, %v2505
    %vm2507 = vcmp.eq.f32.partialorder %v2335, inf
    %v2508 = vsel %vm2507, %v2335, %v2506
    %vm2509 = vcmp.eq.f32.partialorder %v2335, 0.0
    %v2510 = vand.u32 %v2335, 2147483648
    %v2511 = vsel %vm2509, %v2510, %v2508
    %v2512 = vrsqrt.pop %v2336
    %v2513 = vmul.f32 %v2336, %v2512
    %vm2514 = vcmp.eq.f32.partialorder %v2336, inf
    %v2515 = vsel %vm2514, %v2336, %v2513
    %vm2516 = vcmp.eq.f32.partialorder %v2336, 0.0
    %v2517 = vand.u32 %v2336, 2147483648
    %v2518 = vsel %vm2516, %v2517, %v2515
    %v2519 = vrsqrt.pop %v2337
    %v2520 = vmul.f32 %v2337, %v2519
    %vm2521 = vcmp.eq.f32.partialorder %v2337, inf
    %v2522 = vsel %vm2521, %v2337, %v2520
    %vm2523 = vcmp.eq.f32.partialorder %v2337, 0.0
    %v2524 = vand.u32 %v2337, 2147483648
    %v2525 = vsel %vm2523, %v2524, %v2522
    %v2526 = vrsqrt.pop %v2338
    %v2527 = vmul.f32 %v2338, %v2526
    %vm2528 = vcmp.eq.f32.partialorder %v2338, inf
    %v2529 = vsel %vm2528, %v2338, %v2527
    %vm2530 = vcmp.eq.f32.partialorder %v2338, 0.0
    %v2531 = vand.u32 %v2338, 2147483648
    %v2532 = vsel %vm2530, %v2531, %v2529
    %v2533 = vrsqrt.pop %v2339
    %v2534 = vmul.f32 %v2339, %v2533
    %vm2535 = vcmp.eq.f32.partialorder %v2339, inf
    %v2536 = vsel %vm2535, %v2339, %v2534
    %vm2537 = vcmp.eq.f32.partialorder %v2339, 0.0
    %v2538 = vand.u32 %v2339, 2147483648
    %v2539 = vsel %vm2537, %v2538, %v2536
    %v2540 = vrsqrt.pop %v2340
    %v2541 = vmul.f32 %v2340, %v2540
    %vm2542 = vcmp.eq.f32.partialorder %v2340, inf
    %v2543 = vsel %vm2542, %v2340, %v2541
    %vm2544 = vcmp.eq.f32.partialorder %v2340, 0.0
    %v2545 = vand.u32 %v2340, 2147483648
    %v2546 = vsel %vm2544, %v2545, %v2543
    %v2547 = vrsqrt.pop %v2341
    %v2548 = vmul.f32 %v2341, %v2547
    %vm2549 = vcmp.eq.f32.partialorder %v2341, inf
    %v2550 = vsel %vm2549, %v2341, %v2548
    %vm2551 = vcmp.eq.f32.partialorder %v2341, 0.0
    %v2552 = vand.u32 %v2341, 2147483648
    %v2553 = vsel %vm2551, %v2552, %v2550
    %v2554 = vrsqrt.pop %v2342
    %v2555 = vmul.f32 %v2342, %v2554
    %vm2556 = vcmp.eq.f32.partialorder %v2342, inf
    %v2557 = vsel %vm2556, %v2342, %v2555
    %vm2558 = vcmp.eq.f32.partialorder %v2342, 0.0
    %v2559 = vand.u32 %v2342, 2147483648
    %v2560 = vsel %vm2558, %v2559, %v2557
    %v2561 = vrsqrt.pop %v2343
    %v2562 = vmul.f32 %v2343, %v2561
    %vm2563 = vcmp.eq.f32.partialorder %v2343, inf
    %v2564 = vsel %vm2563, %v2343, %v2562
    %vm2565 = vcmp.eq.f32.partialorder %v2343, 0.0
    %v2566 = vand.u32 %v2343, 2147483648
    %v2567 = vsel %vm2565, %v2566, %v2564
    %v2568 = vrcp.pop %v2350
    %v2569 = vmul.f32 %v2024, %v2568
    %v2570 = vrcp.pop %v2357
    %v2571 = vmul.f32 %v2025, %v2570
    %v2572 = vrcp.pop %v2364
    %v2573 = vmul.f32 %v2026, %v2572
    %v2574 = vrcp.pop %v2371
    %v2575 = vmul.f32 %v2027, %v2574
    %v2576 = vrcp.pop %v2378
    %v2577 = vmul.f32 %v2028, %v2576
    %v2578 = vrcp.pop %v2385
    %v2579 = vmul.f32 %v2029, %v2578
    %v2580 = vrcp.pop %v2392
    %v2581 = vmul.f32 %v2030, %v2580
    %v2582 = vrcp.pop %v2399
    %v2583 = vmul.f32 %v2031, %v2582
    %v2584 = vrcp.pop %v2406
    %v2585 = vmul.f32 %v2032, %v2584
    %v2586 = vrcp.pop %v2413
    %v2587 = vmul.f32 %v2033, %v2586
    %v2588 = vrcp.pop %v2420
    %v2589 = vmul.f32 %v2034, %v2588
    %v2590 = vrcp.pop %v2427
    %v2591 = vmul.f32 %v2035, %v2590
    %v2592 = vrcp.pop %v2434
    %v2593 = vmul.f32 %v2036, %v2592
    %v2594 = vrcp.pop %v2441
    %v2595 = vmul.f32 %v2037, %v2594
    %v2596 = vrcp.pop %v2448
    %v2597 = vmul.f32 %v2038, %v2596
    %v2598 = vrcp.pop %v2455
    %v2599 = vmul.f32 %v2039, %v2598
    %v2600 = vrcp.pop %v2462
    %v2601 = vmul.f32 %v2040, %v2600
    %v2602 = vrcp.pop %v2469
    %v2603 = vmul.f32 %v2041, %v2602
    %v2604 = vrcp.pop %v2476
    %v2605 = vmul.f32 %v2042, %v2604
    %v2606 = vrcp.pop %v2483
    %v2607 = vmul.f32 %v2043, %v2606
    %v2608 = vrcp.pop %v2490
    %v2609 = vmul.f32 %v2044, %v2608
    %v2610 = vrcp.pop %v2497
    %v2611 = vmul.f32 %v2045, %v2610
    %v2612 = vrcp.pop %v2504
    %v2613 = vmul.f32 %v2046, %v2612
    %v2614 = vrcp.pop %v2511
    %v2615 = vmul.f32 %v2047, %v2614
    %v2616 = vrcp.pop %v2518
    %v2617 = vmul.f32 %v2048, %v2616
    %v2618 = vrcp.pop %v2525
    %v2619 = vmul.f32 %v2049, %v2618
    %v2620 = vrcp.pop %v2532
    %v2621 = vmul.f32 %v2050, %v2620
    %v2622 = vrcp.pop %v2539
    %v2623 = vmul.f32 %v2051, %v2622
    %v2624 = vrcp.pop %v2546
    %v2625 = vmul.f32 %v2052, %v2624
    %v2626 = vrcp.pop %v2553
    %v2627 = vmul.f32 %v2053, %v2626
    %v2628 = vrcp.pop %v2560
    %v2629 = vmul.f32 %v2054, %v2628
    %v2630 = vrcp.pop %v2567
    %v2631 = vmul.f32 %v2055, %v2630
    %v2632 = vld [vmem:[%s8] sm:$0xff]
    %v2633 = vld [vmem:[%s8 + $0x8] sm:$0xff]
    %v2634 = vld [vmem:[%s8 + $0x10] sm:$0xff]
    %v2635 = vld [vmem:[%s8 + $0x18] sm:$0xff]
    %v2640 = vlaneseq
    %v2641 = vshrl.u32 %v2640, 7
    %v2642 = vsub.s32 0, %v2641
    %v2643 = vrot.slane %v2632, %v2642
    %v2644 = vlaneseq
    %v2645 = vshrl.u32 %v2644, 7
    %v2646 = vsub.s32 1, %v2645
    %v2647 = vrot.slane %v2632, %v2646
    %v2648 = vlaneseq
    %v2649 = vshrl.u32 %v2648, 7
    %v2650 = vsub.s32 2, %v2649
    %v2651 = vrot.slane %v2632, %v2650
    %v2652 = vlaneseq
    %v2653 = vshrl.u32 %v2652, 7
    %v2654 = vsub.s32 3, %v2653
    %v2655 = vrot.slane %v2632, %v2654
    %v2656 = vlaneseq
    %v2657 = vshrl.u32 %v2656, 7
    %v2658 = vsub.s32 4, %v2657
    %v2659 = vrot.slane %v2632, %v2658
    %v2660 = vlaneseq
    %v2661 = vshrl.u32 %v2660, 7
    %v2662 = vsub.s32 5, %v2661
    %v2663 = vrot.slane %v2632, %v2662
    %v2664 = vlaneseq
    %v2665 = vshrl.u32 %v2664, 7
    %v2666 = vsub.s32 6, %v2665
    %v2667 = vrot.slane %v2632, %v2666
    %v2668 = vlaneseq
    %v2669 = vshrl.u32 %v2668, 7
    %v2670 = vsub.s32 7, %v2669
    %v2671 = vrot.slane %v2632, %v2670
    %v2672 = vlaneseq
    %v2673 = vshrl.u32 %v2672, 7
    %v2674 = vsub.s32 0, %v2673
    %v2675 = vrot.slane %v2633, %v2674
    %v2676 = vlaneseq
    %v2677 = vshrl.u32 %v2676, 7
    %v2678 = vsub.s32 1, %v2677
    %v2679 = vrot.slane %v2633, %v2678
    %v2680 = vlaneseq
    %v2681 = vshrl.u32 %v2680, 7
    %v2682 = vsub.s32 2, %v2681
    %v2683 = vrot.slane %v2633, %v2682
    %v2684 = vlaneseq
    %v2685 = vshrl.u32 %v2684, 7
    %v2686 = vsub.s32 3, %v2685
    %v2687 = vrot.slane %v2633, %v2686
    %v2688 = vlaneseq
    %v2689 = vshrl.u32 %v2688, 7
    %v2690 = vsub.s32 4, %v2689
    %v2691 = vrot.slane %v2633, %v2690
    %v2692 = vlaneseq
    %v2693 = vshrl.u32 %v2692, 7
    %v2694 = vsub.s32 5, %v2693
    %v2695 = vrot.slane %v2633, %v2694
    %v2696 = vlaneseq
    %v2697 = vshrl.u32 %v2696, 7
    %v2698 = vsub.s32 6, %v2697
    %v2699 = vrot.slane %v2633, %v2698
    %v2700 = vlaneseq
    %v2701 = vshrl.u32 %v2700, 7
    %v2702 = vsub.s32 7, %v2701
    %v2703 = vrot.slane %v2633, %v2702
    %v2704 = vlaneseq
    %v2705 = vshrl.u32 %v2704, 7
    %v2706 = vsub.s32 0, %v2705
    %v2707 = vrot.slane %v2634, %v2706
    %v2708 = vlaneseq
    %v2709 = vshrl.u32 %v2708, 7
    %v2710 = vsub.s32 1, %v2709
    %v2711 = vrot.slane %v2634, %v2710
    %v2712 = vlaneseq
    %v2713 = vshrl.u32 %v2712, 7
    %v2714 = vsub.s32 2, %v2713
    %v2715 = vrot.slane %v2634, %v2714
    %v2716 = vlaneseq
    %v2717 = vshrl.u32 %v2716, 7
    %v2718 = vsub.s32 3, %v2717
    %v2719 = vrot.slane %v2634, %v2718
    %v2720 = vlaneseq
    %v2721 = vshrl.u32 %v2720, 7
    %v2722 = vsub.s32 4, %v2721
    %v2723 = vrot.slane %v2634, %v2722
    %v2724 = vlaneseq
    %v2725 = vshrl.u32 %v2724, 7
    %v2726 = vsub.s32 5, %v2725
    %v2727 = vrot.slane %v2634, %v2726
    %v2728 = vlaneseq
    %v2729 = vshrl.u32 %v2728, 7
    %v2730 = vsub.s32 6, %v2729
    %v2731 = vrot.slane %v2634, %v2730
    %v2732 = vlaneseq
    %v2733 = vshrl.u32 %v2732, 7
    %v2734 = vsub.s32 7, %v2733
    %v2735 = vrot.slane %v2634, %v2734
    %v2736 = vlaneseq
    %v2737 = vshrl.u32 %v2736, 7
    %v2738 = vsub.s32 0, %v2737
    %v2739 = vrot.slane %v2635, %v2738
    %v2740 = vlaneseq
    %v2741 = vshrl.u32 %v2740, 7
    %v2742 = vsub.s32 1, %v2741
    %v2743 = vrot.slane %v2635, %v2742
    %v2744 = vlaneseq
    %v2745 = vshrl.u32 %v2744, 7
    %v2746 = vsub.s32 2, %v2745
    %v2747 = vrot.slane %v2635, %v2746
    %v2748 = vlaneseq
    %v2749 = vshrl.u32 %v2748, 7
    %v2750 = vsub.s32 3, %v2749
    %v2751 = vrot.slane %v2635, %v2750
    %v2752 = vlaneseq
    %v2753 = vshrl.u32 %v2752, 7
    %v2754 = vsub.s32 4, %v2753
    %v2755 = vrot.slane %v2635, %v2754
    %v2756 = vlaneseq
    %v2757 = vshrl.u32 %v2756, 7
    %v2758 = vsub.s32 5, %v2757
    %v2759 = vrot.slane %v2635, %v2758
    %v2760 = vlaneseq
    %v2761 = vshrl.u32 %v2760, 7
    %v2762 = vsub.s32 6, %v2761
    %v2763 = vrot.slane %v2635, %v2762
    %v2764 = vlaneseq
    %v2765 = vshrl.u32 %v2764, 7
    %v2766 = vsub.s32 7, %v2765
    %v2767 = vrot.slane %v2635, %v2766
    %v2800 = vmul.f32 %v2569, %v2643
    %v2801 = vmul.f32 %v2571, %v2647
    %v2802 = vmul.f32 %v2573, %v2651
    %v2803 = vmul.f32 %v2575, %v2655
    %v2804 = vmul.f32 %v2577, %v2659
    %v2805 = vmul.f32 %v2579, %v2663
    %v2806 = vmul.f32 %v2581, %v2667
    %v2807 = vmul.f32 %v2583, %v2671
    %v2808 = vmul.f32 %v2585, %v2675
    %v2809 = vmul.f32 %v2587, %v2679
    %v2810 = vmul.f32 %v2589, %v2683
    %v2811 = vmul.f32 %v2591, %v2687
    %v2812 = vmul.f32 %v2593, %v2691
    %v2813 = vmul.f32 %v2595, %v2695
    %v2814 = vmul.f32 %v2597, %v2699
    %v2815 = vmul.f32 %v2599, %v2703
    %v2816 = vmul.f32 %v2601, %v2707
    %v2817 = vmul.f32 %v2603, %v2711
    %v2818 = vmul.f32 %v2605, %v2715
    %v2819 = vmul.f32 %v2607, %v2719
    %v2820 = vmul.f32 %v2609, %v2723
    %v2821 = vmul.f32 %v2611, %v2727
    %v2822 = vmul.f32 %v2613, %v2731
    %v2823 = vmul.f32 %v2615, %v2735
    %v2824 = vmul.f32 %v2617, %v2739
    %v2825 = vmul.f32 %v2619, %v2743
    %v2826 = vmul.f32 %v2621, %v2747
    %v2827 = vmul.f32 %v2623, %v2751
    %v2828 = vmul.f32 %v2625, %v2755
    %v2829 = vmul.f32 %v2627, %v2759
    %v2830 = vmul.f32 %v2629, %v2763
    %v2831 = vmul.f32 %v2631, %v2767
    %v2832 = vld [vmem:[%s9] sm:$0xff]
    %v2833 = vld [vmem:[%s9 + $0x8] sm:$0xff]
    %v2834 = vld [vmem:[%s9 + $0x10] sm:$0xff]
    %v2835 = vld [vmem:[%s9 + $0x18] sm:$0xff]
    %v2840 = vlaneseq
    %v2841 = vshrl.u32 %v2840, 7
    %v2842 = vsub.s32 0, %v2841
    %v2843 = vrot.slane %v2832, %v2842
    %v2844 = vlaneseq
    %v2845 = vshrl.u32 %v2844, 7
    %v2846 = vsub.s32 1, %v2845
    %v2847 = vrot.slane %v2832, %v2846
    %v2848 = vlaneseq
    %v2849 = vshrl.u32 %v2848, 7
    %v2850 = vsub.s32 2, %v2849
    %v2851 = vrot.slane %v2832, %v2850
    %v2852 = vlaneseq
    %v2853 = vshrl.u32 %v2852, 7
    %v2854 = vsub.s32 3, %v2853
    %v2855 = vrot.slane %v2832, %v2854
    %v2856 = vlaneseq
    %v2857 = vshrl.u32 %v2856, 7
    %v2858 = vsub.s32 4, %v2857
    %v2859 = vrot.slane %v2832, %v2858
    %v2860 = vlaneseq
    %v2861 = vshrl.u32 %v2860, 7
    %v2862 = vsub.s32 5, %v2861
    %v2863 = vrot.slane %v2832, %v2862
    %v2864 = vlaneseq
    %v2865 = vshrl.u32 %v2864, 7
    %v2866 = vsub.s32 6, %v2865
    %v2867 = vrot.slane %v2832, %v2866
    %v2868 = vlaneseq
    %v2869 = vshrl.u32 %v2868, 7
    %v2870 = vsub.s32 7, %v2869
    %v2871 = vrot.slane %v2832, %v2870
    %v2872 = vlaneseq
    %v2873 = vshrl.u32 %v2872, 7
    %v2874 = vsub.s32 0, %v2873
    %v2875 = vrot.slane %v2833, %v2874
    %v2876 = vlaneseq
    %v2877 = vshrl.u32 %v2876, 7
    %v2878 = vsub.s32 1, %v2877
    %v2879 = vrot.slane %v2833, %v2878
    %v2880 = vlaneseq
    %v2881 = vshrl.u32 %v2880, 7
    %v2882 = vsub.s32 2, %v2881
    %v2883 = vrot.slane %v2833, %v2882
    %v2884 = vlaneseq
    %v2885 = vshrl.u32 %v2884, 7
    %v2886 = vsub.s32 3, %v2885
    %v2887 = vrot.slane %v2833, %v2886
    %v2888 = vlaneseq
    %v2889 = vshrl.u32 %v2888, 7
    %v2890 = vsub.s32 4, %v2889
    %v2891 = vrot.slane %v2833, %v2890
    %v2892 = vlaneseq
    %v2893 = vshrl.u32 %v2892, 7
    %v2894 = vsub.s32 5, %v2893
    %v2895 = vrot.slane %v2833, %v2894
    %v2896 = vlaneseq
    %v2897 = vshrl.u32 %v2896, 7
    %v2898 = vsub.s32 6, %v2897
    %v2899 = vrot.slane %v2833, %v2898
    %v2900 = vlaneseq
    %v2901 = vshrl.u32 %v2900, 7
    %v2902 = vsub.s32 7, %v2901
    %v2903 = vrot.slane %v2833, %v2902
    %v2904 = vlaneseq
    %v2905 = vshrl.u32 %v2904, 7
    %v2906 = vsub.s32 0, %v2905
    %v2907 = vrot.slane %v2834, %v2906
    %v2908 = vlaneseq
    %v2909 = vshrl.u32 %v2908, 7
    %v2910 = vsub.s32 1, %v2909
    %v2911 = vrot.slane %v2834, %v2910
    %v2912 = vlaneseq
    %v2913 = vshrl.u32 %v2912, 7
    %v2914 = vsub.s32 2, %v2913
    %v2915 = vrot.slane %v2834, %v2914
    %v2916 = vlaneseq
    %v2917 = vshrl.u32 %v2916, 7
    %v2918 = vsub.s32 3, %v2917
    %v2919 = vrot.slane %v2834, %v2918
    %v2920 = vlaneseq
    %v2921 = vshrl.u32 %v2920, 7
    %v2922 = vsub.s32 4, %v2921
    %v2923 = vrot.slane %v2834, %v2922
    %v2924 = vlaneseq
    %v2925 = vshrl.u32 %v2924, 7
    %v2926 = vsub.s32 5, %v2925
    %v2927 = vrot.slane %v2834, %v2926
    %v2928 = vlaneseq
    %v2929 = vshrl.u32 %v2928, 7
    %v2930 = vsub.s32 6, %v2929
    %v2931 = vrot.slane %v2834, %v2930
    %v2932 = vlaneseq
    %v2933 = vshrl.u32 %v2932, 7
    %v2934 = vsub.s32 7, %v2933
    %v2935 = vrot.slane %v2834, %v2934
    %v2936 = vlaneseq
    %v2937 = vshrl.u32 %v2936, 7
    %v2938 = vsub.s32 0, %v2937
    %v2939 = vrot.slane %v2835, %v2938
    %v2940 = vlaneseq
    %v2941 = vshrl.u32 %v2940, 7
    %v2942 = vsub.s32 1, %v2941
    %v2943 = vrot.slane %v2835, %v2942
    %v2944 = vlaneseq
    %v2945 = vshrl.u32 %v2944, 7
    %v2946 = vsub.s32 2, %v2945
    %v2947 = vrot.slane %v2835, %v2946
    %v2948 = vlaneseq
    %v2949 = vshrl.u32 %v2948, 7
    %v2950 = vsub.s32 3, %v2949
    %v2951 = vrot.slane %v2835, %v2950
    %v2952 = vlaneseq
    %v2953 = vshrl.u32 %v2952, 7
    %v2954 = vsub.s32 4, %v2953
    %v2955 = vrot.slane %v2835, %v2954
    %v2956 = vlaneseq
    %v2957 = vshrl.u32 %v2956, 7
    %v2958 = vsub.s32 5, %v2957
    %v2959 = vrot.slane %v2835, %v2958
    %v2960 = vlaneseq
    %v2961 = vshrl.u32 %v2960, 7
    %v2962 = vsub.s32 6, %v2961
    %v2963 = vrot.slane %v2835, %v2962
    %v2964 = vlaneseq
    %v2965 = vshrl.u32 %v2964, 7
    %v2966 = vsub.s32 7, %v2965
    %v2967 = vrot.slane %v2835, %v2966
    %v3000 = vadd.f32 %v2800, %v2843
    %v3001 = vadd.f32 %v2801, %v2847
    %v3002 = vadd.f32 %v2802, %v2851
    %v3003 = vadd.f32 %v2803, %v2855
    %v3004 = vadd.f32 %v2804, %v2859
    %v3005 = vadd.f32 %v2805, %v2863
    %v3006 = vadd.f32 %v2806, %v2867
    %v3007 = vadd.f32 %v2807, %v2871
    %v3008 = vadd.f32 %v2808, %v2875
    %v3009 = vadd.f32 %v2809, %v2879
    %v3010 = vadd.f32 %v2810, %v2883
    %v3011 = vadd.f32 %v2811, %v2887
    %v3012 = vadd.f32 %v2812, %v2891
    %v3013 = vadd.f32 %v2813, %v2895
    %v3014 = vadd.f32 %v2814, %v2899
    %v3015 = vadd.f32 %v2815, %v2903
    %v3016 = vadd.f32 %v2816, %v2907
    %v3017 = vadd.f32 %v2817, %v2911
    %v3018 = vadd.f32 %v2818, %v2915
    %v3019 = vadd.f32 %v2819, %v2919
    %v3020 = vadd.f32 %v2820, %v2923
    %v3021 = vadd.f32 %v2821, %v2927
    %v3022 = vadd.f32 %v2822, %v2931
    %v3023 = vadd.f32 %v2823, %v2935
    %v3024 = vadd.f32 %v2824, %v2939
    %v3025 = vadd.f32 %v2825, %v2943
    %v3026 = vadd.f32 %v2826, %v2947
    %v3027 = vadd.f32 %v2827, %v2951
    %v3028 = vadd.f32 %v2828, %v2955
    %v3029 = vadd.f32 %v2829, %v2959
    %v3030 = vadd.f32 %v2830, %v2963
    %v3031 = vadd.f32 %v2831, %v2967
    %v3032 = vmax.f32 %v3000, 0.0
    %v3033 = vmax.f32 %v3001, 0.0
    %v3034 = vmax.f32 %v3002, 0.0
    %v3035 = vmax.f32 %v3003, 0.0
    %v3036 = vmax.f32 %v3004, 0.0
    %v3037 = vmax.f32 %v3005, 0.0
    %v3038 = vmax.f32 %v3006, 0.0
    %v3039 = vmax.f32 %v3007, 0.0
    %v3040 = vmax.f32 %v3008, 0.0
    %v3041 = vmax.f32 %v3009, 0.0
    %v3042 = vmax.f32 %v3010, 0.0
    %v3043 = vmax.f32 %v3011, 0.0
    %v3044 = vmax.f32 %v3012, 0.0
    %v3045 = vmax.f32 %v3013, 0.0
    %v3046 = vmax.f32 %v3014, 0.0
    %v3047 = vmax.f32 %v3015, 0.0
    %v3048 = vmax.f32 %v3016, 0.0
    %v3049 = vmax.f32 %v3017, 0.0
    %v3050 = vmax.f32 %v3018, 0.0
    %v3051 = vmax.f32 %v3019, 0.0
    %v3052 = vmax.f32 %v3020, 0.0
    %v3053 = vmax.f32 %v3021, 0.0
    %v3054 = vmax.f32 %v3022, 0.0
    %v3055 = vmax.f32 %v3023, 0.0
    %v3056 = vmax.f32 %v3024, 0.0
    %v3057 = vmax.f32 %v3025, 0.0
    %v3058 = vmax.f32 %v3026, 0.0
    %v3059 = vmax.f32 %v3027, 0.0
    %v3060 = vmax.f32 %v3028, 0.0
    %v3061 = vmax.f32 %v3029, 0.0
    %v3062 = vmax.f32 %v3030, 0.0
    %v3063 = vmax.f32 %v3031, 0.0
    %3064 = vmatprep.subr.mxu0 %v3033
    %3065 = vmatpush1.xpose.msra.mxu0 %v3032
    %3066 = vmatprep.subr.mxu0 0.0
    %3067 = vmatpush1.xpose.msra.mxu0 0.0
    %3068 = vmatprep.subr.mxu0 0.0
    %3069 = vmatpush1.xpose.msra.mxu0 0.0
    %3070 = vmatprep.subr.mxu0 0.0
    %3071 = vmatpush1.xpose.msra.mxu0 0.0
    %3072 = vmatprep.subr.mxu0 0.0
    %3073 = vmatpush1.xpose.msra.mxu0 0.0
    %3074 = vmatprep.subr.mxu0 0.0
    %3075 = vmatpush1.xpose.msra.mxu0 0.0
    %3076 = vmatprep.subr.mxu0 0.0
    %3077 = vmatpush1.xpose.msra.mxu0 0.0
    %3078 = vmatprep.subr.mxu0 0.0
    %3079 = vmatpush1.xpose.msra.mxu0 0.0
    %3080 = vmatprep.subr.mxu0 0.0
    %3081 = vmatpush1.xpose.msra.mxu0 0.0
    %3082 = vmatprep.subr.mxu0 0.0
    %3083 = vmatpush1.xpose.msra.mxu0 0.0
    %3084 = vmatprep.subr.mxu0 0.0
    %3085 = vmatpush1.xpose.msra.mxu0 0.0
    %3086 = vmatprep.subr.mxu0 0.0
    %3087 = vmatpush1.xpose.msra.mxu0 0.0
    %3088 = vmatprep.subr.mxu0 0.0
    %3089 = vmatpush1.xpose.msra.mxu0 0.0
    %3090 = vmatprep.subr.mxu0 0.0
    %3091 = vmatpush1.xpose.msra.mxu0 0.0
    %3092 = vmatprep.subr.mxu0 0.0
    %3093 = vmatpush1.xpose.msra.mxu0 0.0
    %3094 = vmatprep.subr.mxu0 0.0
    %3095 = vmatpush1.xpose.msra.mxu0 0.0
    %3096 = vmatprep.subr.mxu0 0.0
    %3097 = vmatpush1.xpose.msra.mxu0 0.0
    %3098 = vmatprep.subr.mxu0 0.0
    %3099 = vmatpush1.xpose.msra.mxu0 0.0
    %3100 = vmatprep.subr.mxu0 0.0
    %3101 = vmatpush1.xpose.msra.mxu0 0.0
    %3102 = vmatprep.subr.mxu0 0.0
    %3103 = vmatpush1.xpose.msra.mxu0 0.0
    %3104 = vmatprep.subr.mxu0 0.0
    %3105 = vmatpush1.xpose.msra.mxu0 0.0
    %3106 = vmatprep.subr.mxu0 0.0
    %3107 = vmatpush1.xpose.msra.mxu0 0.0
    %3108 = vmatprep.subr.mxu0 0.0
    %3109 = vmatpush1.xpose.msra.mxu0 0.0
    %3110 = vmatprep.subr.mxu0 0.0
    %3111 = vmatpush1.xpose.msra.mxu0 0.0
    %3112 = vmatprep.subr.mxu0 0.0
    %3113 = vmatpush1.xpose.msra.mxu0 0.0
    %3114 = vmatprep.subr.mxu0 0.0
    %3115 = vmatpush1.xpose.msra.mxu0 0.0
    %3116 = vmatprep.subr.mxu0 0.0
    %3117 = vmatpush1.xpose.msra.mxu0 0.0
    %3118 = vmatprep.subr.mxu0 0.0
    %3119 = vmatpush1.xpose.msra.mxu0 0.0
    %3120 = vmatprep.subr.mxu0 0.0
    %3121 = vmatpush1.xpose.msra.mxu0 0.0
    %3122 = vmatprep.subr.mxu0 0.0
    %3123 = vmatpush1.xpose.msra.mxu0 0.0
    %3124 = vmatprep.subr.mxu0 0.0
    %3125 = vmatpush1.xpose.msra.mxu0 0.0
    %3126 = vmatprep.subr.mxu0 0.0
    %3127 = vmatpush1.xpose.msra.mxu0 0.0
    %3128 = vmatprep.mubr.f32.mxu0 %v3033
    %3129 = vmatmul.mubr.f32.gmra.mrb[0].mxu0 %v3032
    %v3130 = vpop.f32.mrb[0].mxu0
    %v3131 = vadd.f32 0.0, %v3130
    %v3132 = vpop.f32.mrb[0].mxu0
    %3133 = vdwg.mxu0
    %3134 = vmatprep.subr.mxu0 %v3035
    %3135 = vmatpush1.xpose.msra.mxu0 %v3034
    %3136 = vmatprep.subr.mxu0 0.0
    %3137 = vmatpush1.xpose.msra.mxu0 0.0
    %3138 = vmatprep.subr.mxu0 0.0
    %3139 = vmatpush1.xpose.msra.mxu0 0.0
    %3140 = vmatprep.subr.mxu0 0.0
    %3141 = vmatpush1.xpose.msra.mxu0 0.0
    %3142 = vmatprep.subr.mxu0 0.0
    %3143 = vmatpush1.xpose.msra.mxu0 0.0
    %3144 = vmatprep.subr.mxu0 0.0
    %3145 = vmatpush1.xpose.msra.mxu0 0.0
    %3146 = vmatprep.subr.mxu0 0.0
    %3147 = vmatpush1.xpose.msra.mxu0 0.0
    %3148 = vmatprep.subr.mxu0 0.0
    %3149 = vmatpush1.xpose.msra.mxu0 0.0
    %3150 = vmatprep.subr.mxu0 0.0
    %3151 = vmatpush1.xpose.msra.mxu0 0.0
    %3152 = vmatprep.subr.mxu0 0.0
    %3153 = vmatpush1.xpose.msra.mxu0 0.0
    %3154 = vmatprep.subr.mxu0 0.0
    %3155 = vmatpush1.xpose.msra.mxu0 0.0
    %3156 = vmatprep.subr.mxu0 0.0
    %3157 = vmatpush1.xpose.msra.mxu0 0.0
    %3158 = vmatprep.subr.mxu0 0.0
    %3159 = vmatpush1.xpose.msra.mxu0 0.0
    %3160 = vmatprep.subr.mxu0 0.0
    %3161 = vmatpush1.xpose.msra.mxu0 0.0
    %3162 = vmatprep.subr.mxu0 0.0
    %3163 = vmatpush1.xpose.msra.mxu0 0.0
    %3164 = vmatprep.subr.mxu0 0.0
    %3165 = vmatpush1.xpose.msra.mxu0 0.0
    %3166 = vmatprep.subr.mxu0 0.0
    %3167 = vmatpush1.xpose.msra.mxu0 0.0
    %3168 = vmatprep.subr.mxu0 0.0
    %3169 = vmatpush1.xpose.msra.mxu0 0.0
    %3170 = vmatprep.subr.mxu0 0.0
    %3171 = vmatpush1.xpose.msra.mxu0 0.0
    %3172 = vmatprep.subr.mxu0 0.0
    %3173 = vmatpush1.xpose.msra.mxu0 0.0
    %3174 = vmatprep.subr.mxu0 0.0
    %3175 = vmatpush1.xpose.msra.mxu0 0.0
    %3176 = vmatprep.subr.mxu0 0.0
    %3177 = vmatpush1.xpose.msra.mxu0 0.0
    %3178 = vmatprep.subr.mxu0 0.0
    %3179 = vmatpush1.xpose.msra.mxu0 0.0
    %3180 = vmatprep.subr.mxu0 0.0
    %3181 = vmatpush1.xpose.msra.mxu0 0.0
    %3182 = vmatprep.subr.mxu0 0.0
    %3183 = vmatpush1.xpose.msra.mxu0 0.0
    %3184 = vmatprep.subr.mxu0 0.0
    %3185 = vmatpush1.xpose.msra.mxu0 0.0
    %3186 = vmatprep.subr.mxu0 0.0
    %3187 = vmatpush1.xpose.msra.mxu0 0.0
    %3188 = vmatprep.subr.mxu0 0.0
    %3189 = vmatpush1.xpose.msra.mxu0 0.0
    %3190 = vmatprep.subr.mxu0 0.0
    %3191 = vmatpush1.xpose.msra.mxu0 0.0
    %3192 = vmatprep.subr.mxu0 0.0
    %3193 = vmatpush1.xpose.msra.mxu0 0.0
    %3194 = vmatprep.subr.mxu0 0.0
    %3195 = vmatpush1.xpose.msra.mxu0 0.0
    %3196 = vmatprep.subr.mxu0 0.0
    %3197 = vmatpush1.xpose.msra.mxu0 0.0
    %3198 = vmatprep.mubr.f32.mxu0 %v3035
    %3199 = vmatmul.mubr.f32.gmra.mrb[0].mxu0 %v3034
    %v3200 = vpop.f32.mrb[0].mxu0
    %v3201 = vadd.f32 %v3131, %v3200
    %v3202 = vpop.f32.mrb[0].mxu0
    %3203 = vdwg.mxu0
    %3204 = vmatprep.subr.mxu0 %v3037
    %3205 = vmatpush1.xpose.msra.mxu0 %v3036
    %3206 = vmatprep.subr.mxu0 0.0
    %3207 = vmatpush1.xpose.msra.mxu0 0.0
    %3208 = vmatprep.subr.mxu0 0.0
    %3209 = vmatpush1.xpose.msra.mxu0 0.0
    %3210 = vmatprep.subr.mxu0 0.0
    %3211 = vmatpush1.xpose.msra.mxu0 0.0
    %3212 = vmatprep.subr.mxu0 0.0
    %3213 = vmatpush1.xpose.msra.mxu0 0.0
    %3214 = vmatprep.subr.mxu0 0.0
    %3215 = vmatpush1.xpose.msra.mxu0 0.0
    %3216 = vmatprep.subr.mxu0 0.0
    %3217 = vmatpush1.xpose.msra.mxu0 0.0
    %3218 = vmatprep.subr.mxu0 0.0
    %3219 = vmatpush1.xpose.msra.mxu0 0.0
    %3220 = vmatprep.subr.mxu0 0.0
    %3221 = vmatpush1.xpose.msra.mxu0 0.0
    %3222 = vmatprep.subr.mxu0 0.0
    %3223 = vmatpush1.xpose.msra.mxu0 0.0
    %3224 = vmatprep.subr.mxu0 0.0
    %3225 = vmatpush1.xpose.msra.mxu0 0.0
    %3226 = vmatprep.subr.mxu0 0.0
    %3227 = vmatpush1.xpose.msra.mxu0 0.0
    %3228 = vmatprep.subr.mxu0 0.0
    %3229 = vmatpush1.xpose.msra.mxu0 0.0
    %3230 = vmatprep.subr.mxu0 0.0
    %3231 = vmatpush1.xpose.msra.mxu0 0.0
    %3232 = vmatprep.subr.mxu0 0.0
    %3233 = vmatpush1.xpose.msra.mxu0 0.0
    %3234 = vmatprep.subr.mxu0 0.0
    %3235 = vmatpush1.xpose.msra.mxu0 0.0
    %3236 = vmatprep.subr.mxu0 0.0
    %3237 = vmatpush1.xpose.msra.mxu0 0.0
    %3238 = vmatprep.subr.mxu0 0.0
    %3239 = vmatpush1.xpose.msra.mxu0 0.0
    %3240 = vmatprep.subr.mxu0 0.0
    %3241 = vmatpush1.xpose.msra.mxu0 0.0
    %3242 = vmatprep.subr.mxu0 0.0
    %3243 = vmatpush1.xpose.msra.mxu0 0.0
    %3244 = vmatprep.subr.mxu0 0.0
    %3245 = vmatpush1.xpose.msra.mxu0 0.0
    %3246 = vmatprep.subr.mxu0 0.0
    %3247 = vmatpush1.xpose.msra.mxu0 0.0
    %3248 = vmatprep.subr.mxu0 0.0
    %3249 = vmatpush1.xpose.msra.mxu0 0.0
    %3250 = vmatprep.subr.mxu0 0.0
    %3251 = vmatpush1.xpose.msra.mxu0 0.0
    %3252 = vmatprep.subr.mxu0 0.0
    %3253 = vmatpush1.xpose.msra.mxu0 0.0
    %3254 = vmatprep.subr.mxu0 0.0
    %3255 = vmatpush1.xpose.msra.mxu0 0.0
    %3256 = vmatprep.subr.mxu0 0.0
    %3257 = vmatpush1.xpose.msra.mxu0 0.0
    %3258 = vmatprep.subr.mxu0 0.0
    %3259 = vmatpush1.xpose.msra.mxu0 0.0
    %3260 = vmatprep.subr.mxu0 0.0
    %3261 = vmatpush1.xpose.msra.mxu0 0.0
    %3262 = vmatprep.subr.mxu0 0.0
    %3263 = vmatpush1.xpose.msra.mxu0 0.0
    %3264 = vmatprep.subr.mxu0 0.0
    %3265 = vmatpush1.xpose.msra.mxu0 0.0
    %3266 = vmatprep.subr.mxu0 0.0
    %3267 = vmatpush1.xpose.msra.mxu0 0.0
    %3268 = vmatprep.mubr.f32.mxu0 %v3037
    %3269 = vmatmul.mubr.f32.gmra.mrb[0].mxu0 %v3036
    %v3270 = vpop.f32.mrb[0].mxu0
    %v3271 = vadd.f32 %v3201, %v3270
    %v3272 = vpop.f32.mrb[0].mxu0
    %3273 = vdwg.mxu0
    %3274 = vmatprep.subr.mxu0 %v3039
    %3275 = vmatpush1.xpose.msra.mxu0 %v3038
    %3276 = vmatprep.subr.mxu0 0.0
    %3277 = vmatpush1.xpose.msra.mxu0 0.0
    %3278 = vmatprep.subr.mxu0 0.0
    %3279 = vmatpush1.xpose.msra.mxu0 0.0
    %3280 = vmatprep.subr.mxu0 0.0
    %3281 = vmatpush1.xpose.msra.mxu0 0.0
    %3282 = vmatprep.subr.mxu0 0.0
    %3283 = vmatpush1.xpose.msra.mxu0 0.0
    %3284 = vmatprep.subr.mxu0 0.0
    %3285 = vmatpush1.xpose.msra.mxu0 0.0
    %3286 = vmatprep.subr.mxu0 0.0
    %3287 = vmatpush1.xpose.msra.mxu0 0.0
    %3288 = vmatprep.subr.mxu0 0.0
    %3289 = vmatpush1.xpose.msra.mxu0 0.0
    %3290 = vmatprep.subr.mxu0 0.0
    %3291 = vmatpush1.xpose.msra.mxu0 0.0
    %3292 = vmatprep.subr.mxu0 0.0
    %3293 = vmatpush1.xpose.msra.mxu0 0.0
    %3294 = vmatprep.subr.mxu0 0.0
    %3295 = vmatpush1.xpose.msra.mxu0 0.0
    %3296 = vmatprep.subr.mxu0 0.0
    %3297 = vmatpush1.xpose.msra.mxu0 0.0
    %3298 = vmatprep.subr.mxu0 0.0
    %3299 = vmatpush1.xpose.msra.mxu0 0.0
    %3300 = vmatprep.subr.mxu0 0.0
    %3301 = vmatpush1.xpose.msra.mxu0 0.0
    %3302 = vmatprep.subr.mxu0 0.0
    %3303 = vmatpush1.xpose.msra.mxu0 0.0
    %3304 = vmatprep.subr.mxu0 0.0
    %3305 = vmatpush1.xpose.msra.mxu0 0.0
    %3306 = vmatprep.subr.mxu0 0.0
    %3307 = vmatpush1.xpose.msra.mxu0 0.0
    %3308 = vmatprep.subr.mxu0 0.0
    %3309 = vmatpush1.xpose.msra.mxu0 0.0
    %3310 = vmatprep.subr.mxu0 0.0
    %3311 = vmatpush1.xpose.msra.mxu0 0.0
    %3312 = vmatprep.subr.mxu0 0.0
    %3313 = vmatpush1.xpose.msra.mxu0 0.0
    %3314 = vmatprep.subr.mxu0 0.0
    %3315 = vmatpush1.xpose.msra.mxu0 0.0
    %3316 = vmatprep.subr.mxu0 0.0
    %3317 = vmatpush1.xpose.msra.mxu0 0.0
    %3318 = vmatprep.subr.mxu0 0.0
    %3319 = vmatpush1.xpose.msra.mxu0 0.0
    %3320 = vmatprep.subr.mxu0 0.0
    %3321 = vmatpush1.xpose.msra.mxu0 0.0
    %3322 = vmatprep.subr.mxu0 0.0
    %3323 = vmatpush1.xpose.msra.mxu0 0.0
    %3324 = vmatprep.subr.mxu0 0.0
    %3325 = vmatpush1.xpose.msra.mxu0 0.0
    %3326 = vmatprep.subr.mxu0 0.0
    %3327 = vmatpush1.xpose.msra.mxu0 0.0
    %3328 = vmatprep.subr.mxu0 0.0
    %3329 = vmatpush1.xpose.msra.mxu0 0.0
    %3330 = vmatprep.subr.mxu0 0.0
    %3331 = vmatpush1.xpose.msra.mxu0 0.0
    %3332 = vmatprep.subr.mxu0 0.0
    %3333 = vmatpush1.xpose.msra.mxu0 0.0
    %3334 = vmatprep.subr.mxu0 0.0
    %3335 = vmatpush1.xpose.msra.mxu0 0.0
    %3336 = vmatprep.subr.mxu0 0.0
    %3337 = vmatpush1.xpose.msra.mxu0 0.0
    %3338 = vmatprep.mubr.f32.mxu0 %v3039
    %3339 = vmatmul.mubr.f32.gmra.mrb[0].mxu0 %v3038
    %v3340 = vpop.f32.mrb[0].mxu0
    %v3341 = vadd.f32 %v3271, %v3340
    %v3342 = vpop.f32.mrb[0].mxu0
    %3343 = vdwg.mxu0
    %3344 = vmatprep.subr.mxu0 %v3041
    %3345 = vmatpush1.xpose.msra.mxu0 %v3040
    %3346 = vmatprep.subr.mxu0 0.0
    %3347 = vmatpush1.xpose.msra.mxu0 0.0
    %3348 = vmatprep.subr.mxu0 0.0
    %3349 = vmatpush1.xpose.msra.mxu0 0.0
    %3350 = vmatprep.subr.mxu0 0.0
    %3351 = vmatpush1.xpose.msra.mxu0 0.0
    %3352 = vmatprep.subr.mxu0 0.0
    %3353 = vmatpush1.xpose.msra.mxu0 0.0
    %3354 = vmatprep.subr.mxu0 0.0
    %3355 = vmatpush1.xpose.msra.mxu0 0.0
    %3356 = vmatprep.subr.mxu0 0.0
    %3357 = vmatpush1.xpose.msra.mxu0 0.0
    %3358 = vmatprep.subr.mxu0 0.0
    %3359 = vmatpush1.xpose.msra.mxu0 0.0
    %3360 = vmatprep.subr.mxu0 0.0
    %3361 = vmatpush1.xpose.msra.mxu0 0.0
    %3362 = vmatprep.subr.mxu0 0.0
    %3363 = vmatpush1.xpose.msra.mxu0 0.0
    %3364 = vmatprep.subr.mxu0 0.0
    %3365 = vmatpush1.xpose.msra.mxu0 0.0
    %3366 = vmatprep.subr.mxu0 0.0
    %3367 = vmatpush1.xpose.msra.mxu0 0.0
    %3368 = vmatprep.subr.mxu0 0.0
    %3369 = vmatpush1.xpose.msra.mxu0 0.0
    %3370 = vmatprep.subr.mxu0 0.0
    %3371 = vmatpush1.xpose.msra.mxu0 0.0
    %3372 = vmatprep.subr.mxu0 0.0
    %3373 = vmatpush1.xpose.msra.mxu0 0.0
    %3374 = vmatprep.subr.mxu0 0.0
    %3375 = vmatpush1.xpose.msra.mxu0 0.0
    %3376 = vmatprep.subr.mxu0 0.0
    %3377 = vmatpush1.xpose.msra.mxu0 0.0
    %3378 = vmatprep.subr.mxu0 0.0
    %3379 = vmatpush1.xpose.msra.mxu0 0.0
    %3380 = vmatprep.subr.mxu0 0.0
    %3381 = vmatpush1.xpose.msra.mxu0 0.0
    %3382 = vmatprep.subr.mxu0 0.0
    %3383 = vmatpush1.xpose.msra.mxu0 0.0
    %3384 = vmatprep.subr.mxu0 0.0
    %3385 = vmatpush1.xpose.msra.mxu0 0.0
    %3386 = vmatprep.subr.mxu0 0.0
    %3387 = vmatpush1.xpose.msra.mxu0 0.0
    %3388 = vmatprep.subr.mxu0 0.0
    %3389 = vmatpush1.xpose.msra.mxu0 0.0
    %3390 = vmatprep.subr.mxu0 0.0
    %3391 = vmatpush1.xpose.msra.mxu0 0.0
    %3392 = vmatprep.subr.mxu0 0.0
    %3393 = vmatpush1.xpose.msra.mxu0 0.0
    %3394 = vmatprep.subr.mxu0 0.0
    %3395 = vmatpush1.xpose.msra.mxu0 0.0
    %3396 = vmatprep.subr.mxu0 0.0
    %3397 = vmatpush1.xpose.msra.mxu0 0.0
    %3398 = vmatprep.subr.mxu0 0.0
    %3399 = vmatpush1.xpose.msra.mxu0 0.0
    %3400 = vmatprep.subr.mxu0 0.0
    %3401 = vmatpush1.xpose.msra.mxu0 0.0
    %3402 = vmatprep.subr.mxu0 0.0
    %3403 = vmatpush1.xpose.msra.mxu0 0.0
    %3404 = vmatprep.subr.mxu0 0.0
    %3405 = vmatpush1.xpose.msra.mxu0 0.0
    %3406 = vmatprep.subr.mxu0 0.0
    %3407 = vmatpush1.xpose.msra.mxu0 0.0
    %3408 = vmatprep.mubr.f32.mxu0 %v3041
    %3409 = vmatmul.mubr.f32.gmra.mrb[0].mxu0 %v3040
    %v3410 = vpop.f32.mrb[0].mxu0
    %v3411 = vadd.f32 %v3341, %v3410
    %v3412 = vpop.f32.mrb[0].mxu0
    %3413 = vdwg.mxu0
    %3414 = vmatprep.subr.mxu0 %v3043
    %3415 = vmatpush1.xpose.msra.mxu0 %v3042
    %3416 = vmatprep.subr.mxu0 0.0
    %3417 = vmatpush1.xpose.msra.mxu0 0.0
    %3418 = vmatprep.subr.mxu0 0.0
    %3419 = vmatpush1.xpose.msra.mxu0 0.0
    %3420 = vmatprep.subr.mxu0 0.0
    %3421 = vmatpush1.xpose.msra.mxu0 0.0
    %3422 = vmatprep.subr.mxu0 0.0
    %3423 = vmatpush1.xpose.msra.mxu0 0.0
    %3424 = vmatprep.subr.mxu0 0.0
    %3425 = vmatpush1.xpose.msra.mxu0 0.0
    %3426 = vmatprep.subr.mxu0 0.0
    %3427 = vmatpush1.xpose.msra.mxu0 0.0
    %3428 = vmatprep.subr.mxu0 0.0
    %3429 = vmatpush1.xpose.msra.mxu0 0.0
    %3430 = vmatprep.subr.mxu0 0.0
    %3431 = vmatpush1.xpose.msra.mxu0 0.0
    %3432 = vmatprep.subr.mxu0 0.0
    %3433 = vmatpush1.xpose.msra.mxu0 0.0
    %3434 = vmatprep.subr.mxu0 0.0
    %3435 = vmatpush1.xpose.msra.mxu0 0.0
    %3436 = vmatprep.subr.mxu0 0.0
    %3437 = vmatpush1.xpose.msra.mxu0 0.0
    %3438 = vmatprep.subr.mxu0 0.0
    %3439 = vmatpush1.xpose.msra.mxu0 0.0
    %3440 = vmatprep.subr.mxu0 0.0
    %3441 = vmatpush1.xpose.msra.mxu0 0.0
    %3442 = vmatprep.subr.mxu0 0.0
    %3443 = vmatpush1.xpose.msra.mxu0 0.0
    %3444 = vmatprep.subr.mxu0 0.0
    %3445 = vmatpush1.xpose.msra.mxu0 0.0
    %3446 = vmatprep.subr.mxu0 0.0
    %3447 = vmatpush1.xpose.msra.mxu0 0.0
    %3448 = vmatprep.subr.mxu0 0.0
    %3449 = vmatpush1.xpose.msra.mxu0 0.0
    %3450 = vmatprep.subr.mxu0 0.0
    %3451 = vmatpush1.xpose.msra.mxu0 0.0
    %3452 = vmatprep.subr.mxu0 0.0
    %3453 = vmatpush1.xpose.msra.mxu0 0.0
    %3454 = vmatprep.subr.mxu0 0.0
    %3455 = vmatpush1.xpose.msra.mxu0 0.0
    %3456 = vmatprep.subr.mxu0 0.0
    %3457 = vmatpush1.xpose.msra.mxu0 0.0
    %3458 = vmatprep.subr.mxu0 0.0
    %3459 = vmatpush1.xpose.msra.mxu0 0.0
    %3460 = vmatprep.subr.mxu0 0.0
    %3461 = vmatpush1.xpose.msra.mxu0 0.0
    %3462 = vmatprep.subr.mxu0 0.0
    %3463 = vmatpush1.xpose.msra.mxu0 0.0
    %3464 = vmatprep.subr.mxu0 0.0
    %3465 = vmatpush1.xpose.msra.mxu0 0.0
    %3466 = vmatprep.subr.mxu0 0.0
    %3467 = vmatpush1.xpose.msra.mxu0 0.0
    %3468 = vmatprep.subr.mxu0 0.0
    %3469 = vmatpush1.xpose.msra.mxu0 0.0
    %3470 = vmatprep.subr.mxu0 0.0
    %3471 = vmatpush1.xpose.msra.mxu0 0.0
    %3472 = vmatprep.subr.mxu0 0.0
    %3473 = vmatpush1.xpose.msra.mxu0 0.0
    %3474 = vmatprep.subr.mxu0 0.0
    %3475 = vmatpush1.xpose.msra.mxu0 0.0
    %3476 = vmatprep.subr.mxu0 0.0
    %3477 = vmatpush1.xpose.msra.mxu0 0.0
    %3478 = vmatprep.mubr.f32.mxu0 %v3043
    %3479 = vmatmul.mubr.f32.gmra.mrb[0].mxu0 %v3042
    %v3480 = vpop.f32.mrb[0].mxu0
    %v3481 = vadd.f32 %v3411, %v3480
    %v3482 = vpop.f32.mrb[0].mxu0
    %3483 = vdwg.mxu0
    %3484 = vmatprep.subr.mxu0 %v3045
    %3485 = vmatpush1.xpose.msra.mxu0 %v3044
    %3486 = vmatprep.subr.mxu0 0.0
    %3487 = vmatpush1.xpose.msra.mxu0 0.0
    %3488 = vmatprep.subr.mxu0 0.0
    %3489 = vmatpush1.xpose.msra.mxu0 0.0
    %3490 = vmatprep.subr.mxu0 0.0
    %3491 = vmatpush1.xpose.msra.mxu0 0.0
    %3492 = vmatprep.subr.mxu0 0.0
    %3493 = vmatpush1.xpose.msra.mxu0 0.0
    %3494 = vmatprep.subr.mxu0 0.0
    %3495 = vmatpush1.xpose.msra.mxu0 0.0
    %3496 = vmatprep.subr.mxu0 0.0
    %3497 = vmatpush1.xpose.msra.mxu0 0.0
    %3498 = vmatprep.subr.mxu0 0.0
    %3499 = vmatpush1.xpose.msra.mxu0 0.0
    %3500 = vmatprep.subr.mxu0 0.0
    %3501 = vmatpush1.xpose.msra.mxu0 0.0
    %3502 = vmatprep.subr.mxu0 0.0
    %3503 = vmatpush1.xpose.msra.mxu0 0.0
    %3504 = vmatprep.subr.mxu0 0.0
    %3505 = vmatpush1.xpose.msra.mxu0 0.0
    %3506 = vmatprep.subr.mxu0 0.0
    %3507 = vmatpush1.xpose.msra.mxu0 0.0
    %3508 = vmatprep.subr.mxu0 0.0
    %3509 = vmatpush1.xpose.msra.mxu0 0.0
    %3510 = vmatprep.subr.mxu0 0.0
    %3511 = vmatpush1.xpose.msra.mxu0 0.0
    %3512 = vmatprep.subr.mxu0 0.0
    %3513 = vmatpush1.xpose.msra.mxu0 0.0
    %3514 = vmatprep.subr.mxu0 0.0
    %3515 = vmatpush1.xpose.msra.mxu0 0.0
    %3516 = vmatprep.subr.mxu0 0.0
    %3517 = vmatpush1.xpose.msra.mxu0 0.0
    %3518 = vmatprep.subr.mxu0 0.0
    %3519 = vmatpush1.xpose.msra.mxu0 0.0
    %3520 = vmatprep.subr.mxu0 0.0
    %3521 = vmatpush1.xpose.msra.mxu0 0.0
    %3522 = vmatprep.subr.mxu0 0.0
    %3523 = vmatpush1.xpose.msra.mxu0 0.0
    %3524 = vmatprep.subr.mxu0 0.0
    %3525 = vmatpush1.xpose.msra.mxu0 0.0
    %3526 = vmatprep.subr.mxu0 0.0
    %3527 = vmatpush1.xpose.msra.mxu0 0.0
    %3528 = vmatprep.subr.mxu0 0.0
    %3529 = vmatpush1.xpose.msra.mxu0 0.0
    %3530 = vmatprep.subr.mxu0 0.0
    %3531 = vmatpush1.xpose.msra.mxu0 0.0
    %3532 = vmatprep.subr.mxu0 0.0
    %3533 = vmatpush1.xpose.msra.mxu0 0.0
    %3534 = vmatprep.subr.mxu0 0.0
    %3535 = vmatpush1.xpose.msra.mxu0 0.0
    %3536 = vmatprep.subr.mxu0 0.0
    %3537 = vmatpush1.xpose.msra.mxu0 0.0
    %3538 = vmatprep.subr.mxu0 0.0
    %3539 = vmatpush1.xpose.msra.mxu0 0.0
    %3540 = vmatprep.subr.mxu0 0.0
    %3541 = vmatpush1.xpose.msra.mxu0 0.0
    %3542 = vmatprep.subr.mxu0 0.0
    %3543 = vmatpush1.xpose.msra.mxu0 0.0
    %3544 = vmatprep.subr.mxu0 0.0
    %3545 = vmatpush1.xpose.msra.mxu0 0.0
    %3546 = vmatprep.subr.mxu0 0.0
    %3547 = vmatpush1.xpose.msra.mxu0 0.0
    %3548 = vmatprep.mubr.f32.mxu0 %v3045
    %3549 = vmatmul.mubr.f32.gmra.mrb[0].mxu0 %v3044
    %v3550 = vpop.f32.mrb[0].mxu0
    %v3551 = vadd.f32 %v3481, %v3550
    %v3552 = vpop.f32.mrb[0].mxu0
    %3553 = vdwg.mxu0
    %3554 = vmatprep.subr.mxu0 %v3047
    %3555 = vmatpush1.xpose.msra.mxu0 %v3046
    %3556 = vmatprep.subr.mxu0 0.0
    %3557 = vmatpush1.xpose.msra.mxu0 0.0
    %3558 = vmatprep.subr.mxu0 0.0
    %3559 = vmatpush1.xpose.msra.mxu0 0.0
    %3560 = vmatprep.subr.mxu0 0.0
    %3561 = vmatpush1.xpose.msra.mxu0 0.0
    %3562 = vmatprep.subr.mxu0 0.0
    %3563 = vmatpush1.xpose.msra.mxu0 0.0
    %3564 = vmatprep.subr.mxu0 0.0
    %3565 = vmatpush1.xpose.msra.mxu0 0.0
    %3566 = vmatprep.subr.mxu0 0.0
    %3567 = vmatpush1.xpose.msra.mxu0 0.0
    %3568 = vmatprep.subr.mxu0 0.0
    %3569 = vmatpush1.xpose.msra.mxu0 0.0
    %3570 = vmatprep.subr.mxu0 0.0
    %3571 = vmatpush1.xpose.msra.mxu0 0.0
    %3572 = vmatprep.subr.mxu0 0.0
    %3573 = vmatpush1.xpose.msra.mxu0 0.0
    %3574 = vmatprep.subr.mxu0 0.0
    %3575 = vmatpush1.xpose.msra.mxu0 0.0
    %3576 = vmatprep.subr.mxu0 0.0
    %3577 = vmatpush1.xpose.msra.mxu0 0.0
    %3578 = vmatprep.subr.mxu0 0.0
    %3579 = vmatpush1.xpose.msra.mxu0 0.0
    %3580 = vmatprep.subr.mxu0 0.0
    %3581 = vmatpush1.xpose.msra.mxu0 0.0
    %3582 = vmatprep.subr.mxu0 0.0
    %3583 = vmatpush1.xpose.msra.mxu0 0.0
    %3584 = vmatprep.subr.mxu0 0.0
    %3585 = vmatpush1.xpose.msra.mxu0 0.0
    %3586 = vmatprep.subr.mxu0 0.0
    %3587 = vmatpush1.xpose.msra.mxu0 0.0
    %3588 = vmatprep.subr.mxu0 0.0
    %3589 = vmatpush1.xpose.msra.mxu0 0.0
    %3590 = vmatprep.subr.mxu0 0.0
    %3591 = vmatpush1.xpose.msra.mxu0 0.0
    %3592 = vmatprep.subr.mxu0 0.0
    %3593 = vmatpush1.xpose.msra.mxu0 0.0
    %3594 = vmatprep.subr.mxu0 0.0
    %3595 = vmatpush1.xpose.msra.mxu0 0.0
    %3596 = vmatprep.subr.mxu0 0.0
    %3597 = vmatpush1.xpose.msra.mxu0 0.0
    %3598 = vmatprep.subr.mxu0 0.0
    %3599 = vmatpush1.xpose.msra.mxu0 0.0
    %3600 = vmatprep.subr.mxu0 0.0
    %3601 = vmatpush1.xpose.msra.mxu0 0.0
    %3602 = vmatprep.subr.mxu0 0.0
    %3603 = vmatpush1.xpose.msra.mxu0 0.0
    %3604 = vmatprep.subr.mxu0 0.0
    %3605 = vmatpush1.xpose.msra.mxu0 0.0
    %3606 = vmatprep.subr.mxu0 0.0
    %3607 = vmatpush1.xpose.msra.mxu0 0.0
    %3608 = vmatprep.subr.mxu0 0.0
    %3609 = vmatpush1.xpose.msra.mxu0 0.0
    %3610 = vmatprep.subr.mxu0 0.0
    %3611 = vmatpush1.xpose.msra.mxu0 0.0
    %3612 = vmatprep.subr.mxu0 0.0
    %3613 = vmatpush1.xpose.msra.mxu0 0.0
    %3614 = vmatprep.subr.mxu0 0.0
    %3615 = vmatpush1.xpose.msra.mxu0 0.0
    %3616 = vmatprep.subr.mxu0 0.0
    %3617 = vmatpush1.xpose.msra.mxu0 0.0
    %3618 = vmatprep.mubr.f32.mxu0 %v3047
    %3619 = vmatmul.mubr.f32.gmra.mrb[0].mxu0 %v3046
    %v3620 = vpop.f32.mrb[0].mxu0
    %v3621 = vadd.f32 %v3551, %v3620
    %v3622 = vpop.f32.mrb[0].mxu0
    %3623 = vdwg.mxu0
    %3624 = vmatprep.subr.mxu0 %v3049
    %3625 = vmatpush1.xpose.msra.mxu0 %v3048
    %3626 = vmatprep.subr.mxu0 0.0
    %3627 = vmatpush1.xpose.msra.mxu0 0.0
    %3628 = vmatprep.subr.mxu0 0.0
    %3629 = vmatpush1.xpose.msra.mxu0 0.0
    %3630 = vmatprep.subr.mxu0 0.0
    %3631 = vmatpush1.xpose.msra.mxu0 0.0
    %3632 = vmatprep.subr.mxu0 0.0
    %3633 = vmatpush1.xpose.msra.mxu0 0.0
    %3634 = vmatprep.subr.mxu0 0.0
    %3635 = vmatpush1.xpose.msra.mxu0 0.0
    %3636 = vmatprep.subr.mxu0 0.0
    %3637 = vmatpush1.xpose.msra.mxu0 0.0
    %3638 = vmatprep.subr.mxu0 0.0
    %3639 = vmatpush1.xpose.msra.mxu0 0.0
    %3640 = vmatprep.subr.mxu0 0.0
    %3641 = vmatpush1.xpose.msra.mxu0 0.0
    %3642 = vmatprep.subr.mxu0 0.0
    %3643 = vmatpush1.xpose.msra.mxu0 0.0
    %3644 = vmatprep.subr.mxu0 0.0
    %3645 = vmatpush1.xpose.msra.mxu0 0.0
    %3646 = vmatprep.subr.mxu0 0.0
    %3647 = vmatpush1.xpose.msra.mxu0 0.0
    %3648 = vmatprep.subr.mxu0 0.0
    %3649 = vmatpush1.xpose.msra.mxu0 0.0
    %3650 = vmatprep.subr.mxu0 0.0
    %3651 = vmatpush1.xpose.msra.mxu0 0.0
    %3652 = vmatprep.subr.mxu0 0.0
    %3653 = vmatpush1.xpose.msra.mxu0 0.0
    %3654 = vmatprep.subr.mxu0 0.0
    %3655 = vmatpush1.xpose.msra.mxu0 0.0
    %3656 = vmatprep.subr.mxu0 0.0
    %3657 = vmatpush1.xpose.msra.mxu0 0.0
    %3658 = vmatprep.subr.mxu0 0.0
    %3659 = vmatpush1.xpose.msra.mxu0 0.0
    %3660 = vmatprep.subr.mxu0 0.0
    %3661 = vmatpush1.xpose.msra.mxu0 0.0
    %3662 = vmatprep.subr.mxu0 0.0
    %3663 = vmatpush1.xpose.msra.mxu0 0.0
    %3664 = vmatprep.subr.mxu0 0.0
    %3665 = vmatpush1.xpose.msra.mxu0 0.0
    %3666 = vmatprep.subr.mxu0 0.0
    %3667 = vmatpush1.xpose.msra.mxu0 0.0
    %3668 = vmatprep.subr.mxu0 0.0
    %3669 = vmatpush1.xpose.msra.mxu0 0.0
    %3670 = vmatprep.subr.mxu0 0.0
    %3671 = vmatpush1.xpose.msra.mxu0 0.0
    %3672 = vmatprep.subr.mxu0 0.0
    %3673 = vmatpush1.xpose.msra.mxu0 0.0
    %3674 = vmatprep.subr.mxu0 0.0
    %3675 = vmatpush1.xpose.msra.mxu0 0.0
    %3676 = vmatprep.subr.mxu0 0.0
    %3677 = vmatpush1.xpose.msra.mxu0 0.0
    %3678 = vmatprep.subr.mxu0 0.0
    %3679 = vmatpush1.xpose.msra.mxu0 0.0
    %3680 = vmatprep.subr.mxu0 0.0
    %3681 = vmatpush1.xpose.msra.mxu0 0.0
    %3682 = vmatprep.subr.mxu0 0.0
    %3683 = vmatpush1.xpose.msra.mxu0 0.0
    %3684 = vmatprep.subr.mxu0 0.0
    %3685 = vmatpush1.xpose.msra.mxu0 0.0
    %3686 = vmatprep.subr.mxu0 0.0
    %3687 = vmatpush1.xpose.msra.mxu0 0.0
    %3688 = vmatprep.mubr.f32.mxu0 %v3049
    %3689 = vmatmul.mubr.f32.gmra.mrb[0].mxu0 %v3048
    %v3690 = vpop.f32.mrb[0].mxu0
    %v3691 = vadd.f32 %v3621, %v3690
    %v3692 = vpop.f32.mrb[0].mxu0
    %3693 = vdwg.mxu0
    %3694 = vmatprep.subr.mxu0 %v3051
    %3695 = vmatpush1.xpose.msra.mxu0 %v3050
    %3696 = vmatprep.subr.mxu0 0.0
    %3697 = vmatpush1.xpose.msra.mxu0 0.0
    %3698 = vmatprep.subr.mxu0 0.0
    %3699 = vmatpush1.xpose.msra.mxu0 0.0
    %3700 = vmatprep.subr.mxu0 0.0
    %3701 = vmatpush1.xpose.msra.mxu0 0.0
    %3702 = vmatprep.subr.mxu0 0.0
    %3703 = vmatpush1.xpose.msra.mxu0 0.0
    %3704 = vmatprep.subr.mxu0 0.0
    %3705 = vmatpush1.xpose.msra.mxu0 0.0
    %3706 = vmatprep.subr.mxu0 0.0
    %3707 = vmatpush1.xpose.msra.mxu0 0.0
    %3708 = vmatprep.subr.mxu0 0.0
    %3709 = vmatpush1.xpose.msra.mxu0 0.0
    %3710 = vmatprep.subr.mxu0 0.0
    %3711 = vmatpush1.xpose.msra.mxu0 0.0
    %3712 = vmatprep.subr.mxu0 0.0
    %3713 = vmatpush1.xpose.msra.mxu0 0.0
    %3714 = vmatprep.subr.mxu0 0.0
    %3715 = vmatpush1.xpose.msra.mxu0 0.0
    %3716 = vmatprep.subr.mxu0 0.0
    %3717 = vmatpush1.xpose.msra.mxu0 0.0
    %3718 = vmatprep.subr.mxu0 0.0
    %3719 = vmatpush1.xpose.msra.mxu0 0.0
    %3720 = vmatprep.subr.mxu0 0.0
    %3721 = vmatpush1.xpose.msra.mxu0 0.0
    %3722 = vmatprep.subr.mxu0 0.0
    %3723 = vmatpush1.xpose.msra.mxu0 0.0
    %3724 = vmatprep.subr.mxu0 0.0
    %3725 = vmatpush1.xpose.msra.mxu0 0.0
    %3726 = vmatprep.subr.mxu0 0.0
    %3727 = vmatpush1.xpose.msra.mxu0 0.0
    %3728 = vmatprep.subr.mxu0 0.0
    %3729 = vmatpush1.xpose.msra.mxu0 0.0
    %3730 = vmatprep.subr.mxu0 0.0
    %3731 = vmatpush1.xpose.msra.mxu0 0.0
    %3732 = vmatprep.subr.mxu0 0.0
    %3733 = vmatpush1.xpose.msra.mxu0 0.0
    %3734 = vmatprep.subr.mxu0 0.0
    %3735 = vmatpush1.xpose.msra.mxu0 0.0
    %3736 = vmatprep.subr.mxu0 0.0
    %3737 = vmatpush1.xpose.msra.mxu0 0.0
    %3738 = vmatprep.subr.mxu0 0.0
    %3739 = vmatpush1.xpose.msra.mxu0 0.0
    %3740 = vmatprep.subr.mxu0 0.0
    %3741 = vmatpush1.xpose.msra.mxu0 0.0
    %3742 = vmatprep.subr.mxu0 0.0
    %3743 = vmatpush1.xpose.msra.mxu0 0.0
    %3744 = vmatprep.subr.mxu0 0.0
    %3745 = vmatpush1.xpose.msra.mxu0 0.0
    %3746 = vmatprep.subr.mxu0 0.0
    %3747 = vmatpush1.xpose.msra.mxu0 0.0
    %3748 = vmatprep.subr.mxu0 0.0
    %3749 = vmatpush1.xpose.msra.mxu0 0.0
    %3750 = vmatprep.subr.mxu0 0.0
    %3751 = vmatpush1.xpose.msra.mxu0 0.0
    %3752 = vmatprep.subr.mxu0 0.0
    %3753 = vmatpush1.xpose.msra.mxu0 0.0
    %3754 = vmatprep.subr.mxu0 0.0
    %3755 = vmatpush1.xpose.msra.mxu0 0.0
    %3756 = vmatprep.subr.mxu0 0.0
    %3757 = vmatpush1.xpose.msra.mxu0 0.0
    %3758 = vmatprep.mubr.f32.mxu0 %v3051
    %3759 = vmatmul.mubr.f32.gmra.mrb[0].mxu0 %v3050
    %v3760 = vpop.f32.mrb[0].mxu0
    %v3761 = vadd.f32 %v3691, %v3760
    %v3762 = vpop.f32.mrb[0].mxu0
    %3763 = vdwg.mxu0
    %3764 = vmatprep.subr.mxu0 %v3053
    %3765 = vmatpush1.xpose.msra.mxu0 %v3052
    %3766 = vmatprep.subr.mxu0 0.0
    %3767 = vmatpush1.xpose.msra.mxu0 0.0
    %3768 = vmatprep.subr.mxu0 0.0
    %3769 = vmatpush1.xpose.msra.mxu0 0.0
    %3770 = vmatprep.subr.mxu0 0.0
    %3771 = vmatpush1.xpose.msra.mxu0 0.0
    %3772 = vmatprep.subr.mxu0 0.0
    %3773 = vmatpush1.xpose.msra.mxu0 0.0
    %3774 = vmatprep.subr.mxu0 0.0
    %3775 = vmatpush1.xpose.msra.mxu0 0.0
    %3776 = vmatprep.subr.mxu0 0.0
    %3777 = vmatpush1.xpose.msra.mxu0 0.0
    %3778 = vmatprep.subr.mxu0 0.0
    %3779 = vmatpush1.xpose.msra.mxu0 0.0
    %3780 = vmatprep.subr.mxu0 0.0
    %3781 = vmatpush1.xpose.msra.mxu0 0.0
    %3782 = vmatprep.subr.mxu0 0.0
    %3783 = vmatpush1.xpose.msra.mxu0 0.0
    %3784 = vmatprep.subr.mxu0 0.0
    %3785 = vmatpush1.xpose.msra.mxu0 0.0
    %3786 = vmatprep.subr.mxu0 0.0
    %3787 = vmatpush1.xpose.msra.mxu0 0.0
    %3788 = vmatprep.subr.mxu0 0.0
    %3789 = vmatpush1.xpose.msra.mxu0 0.0
    %3790 = vmatprep.subr.mxu0 0.0
    %3791 = vmatpush1.xpose.msra.mxu0 0.0
    %3792 = vmatprep.subr.mxu0 0.0
    %3793 = vmatpush1.xpose.msra.mxu0 0.0
    %3794 = vmatprep.subr.mxu0 0.0
    %3795 = vmatpush1.xpose.msra.mxu0 0.0
    %3796 = vmatprep.subr.mxu0 0.0
    %3797 = vmatpush1.xpose.msra.mxu0 0.0
    %3798 = vmatprep.subr.mxu0 0.0
    %3799 = vmatpush1.xpose.msra.mxu0 0.0
    %3800 = vmatprep.subr.mxu0 0.0
    %3801 = vmatpush1.xpose.msra.mxu0 0.0
    %3802 = vmatprep.subr.mxu0 0.0
    %3803 = vmatpush1.xpose.msra.mxu0 0.0
    %3804 = vmatprep.subr.mxu0 0.0
    %3805 = vmatpush1.xpose.msra.mxu0 0.0
    %3806 = vmatprep.subr.mxu0 0.0
    %3807 = vmatpush1.xpose.msra.mxu0 0.0
    %3808 = vmatprep.subr.mxu0 0.0
    %3809 = vmatpush1.xpose.msra.mxu0 0.0
    %3810 = vmatprep.subr.mxu0 0.0
    %3811 = vmatpush1.xpose.msra.mxu0 0.0
    %3812 = vmatprep.subr.mxu0 0.0
    %3813 = vmatpush1.xpose.msra.mxu0 0.0
    %3814 = vmatprep.subr.mxu0 0.0
    %3815 = vmatpush1.xpose.msra.mxu0 0.0
    %3816 = vmatprep.subr.mxu0 0.0
    %3817 = vmatpush1.xpose.msra.mxu0 0.0
    %3818 = vmatprep.subr.mxu0 0.0
    %3819 = vmatpush1.xpose.msra.mxu0 0.0
    %3820 = vmatprep.subr.mxu0 0.0
    %3821 = vmatpush1.xpose.msra.mxu0 0.0
    %3822 = vmatprep.subr.mxu0 0.0
    %3823 = vmatpush1.xpose.msra.mxu0 0.0
    %3824 = vmatprep.subr.mxu0 0.0
    %3825 = vmatpush1.xpose.msra.mxu0 0.0
    %3826 = vmatprep.subr.mxu0 0.0
    %3827 = vmatpush1.xpose.msra.mxu0 0.0
    %3828 = vmatprep.mubr.f32.mxu0 %v3053
    %3829 = vmatmul.mubr.f32.gmra.mrb[0].mxu0 %v3052
    %v3830 = vpop.f32.mrb[0].mxu0
    %v3831 = vadd.f32 %v3761, %v3830
    %v3832 = vpop.f32.mrb[0].mxu0
    %3833 = vdwg.mxu0
    %3834 = vmatprep.subr.mxu0 %v3055
    %3835 = vmatpush1.xpose.msra.mxu0 %v3054
    %3836 = vmatprep.subr.mxu0 0.0
    %3837 = vmatpush1.xpose.msra.mxu0 0.0
    %3838 = vmatprep.subr.mxu0 0.0
    %3839 = vmatpush1.xpose.msra.mxu0 0.0
    %3840 = vmatprep.subr.mxu0 0.0
    %3841 = vmatpush1.xpose.msra.mxu0 0.0
    %3842 = vmatprep.subr.mxu0 0.0
    %3843 = vmatpush1.xpose.msra.mxu0 0.0
    %3844 = vmatprep.subr.mxu0 0.0
    %3845 = vmatpush1.xpose.msra.mxu0 0.0
    %3846 = vmatprep.subr.mxu0 0.0
    %3847 = vmatpush1.xpose.msra.mxu0 0.0
    %3848 = vmatprep.subr.mxu0 0.0
    %3849 = vmatpush1.xpose.msra.mxu0 0.0
    %3850 = vmatprep.subr.mxu0 0.0
    %3851 = vmatpush1.xpose.msra.mxu0 0.0
    %3852 = vmatprep.subr.mxu0 0.0
    %3853 = vmatpush1.xpose.msra.mxu0 0.0
    %3854 = vmatprep.subr.mxu0 0.0
    %3855 = vmatpush1.xpose.msra.mxu0 0.0
    %3856 = vmatprep.subr.mxu0 0.0
    %3857 = vmatpush1.xpose.msra.mxu0 0.0
    %3858 = vmatprep.subr.mxu0 0.0
    %3859 = vmatpush1.xpose.msra.mxu0 0.0
    %3860 = vmatprep.subr.mxu0 0.0
    %3861 = vmatpush1.xpose.msra.mxu0 0.0
    %3862 = vmatprep.subr.mxu0 0.0
    %3863 = vmatpush1.xpose.msra.mxu0 0.0
    %3864 = vmatprep.subr.mxu0 0.0
    %3865 = vmatpush1.xpose.msra.mxu0 0.0
    %3866 = vmatprep.subr.mxu0 0.0
    %3867 = vmatpush1.xpose.msra.mxu0 0.0
    %3868 = vmatprep.subr.mxu0 0.0
    %3869 = vmatpush1.xpose.msra.mxu0 0.0
    %3870 = vmatprep.subr.mxu0 0.0
    %3871 = vmatpush1.xpose.msra.mxu0 0.0
    %3872 = vmatprep.subr.mxu0 0.0
    %3873 = vmatpush1.xpose.msra.mxu0 0.0
    %3874 = vmatprep.subr.mxu0 0.0
    %3875 = vmatpush1.xpose.msra.mxu0 0.0
    %3876 = vmatprep.subr.mxu0 0.0
    %3877 = vmatpush1.xpose.msra.mxu0 0.0
    %3878 = vmatprep.subr.mxu0 0.0
    %3879 = vmatpush1.xpose.msra.mxu0 0.0
    %3880 = vmatprep.subr.mxu0 0.0
    %3881 = vmatpush1.xpose.msra.mxu0 0.0
    %3882 = vmatprep.subr.mxu0 0.0
    %3883 = vmatpush1.xpose.msra.mxu0 0.0
    %3884 = vmatprep.subr.mxu0 0.0
    %3885 = vmatpush1.xpose.msra.mxu0 0.0
    %3886 = vmatprep.subr.mxu0 0.0
    %3887 = vmatpush1.xpose.msra.mxu0 0.0
    %3888 = vmatprep.subr.mxu0 0.0
    %3889 = vmatpush1.xpose.msra.mxu0 0.0
    %3890 = vmatprep.subr.mxu0 0.0
    %3891 = vmatpush1.xpose.msra.mxu0 0.0
    %3892 = vmatprep.subr.mxu0 0.0
    %3893 = vmatpush1.xpose.msra.mxu0 0.0
    %3894 = vmatprep.subr.mxu0 0.0
    %3895 = vmatpush1.xpose.msra.mxu0 0.0
    %3896 = vmatprep.subr.mxu0 0.0
    %3897 = vmatpush1.xpose.msra.mxu0 0.0
    %3898 = vmatprep.mubr.f32.mxu0 %v3055
    %3899 = vmatmul.mubr.f32.gmra.mrb[0].mxu0 %v3054
    %v3900 = vpop.f32.mrb[0].mxu0
    %v3901 = vadd.f32 %v3831, %v3900
    %v3902 = vpop.f32.mrb[0].mxu0
    %3903 = vdwg.mxu0
    %3904 = vmatprep.subr.mxu0 %v3057
    %3905 = vmatpush1.xpose.msra.mxu0 %v3056
    %3906 = vmatprep.subr.mxu0 0.0
    %3907 = vmatpush1.xpose.msra.mxu0 0.0
    %3908 = vmatprep.subr.mxu0 0.0
    %3909 = vmatpush1.xpose.msra.mxu0 0.0
    %3910 = vmatprep.subr.mxu0 0.0
    %3911 = vmatpush1.xpose.msra.mxu0 0.0
    %3912 = vmatprep.subr.mxu0 0.0
    %3913 = vmatpush1.xpose.msra.mxu0 0.0
    %3914 = vmatprep.subr.mxu0 0.0
    %3915 = vmatpush1.xpose.msra.mxu0 0.0
    %3916 = vmatprep.subr.mxu0 0.0
    %3917 = vmatpush1.xpose.msra.mxu0 0.0
    %3918 = vmatprep.subr.mxu0 0.0
    %3919 = vmatpush1.xpose.msra.mxu0 0.0
    %3920 = vmatprep.subr.mxu0 0.0
    %3921 = vmatpush1.xpose.msra.mxu0 0.0
    %3922 = vmatprep.subr.mxu0 0.0
    %3923 = vmatpush1.xpose.msra.mxu0 0.0
    %3924 = vmatprep.subr.mxu0 0.0
    %3925 = vmatpush1.xpose.msra.mxu0 0.0
    %3926 = vmatprep.subr.mxu0 0.0
    %3927 = vmatpush1.xpose.msra.mxu0 0.0
    %3928 = vmatprep.subr.mxu0 0.0
    %3929 = vmatpush1.xpose.msra.mxu0 0.0
    %3930 = vmatprep.subr.mxu0 0.0
    %3931 = vmatpush1.xpose.msra.mxu0 0.0
    %3932 = vmatprep.subr.mxu0 0.0
    %3933 = vmatpush1.xpose.msra.mxu0 0.0
    %3934 = vmatprep.subr.mxu0 0.0
    %3935 = vmatpush1.xpose.msra.mxu0 0.0
    %3936 = vmatprep.subr.mxu0 0.0
    %3937 = vmatpush1.xpose.msra.mxu0 0.0
    %3938 = vmatprep.subr.mxu0 0.0
    %3939 = vmatpush1.xpose.msra.mxu0 0.0
    %3940 = vmatprep.subr.mxu0 0.0
    %3941 = vmatpush1.xpose.msra.mxu0 0.0
    %3942 = vmatprep.subr.mxu0 0.0
    %3943 = vmatpush1.xpose.msra.mxu0 0.0
    %3944 = vmatprep.subr.mxu0 0.0
    %3945 = vmatpush1.xpose.msra.mxu0 0.0
    %3946 = vmatprep.subr.mxu0 0.0
    %3947 = vmatpush1.xpose.msra.mxu0 0.0
    %3948 = vmatprep.subr.mxu0 0.0
    %3949 = vmatpush1.xpose.msra.mxu0 0.0
    %3950 = vmatprep.subr.mxu0 0.0
    %3951 = vmatpush1.xpose.msra.mxu0 0.0
    %3952 = vmatprep.subr.mxu0 0.0
    %3953 = vmatpush1.xpose.msra.mxu0 0.0
    %3954 = vmatprep.subr.mxu0 0.0
    %3955 = vmatpush1.xpose.msra.mxu0 0.0
    %3956 = vmatprep.subr.mxu0 0.0
    %3957 = vmatpush1.xpose.msra.mxu0 0.0
    %3958 = vmatprep.subr.mxu0 0.0
    %3959 = vmatpush1.xpose.msra.mxu0 0.0
    %3960 = vmatprep.subr.mxu0 0.0
    %3961 = vmatpush1.xpose.msra.mxu0 0.0
    %3962 = vmatprep.subr.mxu0 0.0
    %3963 = vmatpush1.xpose.msra.mxu0 0.0
    %3964 = vmatprep.subr.mxu0 0.0
    %3965 = vmatpush1.xpose.msra.mxu0 0.0
    %3966 = vmatprep.subr.mxu0 0.0
    %3967 = vmatpush1.xpose.msra.mxu0 0.0
    %3968 = vmatprep.mubr.f32.mxu0 %v3057
    %3969 = vmatmul.mubr.f32.gmra.mrb[0].mxu0 %v3056
    %v3970 = vpop.f32.mrb[0].mxu0
    %v3971 = vadd.f32 %v3901, %v3970
    %v3972 = vpop.f32.mrb[0].mxu0
    %3973 = vdwg.mxu0
    %3974 = vmatprep.subr.mxu0 %v3059
    %3975 = vmatpush1.xpose.msra.mxu0 %v3058
    %3976 = vmatprep.subr.mxu0 0.0
    %3977 = vmatpush1.xpose.msra.mxu0 0.0
    %3978 = vmatprep.subr.mxu0 0.0
    %3979 = vmatpush1.xpose.msra.mxu0 0.0
    %3980 = vmatprep.subr.mxu0 0.0
    %3981 = vmatpush1.xpose.msra.mxu0 0.0
    %3982 = vmatprep.subr.mxu0 0.0
    %3983 = vmatpush1.xpose.msra.mxu0 0.0
    %3984 = vmatprep.subr.mxu0 0.0
    %3985 = vmatpush1.xpose.msra.mxu0 0.0
    %3986 = vmatprep.subr.mxu0 0.0
    %3987 = vmatpush1.xpose.msra.mxu0 0.0
    %3988 = vmatprep.subr.mxu0 0.0
    %3989 = vmatpush1.xpose.msra.mxu0 0.0
    %3990 = vmatprep.subr.mxu0 0.0
    %3991 = vmatpush1.xpose.msra.mxu0 0.0
    %3992 = vmatprep.subr.mxu0 0.0
    %3993 = vmatpush1.xpose.msra.mxu0 0.0
    %3994 = vmatprep.subr.mxu0 0.0
    %3995 = vmatpush1.xpose.msra.mxu0 0.0
    %3996 = vmatprep.subr.mxu0 0.0
    %3997 = vmatpush1.xpose.msra.mxu0 0.0
    %3998 = vmatprep.subr.mxu0 0.0
    %3999 = vmatpush1.xpose.msra.mxu0 0.0
    %4000 = vmatprep.subr.mxu0 0.0
    %4001 = vmatpush1.xpose.msra.mxu0 0.0
    %4002 = vmatprep.subr.mxu0 0.0
    %4003 = vmatpush1.xpose.msra.mxu0 0.0
    %4004 = vmatprep.subr.mxu0 0.0
    %4005 = vmatpush1.xpose.msra.mxu0 0.0
    %4006 = vmatprep.subr.mxu0 0.0
    %4007 = vmatpush1.xpose.msra.mxu0 0.0
    %4008 = vmatprep.subr.mxu0 0.0
    %4009 = vmatpush1.xpose.msra.mxu0 0.0
    %4010 = vmatprep.subr.mxu0 0.0
    %4011 = vmatpush1.xpose.msra.mxu0 0.0
    %4012 = vmatprep.subr.mxu0 0.0
    %4013 = vmatpush1.xpose.msra.mxu0 0.0
    %4014 = vmatprep.subr.mxu0 0.0
    %4015 = vmatpush1.xpose.msra.mxu0 0.0
    %4016 = vmatprep.subr.mxu0 0.0
    %4017 = vmatpush1.xpose.msra.mxu0 0.0
    %4018 = vmatprep.subr.mxu0 0.0
    %4019 = vmatpush1.xpose.msra.mxu0 0.0
    %4020 = vmatprep.subr.mxu0 0.0
    %4021 = vmatpush1.xpose.msra.mxu0 0.0
    %4022 = vmatprep.subr.mxu0 0.0
    %4023 = vmatpush1.xpose.msra.mxu0 0.0
    %4024 = vmatprep.subr.mxu0 0.0
    %4025 = vmatpush1.xpose.msra.mxu0 0.0
    %4026 = vmatprep.subr.mxu0 0.0
    %4027 = vmatpush1.xpose.msra.mxu0 0.0
    %4028 = vmatprep.subr.mxu0 0.0
    %4029 = vmatpush1.xpose.msra.mxu0 0.0
    %4030 = vmatprep.subr.mxu0 0.0
    %4031 = vmatpush1.xpose.msra.mxu0 0.0
    %4032 = vmatprep.subr.mxu0 0.0
    %4033 = vmatpush1.xpose.msra.mxu0 0.0
    %4034 = vmatprep.subr.mxu0 0.0
    %4035 = vmatpush1.xpose.msra.mxu0 0.0
    %4036 = vmatprep.subr.mxu0 0.0
    %4037 = vmatpush1.xpose.msra.mxu0 0.0
    %4038 = vmatprep.mubr.f32.mxu0 %v3059
    %4039 = vmatmul.mubr.f32.gmra.mrb[0].mxu0 %v3058
    %v4040 = vpop.f32.mrb[0].mxu0
    %v4041 = vadd.f32 %v3971, %v4040
    %v4042 = vpop.f32.mrb[0].mxu0
    %4043 = vdwg.mxu0
    %4044 = vmatprep.subr.mxu0 %v3061
    %4045 = vmatpush1.xpose.msra.mxu0 %v3060
    %4046 = vmatprep.subr.mxu0 0.0
    %4047 = vmatpush1.xpose.msra.mxu0 0.0
    %4048 = vmatprep.subr.mxu0 0.0
    %4049 = vmatpush1.xpose.msra.mxu0 0.0
    %4050 = vmatprep.subr.mxu0 0.0
    %4051 = vmatpush1.xpose.msra.mxu0 0.0
    %4052 = vmatprep.subr.mxu0 0.0
    %4053 = vmatpush1.xpose.msra.mxu0 0.0
    %4054 = vmatprep.subr.mxu0 0.0
    %4055 = vmatpush1.xpose.msra.mxu0 0.0
    %4056 = vmatprep.subr.mxu0 0.0
    %4057 = vmatpush1.xpose.msra.mxu0 0.0
    %4058 = vmatprep.subr.mxu0 0.0
    %4059 = vmatpush1.xpose.msra.mxu0 0.0
    %4060 = vmatprep.subr.mxu0 0.0
    %4061 = vmatpush1.xpose.msra.mxu0 0.0
    %4062 = vmatprep.subr.mxu0 0.0
    %4063 = vmatpush1.xpose.msra.mxu0 0.0
    %4064 = vmatprep.subr.mxu0 0.0
    %4065 = vmatpush1.xpose.msra.mxu0 0.0
    %4066 = vmatprep.subr.mxu0 0.0
    %4067 = vmatpush1.xpose.msra.mxu0 0.0
    %4068 = vmatprep.subr.mxu0 0.0
    %4069 = vmatpush1.xpose.msra.mxu0 0.0
    %4070 = vmatprep.subr.mxu0 0.0
    %4071 = vmatpush1.xpose.msra.mxu0 0.0
    %4072 = vmatprep.subr.mxu0 0.0
    %4073 = vmatpush1.xpose.msra.mxu0 0.0
    %4074 = vmatprep.subr.mxu0 0.0
    %4075 = vmatpush1.xpose.msra.mxu0 0.0
    %4076 = vmatprep.subr.mxu0 0.0
    %4077 = vmatpush1.xpose.msra.mxu0 0.0
    %4078 = vmatprep.subr.mxu0 0.0
    %4079 = vmatpush1.xpose.msra.mxu0 0.0
    %4080 = vmatprep.subr.mxu0 0.0
    %4081 = vmatpush1.xpose.msra.mxu0 0.0
    %4082 = vmatprep.subr.mxu0 0.0
    %4083 = vmatpush1.xpose.msra.mxu0 0.0
    %4084 = vmatprep.subr.mxu0 0.0
    %4085 = vmatpush1.xpose.msra.mxu0 0.0
    %4086 = vmatprep.subr.mxu0 0.0
    %4087 = vmatpush1.xpose.msra.mxu0 0.0
    %4088 = vmatprep.subr.mxu0 0.0
    %4089 = vmatpush1.xpose.msra.mxu0 0.0
    %4090 = vmatprep.subr.mxu0 0.0
    %4091 = vmatpush1.xpose.msra.mxu0 0.0
    %4092 = vmatprep.subr.mxu0 0.0
    %4093 = vmatpush1.xpose.msra.mxu0 0.0
    %4094 = vmatprep.subr.mxu0 0.0
    %4095 = vmatpush1.xpose.msra.mxu0 0.0
    %4096 = vmatprep.subr.mxu0 0.0
    %4097 = vmatpush1.xpose.msra.mxu0 0.0
    %4098 = vmatprep.subr.mxu0 0.0
    %4099 = vmatpush1.xpose.msra.mxu0 0.0
    %4100 = vmatprep.subr.mxu0 0.0
    %4101 = vmatpush1.xpose.msra.mxu0 0.0
    %4102 = vmatprep.subr.mxu0 0.0
    %4103 = vmatpush1.xpose.msra.mxu0 0.0
    %4104 = vmatprep.subr.mxu0 0.0
    %4105 = vmatpush1.xpose.msra.mxu0 0.0
    %4106 = vmatprep.subr.mxu0 0.0
    %4107 = vmatpush1.xpose.msra.mxu0 0.0
    %4108 = vmatprep.mubr.f32.mxu0 %v3061
    %4109 = vmatmul.mubr.f32.gmra.mrb[0].mxu0 %v3060
    %v4110 = vpop.f32.mrb[0].mxu0
    %v4111 = vadd.f32 %v4041, %v4110
    %v4112 = vpop.f32.mrb[0].mxu0
    %4113 = vdwg.mxu0
    %4114 = vmatprep.subr.mxu0 %v3063
    %4115 = vmatpush1.xpose.msra.mxu0 %v3062
    %4116 = vmatprep.subr.mxu0 0.0
    %4117 = vmatpush1.xpose.msra.mxu0 0.0
    %4118 = vmatprep.subr.mxu0 0.0
    %4119 = vmatpush1.xpose.msra.mxu0 0.0
    %4120 = vmatprep.subr.mxu0 0.0
    %4121 = vmatpush1.xpose.msra.mxu0 0.0
    %4122 = vmatprep.subr.mxu0 0.0
    %4123 = vmatpush1.xpose.msra.mxu0 0.0
    %4124 = vmatprep.subr.mxu0 0.0
    %4125 = vmatpush1.xpose.msra.mxu0 0.0
    %4126 = vmatprep.subr.mxu0 0.0
    %4127 = vmatpush1.xpose.msra.mxu0 0.0
    %4128 = vmatprep.subr.mxu0 0.0
    %4129 = vmatpush1.xpose.msra.mxu0 0.0
    %4130 = vmatprep.subr.mxu0 0.0
    %4131 = vmatpush1.xpose.msra.mxu0 0.0
    %4132 = vmatprep.subr.mxu0 0.0
    %4133 = vmatpush1.xpose.msra.mxu0 0.0
    %4134 = vmatprep.subr.mxu0 0.0
    %4135 = vmatpush1.xpose.msra.mxu0 0.0
    %4136 = vmatprep.subr.mxu0 0.0
    %4137 = vmatpush1.xpose.msra.mxu0 0.0
    %4138 = vmatprep.subr.mxu0 0.0
    %4139 = vmatpush1.xpose.msra.mxu0 0.0
    %4140 = vmatprep.subr.mxu0 0.0
    %4141 = vmatpush1.xpose.msra.mxu0 0.0
    %4142 = vmatprep.subr.mxu0 0.0
    %4143 = vmatpush1.xpose.msra.mxu0 0.0
    %4144 = vmatprep.subr.mxu0 0.0
    %4145 = vmatpush1.xpose.msra.mxu0 0.0
    %4146 = vmatprep.subr.mxu0 0.0
    %4147 = vmatpush1.xpose.msra.mxu0 0.0
    %4148 = vmatprep.subr.mxu0 0.0
    %4149 = vmatpush1.xpose.msra.mxu0 0.0
    %4150 = vmatprep.subr.mxu0 0.0
    %4151 = vmatpush1.xpose.msra.mxu0 0.0
    %4152 = vmatprep.subr.mxu0 0.0
    %4153 = vmatpush1.xpose.msra.mxu0 0.0
    %4154 = vmatprep.subr.mxu0 0.0
    %4155 = vmatpush1.xpose.msra.mxu0 0.0
    %4156 = vmatprep.subr.mxu0 0.0
    %4157 = vmatpush1.xpose.msra.mxu0 0.0
    %4158 = vmatprep.subr.mxu0 0.0
    %4159 = vmatpush1.xpose.msra.mxu0 0.0
    %4160 = vmatprep.subr.mxu0 0.0
    %4161 = vmatpush1.xpose.msra.mxu0 0.0
    %4162 = vmatprep.subr.mxu0 0.0
    %4163 = vmatpush1.xpose.msra.mxu0 0.0
    %4164 = vmatprep.subr.mxu0 0.0
    %4165 = vmatpush1.xpose.msra.mxu0 0.0
    %4166 = vmatprep.subr.mxu0 0.0
    %4167 = vmatpush1.xpose.msra.mxu0 0.0
    %4168 = vmatprep.subr.mxu0 0.0
    %4169 = vmatpush1.xpose.msra.mxu0 0.0
    %4170 = vmatprep.subr.mxu0 0.0
    %4171 = vmatpush1.xpose.msra.mxu0 0.0
    %4172 = vmatprep.subr.mxu0 0.0
    %4173 = vmatpush1.xpose.msra.mxu0 0.0
    %4174 = vmatprep.subr.mxu0 0.0
    %4175 = vmatpush1.xpose.msra.mxu0 0.0
    %4176 = vmatprep.subr.mxu0 0.0
    %4177 = vmatpush1.xpose.msra.mxu0 0.0
    %4178 = vmatprep.mubr.f32.mxu0 %v3063
    %4179 = vmatmul.mubr.f32.gmra.mrb[0].mxu0 %v3062
    %v4180 = vpop.f32.mrb[0].mxu0
    %v4181 = vadd.f32 %v4111, %v4180
    %v4182 = vpop.f32.mrb[0].mxu0
    %4183 = vdwg.mxu0
    %v4216 = vrot.slane %v3032, 7
    %v4217 = vrot.slane %v3033, 7
    %v4218 = vrot.slane %v3034, 7
    %v4219 = vrot.slane %v3035, 7
    %v4220 = vrot.slane %v3036, 7
    %v4221 = vrot.slane %v3037, 7
    %v4222 = vrot.slane %v3038, 7
    %v4223 = vrot.slane %v3039, 7
    %v4224 = vrot.slane %v3040, 7
    %v4225 = vrot.slane %v3041, 7
    %v4226 = vrot.slane %v3042, 7
    %v4227 = vrot.slane %v3043, 7
    %v4228 = vrot.slane %v3044, 7
    %v4229 = vrot.slane %v3045, 7
    %v4230 = vrot.slane %v3046, 7
    %v4231 = vrot.slane %v3047, 7
    %v4232 = vrot.slane %v3048, 7
    %v4233 = vrot.slane %v3049, 7
    %v4234 = vrot.slane %v3050, 7
    %v4235 = vrot.slane %v3051, 7
    %v4236 = vrot.slane %v3052, 7
    %v4237 = vrot.slane %v3053, 7
    %v4238 = vrot.slane %v3054, 7
    %v4239 = vrot.slane %v3055, 7
    %v4240 = vrot.slane %v3056, 7
    %v4241 = vrot.slane %v3057, 7
    %v4242 = vrot.slane %v3058, 7
    %v4243 = vrot.slane %v3059, 7
    %v4244 = vrot.slane %v3060, 7
    %v4245 = vrot.slane %v3061, 7
    %v4246 = vrot.slane %v3062, 7
    %v4247 = vrot.slane %v3063, 7
    %4280 = vmatprep.subr.mxu0 %v3033
    %4281 = vmatpush1.xpose.msra.mxu0 %v3032
    %4282 = vmatprep.subr.mxu0 0.0
    %4283 = vmatpush1.xpose.msra.mxu0 0.0
    %4284 = vmatprep.subr.mxu0 0.0
    %4285 = vmatpush1.xpose.msra.mxu0 0.0
    %4286 = vmatprep.subr.mxu0 0.0
    %4287 = vmatpush1.xpose.msra.mxu0 0.0
    %4288 = vmatprep.subr.mxu0 0.0
    %4289 = vmatpush1.xpose.msra.mxu0 0.0
    %4290 = vmatprep.subr.mxu0 0.0
    %4291 = vmatpush1.xpose.msra.mxu0 0.0
    %4292 = vmatprep.subr.mxu0 0.0
    %4293 = vmatpush1.xpose.msra.mxu0 0.0
    %4294 = vmatprep.subr.mxu0 0.0
    %4295 = vmatpush1.xpose.msra.mxu0 0.0
    %4296 = vmatprep.subr.mxu0 0.0
    %4297 = vmatpush1.xpose.msra.mxu0 0.0
    %4298 = vmatprep.subr.mxu0 0.0
    %4299 = vmatpush1.xpose.msra.mxu0 0.0
    %4300 = vmatprep.subr.mxu0 0.0
    %4301 = vmatpush1.xpose.msra.mxu0 0.0
    %4302 = vmatprep.subr.mxu0 0.0
    %4303 = vmatpush1.xpose.msra.mxu0 0.0
    %4304 = vmatprep.subr.mxu0 0.0
    %4305 = vmatpush1.xpose.msra.mxu0 0.0
    %4306 = vmatprep.subr.mxu0 0.0
    %4307 = vmatpush1.xpose.msra.mxu0 0.0
    %4308 = vmatprep.subr.mxu0 0.0
    %4309 = vmatpush1.xpose.msra.mxu0 0.0
    %4310 = vmatprep.subr.mxu0 0.0
    %4311 = vmatpush1.xpose.msra.mxu0 0.0
    %4312 = vmatprep.subr.mxu0 0.0
    %4313 = vmatpush1.xpose.msra.mxu0 0.0
    %4314 = vmatprep.subr.mxu0 0.0
    %4315 = vmatpush1.xpose.msra.mxu0 0.0
    %4316 = vmatprep.subr.mxu0 0.0
    %4317 = vmatpush1.xpose.msra.mxu0 0.0
    %4318 = vmatprep.subr.mxu0 0.0
    %4319 = vmatpush1.xpose.msra.mxu0 0.0
    %4320 = vmatprep.subr.mxu0 0.0
    %4321 = vmatpush1.xpose.msra.mxu0 0.0
    %4322 = vmatprep.subr.mxu0 0.0
    %4323 = vmatpush1.xpose.msra.mxu0 0.0
    %4324 = vmatprep.subr.mxu0 0.0
    %4325 = vmatpush1.xpose.msra.mxu0 0.0
    %4326 = vmatprep.subr.mxu0 0.0
    %4327 = vmatpush1.xpose.msra.mxu0 0.0
    %4328 = vmatprep.subr.mxu0 0.0
    %4329 = vmatpush1.xpose.msra.mxu0 0.0
    %4330 = vmatprep.subr.mxu0 0.0
    %4331 = vmatpush1.xpose.msra.mxu0 0.0
    %4332 = vmatprep.subr.mxu0 0.0
    %4333 = vmatpush1.xpose.msra.mxu0 0.0
    %4334 = vmatprep.subr.mxu0 0.0
    %4335 = vmatpush1.xpose.msra.mxu0 0.0
    %4336 = vmatprep.subr.mxu0 0.0
    %4337 = vmatpush1.xpose.msra.mxu0 0.0
    %4338 = vmatprep.subr.mxu0 0.0
    %4339 = vmatpush1.xpose.msra.mxu0 0.0
    %4340 = vmatprep.subr.mxu0 0.0
    %4341 = vmatpush1.xpose.msra.mxu0 0.0
    %4342 = vmatprep.subr.mxu0 0.0
    %4343 = vmatpush1.xpose.msra.mxu0 0.0
    %4344 = vmatprep.mubr.f32.mxu0 %v4217
    %4345 = vmatmul.mubr.f32.gmra.mrb[0].mxu0 %v4216
    %v4346 = vpop.f32.mrb[0].mxu0
    %v4347 = vadd.f32 0.0, %v4346
    %v4348 = vpop.f32.mrb[0].mxu0
    %4349 = vdwg.mxu0
    %4350 = vmatprep.subr.mxu0 %v3035
    %4351 = vmatpush1.xpose.msra.mxu0 %v3034
    %4352 = vmatprep.subr.mxu0 0.0
    %4353 = vmatpush1.xpose.msra.mxu0 0.0
    %4354 = vmatprep.subr.mxu0 0.0
    %4355 = vmatpush1.xpose.msra.mxu0 0.0
    %4356 = vmatprep.subr.mxu0 0.0
    %4357 = vmatpush1.xpose.msra.mxu0 0.0
    %4358 = vmatprep.subr.mxu0 0.0
    %4359 = vmatpush1.xpose.msra.mxu0 0.0
    %4360 = vmatprep.subr.mxu0 0.0
    %4361 = vmatpush1.xpose.msra.mxu0 0.0
    %4362 = vmatprep.subr.mxu0 0.0
    %4363 = vmatpush1.xpose.msra.mxu0 0.0
    %4364 = vmatprep.subr.mxu0 0.0
    %4365 = vmatpush1.xpose.msra.mxu0 0.0
    %4366 = vmatprep.subr.mxu0 0.0
    %4367 = vmatpush1.xpose.msra.mxu0 0.0
    %4368 = vmatprep.subr.mxu0 0.0
    %4369 = vmatpush1.xpose.msra.mxu0 0.0
    %4370 = vmatprep.subr.mxu0 0.0
    %4371 = vmatpush1.xpose.msra.mxu0 0.0
    %4372 = vmatprep.subr.mxu0 0.0
    %4373 = vmatpush1.xpose.msra.mxu0 0.0
    %4374 = vmatprep.subr.mxu0 0.0
    %4375 = vmatpush1.xpose.msra.mxu0 0.0
    %4376 = vmatprep.subr.mxu0 0.0
    %4377 = vmatpush1.xpose.msra.mxu0 0.0
    %4378 = vmatprep.subr.mxu0 0.0
    %4379 = vmatpush1.xpose.msra.mxu0 0.0
    %4380 = vmatprep.subr.mxu0 0.0
    %4381 = vmatpush1.xpose.msra.mxu0 0.0
    %4382 = vmatprep.subr.mxu0 0.0
    %4383 = vmatpush1.xpose.msra.mxu0 0.0
    %4384 = vmatprep.subr.mxu0 0.0
    %4385 = vmatpush1.xpose.msra.mxu0 0.0
    %4386 = vmatprep.subr.mxu0 0.0
    %4387 = vmatpush1.xpose.msra.mxu0 0.0
    %4388 = vmatprep.subr.mxu0 0.0
    %4389 = vmatpush1.xpose.msra.mxu0 0.0
    %4390 = vmatprep.subr.mxu0 0.0
    %4391 = vmatpush1.xpose.msra.mxu0 0.0
    %4392 = vmatprep.subr.mxu0 0.0
    %4393 = vmatpush1.xpose.msra.mxu0 0.0
    %4394 = vmatprep.subr.mxu0 0.0
    %4395 = vmatpush1.xpose.msra.mxu0 0.0
    %4396 = vmatprep.subr.mxu0 0.0
    %4397 = vmatpush1.xpose.msra.mxu0 0.0
    %4398 = vmatprep.subr.mxu0 0.0
    %4399 = vmatpush1.xpose.msra.mxu0 0.0
    %4400 = vmatprep.subr.mxu0 0.0
    %4401 = vmatpush1.xpose.msra.mxu0 0.0
    %4402 = vmatprep.subr.mxu0 0.0
    %4403 = vmatpush1.xpose.msra.mxu0 0.0
    %4404 = vmatprep.subr.mxu0 0.0
    %4405 = vmatpush1.xpose.msra.mxu0 0.0
    %4406 = vmatprep.subr.mxu0 0.0
    %4407 = vmatpush1.xpose.msra.mxu0 0.0
    %4408 = vmatprep.subr.mxu0 0.0
    %4409 = vmatpush1.xpose.msra.mxu0 0.0
    %4410 = vmatprep.subr.mxu0 0.0
    %4411 = vmatpush1.xpose.msra.mxu0 0.0
    %4412 = vmatprep.subr.mxu0 0.0
    %4413 = vmatpush1.xpose.msra.mxu0 0.0
    %4414 = vmatprep.mubr.f32.mxu0 %v4219
    %4415 = vmatmul.mubr.f32.gmra.mrb[0].mxu0 %v4218
    %v4416 = vpop.f32.mrb[0].mxu0
    %v4417 = vadd.f32 %v4347, %v4416
    %v4418 = vpop.f32.mrb[0].mxu0
    %4419 = vdwg.mxu0
    %4420 = vmatprep.subr.mxu0 %v3037
    %4421 = vmatpush1.xpose.msra.mxu0 %v3036
    %4422 = vmatprep.subr.mxu0 0.0
    %4423 = vmatpush1.xpose.msra.mxu0 0.0
    %4424 = vmatprep.subr.mxu0 0.0
    %4425 = vmatpush1.xpose.msra.mxu0 0.0
    %4426 = vmatprep.subr.mxu0 0.0
    %4427 = vmatpush1.xpose.msra.mxu0 0.0
    %4428 = vmatprep.subr.mxu0 0.0
    %4429 = vmatpush1.xpose.msra.mxu0 0.0
    %4430 = vmatprep.subr.mxu0 0.0
    %4431 = vmatpush1.xpose.msra.mxu0 0.0
    %4432 = vmatprep.subr.mxu0 0.0
    %4433 = vmatpush1.xpose.msra.mxu0 0.0
    %4434 = vmatprep.subr.mxu0 0.0
    %4435 = vmatpush1.xpose.msra.mxu0 0.0
    %4436 = vmatprep.subr.mxu0 0.0
    %4437 = vmatpush1.xpose.msra.mxu0 0.0
    %4438 = vmatprep.subr.mxu0 0.0
    %4439 = vmatpush1.xpose.msra.mxu0 0.0
    %4440 = vmatprep.subr.mxu0 0.0
    %4441 = vmatpush1.xpose.msra.mxu0 0.0
    %4442 = vmatprep.subr.mxu0 0.0
    %4443 = vmatpush1.xpose.msra.mxu0 0.0
    %4444 = vmatprep.subr.mxu0 0.0
    %4445 = vmatpush1.xpose.msra.mxu0 0.0
    %4446 = vmatprep.subr.mxu0 0.0
    %4447 = vmatpush1.xpose.msra.mxu0 0.0
    %4448 = vmatprep.subr.mxu0 0.0
    %4449 = vmatpush1.xpose.msra.mxu0 0.0
    %4450 = vmatprep.subr.mxu0 0.0
    %4451 = vmatpush1.xpose.msra.mxu0 0.0
    %4452 = vmatprep.subr.mxu0 0.0
    %4453 = vmatpush1.xpose.msra.mxu0 0.0
    %4454 = vmatprep.subr.mxu0 0.0
    %4455 = vmatpush1.xpose.msra.mxu0 0.0
    %4456 = vmatprep.subr.mxu0 0.0
    %4457 = vmatpush1.xpose.msra.mxu0 0.0
    %4458 = vmatprep.subr.mxu0 0.0
    %4459 = vmatpush1.xpose.msra.mxu0 0.0
    %4460 = vmatprep.subr.mxu0 0.0
    %4461 = vmatpush1.xpose.msra.mxu0 0.0
    %4462 = vmatprep.subr.mxu0 0.0
    %4463 = vmatpush1.xpose.msra.mxu0 0.0
    %4464 = vmatprep.subr.mxu0 0.0
    %4465 = vmatpush1.xpose.msra.mxu0 0.0
    %4466 = vmatprep.subr.mxu0 0.0
    %4467 = vmatpush1.xpose.msra.mxu0 0.0
    %4468 = vmatprep.subr.mxu0 0.0
    %4469 = vmatpush1.xpose.msra.mxu0 0.0
    %4470 = vmatprep.subr.mxu0 0.0
    %4471 = vmatpush1.xpose.msra.mxu0 0.0
    %4472 = vmatprep.subr.mxu0 0.0
    %4473 = vmatpush1.xpose.msra.mxu0 0.0
    %4474 = vmatprep.subr.mxu0 0.0
    %4475 = vmatpush1.xpose.msra.mxu0 0.0
    %4476 = vmatprep.subr.mxu0 0.0
    %4477 = vmatpush1.xpose.msra.mxu0 0.0
    %4478 = vmatprep.subr.mxu0 0.0
    %4479 = vmatpush1.xpose.msra.mxu0 0.0
    %4480 = vmatprep.subr.mxu0 0.0
    %4481 = vmatpush1.xpose.msra.mxu0 0.0
    %4482 = vmatprep.subr.mxu0 0.0
    %4483 = vmatpush1.xpose.msra.mxu0 0.0
    %4484 = vmatprep.mubr.f32.mxu0 %v4221
    %4485 = vmatmul.mubr.f32.gmra.mrb[0].mxu0 %v4220
    %v4486 = vpop.f32.mrb[0].mxu0
    %v4487 = vadd.f32 %v4417, %v4486
    %v4488 = vpop.f32.mrb[0].mxu0
    %4489 = vdwg.mxu0
    %4490 = vmatprep.subr.mxu0 %v3039
    %4491 = vmatpush1.xpose.msra.mxu0 %v3038
    %4492 = vmatprep.subr.mxu0 0.0
    %4493 = vmatpush1.xpose.msra.mxu0 0.0
    %4494 = vmatprep.subr.mxu0 0.0
    %4495 = vmatpush1.xpose.msra.mxu0 0.0
    %4496 = vmatprep.subr.mxu0 0.0
    %4497 = vmatpush1.xpose.msra.mxu0 0.0
    %4498 = vmatprep.subr.mxu0 0.0
    %4499 = vmatpush1.xpose.msra.mxu0 0.0
    %4500 = vmatprep.subr.mxu0 0.0
    %4501 = vmatpush1.xpose.msra.mxu0 0.0
    %4502 = vmatprep.subr.mxu0 0.0
    %4503 = vmatpush1.xpose.msra.mxu0 0.0
    %4504 = vmatprep.subr.mxu0 0.0
    %4505 = vmatpush1.xpose.msra.mxu0 0.0
    %4506 = vmatprep.subr.mxu0 0.0
    %4507 = vmatpush1.xpose.msra.mxu0 0.0
    %4508 = vmatprep.subr.mxu0 0.0
    %4509 = vmatpush1.xpose.msra.mxu0 0.0
    %4510 = vmatprep.subr.mxu0 0.0
    %4511 = vmatpush1.xpose.msra.mxu0 0.0
    %4512 = vmatprep.subr.mxu0 0.0
    %4513 = vmatpush1.xpose.msra.mxu0 0.0
    %4514 = vmatprep.subr.mxu0 0.0
    %4515 = vmatpush1.xpose.msra.mxu0 0.0
    %4516 = vmatprep.subr.mxu0 0.0
    %4517 = vmatpush1.xpose.msra.mxu0 0.0
    %4518 = vmatprep.subr.mxu0 0.0
    %4519 = vmatpush1.xpose.msra.mxu0 0.0
    %4520 = vmatprep.subr.mxu0 0.0
    %4521 = vmatpush1.xpose.msra.mxu0 0.0
    %4522 = vmatprep.subr.mxu0 0.0
    %4523 = vmatpush1.xpose.msra.mxu0 0.0
    %4524 = vmatprep.subr.mxu0 0.0
    %4525 = vmatpush1.xpose.msra.mxu0 0.0
    %4526 = vmatprep.subr.mxu0 0.0
    %4527 = vmatpush1.xpose.msra.mxu0 0.0
    %4528 = vmatprep.subr.mxu0 0.0
    %4529 = vmatpush1.xpose.msra.mxu0 0.0
    %4530 = vmatprep.subr.mxu0 0.0
    %4531 = vmatpush1.xpose.msra.mxu0 0.0
    %4532 = vmatprep.subr.mxu0 0.0
    %4533 = vmatpush1.xpose.msra.mxu0 0.0
    %4534 = vmatprep.subr.mxu0 0.0
    %4535 = vmatpush1.xpose.msra.mxu0 0.0
    %4536 = vmatprep.subr.mxu0 0.0
    %4537 = vmatpush1.xpose.msra.mxu0 0.0
    %4538 = vmatprep.subr.mxu0 0.0
    %4539 = vmatpush1.xpose.msra.mxu0 0.0
    %4540 = vmatprep.subr.mxu0 0.0
    %4541 = vmatpush1.xpose.msra.mxu0 0.0
    %4542 = vmatprep.subr.mxu0 0.0
    %4543 = vmatpush1.xpose.msra.mxu0 0.0
    %4544 = vmatprep.subr.mxu0 0.0
    %4545 = vmatpush1.xpose.msra.mxu0 0.0
    %4546 = vmatprep.subr.mxu0 0.0
    %4547 = vmatpush1.xpose.msra.mxu0 0.0
    %4548 = vmatprep.subr.mxu0 0.0
    %4549 = vmatpush1.xpose.msra.mxu0 0.0
    %4550 = vmatprep.subr.mxu0 0.0
    %4551 = vmatpush1.xpose.msra.mxu0 0.0
    %4552 = vmatprep.subr.mxu0 0.0
    %4553 = vmatpush1.xpose.msra.mxu0 0.0
    %4554 = vmatprep.mubr.f32.mxu0 %v4223
    %4555 = vmatmul.mubr.f32.gmra.mrb[0].mxu0 %v4222
    %v4556 = vpop.f32.mrb[0].mxu0
    %v4557 = vadd.f32 %v4487, %v4556
    %v4558 = vpop.f32.mrb[0].mxu0
    %4559 = vdwg.mxu0
    %4560 = vmatprep.subr.mxu0 %v3041
    %4561 = vmatpush1.xpose.msra.mxu0 %v3040
    %4562 = vmatprep.subr.mxu0 0.0
    %4563 = vmatpush1.xpose.msra.mxu0 0.0
    %4564 = vmatprep.subr.mxu0 0.0
    %4565 = vmatpush1.xpose.msra.mxu0 0.0
    %4566 = vmatprep.subr.mxu0 0.0
    %4567 = vmatpush1.xpose.msra.mxu0 0.0
    %4568 = vmatprep.subr.mxu0 0.0
    %4569 = vmatpush1.xpose.msra.mxu0 0.0
    %4570 = vmatprep.subr.mxu0 0.0
    %4571 = vmatpush1.xpose.msra.mxu0 0.0
    %4572 = vmatprep.subr.mxu0 0.0
    %4573 = vmatpush1.xpose.msra.mxu0 0.0
    %4574 = vmatprep.subr.mxu0 0.0
    %4575 = vmatpush1.xpose.msra.mxu0 0.0
    %4576 = vmatprep.subr.mxu0 0.0
    %4577 = vmatpush1.xpose.msra.mxu0 0.0
    %4578 = vmatprep.subr.mxu0 0.0
    %4579 = vmatpush1.xpose.msra.mxu0 0.0
    %4580 = vmatprep.subr.mxu0 0.0
    %4581 = vmatpush1.xpose.msra.mxu0 0.0
    %4582 = vmatprep.subr.mxu0 0.0
    %4583 = vmatpush1.xpose.msra.mxu0 0.0
    %4584 = vmatprep.subr.mxu0 0.0
    %4585 = vmatpush1.xpose.msra.mxu0 0.0
    %4586 = vmatprep.subr.mxu0 0.0
    %4587 = vmatpush1.xpose.msra.mxu0 0.0
    %4588 = vmatprep.subr.mxu0 0.0
    %4589 = vmatpush1.xpose.msra.mxu0 0.0
    %4590 = vmatprep.subr.mxu0 0.0
    %4591 = vmatpush1.xpose.msra.mxu0 0.0
    %4592 = vmatprep.subr.mxu0 0.0
    %4593 = vmatpush1.xpose.msra.mxu0 0.0
    %4594 = vmatprep.subr.mxu0 0.0
    %4595 = vmatpush1.xpose.msra.mxu0 0.0
    %4596 = vmatprep.subr.mxu0 0.0
    %4597 = vmatpush1.xpose.msra.mxu0 0.0
    %4598 = vmatprep.subr.mxu0 0.0
    %4599 = vmatpush1.xpose.msra.mxu0 0.0
    %4600 = vmatprep.subr.mxu0 0.0
    %4601 = vmatpush1.xpose.msra.mxu0 0.0
    %4602 = vmatprep.subr.mxu0 0.0
    %4603 = vmatpush1.xpose.msra.mxu0 0.0
    %4604 = vmatprep.subr.mxu0 0.0
    %4605 = vmatpush1.xpose.msra.mxu0 0.0
    %4606 = vmatprep.subr.mxu0 0.0
    %4607 = vmatpush1.xpose.msra.mxu0 0.0
    %4608 = vmatprep.subr.mxu0 0.0
    %4609 = vmatpush1.xpose.msra.mxu0 0.0
    %4610 = vmatprep.subr.mxu0 0.0
    %4611 = vmatpush1.xpose.msra.mxu0 0.0
    %4612 = vmatprep.subr.mxu0 0.0
    %4613 = vmatpush1.xpose.msra.mxu0 0.0
    %4614 = vmatprep.subr.mxu0 0.0
    %4615 = vmatpush1.xpose.msra.mxu0 0.0
    %4616 = vmatprep.subr.mxu0 0.0
    %4617 = vmatpush1.xpose.msra.mxu0 0.0
    %4618 = vmatprep.subr.mxu0 0.0
    %4619 = vmatpush1.xpose.msra.mxu0 0.0
    %4620 = vmatprep.subr.mxu0 0.0
    %4621 = vmatpush1.xpose.msra.mxu0 0.0
    %4622 = vmatprep.subr.mxu0 0.0
    %4623 = vmatpush1.xpose.msra.mxu0 0.0
    %4624 = vmatprep.mubr.f32.mxu0 %v4225
    %4625 = vmatmul.mubr.f32.gmra.mrb[0].mxu0 %v4224
    %v4626 = vpop.f32.mrb[0].mxu0
    %v4627 = vadd.f32 %v4557, %v4626
    %v4628 = vpop.f32.mrb[0].mxu0
    %4629 = vdwg.mxu0
    %4630 = vmatprep.subr.mxu0 %v3043
    %4631 = vmatpush1.xpose.msra.mxu0 %v3042
    %4632 = vmatprep.subr.mxu0 0.0
    %4633 = vmatpush1.xpose.msra.mxu0 0.0
    %4634 = vmatprep.subr.mxu0 0.0
    %4635 = vmatpush1.xpose.msra.mxu0 0.0
    %4636 = vmatprep.subr.mxu0 0.0
    %4637 = vmatpush1.xpose.msra.mxu0 0.0
    %4638 = vmatprep.subr.mxu0 0.0
    %4639 = vmatpush1.xpose.msra.mxu0 0.0
    %4640 = vmatprep.subr.mxu0 0.0
    %4641 = vmatpush1.xpose.msra.mxu0 0.0
    %4642 = vmatprep.subr.mxu0 0.0
    %4643 = vmatpush1.xpose.msra.mxu0 0.0
    %4644 = vmatprep.subr.mxu0 0.0
    %4645 = vmatpush1.xpose.msra.mxu0 0.0
    %4646 = vmatprep.subr.mxu0 0.0
    %4647 = vmatpush1.xpose.msra.mxu0 0.0
    %4648 = vmatprep.subr.mxu0 0.0
    %4649 = vmatpush1.xpose.msra.mxu0 0.0
    %4650 = vmatprep.subr.mxu0 0.0
    %4651 = vmatpush1.xpose.msra.mxu0 0.0
    %4652 = vmatprep.subr.mxu0 0.0
    %4653 = vmatpush1.xpose.msra.mxu0 0.0
    %4654 = vmatprep.subr.mxu0 0.0
    %4655 = vmatpush1.xpose.msra.mxu0 0.0
    %4656 = vmatprep.subr.mxu0 0.0
    %4657 = vmatpush1.xpose.msra.mxu0 0.0
    %4658 = vmatprep.subr.mxu0 0.0
    %4659 = vmatpush1.xpose.msra.mxu0 0.0
    %4660 = vmatprep.subr.mxu0 0.0
    %4661 = vmatpush1.xpose.msra.mxu0 0.0
    %4662 = vmatprep.subr.mxu0 0.0
    %4663 = vmatpush1.xpose.msra.mxu0 0.0
    %4664 = vmatprep.subr.mxu0 0.0
    %4665 = vmatpush1.xpose.msra.mxu0 0.0
    %4666 = vmatprep.subr.mxu0 0.0
    %4667 = vmatpush1.xpose.msra.mxu0 0.0
    %4668 = vmatprep.subr.mxu0 0.0
    %4669 = vmatpush1.xpose.msra.mxu0 0.0
    %4670 = vmatprep.subr.mxu0 0.0
    %4671 = vmatpush1.xpose.msra.mxu0 0.0
    %4672 = vmatprep.subr.mxu0 0.0
    %4673 = vmatpush1.xpose.msra.mxu0 0.0
    %4674 = vmatprep.subr.mxu0 0.0
    %4675 = vmatpush1.xpose.msra.mxu0 0.0
    %4676 = vmatprep.subr.mxu0 0.0
    %4677 = vmatpush1.xpose.msra.mxu0 0.0
    %4678 = vmatprep.subr.mxu0 0.0
    %4679 = vmatpush1.xpose.msra.mxu0 0.0
    %4680 = vmatprep.subr.mxu0 0.0
    %4681 = vmatpush1.xpose.msra.mxu0 0.0
    %4682 = vmatprep.subr.mxu0 0.0
    %4683 = vmatpush1.xpose.msra.mxu0 0.0
    %4684 = vmatprep.subr.mxu0 0.0
    %4685 = vmatpush1.xpose.msra.mxu0 0.0
    %4686 = vmatprep.subr.mxu0 0.0
    %4687 = vmatpush1.xpose.msra.mxu0 0.0
    %4688 = vmatprep.subr.mxu0 0.0
    %4689 = vmatpush1.xpose.msra.mxu0 0.0
    %4690 = vmatprep.subr.mxu0 0.0
    %4691 = vmatpush1.xpose.msra.mxu0 0.0
    %4692 = vmatprep.subr.mxu0 0.0
    %4693 = vmatpush1.xpose.msra.mxu0 0.0
    %4694 = vmatprep.mubr.f32.mxu0 %v4227
    %4695 = vmatmul.mubr.f32.gmra.mrb[0].mxu0 %v4226
    %v4696 = vpop.f32.mrb[0].mxu0
    %v4697 = vadd.f32 %v4627, %v4696
    %v4698 = vpop.f32.mrb[0].mxu0
    %4699 = vdwg.mxu0
    %4700 = vmatprep.subr.mxu0 %v3045
    %4701 = vmatpush1.xpose.msra.mxu0 %v3044
    %4702 = vmatprep.subr.mxu0 0.0
    %4703 = vmatpush1.xpose.msra.mxu0 0.0
    %4704 = vmatprep.subr.mxu0 0.0
    %4705 = vmatpush1.xpose.msra.mxu0 0.0
    %4706 = vmatprep.subr.mxu0 0.0
    %4707 = vmatpush1.xpose.msra.mxu0 0.0
    %4708 = vmatprep.subr.mxu0 0.0
    %4709 = vmatpush1.xpose.msra.mxu0 0.0
    %4710 = vmatprep.subr.mxu0 0.0
    %4711 = vmatpush1.xpose.msra.mxu0 0.0
    %4712 = vmatprep.subr.mxu0 0.0
    %4713 = vmatpush1.xpose.msra.mxu0 0.0
    %4714 = vmatprep.subr.mxu0 0.0
    %4715 = vmatpush1.xpose.msra.mxu0 0.0
    %4716 = vmatprep.subr.mxu0 0.0
    %4717 = vmatpush1.xpose.msra.mxu0 0.0
    %4718 = vmatprep.subr.mxu0 0.0
    %4719 = vmatpush1.xpose.msra.mxu0 0.0
    %4720 = vmatprep.subr.mxu0 0.0
    %4721 = vmatpush1.xpose.msra.mxu0 0.0
    %4722 = vmatprep.subr.mxu0 0.0
    %4723 = vmatpush1.xpose.msra.mxu0 0.0
    %4724 = vmatprep.subr.mxu0 0.0
    %4725 = vmatpush1.xpose.msra.mxu0 0.0
    %4726 = vmatprep.subr.mxu0 0.0
    %4727 = vmatpush1.xpose.msra.mxu0 0.0
    %4728 = vmatprep.subr.mxu0 0.0
    %4729 = vmatpush1.xpose.msra.mxu0 0.0
    %4730 = vmatprep.subr.mxu0 0.0
    %4731 = vmatpush1.xpose.msra.mxu0 0.0
    %4732 = vmatprep.subr.mxu0 0.0
    %4733 = vmatpush1.xpose.msra.mxu0 0.0
    %4734 = vmatprep.subr.mxu0 0.0
    %4735 = vmatpush1.xpose.msra.mxu0 0.0
    %4736 = vmatprep.subr.mxu0 0.0
    %4737 = vmatpush1.xpose.msra.mxu0 0.0
    %4738 = vmatprep.subr.mxu0 0.0
    %4739 = vmatpush1.xpose.msra.mxu0 0.0
    %4740 = vmatprep.subr.mxu0 0.0
    %4741 = vmatpush1.xpose.msra.mxu0 0.0
    %4742 = vmatprep.subr.mxu0 0.0
    %4743 = vmatpush1.xpose.msra.mxu0 0.0
    %4744 = vmatprep.subr.mxu0 0.0
    %4745 = vmatpush1.xpose.msra.mxu0 0.0
    %4746 = vmatprep.subr.mxu0 0.0
    %4747 = vmatpush1.xpose.msra.mxu0 0.0
    %4748 = vmatprep.subr.mxu0 0.0
    %4749 = vmatpush1.xpose.msra.mxu0 0.0
    %4750 = vmatprep.subr.mxu0 0.0
    %4751 = vmatpush1.xpose.msra.mxu0 0.0
    %4752 = vmatprep.subr.mxu0 0.0
    %4753 = vmatpush1.xpose.msra.mxu0 0.0
    %4754 = vmatprep.subr.mxu0 0.0
    %4755 = vmatpush1.xpose.msra.mxu0 0.0
    %4756 = vmatprep.subr.mxu0 0.0
    %4757 = vmatpush1.xpose.msra.mxu0 0.0
    %4758 = vmatprep.subr.mxu0 0.0
    %4759 = vmatpush1.xpose.msra.mxu0 0.0
    %4760 = vmatprep.subr.mxu0 0.0
    %4761 = vmatpush1.xpose.msra.mxu0 0.0
    %4762 = vmatprep.subr.mxu0 0.0
    %4763 = vmatpush1.xpose.msra.mxu0 0.0
    %4764 = vmatprep.mubr.f32.mxu0 %v4229
    %4765 = vmatmul.mubr.f32.gmra.mrb[0].mxu0 %v4228
    %v4766 = vpop.f32.mrb[0].mxu0
    %v4767 = vadd.f32 %v4697, %v4766
    %v4768 = vpop.f32.mrb[0].mxu0
    %4769 = vdwg.mxu0
    %4770 = vmatprep.subr.mxu0 %v3047
    %4771 = vmatpush1.xpose.msra.mxu0 %v3046
    %4772 = vmatprep.subr.mxu0 0.0
    %4773 = vmatpush1.xpose.msra.mxu0 0.0
    %4774 = vmatprep.subr.mxu0 0.0
    %4775 = vmatpush1.xpose.msra.mxu0 0.0
    %4776 = vmatprep.subr.mxu0 0.0
    %4777 = vmatpush1.xpose.msra.mxu0 0.0
    %4778 = vmatprep.subr.mxu0 0.0
    %4779 = vmatpush1.xpose.msra.mxu0 0.0
    %4780 = vmatprep.subr.mxu0 0.0
    %4781 = vmatpush1.xpose.msra.mxu0 0.0
    %4782 = vmatprep.subr.mxu0 0.0
    %4783 = vmatpush1.xpose.msra.mxu0 0.0
    %4784 = vmatprep.subr.mxu0 0.0
    %4785 = vmatpush1.xpose.msra.mxu0 0.0
    %4786 = vmatprep.subr.mxu0 0.0
    %4787 = vmatpush1.xpose.msra.mxu0 0.0
    %4788 = vmatprep.subr.mxu0 0.0
    %4789 = vmatpush1.xpose.msra.mxu0 0.0
    %4790 = vmatprep.subr.mxu0 0.0
    %4791 = vmatpush1.xpose.msra.mxu0 0.0
    %4792 = vmatprep.subr.mxu0 0.0
    %4793 = vmatpush1.xpose.msra.mxu0 0.0
    %4794 = vmatprep.subr.mxu0 0.0
    %4795 = vmatpush1.xpose.msra.mxu0 0.0
    %4796 = vmatprep.subr.mxu0 0.0
    %4797 = vmatpush1.xpose.msra.mxu0 0.0
    %4798 = vmatprep.subr.mxu0 0.0
    %4799 = vmatpush1.xpose.msra.mxu0 0.0
    %4800 = vmatprep.subr.mxu0 0.0
    %4801 = vmatpush1.xpose.msra.mxu0 0.0
    %4802 = vmatprep.subr.mxu0 0.0
    %4803 = vmatpush1.xpose.msra.mxu0 0.0
    %4804 = vmatprep.subr.mxu0 0.0
    %4805 = vmatpush1.xpose.msra.mxu0 0.0
    %4806 = vmatprep.subr.mxu0 0.0
    %4807 = vmatpush1.xpose.msra.mxu0 0.0
    %4808 = vmatprep.subr.mxu0 0.0
    %4809 = vmatpush1.xpose.msra.mxu0 0.0
    %4810 = vmatprep.subr.mxu0 0.0
    %4811 = vmatpush1.xpose.msra.mxu0 0.0
    %4812 = vmatprep.subr.mxu0 0.0
    %4813 = vmatpush1.xpose.msra.mxu0 0.0
    %4814 = vmatprep.subr.mxu0 0.0
    %4815 = vmatpush1.xpose.msra.mxu0 0.0
    %4816 = vmatprep.subr.mxu0 0.0
    %4817 = vmatpush1.xpose.msra.mxu0 0.0
    %4818 = vmatprep.subr.mxu0 0.0
    %4819 = vmatpush1.xpose.msra.mxu0 0.0
    %4820 = vmatprep.subr.mxu0 0.0
    %4821 = vmatpush1.xpose.msra.mxu0 0.0
    %4822 = vmatprep.subr.mxu0 0.0
    %4823 = vmatpush1.xpose.msra.mxu0 0.0
    %4824 = vmatprep.subr.mxu0 0.0
    %4825 = vmatpush1.xpose.msra.mxu0 0.0
    %4826 = vmatprep.subr.mxu0 0.0
    %4827 = vmatpush1.xpose.msra.mxu0 0.0
    %4828 = vmatprep.subr.mxu0 0.0
    %4829 = vmatpush1.xpose.msra.mxu0 0.0
    %4830 = vmatprep.subr.mxu0 0.0
    %4831 = vmatpush1.xpose.msra.mxu0 0.0
    %4832 = vmatprep.subr.mxu0 0.0
    %4833 = vmatpush1.xpose.msra.mxu0 0.0
    %4834 = vmatprep.mubr.f32.mxu0 %v4231
    %4835 = vmatmul.mubr.f32.gmra.mrb[0].mxu0 %v4230
    %v4836 = vpop.f32.mrb[0].mxu0
    %v4837 = vadd.f32 %v4767, %v4836
    %v4838 = vpop.f32.mrb[0].mxu0
    %4839 = vdwg.mxu0
    %4840 = vmatprep.subr.mxu0 %v3049
    %4841 = vmatpush1.xpose.msra.mxu0 %v3048
    %4842 = vmatprep.subr.mxu0 0.0
    %4843 = vmatpush1.xpose.msra.mxu0 0.0
    %4844 = vmatprep.subr.mxu0 0.0
    %4845 = vmatpush1.xpose.msra.mxu0 0.0
    %4846 = vmatprep.subr.mxu0 0.0
    %4847 = vmatpush1.xpose.msra.mxu0 0.0
    %4848 = vmatprep.subr.mxu0 0.0
    %4849 = vmatpush1.xpose.msra.mxu0 0.0
    %4850 = vmatprep.subr.mxu0 0.0
    %4851 = vmatpush1.xpose.msra.mxu0 0.0
    %4852 = vmatprep.subr.mxu0 0.0
    %4853 = vmatpush1.xpose.msra.mxu0 0.0
    %4854 = vmatprep.subr.mxu0 0.0
    %4855 = vmatpush1.xpose.msra.mxu0 0.0
    %4856 = vmatprep.subr.mxu0 0.0
    %4857 = vmatpush1.xpose.msra.mxu0 0.0
    %4858 = vmatprep.subr.mxu0 0.0
    %4859 = vmatpush1.xpose.msra.mxu0 0.0
    %4860 = vmatprep.subr.mxu0 0.0
    %4861 = vmatpush1.xpose.msra.mxu0 0.0
    %4862 = vmatprep.subr.mxu0 0.0
    %4863 = vmatpush1.xpose.msra.mxu0 0.0
    %4864 = vmatprep.subr.mxu0 0.0
    %4865 = vmatpush1.xpose.msra.mxu0 0.0
    %4866 = vmatprep.subr.mxu0 0.0
    %4867 = vmatpush1.xpose.msra.mxu0 0.0
    %4868 = vmatprep.subr.mxu0 0.0
    %4869 = vmatpush1.xpose.msra.mxu0 0.0
    %4870 = vmatprep.subr.mxu0 0.0
    %4871 = vmatpush1.xpose.msra.mxu0 0.0
    %4872 = vmatprep.subr.mxu0 0.0
    %4873 = vmatpush1.xpose.msra.mxu0 0.0
    %4874 = vmatprep.subr.mxu0 0.0
    %4875 = vmatpush1.xpose.msra.mxu0 0.0
    %4876 = vmatprep.subr.mxu0 0.0
    %4877 = vmatpush1.xpose.msra.mxu0 0.0
    %4878 = vmatprep.subr.mxu0 0.0
    %4879 = vmatpush1.xpose.msra.mxu0 0.0
    %4880 = vmatprep.subr.mxu0 0.0
    %4881 = vmatpush1.xpose.msra.mxu0 0.0
    %4882 = vmatprep.subr.mxu0 0.0
    %4883 = vmatpush1.xpose.msra.mxu0 0.0
    %4884 = vmatprep.subr.mxu0 0.0
    %4885 = vmatpush1.xpose.msra.mxu0 0.0
    %4886 = vmatprep.subr.mxu0 0.0
    %4887 = vmatpush1.xpose.msra.mxu0 0.0
    %4888 = vmatprep.subr.mxu0 0.0
    %4889 = vmatpush1.xpose.msra.mxu0 0.0
    %4890 = vmatprep.subr.mxu0 0.0
    %4891 = vmatpush1.xpose.msra.mxu0 0.0
    %4892 = vmatprep.subr.mxu0 0.0
    %4893 = vmatpush1.xpose.msra.mxu0 0.0
    %4894 = vmatprep.subr.mxu0 0.0
    %4895 = vmatpush1.xpose.msra.mxu0 0.0
    %4896 = vmatprep.subr.mxu0 0.0
    %4897 = vmatpush1.xpose.msra.mxu0 0.0
    %4898 = vmatprep.subr.mxu0 0.0
    %4899 = vmatpush1.xpose.msra.mxu0 0.0
    %4900 = vmatprep.subr.mxu0 0.0
    %4901 = vmatpush1.xpose.msra.mxu0 0.0
    %4902 = vmatprep.subr.mxu0 0.0
    %4903 = vmatpush1.xpose.msra.mxu0 0.0
    %4904 = vmatprep.mubr.f32.mxu0 %v4233
    %4905 = vmatmul.mubr.f32.gmra.mrb[0].mxu0 %v4232
    %v4906 = vpop.f32.mrb[0].mxu0
    %v4907 = vadd.f32 %v4837, %v4906
    %v4908 = vpop.f32.mrb[0].mxu0
    %4909 = vdwg.mxu0
    %4910 = vmatprep.subr.mxu0 %v3051
    %4911 = vmatpush1.xpose.msra.mxu0 %v3050
    %4912 = vmatprep.subr.mxu0 0.0
    %4913 = vmatpush1.xpose.msra.mxu0 0.0
    %4914 = vmatprep.subr.mxu0 0.0
    %4915 = vmatpush1.xpose.msra.mxu0 0.0
    %4916 = vmatprep.subr.mxu0 0.0
    %4917 = vmatpush1.xpose.msra.mxu0 0.0
    %4918 = vmatprep.subr.mxu0 0.0
    %4919 = vmatpush1.xpose.msra.mxu0 0.0
    %4920 = vmatprep.subr.mxu0 0.0
    %4921 = vmatpush1.xpose.msra.mxu0 0.0
    %4922 = vmatprep.subr.mxu0 0.0
    %4923 = vmatpush1.xpose.msra.mxu0 0.0
    %4924 = vmatprep.subr.mxu0 0.0
    %4925 = vmatpush1.xpose.msra.mxu0 0.0
    %4926 = vmatprep.subr.mxu0 0.0
    %4927 = vmatpush1.xpose.msra.mxu0 0.0
    %4928 = vmatprep.subr.mxu0 0.0
    %4929 = vmatpush1.xpose.msra.mxu0 0.0
    %4930 = vmatprep.subr.mxu0 0.0
    %4931 = vmatpush1.xpose.msra.mxu0 0.0
    %4932 = vmatprep.subr.mxu0 0.0
    %4933 = vmatpush1.xpose.msra.mxu0 0.0
    %4934 = vmatprep.subr.mxu0 0.0
    %4935 = vmatpush1.xpose.msra.mxu0 0.0
    %4936 = vmatprep.subr.mxu0 0.0
    %4937 = vmatpush1.xpose.msra.mxu0 0.0
    %4938 = vmatprep.subr.mxu0 0.0
    %4939 = vmatpush1.xpose.msra.mxu0 0.0
    %4940 = vmatprep.subr.mxu0 0.0
    %4941 = vmatpush1.xpose.msra.mxu0 0.0
    %4942 = vmatprep.subr.mxu0 0.0
    %4943 = vmatpush1.xpose.msra.mxu0 0.0
    %4944 = vmatprep.subr.mxu0 0.0
    %4945 = vmatpush1.xpose.msra.mxu0 0.0
    %4946 = vmatprep.subr.mxu0 0.0
    %4947 = vmatpush1.xpose.msra.mxu0 0.0
    %4948 = vmatprep.subr.mxu0 0.0
    %4949 = vmatpush1.xpose.msra.mxu0 0.0
    %4950 = vmatprep.subr.mxu0 0.0
    %4951 = vmatpush1.xpose.msra.mxu0 0.0
    %4952 = vmatprep.subr.mxu0 0.0
    %4953 = vmatpush1.xpose.msra.mxu0 0.0
    %4954 = vmatprep.subr.mxu0 0.0
    %4955 = vmatpush1.xpose.msra.mxu0 0.0
    %4956 = vmatprep.subr.mxu0 0.0
    %4957 = vmatpush1.xpose.msra.mxu0 0.0
    %4958 = vmatprep.subr.mxu0 0.0
    %4959 = vmatpush1.xpose.msra.mxu0 0.0
    %4960 = vmatprep.subr.mxu0 0.0
    %4961 = vmatpush1.xpose.msra.mxu0 0.0
    %4962 = vmatprep.subr.mxu0 0.0
    %4963 = vmatpush1.xpose.msra.mxu0 0.0
    %4964 = vmatprep.subr.mxu0 0.0
    %4965 = vmatpush1.xpose.msra.mxu0 0.0
    %4966 = vmatprep.subr.mxu0 0.0
    %4967 = vmatpush1.xpose.msra.mxu0 0.0
    %4968 = vmatprep.subr.mxu0 0.0
    %4969 = vmatpush1.xpose.msra.mxu0 0.0
    %4970 = vmatprep.subr.mxu0 0.0
    %4971 = vmatpush1.xpose.msra.mxu0 0.0
    %4972 = vmatprep.subr.mxu0 0.0
    %4973 = vmatpush1.xpose.msra.mxu0 0.0
    %4974 = vmatprep.mubr.f32.mxu0 %v4235
    %4975 = vmatmul.mubr.f32.gmra.mrb[0].mxu0 %v4234
    %v4976 = vpop.f32.mrb[0].mxu0
    %v4977 = vadd.f32 %v4907, %v4976
    %v4978 = vpop.f32.mrb[0].mxu0
    %4979 = vdwg.mxu0
    %4980 = vmatprep.subr.mxu0 %v3053
    %4981 = vmatpush1.xpose.msra.mxu0 %v3052
    %4982 = vmatprep.subr.mxu0 0.0
    %4983 = vmatpush1.xpose.msra.mxu0 0.0
    %4984 = vmatprep.subr.mxu0 0.0
    %4985 = vmatpush1.xpose.msra.mxu0 0.0
    %4986 = vmatprep.subr.mxu0 0.0
    %4987 = vmatpush1.xpose.msra.mxu0 0.0
    %4988 = vmatprep.subr.mxu0 0.0
    %4989 = vmatpush1.xpose.msra.mxu0 0.0
    %4990 = vmatprep.subr.mxu0 0.0
    %4991 = vmatpush1.xpose.msra.mxu0 0.0
    %4992 = vmatprep.subr.mxu0 0.0
    %4993 = vmatpush1.xpose.msra.mxu0 0.0
    %4994 = vmatprep.subr.mxu0 0.0
    %4995 = vmatpush1.xpose.msra.mxu0 0.0
    %4996 = vmatprep.subr.mxu0 0.0
    %4997 = vmatpush1.xpose.msra.mxu0 0.0
    %4998 = vmatprep.subr.mxu0 0.0
    %4999 = vmatpush1.xpose.msra.mxu0 0.0
    %5000 = vmatprep.subr.mxu0 0.0
    %5001 = vmatpush1.xpose.msra.mxu0 0.0
    %5002 = vmatprep.subr.mxu0 0.0
    %5003 = vmatpush1.xpose.msra.mxu0 0.0
    %5004 = vmatprep.subr.mxu0 0.0
    %5005 = vmatpush1.xpose.msra.mxu0 0.0
    %5006 = vmatprep.subr.mxu0 0.0
    %5007 = vmatpush1.xpose.msra.mxu0 0.0
    %5008 = vmatprep.subr.mxu0 0.0
    %5009 = vmatpush1.xpose.msra.mxu0 0.0
    %5010 = vmatprep.subr.mxu0 0.0
    %5011 = vmatpush1.xpose.msra.mxu0 0.0
    %5012 = vmatprep.subr.mxu0 0.0
    %5013 = vmatpush1.xpose.msra.mxu0 0.0
    %5014 = vmatprep.subr.mxu0 0.0
    %5015 = vmatpush1.xpose.msra.mxu0 0.0
    %5016 = vmatprep.subr.mxu0 0.0
    %5017 = vmatpush1.xpose.msra.mxu0 0.0
    %5018 = vmatprep.subr.mxu0 0.0
    %5019 = vmatpush1.xpose.msra.mxu0 0.0
    %5020 = vmatprep.subr.mxu0 0.0
    %5021 = vmatpush1.xpose.msra.mxu0 0.0
    %5022 = vmatprep.subr.mxu0 0.0
    %5023 = vmatpush1.xpose.msra.mxu0 0.0
    %5024 = vmatprep.subr.mxu0 0.0
    %5025 = vmatpush1.xpose.msra.mxu0 0.0
    %5026 = vmatprep.subr.mxu0 0.0
    %5027 = vmatpush1.xpose.msra.mxu0 0.0
    %5028 = vmatprep.subr.mxu0 0.0
    %5029 = vmatpush1.xpose.msra.mxu0 0.0
    %5030 = vmatprep.subr.mxu0 0.0
    %5031 = vmatpush1.xpose.msra.mxu0 0.0
    %5032 = vmatprep.subr.mxu0 0.0
    %5033 = vmatpush1.xpose.msra.mxu0 0.0
    %5034 = vmatprep.subr.mxu0 0.0
    %5035 = vmatpush1.xpose.msra.mxu0 0.0
    %5036 = vmatprep.subr.mxu0 0.0
    %5037 = vmatpush1.xpose.msra.mxu0 0.0
    %5038 = vmatprep.subr.mxu0 0.0
    %5039 = vmatpush1.xpose.msra.mxu0 0.0
    %5040 = vmatprep.subr.mxu0 0.0
    %5041 = vmatpush1.xpose.msra.mxu0 0.0
    %5042 = vmatprep.subr.mxu0 0.0
    %5043 = vmatpush1.xpose.msra.mxu0 0.0
    %5044 = vmatprep.mubr.f32.mxu0 %v4237
    %5045 = vmatmul.mubr.f32.gmra.mrb[0].mxu0 %v4236
    %v5046 = vpop.f32.mrb[0].mxu0
    %v5047 = vadd.f32 %v4977, %v5046
    %v5048 = vpop.f32.mrb[0].mxu0
    %5049 = vdwg.mxu0
    %5050 = vmatprep.subr.mxu0 %v3055
    %5051 = vmatpush1.xpose.msra.mxu0 %v3054
    %5052 = vmatprep.subr.mxu0 0.0
    %5053 = vmatpush1.xpose.msra.mxu0 0.0
    %5054 = vmatprep.subr.mxu0 0.0
    %5055 = vmatpush1.xpose.msra.mxu0 0.0
    %5056 = vmatprep.subr.mxu0 0.0
    %5057 = vmatpush1.xpose.msra.mxu0 0.0
    %5058 = vmatprep.subr.mxu0 0.0
    %5059 = vmatpush1.xpose.msra.mxu0 0.0
    %5060 = vmatprep.subr.mxu0 0.0
    %5061 = vmatpush1.xpose.msra.mxu0 0.0
    %5062 = vmatprep.subr.mxu0 0.0
    %5063 = vmatpush1.xpose.msra.mxu0 0.0
    %5064 = vmatprep.subr.mxu0 0.0
    %5065 = vmatpush1.xpose.msra.mxu0 0.0
    %5066 = vmatprep.subr.mxu0 0.0
    %5067 = vmatpush1.xpose.msra.mxu0 0.0
    %5068 = vmatprep.subr.mxu0 0.0
    %5069 = vmatpush1.xpose.msra.mxu0 0.0
    %5070 = vmatprep.subr.mxu0 0.0
    %5071 = vmatpush1.xpose.msra.mxu0 0.0
    %5072 = vmatprep.subr.mxu0 0.0
    %5073 = vmatpush1.xpose.msra.mxu0 0.0
    %5074 = vmatprep.subr.mxu0 0.0
    %5075 = vmatpush1.xpose.msra.mxu0 0.0
    %5076 = vmatprep.subr.mxu0 0.0
    %5077 = vmatpush1.xpose.msra.mxu0 0.0
    %5078 = vmatprep.subr.mxu0 0.0
    %5079 = vmatpush1.xpose.msra.mxu0 0.0
    %5080 = vmatprep.subr.mxu0 0.0
    %5081 = vmatpush1.xpose.msra.mxu0 0.0
    %5082 = vmatprep.subr.mxu0 0.0
    %5083 = vmatpush1.xpose.msra.mxu0 0.0
    %5084 = vmatprep.subr.mxu0 0.0
    %5085 = vmatpush1.xpose.msra.mxu0 0.0
    %5086 = vmatprep.subr.mxu0 0.0
    %5087 = vmatpush1.xpose.msra.mxu0 0.0
    %5088 = vmatprep.subr.mxu0 0.0
    %5089 = vmatpush1.xpose.msra.mxu0 0.0
    %5090 = vmatprep.subr.mxu0 0.0
    %5091 = vmatpush1.xpose.msra.mxu0 0.0
    %5092 = vmatprep.subr.mxu0 0.0
    %5093 = vmatpush1.xpose.msra.mxu0 0.0
    %5094 = vmatprep.subr.mxu0 0.0
    %5095 = vmatpush1.xpose.msra.mxu0 0.0
    %5096 = vmatprep.subr.mxu0 0.0
    %5097 = vmatpush1.xpose.msra.mxu0 0.0
    %5098 = vmatprep.subr.mxu0 0.0
    %5099 = vmatpush1.xpose.msra.mxu0 0.0
    %5100 = vmatprep.subr.mxu0 0.0
    %5101 = vmatpush1.xpose.msra.mxu0 0.0
    %5102 = vmatprep.subr.mxu0 0.0
    %5103 = vmatpush1.xpose.msra.mxu0 0.0
    %5104 = vmatprep.subr.mxu0 0.0
    %5105 = vmatpush1.xpose.msra.mxu0 0.0
    %5106 = vmatprep.subr.mxu0 0.0
    %5107 = vmatpush1.xpose.msra.mxu0 0.0
    %5108 = vmatprep.subr.mxu0 0.0
    %5109 = vmatpush1.xpose.msra.mxu0 0.0
    %5110 = vmatprep.subr.mxu0 0.0
    %5111 = vmatpush1.xpose.msra.mxu0 0.0
    %5112 = vmatprep.subr.mxu0 0.0
    %5113 = vmatpush1.xpose.msra.mxu0 0.0
    %5114 = vmatprep.mubr.f32.mxu0 %v4239
    %5115 = vmatmul.mubr.f32.gmra.mrb[0].mxu0 %v4238
    %v5116 = vpop.f32.mrb[0].mxu0
    %v5117 = vadd.f32 %v5047, %v5116
    %v5118 = vpop.f32.mrb[0].mxu0
    %5119 = vdwg.mxu0
    %5120 = vmatprep.subr.mxu0 %v3057
    %5121 = vmatpush1.xpose.msra.mxu0 %v3056
    %5122 = vmatprep.subr.mxu0 0.0
    %5123 = vmatpush1.xpose.msra.mxu0 0.0
    %5124 = vmatprep.subr.mxu0 0.0
    %5125 = vmatpush1.xpose.msra.mxu0 0.0
    %5126 = vmatprep.subr.mxu0 0.0
    %5127 = vmatpush1.xpose.msra.mxu0 0.0
    %5128 = vmatprep.subr.mxu0 0.0
    %5129 = vmatpush1.xpose.msra.mxu0 0.0
    %5130 = vmatprep.subr.mxu0 0.0
    %5131 = vmatpush1.xpose.msra.mxu0 0.0
    %5132 = vmatprep.subr.mxu0 0.0
    %5133 = vmatpush1.xpose.msra.mxu0 0.0
    %5134 = vmatprep.subr.mxu0 0.0
    %5135 = vmatpush1.xpose.msra.mxu0 0.0
    %5136 = vmatprep.subr.mxu0 0.0
    %5137 = vmatpush1.xpose.msra.mxu0 0.0
    %5138 = vmatprep.subr.mxu0 0.0
    %5139 = vmatpush1.xpose.msra.mxu0 0.0
    %5140 = vmatprep.subr.mxu0 0.0
    %5141 = vmatpush1.xpose.msra.mxu0 0.0
    %5142 = vmatprep.subr.mxu0 0.0
    %5143 = vmatpush1.xpose.msra.mxu0 0.0
    %5144 = vmatprep.subr.mxu0 0.0
    %5145 = vmatpush1.xpose.msra.mxu0 0.0
    %5146 = vmatprep.subr.mxu0 0.0
    %5147 = vmatpush1.xpose.msra.mxu0 0.0
    %5148 = vmatprep.subr.mxu0 0.0
    %5149 = vmatpush1.xpose.msra.mxu0 0.0
    %5150 = vmatprep.subr.mxu0 0.0
    %5151 = vmatpush1.xpose.msra.mxu0 0.0
    %5152 = vmatprep.subr.mxu0 0.0
    %5153 = vmatpush1.xpose.msra.mxu0 0.0
    %5154 = vmatprep.subr.mxu0 0.0
    %5155 = vmatpush1.xpose.msra.mxu0 0.0
    %5156 = vmatprep.subr.mxu0 0.0
    %5157 = vmatpush1.xpose.msra.mxu0 0.0
    %5158 = vmatprep.subr.mxu0 0.0
    %5159 = vmatpush1.xpose.msra.mxu0 0.0
    %5160 = vmatprep.subr.mxu0 0.0
    %5161 = vmatpush1.xpose.msra.mxu0 0.0
    %5162 = vmatprep.subr.mxu0 0.0
    %5163 = vmatpush1.xpose.msra.mxu0 0.0
    %5164 = vmatprep.subr.mxu0 0.0
    %5165 = vmatpush1.xpose.msra.mxu0 0.0
    %5166 = vmatprep.subr.mxu0 0.0
    %5167 = vmatpush1.xpose.msra.mxu0 0.0
    %5168 = vmatprep.subr.mxu0 0.0
    %5169 = vmatpush1.xpose.msra.mxu0 0.0
    %5170 = vmatprep.subr.mxu0 0.0
    %5171 = vmatpush1.xpose.msra.mxu0 0.0
    %5172 = vmatprep.subr.mxu0 0.0
    %5173 = vmatpush1.xpose.msra.mxu0 0.0
    %5174 = vmatprep.subr.mxu0 0.0
    %5175 = vmatpush1.xpose.msra.mxu0 0.0
    %5176 = vmatprep.subr.mxu0 0.0
    %5177 = vmatpush1.xpose.msra.mxu0 0.0
    %5178 = vmatprep.subr.mxu0 0.0
    %5179 = vmatpush1.xpose.msra.mxu0 0.0
    %5180 = vmatprep.subr.mxu0 0.0
    %5181 = vmatpush1.xpose.msra.mxu0 0.0
    %5182 = vmatprep.subr.mxu0 0.0
    %5183 = vmatpush1.xpose.msra.mxu0 0.0
    %5184 = vmatprep.mubr.f32.mxu0 %v4241
    %5185 = vmatmul.mubr.f32.gmra.mrb[0].mxu0 %v4240
    %v5186 = vpop.f32.mrb[0].mxu0
    %v5187 = vadd.f32 %v5117, %v5186
    %v5188 = vpop.f32.mrb[0].mxu0
    %5189 = vdwg.mxu0
    %5190 = vmatprep.subr.mxu0 %v3059
    %5191 = vmatpush1.xpose.msra.mxu0 %v3058
    %5192 = vmatprep.subr.mxu0 0.0
    %5193 = vmatpush1.xpose.msra.mxu0 0.0
    %5194 = vmatprep.subr.mxu0 0.0
    %5195 = vmatpush1.xpose.msra.mxu0 0.0
    %5196 = vmatprep.subr.mxu0 0.0
    %5197 = vmatpush1.xpose.msra.mxu0 0.0
    %5198 = vmatprep.subr.mxu0 0.0
    %5199 = vmatpush1.xpose.msra.mxu0 0.0
    %5200 = vmatprep.subr.mxu0 0.0
    %5201 = vmatpush1.xpose.msra.mxu0 0.0
    %5202 = vmatprep.subr.mxu0 0.0
    %5203 = vmatpush1.xpose.msra.mxu0 0.0
    %5204 = vmatprep.subr.mxu0 0.0
    %5205 = vmatpush1.xpose.msra.mxu0 0.0
    %5206 = vmatprep.subr.mxu0 0.0
    %5207 = vmatpush1.xpose.msra.mxu0 0.0
    %5208 = vmatprep.subr.mxu0 0.0
    %5209 = vmatpush1.xpose.msra.mxu0 0.0
    %5210 = vmatprep.subr.mxu0 0.0
    %5211 = vmatpush1.xpose.msra.mxu0 0.0
    %5212 = vmatprep.subr.mxu0 0.0
    %5213 = vmatpush1.xpose.msra.mxu0 0.0
    %5214 = vmatprep.subr.mxu0 0.0
    %5215 = vmatpush1.xpose.msra.mxu0 0.0
    %5216 = vmatprep.subr.mxu0 0.0
    %5217 = vmatpush1.xpose.msra.mxu0 0.0
    %5218 = vmatprep.subr.mxu0 0.0
    %5219 = vmatpush1.xpose.msra.mxu0 0.0
    %5220 = vmatprep.subr.mxu0 0.0
    %5221 = vmatpush1.xpose.msra.mxu0 0.0
    %5222 = vmatprep.subr.mxu0 0.0
    %5223 = vmatpush1.xpose.msra.mxu0 0.0
    %5224 = vmatprep.subr.mxu0 0.0
    %5225 = vmatpush1.xpose.msra.mxu0 0.0
    %5226 = vmatprep.subr.mxu0 0.0
    %5227 = vmatpush1.xpose.msra.mxu0 0.0
    %5228 = vmatprep.subr.mxu0 0.0
    %5229 = vmatpush1.xpose.msra.mxu0 0.0
    %5230 = vmatprep.subr.mxu0 0.0
    %5231 = vmatpush1.xpose.msra.mxu0 0.0
    %5232 = vmatprep.subr.mxu0 0.0
    %5233 = vmatpush1.xpose.msra.mxu0 0.0
    %5234 = vmatprep.subr.mxu0 0.0
    %5235 = vmatpush1.xpose.msra.mxu0 0.0
    %5236 = vmatprep.subr.mxu0 0.0
    %5237 = vmatpush1.xpose.msra.mxu0 0.0
    %5238 = vmatprep.subr.mxu0 0.0
    %5239 = vmatpush1.xpose.msra.mxu0 0.0
    %5240 = vmatprep.subr.mxu0 0.0
    %5241 = vmatpush1.xpose.msra.mxu0 0.0
    %5242 = vmatprep.subr.mxu0 0.0
    %5243 = vmatpush1.xpose.msra.mxu0 0.0
    %5244 = vmatprep.subr.mxu0 0.0
    %5245 = vmatpush1.xpose.msra.mxu0 0.0
    %5246 = vmatprep.subr.mxu0 0.0
    %5247 = vmatpush1.xpose.msra.mxu0 0.0
    %5248 = vmatprep.subr.mxu0 0.0
    %5249 = vmatpush1.xpose.msra.mxu0 0.0
    %5250 = vmatprep.subr.mxu0 0.0
    %5251 = vmatpush1.xpose.msra.mxu0 0.0
    %5252 = vmatprep.subr.mxu0 0.0
    %5253 = vmatpush1.xpose.msra.mxu0 0.0
    %5254 = vmatprep.mubr.f32.mxu0 %v4243
    %5255 = vmatmul.mubr.f32.gmra.mrb[0].mxu0 %v4242
    %v5256 = vpop.f32.mrb[0].mxu0
    %v5257 = vadd.f32 %v5187, %v5256
    %v5258 = vpop.f32.mrb[0].mxu0
    %5259 = vdwg.mxu0
    %5260 = vmatprep.subr.mxu0 %v3061
    %5261 = vmatpush1.xpose.msra.mxu0 %v3060
    %5262 = vmatprep.subr.mxu0 0.0
    %5263 = vmatpush1.xpose.msra.mxu0 0.0
    %5264 = vmatprep.subr.mxu0 0.0
    %5265 = vmatpush1.xpose.msra.mxu0 0.0
    %5266 = vmatprep.subr.mxu0 0.0
    %5267 = vmatpush1.xpose.msra.mxu0 0.0
    %5268 = vmatprep.subr.mxu0 0.0
    %5269 = vmatpush1.xpose.msra.mxu0 0.0
    %5270 = vmatprep.subr.mxu0 0.0
    %5271 = vmatpush1.xpose.msra.mxu0 0.0
    %5272 = vmatprep.subr.mxu0 0.0
    %5273 = vmatpush1.xpose.msra.mxu0 0.0
    %5274 = vmatprep.subr.mxu0 0.0
    %5275 = vmatpush1.xpose.msra.mxu0 0.0
    %5276 = vmatprep.subr.mxu0 0.0
    %5277 = vmatpush1.xpose.msra.mxu0 0.0
    %5278 = vmatprep.subr.mxu0 0.0
    %5279 = vmatpush1.xpose.msra.mxu0 0.0
    %5280 = vmatprep.subr.mxu0 0.0
    %5281 = vmatpush1.xpose.msra.mxu0 0.0
    %5282 = vmatprep.subr.mxu0 0.0
    %5283 = vmatpush1.xpose.msra.mxu0 0.0
    %5284 = vmatprep.subr.mxu0 0.0
    %5285 = vmatpush1.xpose.msra.mxu0 0.0
    %5286 = vmatprep.subr.mxu0 0.0
    %5287 = vmatpush1.xpose.msra.mxu0 0.0
    %5288 = vmatprep.subr.mxu0 0.0
    %5289 = vmatpush1.xpose.msra.mxu0 0.0
    %5290 = vmatprep.subr.mxu0 0.0
    %5291 = vmatpush1.xpose.msra.mxu0 0.0
    %5292 = vmatprep.subr.mxu0 0.0
    %5293 = vmatpush1.xpose.msra.mxu0 0.0
    %5294 = vmatprep.subr.mxu0 0.0
    %5295 = vmatpush1.xpose.msra.mxu0 0.0
    %5296 = vmatprep.subr.mxu0 0.0
    %5297 = vmatpush1.xpose.msra.mxu0 0.0
    %5298 = vmatprep.subr.mxu0 0.0
    %5299 = vmatpush1.xpose.msra.mxu0 0.0
    %5300 = vmatprep.subr.mxu0 0.0
    %5301 = vmatpush1.xpose.msra.mxu0 0.0
    %5302 = vmatprep.subr.mxu0 0.0
    %5303 = vmatpush1.xpose.msra.mxu0 0.0
    %5304 = vmatprep.subr.mxu0 0.0
    %5305 = vmatpush1.xpose.msra.mxu0 0.0
    %5306 = vmatprep.subr.mxu0 0.0
    %5307 = vmatpush1.xpose.msra.mxu0 0.0
    %5308 = vmatprep.subr.mxu0 0.0
    %5309 = vmatpush1.xpose.msra.mxu0 0.0
    %5310 = vmatprep.subr.mxu0 0.0
    %5311 = vmatpush1.xpose.msra.mxu0 0.0
    %5312 = vmatprep.subr.mxu0 0.0
    %5313 = vmatpush1.xpose.msra.mxu0 0.0
    %5314 = vmatprep.subr.mxu0 0.0
    %5315 = vmatpush1.xpose.msra.mxu0 0.0
    %5316 = vmatprep.subr.mxu0 0.0
    %5317 = vmatpush1.xpose.msra.mxu0 0.0
    %5318 = vmatprep.subr.mxu0 0.0
    %5319 = vmatpush1.xpose.msra.mxu0 0.0
    %5320 = vmatprep.subr.mxu0 0.0
    %5321 = vmatpush1.xpose.msra.mxu0 0.0
    %5322 = vmatprep.subr.mxu0 0.0
    %5323 = vmatpush1.xpose.msra.mxu0 0.0
    %5324 = vmatprep.mubr.f32.mxu0 %v4245
    %5325 = vmatmul.mubr.f32.gmra.mrb[0].mxu0 %v4244
    %v5326 = vpop.f32.mrb[0].mxu0
    %v5327 = vadd.f32 %v5257, %v5326
    %v5328 = vpop.f32.mrb[0].mxu0
    %5329 = vdwg.mxu0
    %5330 = vmatprep.subr.mxu0 %v3063
    %5331 = vmatpush1.xpose.msra.mxu0 %v3062
    %5332 = vmatprep.subr.mxu0 0.0
    %5333 = vmatpush1.xpose.msra.mxu0 0.0
    %5334 = vmatprep.subr.mxu0 0.0
    %5335 = vmatpush1.xpose.msra.mxu0 0.0
    %5336 = vmatprep.subr.mxu0 0.0
    %5337 = vmatpush1.xpose.msra.mxu0 0.0
    %5338 = vmatprep.subr.mxu0 0.0
    %5339 = vmatpush1.xpose.msra.mxu0 0.0
    %5340 = vmatprep.subr.mxu0 0.0
    %5341 = vmatpush1.xpose.msra.mxu0 0.0
    %5342 = vmatprep.subr.mxu0 0.0
    %5343 = vmatpush1.xpose.msra.mxu0 0.0
    %5344 = vmatprep.subr.mxu0 0.0
    %5345 = vmatpush1.xpose.msra.mxu0 0.0
    %5346 = vmatprep.subr.mxu0 0.0
    %5347 = vmatpush1.xpose.msra.mxu0 0.0
    %5348 = vmatprep.subr.mxu0 0.0
    %5349 = vmatpush1.xpose.msra.mxu0 0.0
    %5350 = vmatprep.subr.mxu0 0.0
    %5351 = vmatpush1.xpose.msra.mxu0 0.0
    %5352 = vmatprep.subr.mxu0 0.0
    %5353 = vmatpush1.xpose.msra.mxu0 0.0
    %5354 = vmatprep.subr.mxu0 0.0
    %5355 = vmatpush1.xpose.msra.mxu0 0.0
    %5356 = vmatprep.subr.mxu0 0.0
    %5357 = vmatpush1.xpose.msra.mxu0 0.0
    %5358 = vmatprep.subr.mxu0 0.0
    %5359 = vmatpush1.xpose.msra.mxu0 0.0
    %5360 = vmatprep.subr.mxu0 0.0
    %5361 = vmatpush1.xpose.msra.mxu0 0.0
    %5362 = vmatprep.subr.mxu0 0.0
    %5363 = vmatpush1.xpose.msra.mxu0 0.0
    %5364 = vmatprep.subr.mxu0 0.0
    %5365 = vmatpush1.xpose.msra.mxu0 0.0
    %5366 = vmatprep.subr.mxu0 0.0
    %5367 = vmatpush1.xpose.msra.mxu0 0.0
    %5368 = vmatprep.subr.mxu0 0.0
    %5369 = vmatpush1.xpose.msra.mxu0 0.0
    %5370 = vmatprep.subr.mxu0 0.0
    %5371 = vmatpush1.xpose.msra.mxu0 0.0
    %5372 = vmatprep.subr.mxu0 0.0
    %5373 = vmatpush1.xpose.msra.mxu0 0.0
    %5374 = vmatprep.subr.mxu0 0.0
    %5375 = vmatpush1.xpose.msra.mxu0 0.0
    %5376 = vmatprep.subr.mxu0 0.0
    %5377 = vmatpush1.xpose.msra.mxu0 0.0
    %5378 = vmatprep.subr.mxu0 0.0
    %5379 = vmatpush1.xpose.msra.mxu0 0.0
    %5380 = vmatprep.subr.mxu0 0.0
    %5381 = vmatpush1.xpose.msra.mxu0 0.0
    %5382 = vmatprep.subr.mxu0 0.0
    %5383 = vmatpush1.xpose.msra.mxu0 0.0
    %5384 = vmatprep.subr.mxu0 0.0
    %5385 = vmatpush1.xpose.msra.mxu0 0.0
    %5386 = vmatprep.subr.mxu0 0.0
    %5387 = vmatpush1.xpose.msra.mxu0 0.0
    %5388 = vmatprep.subr.mxu0 0.0
    %5389 = vmatpush1.xpose.msra.mxu0 0.0
    %5390 = vmatprep.subr.mxu0 0.0
    %5391 = vmatpush1.xpose.msra.mxu0 0.0
    %5392 = vmatprep.subr.mxu0 0.0
    %5393 = vmatpush1.xpose.msra.mxu0 0.0
    %5394 = vmatprep.mubr.f32.mxu0 %v4247
    %5395 = vmatmul.mubr.f32.gmra.mrb[0].mxu0 %v4246
    %v5396 = vpop.f32.mrb[0].mxu0
    %v5397 = vadd.f32 %v5327, %v5396
    %v5398 = vpop.f32.mrb[0].mxu0
    %5399 = vdwg.mxu0
    %v5400 = vmul.f32 %v3032, %v3032
    %v5401 = vmul.f32 %v3033, %v3033
    %v5402 = vmul.f32 %v3034, %v3034
    %v5403 = vmul.f32 %v3035, %v3035
    %v5404 = vmul.f32 %v3036, %v3036
    %v5405 = vmul.f32 %v3037, %v3037
    %v5406 = vmul.f32 %v3038, %v3038
    %v5407 = vmul.f32 %v3039, %v3039
    %v5408 = vmul.f32 %v3040, %v3040
    %v5409 = vmul.f32 %v3041, %v3041
    %v5410 = vmul.f32 %v3042, %v3042
    %v5411 = vmul.f32 %v3043, %v3043
    %v5412 = vmul.f32 %v3044, %v3044
    %v5413 = vmul.f32 %v3045, %v3045
    %v5414 = vmul.f32 %v3046, %v3046
    %v5415 = vmul.f32 %v3047, %v3047
    %v5416 = vmul.f32 %v3048, %v3048
    %v5417 = vmul.f32 %v3049, %v3049
    %v5418 = vmul.f32 %v3050, %v3050
    %v5419 = vmul.f32 %v3051, %v3051
    %v5420 = vmul.f32 %v3052, %v3052
    %v5421 = vmul.f32 %v3053, %v3053
    %v5422 = vmul.f32 %v3054, %v3054
    %v5423 = vmul.f32 %v3055, %v3055
    %v5424 = vmul.f32 %v3056, %v3056
    %v5425 = vmul.f32 %v3057, %v3057
    %v5426 = vmul.f32 %v3058, %v3058
    %v5427 = vmul.f32 %v3059, %v3059
    %v5428 = vmul.f32 %v3060, %v3060
    %v5429 = vmul.f32 %v3061, %v3061
    %v5430 = vmul.f32 %v3062, %v3062
    %v5431 = vmul.f32 %v3063, %v3063
    %v5432 = vadd.f32 %v5400, %v5401
    %v5433 = vadd.f32 %v5432, %v5402
    %v5434 = vadd.f32 %v5433, %v5403
    %v5435 = vadd.f32 %v5434, %v5404
    %v5436 = vadd.f32 %v5435, %v5405
    %v5437 = vadd.f32 %v5436, %v5406
    %v5438 = vadd.f32 %v5437, %v5407
    %v5439 = vadd.f32 %v5438, %v5408
    %v5440 = vadd.f32 %v5439, %v5409
    %v5441 = vadd.f32 %v5440, %v5410
    %v5442 = vadd.f32 %v5441, %v5411
    %v5443 = vadd.f32 %v5442, %v5412
    %v5444 = vadd.f32 %v5443, %v5413
    %v5445 = vadd.f32 %v5444, %v5414
    %v5446 = vadd.f32 %v5445, %v5415
    %v5447 = vadd.f32 %v5446, %v5416
    %v5448 = vadd.f32 %v5447, %v5417
    %v5449 = vadd.f32 %v5448, %v5418
    %v5450 = vadd.f32 %v5449, %v5419
    %v5451 = vadd.f32 %v5450, %v5420
    %v5452 = vadd.f32 %v5451, %v5421
    %v5453 = vadd.f32 %v5452, %v5422
    %v5454 = vadd.f32 %v5453, %v5423
    %v5455 = vadd.f32 %v5454, %v5424
    %v5456 = vadd.f32 %v5455, %v5425
    %v5457 = vadd.f32 %v5456, %v5426
    %v5458 = vadd.f32 %v5457, %v5427
    %v5459 = vadd.f32 %v5458, %v5428
    %v5460 = vadd.f32 %v5459, %v5429
    %v5461 = vadd.f32 %v5460, %v5430
    %v5462 = vadd.f32 %v5461, %v5431
    %5463 = vadd.xlane.f32.xlu0 %v5462
    %v5464 = vpop.xlane.xlu0 %5463
    %v5465 = vld [vmem:[%s1] sm:$0xff]
    %v5466 = vld [vmem:[%s1 + $0x8] sm:$0xff]
    %v5467 = vld [vmem:[%s1 + $0x10] sm:$0xff]
    %v5468 = vld [vmem:[%s1 + $0x18] sm:$0xff]
    %v5469 = vld [vmem:[%s1 + $0x20] sm:$0xff]
    %v5470 = vld [vmem:[%s1 + $0x28] sm:$0xff]
    %v5471 = vld [vmem:[%s1 + $0x30] sm:$0xff]
    %v5472 = vld [vmem:[%s1 + $0x38] sm:$0xff]
    %v5473 = vpack.c.bf16 %v5465, %v5465
    %v5474 = vpack.c.bf16 %v5466, %v5466
    %v5475 = vpack.c.bf16 %v5467, %v5467
    %v5476 = vpack.c.bf16 %v5468, %v5468
    %v5477 = vpack.c.bf16 %v5469, %v5469
    %v5478 = vpack.c.bf16 %v5470, %v5470
    %v5479 = vpack.c.bf16 %v5471, %v5471
    %v5480 = vpack.c.bf16 %v5472, %v5472
    %5481 = vmatprep.subr.bf16.mxu0 0
    %5482 = vmatpush1.bf16.msra.mxu0 %v444
    %5483 = vmatprep.subr.bf16.mxu0 0
    %5484 = vmatpush1.bf16.msra.mxu0 %v445
    %5485 = vmatprep.subr.bf16.mxu0 0
    %5486 = vmatpush1.bf16.msra.mxu0 %v446
    %5487 = vmatprep.subr.bf16.mxu0 0
    %5488 = vmatpush1.bf16.msra.mxu0 %v447
    %5489 = vmatprep.subr.bf16.mxu0 0
    %5490 = vmatpush1.bf16.msra.mxu0 %v448
    %5491 = vmatprep.subr.bf16.mxu0 0
    %5492 = vmatpush1.bf16.msra.mxu0 %v449
    %5493 = vmatprep.subr.bf16.mxu0 0
    %5494 = vmatpush1.bf16.msra.mxu0 %v450
    %5495 = vmatprep.subr.bf16.mxu0 0
    %5496 = vmatpush1.bf16.msra.mxu0 %v451
    %5497 = vmatprep.subr.bf16.mxu0 0
    %5498 = vmatpush1.bf16.msra.mxu0 %v452
    %5499 = vmatprep.subr.bf16.mxu0 0
    %5500 = vmatpush1.bf16.msra.mxu0 %v453
    %5501 = vmatprep.subr.bf16.mxu0 0
    %5502 = vmatpush1.bf16.msra.mxu0 %v454
    %5503 = vmatprep.subr.bf16.mxu0 0
    %5504 = vmatpush1.bf16.msra.mxu0 %v455
    %5505 = vmatprep.subr.bf16.mxu0 0
    %5506 = vmatpush1.bf16.msra.mxu0 %v456
    %5507 = vmatprep.subr.bf16.mxu0 0
    %5508 = vmatpush1.bf16.msra.mxu0 %v457
    %5509 = vmatprep.subr.bf16.mxu0 0
    %5510 = vmatpush1.bf16.msra.mxu0 %v458
    %5511 = vmatprep.subr.bf16.mxu0 0
    %5512 = vmatpush1.bf16.msra.mxu0 %v459
    %5513 = vmatprep.mubr.bf16.mxu0 %v5474
    %5514 = vmatmul.mubr.bf16.gmra.mrb[0].mxu0 %v5473
    %v5515 = vpop.f32.mrb[0].mxu0
    %v5516 = vadd.f32 %v186, %v5515
    %v5517 = vpop.f32.mrb[0].mxu0
    %v5518 = vpop.f32.mrb[0].mxu0
    %v5519 = vpop.f32.mrb[0].mxu0
    %5520 = vdwg.mxu0
    %5521 = vmatprep.subr.bf16.mxu0 0
    %5522 = vmatpush1.bf16.msra.mxu0 %v460
    %5523 = vmatprep.subr.bf16.mxu0 0
    %5524 = vmatpush1.bf16.msra.mxu0 %v461
    %5525 = vmatprep.subr.bf16.mxu0 0
    %5526 = vmatpush1.bf16.msra.mxu0 %v462
    %5527 = vmatprep.subr.bf16.mxu0 0
    %5528 = vmatpush1.bf16.msra.mxu0 %v463
    %5529 = vmatprep.subr.bf16.mxu0 0
    %5530 = vmatpush1.bf16.msra.mxu0 %v464
    %5531 = vmatprep.subr.bf16.mxu0 0
    %5532 = vmatpush1.bf16.msra.mxu0 %v465
    %5533 = vmatprep.subr.bf16.mxu0 0
    %5534 = vmatpush1.bf16.msra.mxu0 %v466
    %5535 = vmatprep.subr.bf16.mxu0 0
    %5536 = vmatpush1.bf16.msra.mxu0 %v467
    %5537 = vmatprep.subr.bf16.mxu0 0
    %5538 = vmatpush1.bf16.msra.mxu0 %v468
    %5539 = vmatprep.subr.bf16.mxu0 0
    %5540 = vmatpush1.bf16.msra.mxu0 %v469
    %5541 = vmatprep.subr.bf16.mxu0 0
    %5542 = vmatpush1.bf16.msra.mxu0 %v470
    %5543 = vmatprep.subr.bf16.mxu0 0
    %5544 = vmatpush1.bf16.msra.mxu0 %v471
    %5545 = vmatprep.subr.bf16.mxu0 0
    %5546 = vmatpush1.bf16.msra.mxu0 %v472
    %5547 = vmatprep.subr.bf16.mxu0 0
    %5548 = vmatpush1.bf16.msra.mxu0 %v473
    %5549 = vmatprep.subr.bf16.mxu0 0
    %5550 = vmatpush1.bf16.msra.mxu0 %v474
    %5551 = vmatprep.subr.bf16.mxu0 0
    %5552 = vmatpush1.bf16.msra.mxu0 %v475
    %5553 = vmatprep.mubr.bf16.mxu0 %v5476
    %5554 = vmatmul.mubr.bf16.gmra.mrb[0].mxu0 %v5475
    %v5555 = vpop.f32.mrb[0].mxu0
    %v5556 = vadd.f32 %v5516, %v5555
    %v5557 = vpop.f32.mrb[0].mxu0
    %v5558 = vpop.f32.mrb[0].mxu0
    %v5559 = vpop.f32.mrb[0].mxu0
    %5560 = vdwg.mxu0
    %5561 = vmatprep.subr.bf16.mxu0 0
    %5562 = vmatpush1.bf16.msra.mxu0 %v476
    %5563 = vmatprep.subr.bf16.mxu0 0
    %5564 = vmatpush1.bf16.msra.mxu0 %v477
    %5565 = vmatprep.subr.bf16.mxu0 0
    %5566 = vmatpush1.bf16.msra.mxu0 %v478
    %5567 = vmatprep.subr.bf16.mxu0 0
    %5568 = vmatpush1.bf16.msra.mxu0 %v479
    %5569 = vmatprep.subr.bf16.mxu0 0
    %5570 = vmatpush1.bf16.msra.mxu0 %v480
    %5571 = vmatprep.subr.bf16.mxu0 0
    %5572 = vmatpush1.bf16.msra.mxu0 %v481
    %5573 = vmatprep.subr.bf16.mxu0 0
    %5574 = vmatpush1.bf16.msra.mxu0 %v482
    %5575 = vmatprep.subr.bf16.mxu0 0
    %5576 = vmatpush1.bf16.msra.mxu0 %v483
    %5577 = vmatprep.subr.bf16.mxu0 0
    %5578 = vmatpush1.bf16.msra.mxu0 %v484
    %5579 = vmatprep.subr.bf16.mxu0 0
    %5580 = vmatpush1.bf16.msra.mxu0 %v485
    %5581 = vmatprep.subr.bf16.mxu0 0
    %5582 = vmatpush1.bf16.msra.mxu0 %v486
    %5583 = vmatprep.subr.bf16.mxu0 0
    %5584 = vmatpush1.bf16.msra.mxu0 %v487
    %5585 = vmatprep.subr.bf16.mxu0 0
    %5586 = vmatpush1.bf16.msra.mxu0 %v488
    %5587 = vmatprep.subr.bf16.mxu0 0
    %5588 = vmatpush1.bf16.msra.mxu0 %v489
    %5589 = vmatprep.subr.bf16.mxu0 0
    %5590 = vmatpush1.bf16.msra.mxu0 %v490
    %5591 = vmatprep.subr.bf16.mxu0 0
    %5592 = vmatpush1.bf16.msra.mxu0 %v491
    %5593 = vmatprep.mubr.bf16.mxu0 %v5478
    %5594 = vmatmul.mubr.bf16.gmra.mrb[0].mxu0 %v5477
    %v5595 = vpop.f32.mrb[0].mxu0
    %v5596 = vadd.f32 %v5556, %v5595
    %v5597 = vpop.f32.mrb[0].mxu0
    %v5598 = vpop.f32.mrb[0].mxu0
    %v5599 = vpop.f32.mrb[0].mxu0
    %5600 = vdwg.mxu0
    %5601 = vmatprep.subr.bf16.mxu0 0
    %5602 = vmatpush1.bf16.msra.mxu0 %v492
    %5603 = vmatprep.subr.bf16.mxu0 0
    %5604 = vmatpush1.bf16.msra.mxu0 %v493
    %5605 = vmatprep.subr.bf16.mxu0 0
    %5606 = vmatpush1.bf16.msra.mxu0 %v494
    %5607 = vmatprep.subr.bf16.mxu0 0
    %5608 = vmatpush1.bf16.msra.mxu0 %v495
    %5609 = vmatprep.subr.bf16.mxu0 0
    %5610 = vmatpush1.bf16.msra.mxu0 %v496
    %5611 = vmatprep.subr.bf16.mxu0 0
    %5612 = vmatpush1.bf16.msra.mxu0 %v497
    %5613 = vmatprep.subr.bf16.mxu0 0
    %5614 = vmatpush1.bf16.msra.mxu0 %v498
    %5615 = vmatprep.subr.bf16.mxu0 0
    %5616 = vmatpush1.bf16.msra.mxu0 %v499
    %5617 = vmatprep.subr.bf16.mxu0 0
    %5618 = vmatpush1.bf16.msra.mxu0 %v500
    %5619 = vmatprep.subr.bf16.mxu0 0
    %5620 = vmatpush1.bf16.msra.mxu0 %v501
    %5621 = vmatprep.subr.bf16.mxu0 0
    %5622 = vmatpush1.bf16.msra.mxu0 %v502
    %5623 = vmatprep.subr.bf16.mxu0 0
    %5624 = vmatpush1.bf16.msra.mxu0 %v503
    %5625 = vmatprep.subr.bf16.mxu0 0
    %5626 = vmatpush1.bf16.msra.mxu0 %v504
    %5627 = vmatprep.subr.bf16.mxu0 0
    %5628 = vmatpush1.bf16.msra.mxu0 %v505
    %5629 = vmatprep.subr.bf16.mxu0 0
    %5630 = vmatpush1.bf16.msra.mxu0 %v506
    %5631 = vmatprep.subr.bf16.mxu0 0
    %5632 = vmatpush1.bf16.msra.mxu0 %v507
    %5633 = vmatprep.mubr.bf16.mxu0 %v5480
    %5634 = vmatmul.mubr.bf16.gmra.mrb[0].mxu0 %v5479
    %v5635 = vpop.f32.mrb[0].mxu0
    %v5636 = vadd.f32 %v5596, %v5635
    %v5637 = vpop.f32.mrb[0].mxu0
    %v5638 = vpop.f32.mrb[0].mxu0
    %v5639 = vpop.f32.mrb[0].mxu0
    %5640 = vdwg.mxu0
    %v5641 = vsel %vm732, %v5636, 0.0
    %v5642 = vrot.slane %v5641, 4
    %v5643 = vadd.f32 %v5641, %v5642
    %v5644 = vrot.slane %v5643, 2
    %v5645 = vadd.f32 %v5643, %v5644
    %v5646 = vrot.slane %v5645, 1
    %v5647 = vadd.f32 %v5645, %v5646
    %v5648 = vmul.f32 %v5647, %v740
    %v5649 = vsub.f32 %v5636, %v5648
    %v5650 = vmul.f32 %v5649, %v5649
    %v5651 = vsel %vm732, %v5650, 0.0
    %v5652 = vrot.slane %v5651, 4
    %v5653 = vadd.f32 %v5651, %v5652
    %v5654 = vrot.slane %v5653, 2
    %v5655 = vadd.f32 %v5653, %v5654
    %v5656 = vrot.slane %v5655, 1
    %v5657 = vadd.f32 %v5655, %v5656
    %v5658 = vmul.f32 %v5657, %v740
    %v5659 = vadd.f32 %v5658, 1e-05
    %v5660 = vrsqrt.pop %v5659
    %v5661 = vmul.f32 %v5659, %v5660
    %vm5662 = vcmp.eq.f32.partialorder %v5659, inf
    %v5663 = vsel %vm5662, %v5659, %v5661
    %vm5664 = vcmp.eq.f32.partialorder %v5659, 0.0
    %v5665 = vand.u32 %v5659, 2147483648
    %v5666 = vsel %vm5664, %v5665, %v5663
    %v5667 = vrcp.pop %v5666
    %v5668 = vmul.f32 %v5649, %v5667
    %v5669 = vmul.f32 %v5668, %v767
    %v5670 = vadd.f32 %v5669, %v775
    %v5671 = vmax.f32 %v5670, 0.0
    %v5672 = vpack.c.bf16 %v5671, %v5671
    %v5674 = vsel %vm732, %v5672, 0
    %5676 = vmatprep.subr.bf16.mxu0 %v1052
    %5677 = vmatpush1.bf16.msra.mxu0 %v1049
    %5678 = vmatprep.subr.bf16.mxu0 0
    %5679 = vmatpush1.bf16.msra.mxu0 0
    %5680 = vmatprep.subr.bf16.mxu0 0
    %5681 = vmatpush1.bf16.msra.mxu0 0
    %5682 = vmatprep.subr.bf16.mxu0 0
    %5683 = vmatpush1.bf16.msra.mxu0 0
    %5684 = vmatprep.subr.bf16.mxu0 0
    %5685 = vmatpush1.bf16.msra.mxu0 0
    %5686 = vmatprep.subr.bf16.mxu0 0
    %5687 = vmatpush1.bf16.msra.mxu0 0
    %5688 = vmatprep.subr.bf16.mxu0 0
    %5689 = vmatpush1.bf16.msra.mxu0 0
    %5690 = vmatprep.subr.bf16.mxu0 0
    %5691 = vmatpush1.bf16.msra.mxu0 0
    %5692 = vmatprep.subr.bf16.mxu0 0
    %5693 = vmatpush1.bf16.msra.mxu0 0
    %5694 = vmatprep.subr.bf16.mxu0 0
    %5695 = vmatpush1.bf16.msra.mxu0 0
    %5696 = vmatprep.subr.bf16.mxu0 0
    %5697 = vmatpush1.bf16.msra.mxu0 0
    %5698 = vmatprep.subr.bf16.mxu0 0
    %5699 = vmatpush1.bf16.msra.mxu0 0
    %5700 = vmatprep.subr.bf16.mxu0 0
    %5701 = vmatpush1.bf16.msra.mxu0 0
    %5702 = vmatprep.subr.bf16.mxu0 0
    %5703 = vmatpush1.bf16.msra.mxu0 0
    %5704 = vmatprep.subr.bf16.mxu0 0
    %5705 = vmatpush1.bf16.msra.mxu0 0
    %5706 = vmatprep.subr.bf16.mxu0 0
    %5707 = vmatpush1.bf16.msra.mxu0 0
    %5708 = vmatprep.mubr.bf16.mxu0 0
    %5709 = vmatmul.mubr.bf16.gmra.mrb[0].mxu0 %v5674
    %v5710 = vpop.f32.mrb[0].mxu0
    %v5711 = vadd.f32 %v807, %v5710
    %v5712 = vpop.f32.mrb[0].mxu0
    %v5713 = vadd.f32 %v811, %v5712
    %v5714 = vpop.f32.mrb[0].mxu0
    %v5715 = vpop.f32.mrb[0].mxu0
    %5716 = vdwg.mxu0
    %5717 = vmatprep.subr.bf16.mxu0 %v1058
    %5718 = vmatpush1.bf16.msra.mxu0 %v1055
    %5719 = vmatprep.subr.bf16.mxu0 0
    %5720 = vmatpush1.bf16.msra.mxu0 0
    %5721 = vmatprep.subr.bf16.mxu0 0
    %5722 = vmatpush1.bf16.msra.mxu0 0
    %5723 = vmatprep.subr.bf16.mxu0 0
    %5724 = vmatpush1.bf16.msra.mxu0 0
    %5725 = vmatprep.subr.bf16.mxu0 0
    %5726 = vmatpush1.bf16.msra.mxu0 0
    %5727 = vmatprep.subr.bf16.mxu0 0
    %5728 = vmatpush1.bf16.msra.mxu0 0
    %5729 = vmatprep.subr.bf16.mxu0 0
    %5730 = vmatpush1.bf16.msra.mxu0 0
    %5731 = vmatprep.subr.bf16.mxu0 0
    %5732 = vmatpush1.bf16.msra.mxu0 0
    %5733 = vmatprep.subr.bf16.mxu0 0
    %5734 = vmatpush1.bf16.msra.mxu0 0
    %5735 = vmatprep.subr.bf16.mxu0 0
    %5736 = vmatpush1.bf16.msra.mxu0 0
    %5737 = vmatprep.subr.bf16.mxu0 0
    %5738 = vmatpush1.bf16.msra.mxu0 0
    %5739 = vmatprep.subr.bf16.mxu0 0
    %5740 = vmatpush1.bf16.msra.mxu0 0
    %5741 = vmatprep.subr.bf16.mxu0 0
    %5742 = vmatpush1.bf16.msra.mxu0 0
    %5743 = vmatprep.subr.bf16.mxu0 0
    %5744 = vmatpush1.bf16.msra.mxu0 0
    %5745 = vmatprep.subr.bf16.mxu0 0
    %5746 = vmatpush1.bf16.msra.mxu0 0
    %5747 = vmatprep.subr.bf16.mxu0 0
    %5748 = vmatpush1.bf16.msra.mxu0 0
    %5749 = vmatprep.mubr.bf16.mxu0 0
    %5750 = vmatmul.mubr.bf16.gmra.mrb[0].mxu0 %v5674
    %v5751 = vpop.f32.mrb[0].mxu0
    %v5752 = vadd.f32 %v815, %v5751
    %v5753 = vpop.f32.mrb[0].mxu0
    %v5754 = vadd.f32 %v819, %v5753
    %v5755 = vpop.f32.mrb[0].mxu0
    %v5756 = vpop.f32.mrb[0].mxu0
    %5757 = vdwg.mxu0
    %5758 = vmatprep.subr.bf16.mxu0 %v1064
    %5759 = vmatpush1.bf16.msra.mxu0 %v1061
    %5760 = vmatprep.subr.bf16.mxu0 0
    %5761 = vmatpush1.bf16.msra.mxu0 0
    %5762 = vmatprep.subr.bf16.mxu0 0
    %5763 = vmatpush1.bf16.msra.mxu0 0
    %5764 = vmatprep.subr.bf16.mxu0 0
    %5765 = vmatpush1.bf16.msra.mxu0 0
    %5766 = vmatprep.subr.bf16.mxu0 0
    %5767 = vmatpush1.bf16.msra.mxu0 0
    %5768 = vmatprep.subr.bf16.mxu0 0
    %5769 = vmatpush1.bf16.msra.mxu0 0
    %5770 = vmatprep.subr.bf16.mxu0 0
    %5771 = vmatpush1.bf16.msra.mxu0 0
    %5772 = vmatprep.subr.bf16.mxu0 0
    %5773 = vmatpush1.bf16.msra.mxu0 0
    %5774 = vmatprep.subr.bf16.mxu0 0
    %5775 = vmatpush1.bf16.msra.mxu0 0
    %5776 = vmatprep.subr.bf16.mxu0 0
    %5777 = vmatpush1.bf16.msra.mxu0 0
    %5778 = vmatprep.subr.bf16.mxu0 0
    %5779 = vmatpush1.bf16.msra.mxu0 0
    %5780 = vmatprep.subr.bf16.mxu0 0
    %5781 = vmatpush1.bf16.msra.mxu0 0
    %5782 = vmatprep.subr.bf16.mxu0 0
    %5783 = vmatpush1.bf16.msra.mxu0 0
    %5784 = vmatprep.subr.bf16.mxu0 0
    %5785 = vmatpush1.bf16.msra.mxu0 0
    %5786 = vmatprep.subr.bf16.mxu0 0
    %5787 = vmatpush1.bf16.msra.mxu0 0
    %5788 = vmatprep.subr.bf16.mxu0 0
    %5789 = vmatpush1.bf16.msra.mxu0 0
    %5790 = vmatprep.mubr.bf16.mxu0 0
    %5791 = vmatmul.mubr.bf16.gmra.mrb[0].mxu0 %v5674
    %v5792 = vpop.f32.mrb[0].mxu0
    %v5793 = vadd.f32 %v823, %v5792
    %v5794 = vpop.f32.mrb[0].mxu0
    %v5795 = vadd.f32 %v827, %v5794
    %v5796 = vpop.f32.mrb[0].mxu0
    %v5797 = vpop.f32.mrb[0].mxu0
    %5798 = vdwg.mxu0
    %5799 = vmatprep.subr.bf16.mxu0 %v1070
    %5800 = vmatpush1.bf16.msra.mxu0 %v1067
    %5801 = vmatprep.subr.bf16.mxu0 0
    %5802 = vmatpush1.bf16.msra.mxu0 0
    %5803 = vmatprep.subr.bf16.mxu0 0
    %5804 = vmatpush1.bf16.msra.mxu0 0
    %5805 = vmatprep.subr.bf16.mxu0 0
    %5806 = vmatpush1.bf16.msra.mxu0 0
    %5807 = vmatprep.subr.bf16.mxu0 0
    %5808 = vmatpush1.bf16.msra.mxu0 0
    %5809 = vmatprep.subr.bf16.mxu0 0
    %5810 = vmatpush1.bf16.msra.mxu0 0
    %5811 = vmatprep.subr.bf16.mxu0 0
    %5812 = vmatpush1.bf16.msra.mxu0 0
    %5813 = vmatprep.subr.bf16.mxu0 0
    %5814 = vmatpush1.bf16.msra.mxu0 0
    %5815 = vmatprep.subr.bf16.mxu0 0
    %5816 = vmatpush1.bf16.msra.mxu0 0
    %5817 = vmatprep.subr.bf16.mxu0 0
    %5818 = vmatpush1.bf16.msra.mxu0 0
    %5819 = vmatprep.subr.bf16.mxu0 0
    %5820 = vmatpush1.bf16.msra.mxu0 0
    %5821 = vmatprep.subr.bf16.mxu0 0
    %5822 = vmatpush1.bf16.msra.mxu0 0
    %5823 = vmatprep.subr.bf16.mxu0 0
    %5824 = vmatpush1.bf16.msra.mxu0 0
    %5825 = vmatprep.subr.bf16.mxu0 0
    %5826 = vmatpush1.bf16.msra.mxu0 0
    %5827 = vmatprep.subr.bf16.mxu0 0
    %5828 = vmatpush1.bf16.msra.mxu0 0
    %5829 = vmatprep.subr.bf16.mxu0 0
    %5830 = vmatpush1.bf16.msra.mxu0 0
    %5831 = vmatprep.mubr.bf16.mxu0 0
    %5832 = vmatmul.mubr.bf16.gmra.mrb[0].mxu0 %v5674
    %v5833 = vpop.f32.mrb[0].mxu0
    %v5834 = vadd.f32 %v831, %v5833
    %v5835 = vpop.f32.mrb[0].mxu0
    %v5836 = vadd.f32 %v835, %v5835
    %v5837 = vpop.f32.mrb[0].mxu0
    %v5838 = vpop.f32.mrb[0].mxu0
    %5839 = vdwg.mxu0
    %5840 = vmatprep.subr.bf16.mxu0 %v1076
    %5841 = vmatpush1.bf16.msra.mxu0 %v1073
    %5842 = vmatprep.subr.bf16.mxu0 0
    %5843 = vmatpush1.bf16.msra.mxu0 0
    %5844 = vmatprep.subr.bf16.mxu0 0
    %5845 = vmatpush1.bf16.msra.mxu0 0
    %5846 = vmatprep.subr.bf16.mxu0 0
    %5847 = vmatpush1.bf16.msra.mxu0 0
    %5848 = vmatprep.subr.bf16.mxu0 0
    %5849 = vmatpush1.bf16.msra.mxu0 0
    %5850 = vmatprep.subr.bf16.mxu0 0
    %5851 = vmatpush1.bf16.msra.mxu0 0
    %5852 = vmatprep.subr.bf16.mxu0 0
    %5853 = vmatpush1.bf16.msra.mxu0 0
    %5854 = vmatprep.subr.bf16.mxu0 0
    %5855 = vmatpush1.bf16.msra.mxu0 0
    %5856 = vmatprep.subr.bf16.mxu0 0
    %5857 = vmatpush1.bf16.msra.mxu0 0
    %5858 = vmatprep.subr.bf16.mxu0 0
    %5859 = vmatpush1.bf16.msra.mxu0 0
    %5860 = vmatprep.subr.bf16.mxu0 0
    %5861 = vmatpush1.bf16.msra.mxu0 0
    %5862 = vmatprep.subr.bf16.mxu0 0
    %5863 = vmatpush1.bf16.msra.mxu0 0
    %5864 = vmatprep.subr.bf16.mxu0 0
    %5865 = vmatpush1.bf16.msra.mxu0 0
    %5866 = vmatprep.subr.bf16.mxu0 0
    %5867 = vmatpush1.bf16.msra.mxu0 0
    %5868 = vmatprep.subr.bf16.mxu0 0
    %5869 = vmatpush1.bf16.msra.mxu0 0
    %5870 = vmatprep.subr.bf16.mxu0 0
    %5871 = vmatpush1.bf16.msra.mxu0 0
    %5872 = vmatprep.mubr.bf16.mxu0 0
    %5873 = vmatmul.mubr.bf16.gmra.mrb[0].mxu0 %v5674
    %v5874 = vpop.f32.mrb[0].mxu0
    %v5875 = vadd.f32 %v839, %v5874
    %v5876 = vpop.f32.mrb[0].mxu0
    %v5877 = vadd.f32 %v843, %v5876
    %v5878 = vpop.f32.mrb[0].mxu0
    %v5879 = vpop.f32.mrb[0].mxu0
    %5880 = vdwg.mxu0
    %5881 = vmatprep.subr.bf16.mxu0 %v1082
    %5882 = vmatpush1.bf16.msra.mxu0 %v1079
    %5883 = vmatprep.subr.bf16.mxu0 0
    %5884 = vmatpush1.bf16.msra.mxu0 0
    %5885 = vmatprep.subr.bf16.mxu0 0
    %5886 = vmatpush1.bf16.msra.mxu0 0
    %5887 = vmatprep.subr.bf16.mxu0 0
    %5888 = vmatpush1.bf16.msra.mxu0 0
    %5889 = vmatprep.subr.bf16.mxu0 0
    %5890 = vmatpush1.bf16.msra.mxu0 0
    %5891 = vmatprep.subr.bf16.mxu0 0
    %5892 = vmatpush1.bf16.msra.mxu0 0
    %5893 = vmatprep.subr.bf16.mxu0 0
    %5894 = vmatpush1.bf16.msra.mxu0 0
    %5895 = vmatprep.subr.bf16.mxu0 0
    %5896 = vmatpush1.bf16.msra.mxu0 0
    %5897 = vmatprep.subr.bf16.mxu0 0
    %5898 = vmatpush1.bf16.msra.mxu0 0
    %5899 = vmatprep.subr.bf16.mxu0 0
    %5900 = vmatpush1.bf16.msra.mxu0 0
    %5901 = vmatprep.subr.bf16.mxu0 0
    %5902 = vmatpush1.bf16.msra.mxu0 0
    %5903 = vmatprep.subr.bf16.mxu0 0
    %5904 = vmatpush1.bf16.msra.mxu0 0
    %5905 = vmatprep.subr.bf16.mxu0 0
    %5906 = vmatpush1.bf16.msra.mxu0 0
    %5907 = vmatprep.subr.bf16.mxu0 0
    %5908 = vmatpush1.bf16.msra.mxu0 0
    %5909 = vmatprep.subr.bf16.mxu0 0
    %5910 = vmatpush1.bf16.msra.mxu0 0
    %5911 = vmatprep.subr.bf16.mxu0 0
    %5912 = vmatpush1.bf16.msra.mxu0 0
    %5913 = vmatprep.mubr.bf16.mxu0 0
    %5914 = vmatmul.mubr.bf16.gmra.mrb[0].mxu0 %v5674
    %v5915 = vpop.f32.mrb[0].mxu0
    %v5916 = vadd.f32 %v847, %v5915
    %v5917 = vpop.f32.mrb[0].mxu0
    %v5918 = vadd.f32 %v851, %v5917
    %v5919 = vpop.f32.mrb[0].mxu0
    %v5920 = vpop.f32.mrb[0].mxu0
    %5921 = vdwg.mxu0
    %5922 = vmatprep.subr.bf16.mxu0 %v1088
    %5923 = vmatpush1.bf16.msra.mxu0 %v1085
    %5924 = vmatprep.subr.bf16.mxu0 0
    %5925 = vmatpush1.bf16.msra.mxu0 0
    %5926 = vmatprep.subr.bf16.mxu0 0
    %5927 = vmatpush1.bf16.msra.mxu0 0
    %5928 = vmatprep.subr.bf16.mxu0 0
    %5929 = vmatpush1.bf16.msra.mxu0 0
    %5930 = vmatprep.subr.bf16.mxu0 0
    %5931 = vmatpush1.bf16.msra.mxu0 0
    %5932 = vmatprep.subr.bf16.mxu0 0
    %5933 = vmatpush1.bf16.msra.mxu0 0
    %5934 = vmatprep.subr.bf16.mxu0 0
    %5935 = vmatpush1.bf16.msra.mxu0 0
    %5936 = vmatprep.subr.bf16.mxu0 0
    %5937 = vmatpush1.bf16.msra.mxu0 0
    %5938 = vmatprep.subr.bf16.mxu0 0
    %5939 = vmatpush1.bf16.msra.mxu0 0
    %5940 = vmatprep.subr.bf16.mxu0 0
    %5941 = vmatpush1.bf16.msra.mxu0 0
    %5942 = vmatprep.subr.bf16.mxu0 0
    %5943 = vmatpush1.bf16.msra.mxu0 0
    %5944 = vmatprep.subr.bf16.mxu0 0
    %5945 = vmatpush1.bf16.msra.mxu0 0
    %5946 = vmatprep.subr.bf16.mxu0 0
    %5947 = vmatpush1.bf16.msra.mxu0 0
    %5948 = vmatprep.subr.bf16.mxu0 0
    %5949 = vmatpush1.bf16.msra.mxu0 0
    %5950 = vmatprep.subr.bf16.mxu0 0
    %5951 = vmatpush1.bf16.msra.mxu0 0
    %5952 = vmatprep.subr.bf16.mxu0 0
    %5953 = vmatpush1.bf16.msra.mxu0 0
    %5954 = vmatprep.mubr.bf16.mxu0 0
    %5955 = vmatmul.mubr.bf16.gmra.mrb[0].mxu0 %v5674
    %v5956 = vpop.f32.mrb[0].mxu0
    %v5957 = vadd.f32 %v855, %v5956
    %v5958 = vpop.f32.mrb[0].mxu0
    %v5959 = vadd.f32 %v859, %v5958
    %v5960 = vpop.f32.mrb[0].mxu0
    %v5961 = vpop.f32.mrb[0].mxu0
    %5962 = vdwg.mxu0
    %5963 = vmatprep.subr.bf16.mxu0 %v1094
    %5964 = vmatpush1.bf16.msra.mxu0 %v1091
    %5965 = vmatprep.subr.bf16.mxu0 0
    %5966 = vmatpush1.bf16.msra.mxu0 0
    %5967 = vmatprep.subr.bf16.mxu0 0
    %5968 = vmatpush1.bf16.msra.mxu0 0
    %5969 = vmatprep.subr.bf16.mxu0 0
    %5970 = vmatpush1.bf16.msra.mxu0 0
    %5971 = vmatprep.subr.bf16.mxu0 0
    %5972 = vmatpush1.bf16.msra.mxu0 0
    %5973 = vmatprep.subr.bf16.mxu0 0
    %5974 = vmatpush1.bf16.msra.mxu0 0
    %5975 = vmatprep.subr.bf16.mxu0 0
    %5976 = vmatpush1.bf16.msra.mxu0 0
    %5977 = vmatprep.subr.bf16.mxu0 0
    %5978 = vmatpush1.bf16.msra.mxu0 0
    %5979 = vmatprep.subr.bf16.mxu0 0
    %5980 = vmatpush1.bf16.msra.mxu0 0
    %5981 = vmatprep.subr.bf16.mxu0 0
    %5982 = vmatpush1.bf16.msra.mxu0 0
    %5983 = vmatprep.subr.bf16.mxu0 0
    %5984 = vmatpush1.bf16.msra.mxu0 0
    %5985 = vmatprep.subr.bf16.mxu0 0
    %5986 = vmatpush1.bf16.msra.mxu0 0
    %5987 = vmatprep.subr.bf16.mxu0 0
    %5988 = vmatpush1.bf16.msra.mxu0 0
    %5989 = vmatprep.subr.bf16.mxu0 0
    %5990 = vmatpush1.bf16.msra.mxu0 0
    %5991 = vmatprep.subr.bf16.mxu0 0
    %5992 = vmatpush1.bf16.msra.mxu0 0
    %5993 = vmatprep.subr.bf16.mxu0 0
    %5994 = vmatpush1.bf16.msra.mxu0 0
    %5995 = vmatprep.mubr.bf16.mxu0 0
    %5996 = vmatmul.mubr.bf16.gmra.mrb[0].mxu0 %v5674
    %v5997 = vpop.f32.mrb[0].mxu0
    %v5998 = vadd.f32 %v863, %v5997
    %v5999 = vpop.f32.mrb[0].mxu0
    %v6000 = vadd.f32 %v867, %v5999
    %v6001 = vpop.f32.mrb[0].mxu0
    %v6002 = vpop.f32.mrb[0].mxu0
    %6003 = vdwg.mxu0
    %6004 = vmatprep.subr.bf16.mxu0 %v1100
    %6005 = vmatpush1.bf16.msra.mxu0 %v1097
    %6006 = vmatprep.subr.bf16.mxu0 0
    %6007 = vmatpush1.bf16.msra.mxu0 0
    %6008 = vmatprep.subr.bf16.mxu0 0
    %6009 = vmatpush1.bf16.msra.mxu0 0
    %6010 = vmatprep.subr.bf16.mxu0 0
    %6011 = vmatpush1.bf16.msra.mxu0 0
    %6012 = vmatprep.subr.bf16.mxu0 0
    %6013 = vmatpush1.bf16.msra.mxu0 0
    %6014 = vmatprep.subr.bf16.mxu0 0
    %6015 = vmatpush1.bf16.msra.mxu0 0
    %6016 = vmatprep.subr.bf16.mxu0 0
    %6017 = vmatpush1.bf16.msra.mxu0 0
    %6018 = vmatprep.subr.bf16.mxu0 0
    %6019 = vmatpush1.bf16.msra.mxu0 0
    %6020 = vmatprep.subr.bf16.mxu0 0
    %6021 = vmatpush1.bf16.msra.mxu0 0
    %6022 = vmatprep.subr.bf16.mxu0 0
    %6023 = vmatpush1.bf16.msra.mxu0 0
    %6024 = vmatprep.subr.bf16.mxu0 0
    %6025 = vmatpush1.bf16.msra.mxu0 0
    %6026 = vmatprep.subr.bf16.mxu0 0
    %6027 = vmatpush1.bf16.msra.mxu0 0
    %6028 = vmatprep.subr.bf16.mxu0 0
    %6029 = vmatpush1.bf16.msra.mxu0 0
    %6030 = vmatprep.subr.bf16.mxu0 0
    %6031 = vmatpush1.bf16.msra.mxu0 0
    %6032 = vmatprep.subr.bf16.mxu0 0
    %6033 = vmatpush1.bf16.msra.mxu0 0
    %6034 = vmatprep.subr.bf16.mxu0 0
    %6035 = vmatpush1.bf16.msra.mxu0 0
    %6036 = vmatprep.mubr.bf16.mxu0 0
    %6037 = vmatmul.mubr.bf16.gmra.mrb[0].mxu0 %v5674
    %v6038 = vpop.f32.mrb[0].mxu0
    %v6039 = vadd.f32 %v871, %v6038
    %v6040 = vpop.f32.mrb[0].mxu0
    %v6041 = vadd.f32 %v875, %v6040
    %v6042 = vpop.f32.mrb[0].mxu0
    %v6043 = vpop.f32.mrb[0].mxu0
    %6044 = vdwg.mxu0
    %6045 = vmatprep.subr.bf16.mxu0 %v1106
    %6046 = vmatpush1.bf16.msra.mxu0 %v1103
    %6047 = vmatprep.subr.bf16.mxu0 0
    %6048 = vmatpush1.bf16.msra.mxu0 0
    %6049 = vmatprep.subr.bf16.mxu0 0
    %6050 = vmatpush1.bf16.msra.mxu0 0
    %6051 = vmatprep.subr.bf16.mxu0 0
    %6052 = vmatpush1.bf16.msra.mxu0 0
    %6053 = vmatprep.subr.bf16.mxu0 0
    %6054 = vmatpush1.bf16.msra.mxu0 0
    %6055 = vmatprep.subr.bf16.mxu0 0
    %6056 = vmatpush1.bf16.msra.mxu0 0
    %6057 = vmatprep.subr.bf16.mxu0 0
    %6058 = vmatpush1.bf16.msra.mxu0 0
    %6059 = vmatprep.subr.bf16.mxu0 0
    %6060 = vmatpush1.bf16.msra.mxu0 0
    %6061 = vmatprep.subr.bf16.mxu0 0
    %6062 = vmatpush1.bf16.msra.mxu0 0
    %6063 = vmatprep.subr.bf16.mxu0 0
    %6064 = vmatpush1.bf16.msra.mxu0 0
    %6065 = vmatprep.subr.bf16.mxu0 0
    %6066 = vmatpush1.bf16.msra.mxu0 0
    %6067 = vmatprep.subr.bf16.mxu0 0
    %6068 = vmatpush1.bf16.msra.mxu0 0
    %6069 = vmatprep.subr.bf16.mxu0 0
    %6070 = vmatpush1.bf16.msra.mxu0 0
    %6071 = vmatprep.subr.bf16.mxu0 0
    %6072 = vmatpush1.bf16.msra.mxu0 0
    %6073 = vmatprep.subr.bf16.mxu0 0
    %6074 = vmatpush1.bf16.msra.mxu0 0
    %6075 = vmatprep.subr.bf16.mxu0 0
    %6076 = vmatpush1.bf16.msra.mxu0 0
    %6077 = vmatprep.mubr.bf16.mxu0 0
    %6078 = vmatmul.mubr.bf16.gmra.mrb[0].mxu0 %v5674
    %v6079 = vpop.f32.mrb[0].mxu0
    %v6080 = vadd.f32 %v879, %v6079
    %v6081 = vpop.f32.mrb[0].mxu0
    %v6082 = vadd.f32 %v883, %v6081
    %v6083 = vpop.f32.mrb[0].mxu0
    %v6084 = vpop.f32.mrb[0].mxu0
    %6085 = vdwg.mxu0
    %6086 = vmatprep.subr.bf16.mxu0 %v1112
    %6087 = vmatpush1.bf16.msra.mxu0 %v1109
    %6088 = vmatprep.subr.bf16.mxu0 0
    %6089 = vmatpush1.bf16.msra.mxu0 0
    %6090 = vmatprep.subr.bf16.mxu0 0
    %6091 = vmatpush1.bf16.msra.mxu0 0
    %6092 = vmatprep.subr.bf16.mxu0 0
    %6093 = vmatpush1.bf16.msra.mxu0 0
    %6094 = vmatprep.subr.bf16.mxu0 0
    %6095 = vmatpush1.bf16.msra.mxu0 0
    %6096 = vmatprep.subr.bf16.mxu0 0
    %6097 = vmatpush1.bf16.msra.mxu0 0
    %6098 = vmatprep.subr.bf16.mxu0 0
    %6099 = vmatpush1.bf16.msra.mxu0 0
    %6100 = vmatprep.subr.bf16.mxu0 0
    %6101 = vmatpush1.bf16.msra.mxu0 0
    %6102 = vmatprep.subr.bf16.mxu0 0
    %6103 = vmatpush1.bf16.msra.mxu0 0
    %6104 = vmatprep.subr.bf16.mxu0 0
    %6105 = vmatpush1.bf16.msra.mxu0 0
    %6106 = vmatprep.subr.bf16.mxu0 0
    %6107 = vmatpush1.bf16.msra.mxu0 0
    %6108 = vmatprep.subr.bf16.mxu0 0
    %6109 = vmatpush1.bf16.msra.mxu0 0
    %6110 = vmatprep.subr.bf16.mxu0 0
    %6111 = vmatpush1.bf16.msra.mxu0 0
    %6112 = vmatprep.subr.bf16.mxu0 0
    %6113 = vmatpush1.bf16.msra.mxu0 0
    %6114 = vmatprep.subr.bf16.mxu0 0
    %6115 = vmatpush1.bf16.msra.mxu0 0
    %6116 = vmatprep.subr.bf16.mxu0 0
    %6117 = vmatpush1.bf16.msra.mxu0 0
    %6118 = vmatprep.mubr.bf16.mxu0 0
    %6119 = vmatmul.mubr.bf16.gmra.mrb[0].mxu0 %v5674
    %v6120 = vpop.f32.mrb[0].mxu0
    %v6121 = vadd.f32 %v887, %v6120
    %v6122 = vpop.f32.mrb[0].mxu0
    %v6123 = vadd.f32 %v891, %v6122
    %v6124 = vpop.f32.mrb[0].mxu0
    %v6125 = vpop.f32.mrb[0].mxu0
    %6126 = vdwg.mxu0
    %6127 = vmatprep.subr.bf16.mxu0 %v1118
    %6128 = vmatpush1.bf16.msra.mxu0 %v1115
    %6129 = vmatprep.subr.bf16.mxu0 0
    %6130 = vmatpush1.bf16.msra.mxu0 0
    %6131 = vmatprep.subr.bf16.mxu0 0
    %6132 = vmatpush1.bf16.msra.mxu0 0
    %6133 = vmatprep.subr.bf16.mxu0 0
    %6134 = vmatpush1.bf16.msra.mxu0 0
    %6135 = vmatprep.subr.bf16.mxu0 0
    %6136 = vmatpush1.bf16.msra.mxu0 0
    %6137 = vmatprep.subr.bf16.mxu0 0
    %6138 = vmatpush1.bf16.msra.mxu0 0
    %6139 = vmatprep.subr.bf16.mxu0 0
    %6140 = vmatpush1.bf16.msra.mxu0 0
    %6141 = vmatprep.subr.bf16.mxu0 0
    %6142 = vmatpush1.bf16.msra.mxu0 0
    %6143 = vmatprep.subr.bf16.mxu0 0
    %6144 = vmatpush1.bf16.msra.mxu0 0
    %6145 = vmatprep.subr.bf16.mxu0 0
    %6146 = vmatpush1.bf16.msra.mxu0 0
    %6147 = vmatprep.subr.bf16.mxu0 0
    %6148 = vmatpush1.bf16.msra.mxu0 0
    %6149 = vmatprep.subr.bf16.mxu0 0
    %6150 = vmatpush1.bf16.msra.mxu0 0
    %6151 = vmatprep.subr.bf16.mxu0 0
    %6152 = vmatpush1.bf16.msra.mxu0 0
    %6153 = vmatprep.subr.bf16.mxu0 0
    %6154 = vmatpush1.bf16.msra.mxu0 0
    %6155 = vmatprep.subr.bf16.mxu0 0
    %6156 = vmatpush1.bf16.msra.mxu0 0
    %6157 = vmatprep.subr.bf16.mxu0 0
    %6158 = vmatpush1.bf16.msra.mxu0 0
    %6159 = vmatprep.mubr.bf16.mxu0 0
    %6160 = vmatmul.mubr.bf16.gmra.mrb[0].mxu0 %v5674
    %v6161 = vpop.f32.mrb[0].mxu0
    %v6162 = vadd.f32 %v895, %v6161
    %v6163 = vpop.f32.mrb[0].mxu0
    %v6164 = vadd.f32 %v899, %v6163
    %v6165 = vpop.f32.mrb[0].mxu0
    %v6166 = vpop.f32.mrb[0].mxu0
    %6167 = vdwg.mxu0
    %6168 = vmatprep.subr.bf16.mxu0 %v1124
    %6169 = vmatpush1.bf16.msra.mxu0 %v1121
    %6170 = vmatprep.subr.bf16.mxu0 0
    %6171 = vmatpush1.bf16.msra.mxu0 0
    %6172 = vmatprep.subr.bf16.mxu0 0
    %6173 = vmatpush1.bf16.msra.mxu0 0
    %6174 = vmatprep.subr.bf16.mxu0 0
    %6175 = vmatpush1.bf16.msra.mxu0 0
    %6176 = vmatprep.subr.bf16.mxu0 0
    %6177 = vmatpush1.bf16.msra.mxu0 0
    %6178 = vmatprep.subr.bf16.mxu0 0
    %6179 = vmatpush1.bf16.msra.mxu0 0
    %6180 = vmatprep.subr.bf16.mxu0 0
    %6181 = vmatpush1.bf16.msra.mxu0 0
    %6182 = vmatprep.subr.bf16.mxu0 0
    %6183 = vmatpush1.bf16.msra.mxu0 0
    %6184 = vmatprep.subr.bf16.mxu0 0
    %6185 = vmatpush1.bf16.msra.mxu0 0
    %6186 = vmatprep.subr.bf16.mxu0 0
    %6187 = vmatpush1.bf16.msra.mxu0 0
    %6188 = vmatprep.subr.bf16.mxu0 0
    %6189 = vmatpush1.bf16.msra.mxu0 0
    %6190 = vmatprep.subr.bf16.mxu0 0
    %6191 = vmatpush1.bf16.msra.mxu0 0
    %6192 = vmatprep.subr.bf16.mxu0 0
    %6193 = vmatpush1.bf16.msra.mxu0 0
    %6194 = vmatprep.subr.bf16.mxu0 0
    %6195 = vmatpush1.bf16.msra.mxu0 0
    %6196 = vmatprep.subr.bf16.mxu0 0
    %6197 = vmatpush1.bf16.msra.mxu0 0
    %6198 = vmatprep.subr.bf16.mxu0 0
    %6199 = vmatpush1.bf16.msra.mxu0 0
    %6200 = vmatprep.mubr.bf16.mxu0 0
    %6201 = vmatmul.mubr.bf16.gmra.mrb[0].mxu0 %v5674
    %v6202 = vpop.f32.mrb[0].mxu0
    %v6203 = vadd.f32 %v903, %v6202
    %v6204 = vpop.f32.mrb[0].mxu0
    %v6205 = vadd.f32 %v907, %v6204
    %v6206 = vpop.f32.mrb[0].mxu0
    %v6207 = vpop.f32.mrb[0].mxu0
    %6208 = vdwg.mxu0
    %6209 = vmatprep.subr.bf16.mxu0 %v1130
    %6210 = vmatpush1.bf16.msra.mxu0 %v1127
    %6211 = vmatprep.subr.bf16.mxu0 0
    %6212 = vmatpush1.bf16.msra.mxu0 0
    %6213 = vmatprep.subr.bf16.mxu0 0
    %6214 = vmatpush1.bf16.msra.mxu0 0
    %6215 = vmatprep.subr.bf16.mxu0 0
    %6216 = vmatpush1.bf16.msra.mxu0 0
    %6217 = vmatprep.subr.bf16.mxu0 0
    %6218 = vmatpush1.bf16.msra.mxu0 0
    %6219 = vmatprep.subr.bf16.mxu0 0
    %6220 = vmatpush1.bf16.msra.mxu0 0
    %6221 = vmatprep.subr.bf16.mxu0 0
    %6222 = vmatpush1.bf16.msra.mxu0 0
    %6223 = vmatprep.subr.bf16.mxu0 0
    %6224 = vmatpush1.bf16.msra.mxu0 0
    %6225 = vmatprep.subr.bf16.mxu0 0
    %6226 = vmatpush1.bf16.msra.mxu0 0
    %6227 = vmatprep.subr.bf16.mxu0 0
    %6228 = vmatpush1.bf16.msra.mxu0 0
    %6229 = vmatprep.subr.bf16.mxu0 0
    %6230 = vmatpush1.bf16.msra.mxu0 0
    %6231 = vmatprep.subr.bf16.mxu0 0
    %6232 = vmatpush1.bf16.msra.mxu0 0
    %6233 = vmatprep.subr.bf16.mxu0 0
    %6234 = vmatpush1.bf16.msra.mxu0 0
    %6235 = vmatprep.subr.bf16.mxu0 0
    %6236 = vmatpush1.bf16.msra.mxu0 0
    %6237 = vmatprep.subr.bf16.mxu0 0
    %6238 = vmatpush1.bf16.msra.mxu0 0
    %6239 = vmatprep.subr.bf16.mxu0 0
    %6240 = vmatpush1.bf16.msra.mxu0 0
    %6241 = vmatprep.mubr.bf16.mxu0 0
    %6242 = vmatmul.mubr.bf16.gmra.mrb[0].mxu0 %v5674
    %v6243 = vpop.f32.mrb[0].mxu0
    %v6244 = vadd.f32 %v911, %v6243
    %v6245 = vpop.f32.mrb[0].mxu0
    %v6246 = vadd.f32 %v915, %v6245
    %v6247 = vpop.f32.mrb[0].mxu0
    %v6248 = vpop.f32.mrb[0].mxu0
    %6249 = vdwg.mxu0
    %6250 = vmatprep.subr.bf16.mxu0 %v1136
    %6251 = vmatpush1.bf16.msra.mxu0 %v1133
    %6252 = vmatprep.subr.bf16.mxu0 0
    %6253 = vmatpush1.bf16.msra.mxu0 0
    %6254 = vmatprep.subr.bf16.mxu0 0
    %6255 = vmatpush1.bf16.msra.mxu0 0
    %6256 = vmatprep.subr.bf16.mxu0 0
    %6257 = vmatpush1.bf16.msra.mxu0 0
    %6258 = vmatprep.subr.bf16.mxu0 0
    %6259 = vmatpush1.bf16.msra.mxu0 0
    %6260 = vmatprep.subr.bf16.mxu0 0
    %6261 = vmatpush1.bf16.msra.mxu0 0
    %6262 = vmatprep.subr.bf16.mxu0 0
    %6263 = vmatpush1.bf16.msra.mxu0 0
    %6264 = vmatprep.subr.bf16.mxu0 0
    %6265 = vmatpush1.bf16.msra.mxu0 0
    %6266 = vmatprep.subr.bf16.mxu0 0
    %6267 = vmatpush1.bf16.msra.mxu0 0
    %6268 = vmatprep.subr.bf16.mxu0 0
    %6269 = vmatpush1.bf16.msra.mxu0 0
    %6270 = vmatprep.subr.bf16.mxu0 0
    %6271 = vmatpush1.bf16.msra.mxu0 0
    %6272 = vmatprep.subr.bf16.mxu0 0
    %6273 = vmatpush1.bf16.msra.mxu0 0
    %6274 = vmatprep.subr.bf16.mxu0 0
    %6275 = vmatpush1.bf16.msra.mxu0 0
    %6276 = vmatprep.subr.bf16.mxu0 0
    %6277 = vmatpush1.bf16.msra.mxu0 0
    %6278 = vmatprep.subr.bf16.mxu0 0
    %6279 = vmatpush1.bf16.msra.mxu0 0
    %6280 = vmatprep.subr.bf16.mxu0 0
    %6281 = vmatpush1.bf16.msra.mxu0 0
    %6282 = vmatprep.mubr.bf16.mxu0 0
    %6283 = vmatmul.mubr.bf16.gmra.mrb[0].mxu0 %v5674
    %v6284 = vpop.f32.mrb[0].mxu0
    %v6285 = vadd.f32 %v919, %v6284
    %v6286 = vpop.f32.mrb[0].mxu0
    %v6287 = vadd.f32 %v923, %v6286
    %v6288 = vpop.f32.mrb[0].mxu0
    %v6289 = vpop.f32.mrb[0].mxu0
    %6290 = vdwg.mxu0
    %6291 = vmatprep.subr.bf16.mxu0 %v1142
    %6292 = vmatpush1.bf16.msra.mxu0 %v1139
    %6293 = vmatprep.subr.bf16.mxu0 0
    %6294 = vmatpush1.bf16.msra.mxu0 0
    %6295 = vmatprep.subr.bf16.mxu0 0
    %6296 = vmatpush1.bf16.msra.mxu0 0
    %6297 = vmatprep.subr.bf16.mxu0 0
    %6298 = vmatpush1.bf16.msra.mxu0 0
    %6299 = vmatprep.subr.bf16.mxu0 0
    %6300 = vmatpush1.bf16.msra.mxu0 0
    %6301 = vmatprep.subr.bf16.mxu0 0
    %6302 = vmatpush1.bf16.msra.mxu0 0
    %6303 = vmatprep.subr.bf16.mxu0 0
    %6304 = vmatpush1.bf16.msra.mxu0 0
    %6305 = vmatprep.subr.bf16.mxu0 0
    %6306 = vmatpush1.bf16.msra.mxu0 0
    %6307 = vmatprep.subr.bf16.mxu0 0
    %6308 = vmatpush1.bf16.msra.mxu0 0
    %6309 = vmatprep.subr.bf16.mxu0 0
    %6310 = vmatpush1.bf16.msra.mxu0 0
    %6311 = vmatprep.subr.bf16.mxu0 0
    %6312 = vmatpush1.bf16.msra.mxu0 0
    %6313 = vmatprep.subr.bf16.mxu0 0
    %6314 = vmatpush1.bf16.msra.mxu0 0
    %6315 = vmatprep.subr.bf16.mxu0 0
    %6316 = vmatpush1.bf16.msra.mxu0 0
    %6317 = vmatprep.subr.bf16.mxu0 0
    %6318 = vmatpush1.bf16.msra.mxu0 0
    %6319 = vmatprep.subr.bf16.mxu0 0
    %6320 = vmatpush1.bf16.msra.mxu0 0
    %6321 = vmatprep.subr.bf16.mxu0 0
    %6322 = vmatpush1.bf16.msra.mxu0 0
    %6323 = vmatprep.mubr.bf16.mxu0 0
    %6324 = vmatmul.mubr.bf16.gmra.mrb[0].mxu0 %v5674
    %v6325 = vpop.f32.mrb[0].mxu0
    %v6326 = vadd.f32 %v927, %v6325
    %v6327 = vpop.f32.mrb[0].mxu0
    %v6328 = vadd.f32 %v931, %v6327
    %v6329 = vpop.f32.mrb[0].mxu0
    %v6330 = vpop.f32.mrb[0].mxu0
    %6331 = vdwg.mxu0
    %v6332 = vrot.slane %v5711, 4
    %v6333 = vadd.f32 %v5711, %v6332
    %v6334 = vrot.slane %v6333, 2
    %v6335 = vadd.f32 %v6333, %v6334
    %v6336 = vrot.slane %v6335, 1
    %v6337 = vadd.f32 %v6335, %v6336
    %v6338 = vrot.slane %v5713, 4
    %v6339 = vadd.f32 %v5713, %v6338
    %v6340 = vrot.slane %v6339, 2
    %v6341 = vadd.f32 %v6339, %v6340
    %v6342 = vrot.slane %v6341, 1
    %v6343 = vadd.f32 %v6341, %v6342
    %v6344 = vrot.slane %v5752, 4
    %v6345 = vadd.f32 %v5752, %v6344
    %v6346 = vrot.slane %v6345, 2
    %v6347 = vadd.f32 %v6345, %v6346
    %v6348 = vrot.slane %v6347, 1
    %v6349 = vadd.f32 %v6347, %v6348
    %v6350 = vrot.slane %v5754, 4
    %v6351 = vadd.f32 %v5754, %v6350
    %v6352 = vrot.slane %v6351, 2
    %v6353 = vadd.f32 %v6351, %v6352
    %v6354 = vrot.slane %v6353, 1
    %v6355 = vadd.f32 %v6353, %v6354
    %v6356 = vrot.slane %v5793, 4
    %v6357 = vadd.f32 %v5793, %v6356
    %v6358 = vrot.slane %v6357, 2
    %v6359 = vadd.f32 %v6357, %v6358
    %v6360 = vrot.slane %v6359, 1
    %v6361 = vadd.f32 %v6359, %v6360
    %v6362 = vrot.slane %v5795, 4
    %v6363 = vadd.f32 %v5795, %v6362
    %v6364 = vrot.slane %v6363, 2
    %v6365 = vadd.f32 %v6363, %v6364
    %v6366 = vrot.slane %v6365, 1
    %v6367 = vadd.f32 %v6365, %v6366
    %v6368 = vrot.slane %v5834, 4
    %v6369 = vadd.f32 %v5834, %v6368
    %v6370 = vrot.slane %v6369, 2
    %v6371 = vadd.f32 %v6369, %v6370
    %v6372 = vrot.slane %v6371, 1
    %v6373 = vadd.f32 %v6371, %v6372
    %v6374 = vrot.slane %v5836, 4
    %v6375 = vadd.f32 %v5836, %v6374
    %v6376 = vrot.slane %v6375, 2
    %v6377 = vadd.f32 %v6375, %v6376
    %v6378 = vrot.slane %v6377, 1
    %v6379 = vadd.f32 %v6377, %v6378
    %v6380 = vrot.slane %v5875, 4
    %v6381 = vadd.f32 %v5875, %v6380
    %v6382 = vrot.slane %v6381, 2
    %v6383 = vadd.f32 %v6381, %v6382
    %v6384 = vrot.slane %v6383, 1
    %v6385 = vadd.f32 %v6383, %v6384
    %v6386 = vrot.slane %v5877, 4
    %v6387 = vadd.f32 %v5877, %v6386
    %v6388 = vrot.slane %v6387, 2
    %v6389 = vadd.f32 %v6387, %v6388
    %v6390 = vrot.slane %v6389, 1
    %v6391 = vadd.f32 %v6389, %v6390
    %v6392 = vrot.slane %v5916, 4
    %v6393 = vadd.f32 %v5916, %v6392
    %v6394 = vrot.slane %v6393, 2
    %v6395 = vadd.f32 %v6393, %v6394
    %v6396 = vrot.slane %v6395, 1
    %v6397 = vadd.f32 %v6395, %v6396
    %v6398 = vrot.slane %v5918, 4
    %v6399 = vadd.f32 %v5918, %v6398
    %v6400 = vrot.slane %v6399, 2
    %v6401 = vadd.f32 %v6399, %v6400
    %v6402 = vrot.slane %v6401, 1
    %v6403 = vadd.f32 %v6401, %v6402
    %v6404 = vrot.slane %v5957, 4
    %v6405 = vadd.f32 %v5957, %v6404
    %v6406 = vrot.slane %v6405, 2
    %v6407 = vadd.f32 %v6405, %v6406
    %v6408 = vrot.slane %v6407, 1
    %v6409 = vadd.f32 %v6407, %v6408
    %v6410 = vrot.slane %v5959, 4
    %v6411 = vadd.f32 %v5959, %v6410
    %v6412 = vrot.slane %v6411, 2
    %v6413 = vadd.f32 %v6411, %v6412
    %v6414 = vrot.slane %v6413, 1
    %v6415 = vadd.f32 %v6413, %v6414
    %v6416 = vrot.slane %v5998, 4
    %v6417 = vadd.f32 %v5998, %v6416
    %v6418 = vrot.slane %v6417, 2
    %v6419 = vadd.f32 %v6417, %v6418
    %v6420 = vrot.slane %v6419, 1
    %v6421 = vadd.f32 %v6419, %v6420
    %v6422 = vrot.slane %v6000, 4
    %v6423 = vadd.f32 %v6000, %v6422
    %v6424 = vrot.slane %v6423, 2
    %v6425 = vadd.f32 %v6423, %v6424
    %v6426 = vrot.slane %v6425, 1
    %v6427 = vadd.f32 %v6425, %v6426
    %v6428 = vrot.slane %v6039, 4
    %v6429 = vadd.f32 %v6039, %v6428
    %v6430 = vrot.slane %v6429, 2
    %v6431 = vadd.f32 %v6429, %v6430
    %v6432 = vrot.slane %v6431, 1
    %v6433 = vadd.f32 %v6431, %v6432
    %v6434 = vrot.slane %v6041, 4
    %v6435 = vadd.f32 %v6041, %v6434
    %v6436 = vrot.slane %v6435, 2
    %v6437 = vadd.f32 %v6435, %v6436
    %v6438 = vrot.slane %v6437, 1
    %v6439 = vadd.f32 %v6437, %v6438
    %v6440 = vrot.slane %v6080, 4
    %v6441 = vadd.f32 %v6080, %v6440
    %v6442 = vrot.slane %v6441, 2
    %v6443 = vadd.f32 %v6441, %v6442
    %v6444 = vrot.slane %v6443, 1
    %v6445 = vadd.f32 %v6443, %v6444
    %v6446 = vrot.slane %v6082, 4
    %v6447 = vadd.f32 %v6082, %v6446
    %v6448 = vrot.slane %v6447, 2
    %v6449 = vadd.f32 %v6447, %v6448
    %v6450 = vrot.slane %v6449, 1
    %v6451 = vadd.f32 %v6449, %v6450
    %v6452 = vrot.slane %v6121, 4
    %v6453 = vadd.f32 %v6121, %v6452
    %v6454 = vrot.slane %v6453, 2
    %v6455 = vadd.f32 %v6453, %v6454
    %v6456 = vrot.slane %v6455, 1
    %v6457 = vadd.f32 %v6455, %v6456
    %v6458 = vrot.slane %v6123, 4
    %v6459 = vadd.f32 %v6123, %v6458
    %v6460 = vrot.slane %v6459, 2
    %v6461 = vadd.f32 %v6459, %v6460
    %v6462 = vrot.slane %v6461, 1
    %v6463 = vadd.f32 %v6461, %v6462
    %v6464 = vrot.slane %v6162, 4
    %v6465 = vadd.f32 %v6162, %v6464
    %v6466 = vrot.slane %v6465, 2
    %v6467 = vadd.f32 %v6465, %v6466
    %v6468 = vrot.slane %v6467, 1
    %v6469 = vadd.f32 %v6467, %v6468
    %v6470 = vrot.slane %v6164, 4
    %v6471 = vadd.f32 %v6164, %v6470
    %v6472 = vrot.slane %v6471, 2
    %v6473 = vadd.f32 %v6471, %v6472
    %v6474 = vrot.slane %v6473, 1
    %v6475 = vadd.f32 %v6473, %v6474
    %v6476 = vrot.slane %v6203, 4
    %v6477 = vadd.f32 %v6203, %v6476
    %v6478 = vrot.slane %v6477, 2
    %v6479 = vadd.f32 %v6477, %v6478
    %v6480 = vrot.slane %v6479, 1
    %v6481 = vadd.f32 %v6479, %v6480
    %v6482 = vrot.slane %v6205, 4
    %v6483 = vadd.f32 %v6205, %v6482
    %v6484 = vrot.slane %v6483, 2
    %v6485 = vadd.f32 %v6483, %v6484
    %v6486 = vrot.slane %v6485, 1
    %v6487 = vadd.f32 %v6485, %v6486
    %v6488 = vrot.slane %v6244, 4
    %v6489 = vadd.f32 %v6244, %v6488
    %v6490 = vrot.slane %v6489, 2
    %v6491 = vadd.f32 %v6489, %v6490
    %v6492 = vrot.slane %v6491, 1
    %v6493 = vadd.f32 %v6491, %v6492
    %v6494 = vrot.slane %v6246, 4
    %v6495 = vadd.f32 %v6246, %v6494
    %v6496 = vrot.slane %v6495, 2
    %v6497 = vadd.f32 %v6495, %v6496
    %v6498 = vrot.slane %v6497, 1
    %v6499 = vadd.f32 %v6497, %v6498
    %v6500 = vrot.slane %v6285, 4
    %v6501 = vadd.f32 %v6285, %v6500
    %v6502 = vrot.slane %v6501, 2
    %v6503 = vadd.f32 %v6501, %v6502
    %v6504 = vrot.slane %v6503, 1
    %v6505 = vadd.f32 %v6503, %v6504
    %v6506 = vrot.slane %v6287, 4
    %v6507 = vadd.f32 %v6287, %v6506
    %v6508 = vrot.slane %v6507, 2
    %v6509 = vadd.f32 %v6507, %v6508
    %v6510 = vrot.slane %v6509, 1
    %v6511 = vadd.f32 %v6509, %v6510
    %v6512 = vrot.slane %v6326, 4
    %v6513 = vadd.f32 %v6326, %v6512
    %v6514 = vrot.slane %v6513, 2
    %v6515 = vadd.f32 %v6513, %v6514
    %v6516 = vrot.slane %v6515, 1
    %v6517 = vadd.f32 %v6515, %v6516
    %v6518 = vrot.slane %v6328, 4
    %v6519 = vadd.f32 %v6328, %v6518
    %v6520 = vrot.slane %v6519, 2
    %v6521 = vadd.f32 %v6519, %v6520
    %v6522 = vrot.slane %v6521, 1
    %v6523 = vadd.f32 %v6521, %v6522
    %v6524 = vmul.f32 %v6337, %v740
    %v6525 = vmul.f32 %v6343, %v740
    %v6526 = vmul.f32 %v6349, %v740
    %v6527 = vmul.f32 %v6355, %v740
    %v6528 = vmul.f32 %v6361, %v740
    %v6529 = vmul.f32 %v6367, %v740
    %v6530 = vmul.f32 %v6373, %v740
    %v6531 = vmul.f32 %v6379, %v740
    %v6532 = vmul.f32 %v6385, %v740
    %v6533 = vmul.f32 %v6391, %v740
    %v6534 = vmul.f32 %v6397, %v740
    %v6535 = vmul.f32 %v6403, %v740
    %v6536 = vmul.f32 %v6409, %v740
    %v6537 = vmul.f32 %v6415, %v740
    %v6538 = vmul.f32 %v6421, %v740
    %v6539 = vmul.f32 %v6427, %v740
    %v6540 = vmul.f32 %v6433, %v740
    %v6541 = vmul.f32 %v6439, %v740
    %v6542 = vmul.f32 %v6445, %v740
    %v6543 = vmul.f32 %v6451, %v740
    %v6544 = vmul.f32 %v6457, %v740
    %v6545 = vmul.f32 %v6463, %v740
    %v6546 = vmul.f32 %v6469, %v740
    %v6547 = vmul.f32 %v6475, %v740
    %v6548 = vmul.f32 %v6481, %v740
    %v6549 = vmul.f32 %v6487, %v740
    %v6550 = vmul.f32 %v6493, %v740
    %v6551 = vmul.f32 %v6499, %v740
    %v6552 = vmul.f32 %v6505, %v740
    %v6553 = vmul.f32 %v6511, %v740
    %v6554 = vmul.f32 %v6517, %v740
    %v6555 = vmul.f32 %v6523, %v740
    %v6556 = vsub.f32 %v5711, %v6524
    %v6557 = vsub.f32 %v5713, %v6525
    %v6558 = vsub.f32 %v5752, %v6526
    %v6559 = vsub.f32 %v5754, %v6527
    %v6560 = vsub.f32 %v5793, %v6528
    %v6561 = vsub.f32 %v5795, %v6529
    %v6562 = vsub.f32 %v5834, %v6530
    %v6563 = vsub.f32 %v5836, %v6531
    %v6564 = vsub.f32 %v5875, %v6532
    %v6565 = vsub.f32 %v5877, %v6533
    %v6566 = vsub.f32 %v5916, %v6534
    %v6567 = vsub.f32 %v5918, %v6535
    %v6568 = vsub.f32 %v5957, %v6536
    %v6569 = vsub.f32 %v5959, %v6537
    %v6570 = vsub.f32 %v5998, %v6538
    %v6571 = vsub.f32 %v6000, %v6539
    %v6572 = vsub.f32 %v6039, %v6540
    %v6573 = vsub.f32 %v6041, %v6541
    %v6574 = vsub.f32 %v6080, %v6542
    %v6575 = vsub.f32 %v6082, %v6543
    %v6576 = vsub.f32 %v6121, %v6544
    %v6577 = vsub.f32 %v6123, %v6545
    %v6578 = vsub.f32 %v6162, %v6546
    %v6579 = vsub.f32 %v6164, %v6547
    %v6580 = vsub.f32 %v6203, %v6548
    %v6581 = vsub.f32 %v6205, %v6549
    %v6582 = vsub.f32 %v6244, %v6550
    %v6583 = vsub.f32 %v6246, %v6551
    %v6584 = vsub.f32 %v6285, %v6552
    %v6585 = vsub.f32 %v6287, %v6553
    %v6586 = vsub.f32 %v6326, %v6554
    %v6587 = vsub.f32 %v6328, %v6555
    %v6588 = vmul.f32 %v6556, %v6556
    %v6589 = vmul.f32 %v6557, %v6557
    %v6590 = vmul.f32 %v6558, %v6558
    %v6591 = vmul.f32 %v6559, %v6559
    %v6592 = vmul.f32 %v6560, %v6560
    %v6593 = vmul.f32 %v6561, %v6561
    %v6594 = vmul.f32 %v6562, %v6562
    %v6595 = vmul.f32 %v6563, %v6563
    %v6596 = vmul.f32 %v6564, %v6564
    %v6597 = vmul.f32 %v6565, %v6565
    %v6598 = vmul.f32 %v6566, %v6566
    %v6599 = vmul.f32 %v6567, %v6567
    %v6600 = vmul.f32 %v6568, %v6568
    %v6601 = vmul.f32 %v6569, %v6569
    %v6602 = vmul.f32 %v6570, %v6570
    %v6603 = vmul.f32 %v6571, %v6571
    %v6604 = vmul.f32 %v6572, %v6572
    %v6605 = vmul.f32 %v6573, %v6573
    %v6606 = vmul.f32 %v6574, %v6574
    %v6607 = vmul.f32 %v6575, %v6575
    %v6608 = vmul.f32 %v6576, %v6576
    %v6609 = vmul.f32 %v6577, %v6577
    %v6610 = vmul.f32 %v6578, %v6578
    %v6611 = vmul.f32 %v6579, %v6579
    %v6612 = vmul.f32 %v6580, %v6580
    %v6613 = vmul.f32 %v6581, %v6581
    %v6614 = vmul.f32 %v6582, %v6582
    %v6615 = vmul.f32 %v6583, %v6583
    %v6616 = vmul.f32 %v6584, %v6584
    %v6617 = vmul.f32 %v6585, %v6585
    %v6618 = vmul.f32 %v6586, %v6586
    %v6619 = vmul.f32 %v6587, %v6587
    %v6620 = vrot.slane %v6588, 4
    %v6621 = vadd.f32 %v6588, %v6620
    %v6622 = vrot.slane %v6621, 2
    %v6623 = vadd.f32 %v6621, %v6622
    %v6624 = vrot.slane %v6623, 1
    %v6625 = vadd.f32 %v6623, %v6624
    %v6626 = vrot.slane %v6589, 4
    %v6627 = vadd.f32 %v6589, %v6626
    %v6628 = vrot.slane %v6627, 2
    %v6629 = vadd.f32 %v6627, %v6628
    %v6630 = vrot.slane %v6629, 1
    %v6631 = vadd.f32 %v6629, %v6630
    %v6632 = vrot.slane %v6590, 4
    %v6633 = vadd.f32 %v6590, %v6632
    %v6634 = vrot.slane %v6633, 2
    %v6635 = vadd.f32 %v6633, %v6634
    %v6636 = vrot.slane %v6635, 1
    %v6637 = vadd.f32 %v6635, %v6636
    %v6638 = vrot.slane %v6591, 4
    %v6639 = vadd.f32 %v6591, %v6638
    %v6640 = vrot.slane %v6639, 2
    %v6641 = vadd.f32 %v6639, %v6640
    %v6642 = vrot.slane %v6641, 1
    %v6643 = vadd.f32 %v6641, %v6642
    %v6644 = vrot.slane %v6592, 4
    %v6645 = vadd.f32 %v6592, %v6644
    %v6646 = vrot.slane %v6645, 2
    %v6647 = vadd.f32 %v6645, %v6646
    %v6648 = vrot.slane %v6647, 1
    %v6649 = vadd.f32 %v6647, %v6648
    %v6650 = vrot.slane %v6593, 4
    %v6651 = vadd.f32 %v6593, %v6650
    %v6652 = vrot.slane %v6651, 2
    %v6653 = vadd.f32 %v6651, %v6652
    %v6654 = vrot.slane %v6653, 1
    %v6655 = vadd.f32 %v6653, %v6654
    %v6656 = vrot.slane %v6594, 4
    %v6657 = vadd.f32 %v6594, %v6656
    %v6658 = vrot.slane %v6657, 2
    %v6659 = vadd.f32 %v6657, %v6658
    %v6660 = vrot.slane %v6659, 1
    %v6661 = vadd.f32 %v6659, %v6660
    %v6662 = vrot.slane %v6595, 4
    %v6663 = vadd.f32 %v6595, %v6662
    %v6664 = vrot.slane %v6663, 2
    %v6665 = vadd.f32 %v6663, %v6664
    %v6666 = vrot.slane %v6665, 1
    %v6667 = vadd.f32 %v6665, %v6666
    %v6668 = vrot.slane %v6596, 4
    %v6669 = vadd.f32 %v6596, %v6668
    %v6670 = vrot.slane %v6669, 2
    %v6671 = vadd.f32 %v6669, %v6670
    %v6672 = vrot.slane %v6671, 1
    %v6673 = vadd.f32 %v6671, %v6672
    %v6674 = vrot.slane %v6597, 4
    %v6675 = vadd.f32 %v6597, %v6674
    %v6676 = vrot.slane %v6675, 2
    %v6677 = vadd.f32 %v6675, %v6676
    %v6678 = vrot.slane %v6677, 1
    %v6679 = vadd.f32 %v6677, %v6678
    %v6680 = vrot.slane %v6598, 4
    %v6681 = vadd.f32 %v6598, %v6680
    %v6682 = vrot.slane %v6681, 2
    %v6683 = vadd.f32 %v6681, %v6682
    %v6684 = vrot.slane %v6683, 1
    %v6685 = vadd.f32 %v6683, %v6684
    %v6686 = vrot.slane %v6599, 4
    %v6687 = vadd.f32 %v6599, %v6686
    %v6688 = vrot.slane %v6687, 2
    %v6689 = vadd.f32 %v6687, %v6688
    %v6690 = vrot.slane %v6689, 1
    %v6691 = vadd.f32 %v6689, %v6690
    %v6692 = vrot.slane %v6600, 4
    %v6693 = vadd.f32 %v6600, %v6692
    %v6694 = vrot.slane %v6693, 2
    %v6695 = vadd.f32 %v6693, %v6694
    %v6696 = vrot.slane %v6695, 1
    %v6697 = vadd.f32 %v6695, %v6696
    %v6698 = vrot.slane %v6601, 4
    %v6699 = vadd.f32 %v6601, %v6698
    %v6700 = vrot.slane %v6699, 2
    %v6701 = vadd.f32 %v6699, %v6700
    %v6702 = vrot.slane %v6701, 1
    %v6703 = vadd.f32 %v6701, %v6702
    %v6704 = vrot.slane %v6602, 4
    %v6705 = vadd.f32 %v6602, %v6704
    %v6706 = vrot.slane %v6705, 2
    %v6707 = vadd.f32 %v6705, %v6706
    %v6708 = vrot.slane %v6707, 1
    %v6709 = vadd.f32 %v6707, %v6708
    %v6710 = vrot.slane %v6603, 4
    %v6711 = vadd.f32 %v6603, %v6710
    %v6712 = vrot.slane %v6711, 2
    %v6713 = vadd.f32 %v6711, %v6712
    %v6714 = vrot.slane %v6713, 1
    %v6715 = vadd.f32 %v6713, %v6714
    %v6716 = vrot.slane %v6604, 4
    %v6717 = vadd.f32 %v6604, %v6716
    %v6718 = vrot.slane %v6717, 2
    %v6719 = vadd.f32 %v6717, %v6718
    %v6720 = vrot.slane %v6719, 1
    %v6721 = vadd.f32 %v6719, %v6720
    %v6722 = vrot.slane %v6605, 4
    %v6723 = vadd.f32 %v6605, %v6722
    %v6724 = vrot.slane %v6723, 2
    %v6725 = vadd.f32 %v6723, %v6724
    %v6726 = vrot.slane %v6725, 1
    %v6727 = vadd.f32 %v6725, %v6726
    %v6728 = vrot.slane %v6606, 4
    %v6729 = vadd.f32 %v6606, %v6728
    %v6730 = vrot.slane %v6729, 2
    %v6731 = vadd.f32 %v6729, %v6730
    %v6732 = vrot.slane %v6731, 1
    %v6733 = vadd.f32 %v6731, %v6732
    %v6734 = vrot.slane %v6607, 4
    %v6735 = vadd.f32 %v6607, %v6734
    %v6736 = vrot.slane %v6735, 2
    %v6737 = vadd.f32 %v6735, %v6736
    %v6738 = vrot.slane %v6737, 1
    %v6739 = vadd.f32 %v6737, %v6738
    %v6740 = vrot.slane %v6608, 4
    %v6741 = vadd.f32 %v6608, %v6740
    %v6742 = vrot.slane %v6741, 2
    %v6743 = vadd.f32 %v6741, %v6742
    %v6744 = vrot.slane %v6743, 1
    %v6745 = vadd.f32 %v6743, %v6744
    %v6746 = vrot.slane %v6609, 4
    %v6747 = vadd.f32 %v6609, %v6746
    %v6748 = vrot.slane %v6747, 2
    %v6749 = vadd.f32 %v6747, %v6748
    %v6750 = vrot.slane %v6749, 1
    %v6751 = vadd.f32 %v6749, %v6750
    %v6752 = vrot.slane %v6610, 4
    %v6753 = vadd.f32 %v6610, %v6752
    %v6754 = vrot.slane %v6753, 2
    %v6755 = vadd.f32 %v6753, %v6754
    %v6756 = vrot.slane %v6755, 1
    %v6757 = vadd.f32 %v6755, %v6756
    %v6758 = vrot.slane %v6611, 4
    %v6759 = vadd.f32 %v6611, %v6758
    %v6760 = vrot.slane %v6759, 2
    %v6761 = vadd.f32 %v6759, %v6760
    %v6762 = vrot.slane %v6761, 1
    %v6763 = vadd.f32 %v6761, %v6762
    %v6764 = vrot.slane %v6612, 4
    %v6765 = vadd.f32 %v6612, %v6764
    %v6766 = vrot.slane %v6765, 2
    %v6767 = vadd.f32 %v6765, %v6766
    %v6768 = vrot.slane %v6767, 1
    %v6769 = vadd.f32 %v6767, %v6768
    %v6770 = vrot.slane %v6613, 4
    %v6771 = vadd.f32 %v6613, %v6770
    %v6772 = vrot.slane %v6771, 2
    %v6773 = vadd.f32 %v6771, %v6772
    %v6774 = vrot.slane %v6773, 1
    %v6775 = vadd.f32 %v6773, %v6774
    %v6776 = vrot.slane %v6614, 4
    %v6777 = vadd.f32 %v6614, %v6776
    %v6778 = vrot.slane %v6777, 2
    %v6779 = vadd.f32 %v6777, %v6778
    %v6780 = vrot.slane %v6779, 1
    %v6781 = vadd.f32 %v6779, %v6780
    %v6782 = vrot.slane %v6615, 4
    %v6783 = vadd.f32 %v6615, %v6782
    %v6784 = vrot.slane %v6783, 2
    %v6785 = vadd.f32 %v6783, %v6784
    %v6786 = vrot.slane %v6785, 1
    %v6787 = vadd.f32 %v6785, %v6786
    %v6788 = vrot.slane %v6616, 4
    %v6789 = vadd.f32 %v6616, %v6788
    %v6790 = vrot.slane %v6789, 2
    %v6791 = vadd.f32 %v6789, %v6790
    %v6792 = vrot.slane %v6791, 1
    %v6793 = vadd.f32 %v6791, %v6792
    %v6794 = vrot.slane %v6617, 4
    %v6795 = vadd.f32 %v6617, %v6794
    %v6796 = vrot.slane %v6795, 2
    %v6797 = vadd.f32 %v6795, %v6796
    %v6798 = vrot.slane %v6797, 1
    %v6799 = vadd.f32 %v6797, %v6798
    %v6800 = vrot.slane %v6618, 4
    %v6801 = vadd.f32 %v6618, %v6800
    %v6802 = vrot.slane %v6801, 2
    %v6803 = vadd.f32 %v6801, %v6802
    %v6804 = vrot.slane %v6803, 1
    %v6805 = vadd.f32 %v6803, %v6804
    %v6806 = vrot.slane %v6619, 4
    %v6807 = vadd.f32 %v6619, %v6806
    %v6808 = vrot.slane %v6807, 2
    %v6809 = vadd.f32 %v6807, %v6808
    %v6810 = vrot.slane %v6809, 1
    %v6811 = vadd.f32 %v6809, %v6810
    %v6812 = vmul.f32 %v6625, %v740
    %v6813 = vmul.f32 %v6631, %v740
    %v6814 = vmul.f32 %v6637, %v740
    %v6815 = vmul.f32 %v6643, %v740
    %v6816 = vmul.f32 %v6649, %v740
    %v6817 = vmul.f32 %v6655, %v740
    %v6818 = vmul.f32 %v6661, %v740
    %v6819 = vmul.f32 %v6667, %v740
    %v6820 = vmul.f32 %v6673, %v740
    %v6821 = vmul.f32 %v6679, %v740
    %v6822 = vmul.f32 %v6685, %v740
    %v6823 = vmul.f32 %v6691, %v740
    %v6824 = vmul.f32 %v6697, %v740
    %v6825 = vmul.f32 %v6703, %v740
    %v6826 = vmul.f32 %v6709, %v740
    %v6827 = vmul.f32 %v6715, %v740
    %v6828 = vmul.f32 %v6721, %v740
    %v6829 = vmul.f32 %v6727, %v740
    %v6830 = vmul.f32 %v6733, %v740
    %v6831 = vmul.f32 %v6739, %v740
    %v6832 = vmul.f32 %v6745, %v740
    %v6833 = vmul.f32 %v6751, %v740
    %v6834 = vmul.f32 %v6757, %v740
    %v6835 = vmul.f32 %v6763, %v740
    %v6836 = vmul.f32 %v6769, %v740
    %v6837 = vmul.f32 %v6775, %v740
    %v6838 = vmul.f32 %v6781, %v740
    %v6839 = vmul.f32 %v6787, %v740
    %v6840 = vmul.f32 %v6793, %v740
    %v6841 = vmul.f32 %v6799, %v740
    %v6842 = vmul.f32 %v6805, %v740
    %v6843 = vmul.f32 %v6811, %v740
    %v6844 = vadd.f32 %v6812, 1e-05
    %v6845 = vadd.f32 %v6813, 1e-05
    %v6846 = vadd.f32 %v6814, 1e-05
    %v6847 = vadd.f32 %v6815, 1e-05
    %v6848 = vadd.f32 %v6816, 1e-05
    %v6849 = vadd.f32 %v6817, 1e-05
    %v6850 = vadd.f32 %v6818, 1e-05
    %v6851 = vadd.f32 %v6819, 1e-05
    %v6852 = vadd.f32 %v6820, 1e-05
    %v6853 = vadd.f32 %v6821, 1e-05
    %v6854 = vadd.f32 %v6822, 1e-05
    %v6855 = vadd.f32 %v6823, 1e-05
    %v6856 = vadd.f32 %v6824, 1e-05
    %v6857 = vadd.f32 %v6825, 1e-05
    %v6858 = vadd.f32 %v6826, 1e-05
    %v6859 = vadd.f32 %v6827, 1e-05
    %v6860 = vadd.f32 %v6828, 1e-05
    %v6861 = vadd.f32 %v6829, 1e-05
    %v6862 = vadd.f32 %v6830, 1e-05
    %v6863 = vadd.f32 %v6831, 1e-05
    %v6864 = vadd.f32 %v6832, 1e-05
    %v6865 = vadd.f32 %v6833, 1e-05
    %v6866 = vadd.f32 %v6834, 1e-05
    %v6867 = vadd.f32 %v6835, 1e-05
    %v6868 = vadd.f32 %v6836, 1e-05
    %v6869 = vadd.f32 %v6837, 1e-05
    %v6870 = vadd.f32 %v6838, 1e-05
    %v6871 = vadd.f32 %v6839, 1e-05
    %v6872 = vadd.f32 %v6840, 1e-05
    %v6873 = vadd.f32 %v6841, 1e-05
    %v6874 = vadd.f32 %v6842, 1e-05
    %v6875 = vadd.f32 %v6843, 1e-05
    %v6876 = vrsqrt.pop %v6844
    %v6877 = vmul.f32 %v6844, %v6876
    %vm6878 = vcmp.eq.f32.partialorder %v6844, inf
    %v6879 = vsel %vm6878, %v6844, %v6877
    %vm6880 = vcmp.eq.f32.partialorder %v6844, 0.0
    %v6881 = vand.u32 %v6844, 2147483648
    %v6882 = vsel %vm6880, %v6881, %v6879
    %v6883 = vrsqrt.pop %v6845
    %v6884 = vmul.f32 %v6845, %v6883
    %vm6885 = vcmp.eq.f32.partialorder %v6845, inf
    %v6886 = vsel %vm6885, %v6845, %v6884
    %vm6887 = vcmp.eq.f32.partialorder %v6845, 0.0
    %v6888 = vand.u32 %v6845, 2147483648
    %v6889 = vsel %vm6887, %v6888, %v6886
    %v6890 = vrsqrt.pop %v6846
    %v6891 = vmul.f32 %v6846, %v6890
    %vm6892 = vcmp.eq.f32.partialorder %v6846, inf
    %v6893 = vsel %vm6892, %v6846, %v6891
    %vm6894 = vcmp.eq.f32.partialorder %v6846, 0.0
    %v6895 = vand.u32 %v6846, 2147483648
    %v6896 = vsel %vm6894, %v6895, %v6893
    %v6897 = vrsqrt.pop %v6847
    %v6898 = vmul.f32 %v6847, %v6897
    %vm6899 = vcmp.eq.f32.partialorder %v6847, inf
    %v6900 = vsel %vm6899, %v6847, %v6898
    %vm6901 = vcmp.eq.f32.partialorder %v6847, 0.0
    %v6902 = vand.u32 %v6847, 2147483648
    %v6903 = vsel %vm6901, %v6902, %v6900
    %v6904 = vrsqrt.pop %v6848
    %v6905 = vmul.f32 %v6848, %v6904
    %vm6906 = vcmp.eq.f32.partialorder %v6848, inf
    %v6907 = vsel %vm6906, %v6848, %v6905
    %vm6908 = vcmp.eq.f32.partialorder %v6848, 0.0
    %v6909 = vand.u32 %v6848, 2147483648
    %v6910 = vsel %vm6908, %v6909, %v6907
    %v6911 = vrsqrt.pop %v6849
    %v6912 = vmul.f32 %v6849, %v6911
    %vm6913 = vcmp.eq.f32.partialorder %v6849, inf
    %v6914 = vsel %vm6913, %v6849, %v6912
    %vm6915 = vcmp.eq.f32.partialorder %v6849, 0.0
    %v6916 = vand.u32 %v6849, 2147483648
    %v6917 = vsel %vm6915, %v6916, %v6914
    %v6918 = vrsqrt.pop %v6850
    %v6919 = vmul.f32 %v6850, %v6918
    %vm6920 = vcmp.eq.f32.partialorder %v6850, inf
    %v6921 = vsel %vm6920, %v6850, %v6919
    %vm6922 = vcmp.eq.f32.partialorder %v6850, 0.0
    %v6923 = vand.u32 %v6850, 2147483648
    %v6924 = vsel %vm6922, %v6923, %v6921
    %v6925 = vrsqrt.pop %v6851
    %v6926 = vmul.f32 %v6851, %v6925
    %vm6927 = vcmp.eq.f32.partialorder %v6851, inf
    %v6928 = vsel %vm6927, %v6851, %v6926
    %vm6929 = vcmp.eq.f32.partialorder %v6851, 0.0
    %v6930 = vand.u32 %v6851, 2147483648
    %v6931 = vsel %vm6929, %v6930, %v6928
    %v6932 = vrsqrt.pop %v6852
    %v6933 = vmul.f32 %v6852, %v6932
    %vm6934 = vcmp.eq.f32.partialorder %v6852, inf
    %v6935 = vsel %vm6934, %v6852, %v6933
    %vm6936 = vcmp.eq.f32.partialorder %v6852, 0.0
    %v6937 = vand.u32 %v6852, 2147483648
    %v6938 = vsel %vm6936, %v6937, %v6935
    %v6939 = vrsqrt.pop %v6853
    %v6940 = vmul.f32 %v6853, %v6939
    %vm6941 = vcmp.eq.f32.partialorder %v6853, inf
    %v6942 = vsel %vm6941, %v6853, %v6940
    %vm6943 = vcmp.eq.f32.partialorder %v6853, 0.0
    %v6944 = vand.u32 %v6853, 2147483648
    %v6945 = vsel %vm6943, %v6944, %v6942
    %v6946 = vrsqrt.pop %v6854
    %v6947 = vmul.f32 %v6854, %v6946
    %vm6948 = vcmp.eq.f32.partialorder %v6854, inf
    %v6949 = vsel %vm6948, %v6854, %v6947
    %vm6950 = vcmp.eq.f32.partialorder %v6854, 0.0
    %v6951 = vand.u32 %v6854, 2147483648
    %v6952 = vsel %vm6950, %v6951, %v6949
    %v6953 = vrsqrt.pop %v6855
    %v6954 = vmul.f32 %v6855, %v6953
    %vm6955 = vcmp.eq.f32.partialorder %v6855, inf
    %v6956 = vsel %vm6955, %v6855, %v6954
    %vm6957 = vcmp.eq.f32.partialorder %v6855, 0.0
    %v6958 = vand.u32 %v6855, 2147483648
    %v6959 = vsel %vm6957, %v6958, %v6956
    %v6960 = vrsqrt.pop %v6856
    %v6961 = vmul.f32 %v6856, %v6960
    %vm6962 = vcmp.eq.f32.partialorder %v6856, inf
    %v6963 = vsel %vm6962, %v6856, %v6961
    %vm6964 = vcmp.eq.f32.partialorder %v6856, 0.0
    %v6965 = vand.u32 %v6856, 2147483648
    %v6966 = vsel %vm6964, %v6965, %v6963
    %v6967 = vrsqrt.pop %v6857
    %v6968 = vmul.f32 %v6857, %v6967
    %vm6969 = vcmp.eq.f32.partialorder %v6857, inf
    %v6970 = vsel %vm6969, %v6857, %v6968
    %vm6971 = vcmp.eq.f32.partialorder %v6857, 0.0
    %v6972 = vand.u32 %v6857, 2147483648
    %v6973 = vsel %vm6971, %v6972, %v6970
    %v6974 = vrsqrt.pop %v6858
    %v6975 = vmul.f32 %v6858, %v6974
    %vm6976 = vcmp.eq.f32.partialorder %v6858, inf
    %v6977 = vsel %vm6976, %v6858, %v6975
    %vm6978 = vcmp.eq.f32.partialorder %v6858, 0.0
    %v6979 = vand.u32 %v6858, 2147483648
    %v6980 = vsel %vm6978, %v6979, %v6977
    %v6981 = vrsqrt.pop %v6859
    %v6982 = vmul.f32 %v6859, %v6981
    %vm6983 = vcmp.eq.f32.partialorder %v6859, inf
    %v6984 = vsel %vm6983, %v6859, %v6982
    %vm6985 = vcmp.eq.f32.partialorder %v6859, 0.0
    %v6986 = vand.u32 %v6859, 2147483648
    %v6987 = vsel %vm6985, %v6986, %v6984
    %v6988 = vrsqrt.pop %v6860
    %v6989 = vmul.f32 %v6860, %v6988
    %vm6990 = vcmp.eq.f32.partialorder %v6860, inf
    %v6991 = vsel %vm6990, %v6860, %v6989
    %vm6992 = vcmp.eq.f32.partialorder %v6860, 0.0
    %v6993 = vand.u32 %v6860, 2147483648
    %v6994 = vsel %vm6992, %v6993, %v6991
    %v6995 = vrsqrt.pop %v6861
    %v6996 = vmul.f32 %v6861, %v6995
    %vm6997 = vcmp.eq.f32.partialorder %v6861, inf
    %v6998 = vsel %vm6997, %v6861, %v6996
    %vm6999 = vcmp.eq.f32.partialorder %v6861, 0.0
    %v7000 = vand.u32 %v6861, 2147483648
    %v7001 = vsel %vm6999, %v7000, %v6998
    %v7002 = vrsqrt.pop %v6862
    %v7003 = vmul.f32 %v6862, %v7002
    %vm7004 = vcmp.eq.f32.partialorder %v6862, inf
    %v7005 = vsel %vm7004, %v6862, %v7003
    %vm7006 = vcmp.eq.f32.partialorder %v6862, 0.0
    %v7007 = vand.u32 %v6862, 2147483648
    %v7008 = vsel %vm7006, %v7007, %v7005
    %v7009 = vrsqrt.pop %v6863
    %v7010 = vmul.f32 %v6863, %v7009
    %vm7011 = vcmp.eq.f32.partialorder %v6863, inf
    %v7012 = vsel %vm7011, %v6863, %v7010
    %vm7013 = vcmp.eq.f32.partialorder %v6863, 0.0
    %v7014 = vand.u32 %v6863, 2147483648
    %v7015 = vsel %vm7013, %v7014, %v7012
    %v7016 = vrsqrt.pop %v6864
    %v7017 = vmul.f32 %v6864, %v7016
    %vm7018 = vcmp.eq.f32.partialorder %v6864, inf
    %v7019 = vsel %vm7018, %v6864, %v7017
    %vm7020 = vcmp.eq.f32.partialorder %v6864, 0.0
    %v7021 = vand.u32 %v6864, 2147483648
    %v7022 = vsel %vm7020, %v7021, %v7019
    %v7023 = vrsqrt.pop %v6865
    %v7024 = vmul.f32 %v6865, %v7023
    %vm7025 = vcmp.eq.f32.partialorder %v6865, inf
    %v7026 = vsel %vm7025, %v6865, %v7024
    %vm7027 = vcmp.eq.f32.partialorder %v6865, 0.0
    %v7028 = vand.u32 %v6865, 2147483648
    %v7029 = vsel %vm7027, %v7028, %v7026
    %v7030 = vrsqrt.pop %v6866
    %v7031 = vmul.f32 %v6866, %v7030
    %vm7032 = vcmp.eq.f32.partialorder %v6866, inf
    %v7033 = vsel %vm7032, %v6866, %v7031
    %vm7034 = vcmp.eq.f32.partialorder %v6866, 0.0
    %v7035 = vand.u32 %v6866, 2147483648
    %v7036 = vsel %vm7034, %v7035, %v7033
    %v7037 = vrsqrt.pop %v6867
    %v7038 = vmul.f32 %v6867, %v7037
    %vm7039 = vcmp.eq.f32.partialorder %v6867, inf
    %v7040 = vsel %vm7039, %v6867, %v7038
    %vm7041 = vcmp.eq.f32.partialorder %v6867, 0.0
    %v7042 = vand.u32 %v6867, 2147483648
    %v7043 = vsel %vm7041, %v7042, %v7040
    %v7044 = vrsqrt.pop %v6868
    %v7045 = vmul.f32 %v6868, %v7044
    %vm7046 = vcmp.eq.f32.partialorder %v6868, inf
    %v7047 = vsel %vm7046, %v6868, %v7045
    %vm7048 = vcmp.eq.f32.partialorder %v6868, 0.0
    %v7049 = vand.u32 %v6868, 2147483648
    %v7050 = vsel %vm7048, %v7049, %v7047
    %v7051 = vrsqrt.pop %v6869
    %v7052 = vmul.f32 %v6869, %v7051
    %vm7053 = vcmp.eq.f32.partialorder %v6869, inf
    %v7054 = vsel %vm7053, %v6869, %v7052
    %vm7055 = vcmp.eq.f32.partialorder %v6869, 0.0
    %v7056 = vand.u32 %v6869, 2147483648
    %v7057 = vsel %vm7055, %v7056, %v7054
    %v7058 = vrsqrt.pop %v6870
    %v7059 = vmul.f32 %v6870, %v7058
    %vm7060 = vcmp.eq.f32.partialorder %v6870, inf
    %v7061 = vsel %vm7060, %v6870, %v7059
    %vm7062 = vcmp.eq.f32.partialorder %v6870, 0.0
    %v7063 = vand.u32 %v6870, 2147483648
    %v7064 = vsel %vm7062, %v7063, %v7061
    %v7065 = vrsqrt.pop %v6871
    %v7066 = vmul.f32 %v6871, %v7065
    %vm7067 = vcmp.eq.f32.partialorder %v6871, inf
    %v7068 = vsel %vm7067, %v6871, %v7066
    %vm7069 = vcmp.eq.f32.partialorder %v6871, 0.0
    %v7070 = vand.u32 %v6871, 2147483648
    %v7071 = vsel %vm7069, %v7070, %v7068
    %v7072 = vrsqrt.pop %v6872
    %v7073 = vmul.f32 %v6872, %v7072
    %vm7074 = vcmp.eq.f32.partialorder %v6872, inf
    %v7075 = vsel %vm7074, %v6872, %v7073
    %vm7076 = vcmp.eq.f32.partialorder %v6872, 0.0
    %v7077 = vand.u32 %v6872, 2147483648
    %v7078 = vsel %vm7076, %v7077, %v7075
    %v7079 = vrsqrt.pop %v6873
    %v7080 = vmul.f32 %v6873, %v7079
    %vm7081 = vcmp.eq.f32.partialorder %v6873, inf
    %v7082 = vsel %vm7081, %v6873, %v7080
    %vm7083 = vcmp.eq.f32.partialorder %v6873, 0.0
    %v7084 = vand.u32 %v6873, 2147483648
    %v7085 = vsel %vm7083, %v7084, %v7082
    %v7086 = vrsqrt.pop %v6874
    %v7087 = vmul.f32 %v6874, %v7086
    %vm7088 = vcmp.eq.f32.partialorder %v6874, inf
    %v7089 = vsel %vm7088, %v6874, %v7087
    %vm7090 = vcmp.eq.f32.partialorder %v6874, 0.0
    %v7091 = vand.u32 %v6874, 2147483648
    %v7092 = vsel %vm7090, %v7091, %v7089
    %v7093 = vrsqrt.pop %v6875
    %v7094 = vmul.f32 %v6875, %v7093
    %vm7095 = vcmp.eq.f32.partialorder %v6875, inf
    %v7096 = vsel %vm7095, %v6875, %v7094
    %vm7097 = vcmp.eq.f32.partialorder %v6875, 0.0
    %v7098 = vand.u32 %v6875, 2147483648
    %v7099 = vsel %vm7097, %v7098, %v7096
    %v7100 = vrcp.pop %v6882
    %v7101 = vmul.f32 %v6556, %v7100
    %v7102 = vrcp.pop %v6889
    %v7103 = vmul.f32 %v6557, %v7102
    %v7104 = vrcp.pop %v6896
    %v7105 = vmul.f32 %v6558, %v7104
    %v7106 = vrcp.pop %v6903
    %v7107 = vmul.f32 %v6559, %v7106
    %v7108 = vrcp.pop %v6910
    %v7109 = vmul.f32 %v6560, %v7108
    %v7110 = vrcp.pop %v6917
    %v7111 = vmul.f32 %v6561, %v7110
    %v7112 = vrcp.pop %v6924
    %v7113 = vmul.f32 %v6562, %v7112
    %v7114 = vrcp.pop %v6931
    %v7115 = vmul.f32 %v6563, %v7114
    %v7116 = vrcp.pop %v6938
    %v7117 = vmul.f32 %v6564, %v7116
    %v7118 = vrcp.pop %v6945
    %v7119 = vmul.f32 %v6565, %v7118
    %v7120 = vrcp.pop %v6952
    %v7121 = vmul.f32 %v6566, %v7120
    %v7122 = vrcp.pop %v6959
    %v7123 = vmul.f32 %v6567, %v7122
    %v7124 = vrcp.pop %v6966
    %v7125 = vmul.f32 %v6568, %v7124
    %v7126 = vrcp.pop %v6973
    %v7127 = vmul.f32 %v6569, %v7126
    %v7128 = vrcp.pop %v6980
    %v7129 = vmul.f32 %v6570, %v7128
    %v7130 = vrcp.pop %v6987
    %v7131 = vmul.f32 %v6571, %v7130
    %v7132 = vrcp.pop %v6994
    %v7133 = vmul.f32 %v6572, %v7132
    %v7134 = vrcp.pop %v7001
    %v7135 = vmul.f32 %v6573, %v7134
    %v7136 = vrcp.pop %v7008
    %v7137 = vmul.f32 %v6574, %v7136
    %v7138 = vrcp.pop %v7015
    %v7139 = vmul.f32 %v6575, %v7138
    %v7140 = vrcp.pop %v7022
    %v7141 = vmul.f32 %v6576, %v7140
    %v7142 = vrcp.pop %v7029
    %v7143 = vmul.f32 %v6577, %v7142
    %v7144 = vrcp.pop %v7036
    %v7145 = vmul.f32 %v6578, %v7144
    %v7146 = vrcp.pop %v7043
    %v7147 = vmul.f32 %v6579, %v7146
    %v7148 = vrcp.pop %v7050
    %v7149 = vmul.f32 %v6580, %v7148
    %v7150 = vrcp.pop %v7057
    %v7151 = vmul.f32 %v6581, %v7150
    %v7152 = vrcp.pop %v7064
    %v7153 = vmul.f32 %v6582, %v7152
    %v7154 = vrcp.pop %v7071
    %v7155 = vmul.f32 %v6583, %v7154
    %v7156 = vrcp.pop %v7078
    %v7157 = vmul.f32 %v6584, %v7156
    %v7158 = vrcp.pop %v7085
    %v7159 = vmul.f32 %v6585, %v7158
    %v7160 = vrcp.pop %v7092
    %v7161 = vmul.f32 %v6586, %v7160
    %v7162 = vrcp.pop %v7099
    %v7163 = vmul.f32 %v6587, %v7162
    %v7164 = vmul.f32 %v7101, %v2643
    %v7165 = vmul.f32 %v7103, %v2647
    %v7166 = vmul.f32 %v7105, %v2651
    %v7167 = vmul.f32 %v7107, %v2655
    %v7168 = vmul.f32 %v7109, %v2659
    %v7169 = vmul.f32 %v7111, %v2663
    %v7170 = vmul.f32 %v7113, %v2667
    %v7171 = vmul.f32 %v7115, %v2671
    %v7172 = vmul.f32 %v7117, %v2675
    %v7173 = vmul.f32 %v7119, %v2679
    %v7174 = vmul.f32 %v7121, %v2683
    %v7175 = vmul.f32 %v7123, %v2687
    %v7176 = vmul.f32 %v7125, %v2691
    %v7177 = vmul.f32 %v7127, %v2695
    %v7178 = vmul.f32 %v7129, %v2699
    %v7179 = vmul.f32 %v7131, %v2703
    %v7180 = vmul.f32 %v7133, %v2707
    %v7181 = vmul.f32 %v7135, %v2711
    %v7182 = vmul.f32 %v7137, %v2715
    %v7183 = vmul.f32 %v7139, %v2719
    %v7184 = vmul.f32 %v7141, %v2723
    %v7185 = vmul.f32 %v7143, %v2727
    %v7186 = vmul.f32 %v7145, %v2731
    %v7187 = vmul.f32 %v7147, %v2735
    %v7188 = vmul.f32 %v7149, %v2739
    %v7189 = vmul.f32 %v7151, %v2743
    %v7190 = vmul.f32 %v7153, %v2747
    %v7191 = vmul.f32 %v7155, %v2751
    %v7192 = vmul.f32 %v7157, %v2755
    %v7193 = vmul.f32 %v7159, %v2759
    %v7194 = vmul.f32 %v7161, %v2763
    %v7195 = vmul.f32 %v7163, %v2767
    %v7196 = vadd.f32 %v7164, %v2843
    %v7197 = vadd.f32 %v7165, %v2847
    %v7198 = vadd.f32 %v7166, %v2851
    %v7199 = vadd.f32 %v7167, %v2855
    %v7200 = vadd.f32 %v7168, %v2859
    %v7201 = vadd.f32 %v7169, %v2863
    %v7202 = vadd.f32 %v7170, %v2867
    %v7203 = vadd.f32 %v7171, %v2871
    %v7204 = vadd.f32 %v7172, %v2875
    %v7205 = vadd.f32 %v7173, %v2879
    %v7206 = vadd.f32 %v7174, %v2883
    %v7207 = vadd.f32 %v7175, %v2887
    %v7208 = vadd.f32 %v7176, %v2891
    %v7209 = vadd.f32 %v7177, %v2895
    %v7210 = vadd.f32 %v7178, %v2899
    %v7211 = vadd.f32 %v7179, %v2903
    %v7212 = vadd.f32 %v7180, %v2907
    %v7213 = vadd.f32 %v7181, %v2911
    %v7214 = vadd.f32 %v7182, %v2915
    %v7215 = vadd.f32 %v7183, %v2919
    %v7216 = vadd.f32 %v7184, %v2923
    %v7217 = vadd.f32 %v7185, %v2927
    %v7218 = vadd.f32 %v7186, %v2931
    %v7219 = vadd.f32 %v7187, %v2935
    %v7220 = vadd.f32 %v7188, %v2939
    %v7221 = vadd.f32 %v7189, %v2943
    %v7222 = vadd.f32 %v7190, %v2947
    %v7223 = vadd.f32 %v7191, %v2951
    %v7224 = vadd.f32 %v7192, %v2955
    %v7225 = vadd.f32 %v7193, %v2959
    %v7226 = vadd.f32 %v7194, %v2963
    %v7227 = vadd.f32 %v7195, %v2967
    %v7228 = vmax.f32 %v7196, 0.0
    %v7229 = vmax.f32 %v7197, 0.0
    %v7230 = vmax.f32 %v7198, 0.0
    %v7231 = vmax.f32 %v7199, 0.0
    %v7232 = vmax.f32 %v7200, 0.0
    %v7233 = vmax.f32 %v7201, 0.0
    %v7234 = vmax.f32 %v7202, 0.0
    %v7235 = vmax.f32 %v7203, 0.0
    %v7236 = vmax.f32 %v7204, 0.0
    %v7237 = vmax.f32 %v7205, 0.0
    %v7238 = vmax.f32 %v7206, 0.0
    %v7239 = vmax.f32 %v7207, 0.0
    %v7240 = vmax.f32 %v7208, 0.0
    %v7241 = vmax.f32 %v7209, 0.0
    %v7242 = vmax.f32 %v7210, 0.0
    %v7243 = vmax.f32 %v7211, 0.0
    %v7244 = vmax.f32 %v7212, 0.0
    %v7245 = vmax.f32 %v7213, 0.0
    %v7246 = vmax.f32 %v7214, 0.0
    %v7247 = vmax.f32 %v7215, 0.0
    %v7248 = vmax.f32 %v7216, 0.0
    %v7249 = vmax.f32 %v7217, 0.0
    %v7250 = vmax.f32 %v7218, 0.0
    %v7251 = vmax.f32 %v7219, 0.0
    %v7252 = vmax.f32 %v7220, 0.0
    %v7253 = vmax.f32 %v7221, 0.0
    %v7254 = vmax.f32 %v7222, 0.0
    %v7255 = vmax.f32 %v7223, 0.0
    %v7256 = vmax.f32 %v7224, 0.0
    %v7257 = vmax.f32 %v7225, 0.0
    %v7258 = vmax.f32 %v7226, 0.0
    %v7259 = vmax.f32 %v7227, 0.0
    %7260 = vmatprep.subr.mxu0 %v7229
    %7261 = vmatpush1.xpose.msra.mxu0 %v7228
    %7262 = vmatprep.subr.mxu0 0.0
    %7263 = vmatpush1.xpose.msra.mxu0 0.0
    %7264 = vmatprep.subr.mxu0 0.0
    %7265 = vmatpush1.xpose.msra.mxu0 0.0
    %7266 = vmatprep.subr.mxu0 0.0
    %7267 = vmatpush1.xpose.msra.mxu0 0.0
    %7268 = vmatprep.subr.mxu0 0.0
    %7269 = vmatpush1.xpose.msra.mxu0 0.0
    %7270 = vmatprep.subr.mxu0 0.0
    %7271 = vmatpush1.xpose.msra.mxu0 0.0
    %7272 = vmatprep.subr.mxu0 0.0
    %7273 = vmatpush1.xpose.msra.mxu0 0.0
    %7274 = vmatprep.subr.mxu0 0.0
    %7275 = vmatpush1.xpose.msra.mxu0 0.0
    %7276 = vmatprep.subr.mxu0 0.0
    %7277 = vmatpush1.xpose.msra.mxu0 0.0
    %7278 = vmatprep.subr.mxu0 0.0
    %7279 = vmatpush1.xpose.msra.mxu0 0.0
    %7280 = vmatprep.subr.mxu0 0.0
    %7281 = vmatpush1.xpose.msra.mxu0 0.0
    %7282 = vmatprep.subr.mxu0 0.0
    %7283 = vmatpush1.xpose.msra.mxu0 0.0
    %7284 = vmatprep.subr.mxu0 0.0
    %7285 = vmatpush1.xpose.msra.mxu0 0.0
    %7286 = vmatprep.subr.mxu0 0.0
    %7287 = vmatpush1.xpose.msra.mxu0 0.0
    %7288 = vmatprep.subr.mxu0 0.0
    %7289 = vmatpush1.xpose.msra.mxu0 0.0
    %7290 = vmatprep.subr.mxu0 0.0
    %7291 = vmatpush1.xpose.msra.mxu0 0.0
    %7292 = vmatprep.subr.mxu0 0.0
    %7293 = vmatpush1.xpose.msra.mxu0 0.0
    %7294 = vmatprep.subr.mxu0 0.0
    %7295 = vmatpush1.xpose.msra.mxu0 0.0
    %7296 = vmatprep.subr.mxu0 0.0
    %7297 = vmatpush1.xpose.msra.mxu0 0.0
    %7298 = vmatprep.subr.mxu0 0.0
    %7299 = vmatpush1.xpose.msra.mxu0 0.0
    %7300 = vmatprep.subr.mxu0 0.0
    %7301 = vmatpush1.xpose.msra.mxu0 0.0
    %7302 = vmatprep.subr.mxu0 0.0
    %7303 = vmatpush1.xpose.msra.mxu0 0.0
    %7304 = vmatprep.subr.mxu0 0.0
    %7305 = vmatpush1.xpose.msra.mxu0 0.0
    %7306 = vmatprep.subr.mxu0 0.0
    %7307 = vmatpush1.xpose.msra.mxu0 0.0
    %7308 = vmatprep.subr.mxu0 0.0
    %7309 = vmatpush1.xpose.msra.mxu0 0.0
    %7310 = vmatprep.subr.mxu0 0.0
    %7311 = vmatpush1.xpose.msra.mxu0 0.0
    %7312 = vmatprep.subr.mxu0 0.0
    %7313 = vmatpush1.xpose.msra.mxu0 0.0
    %7314 = vmatprep.subr.mxu0 0.0
    %7315 = vmatpush1.xpose.msra.mxu0 0.0
    %7316 = vmatprep.subr.mxu0 0.0
    %7317 = vmatpush1.xpose.msra.mxu0 0.0
    %7318 = vmatprep.subr.mxu0 0.0
    %7319 = vmatpush1.xpose.msra.mxu0 0.0
    %7320 = vmatprep.subr.mxu0 0.0
    %7321 = vmatpush1.xpose.msra.mxu0 0.0
    %7322 = vmatprep.subr.mxu0 0.0
    %7323 = vmatpush1.xpose.msra.mxu0 0.0
    %7324 = vmatprep.mubr.f32.mxu0 %v7229
    %7325 = vmatmul.mubr.f32.gmra.mrb[0].mxu0 %v7228
    %v7326 = vpop.f32.mrb[0].mxu0
    %v7327 = vadd.f32 0.0, %v7326
    %v7328 = vpop.f32.mrb[0].mxu0
    %7329 = vdwg.mxu0
    %7330 = vmatprep.subr.mxu0 %v7231
    %7331 = vmatpush1.xpose.msra.mxu0 %v7230
    %7332 = vmatprep.subr.mxu0 0.0
    %7333 = vmatpush1.xpose.msra.mxu0 0.0
    %7334 = vmatprep.subr.mxu0 0.0
    %7335 = vmatpush1.xpose.msra.mxu0 0.0
    %7336 = vmatprep.subr.mxu0 0.0
    %7337 = vmatpush1.xpose.msra.mxu0 0.0
    %7338 = vmatprep.subr.mxu0 0.0
    %7339 = vmatpush1.xpose.msra.mxu0 0.0
    %7340 = vmatprep.subr.mxu0 0.0
    %7341 = vmatpush1.xpose.msra.mxu0 0.0
    %7342 = vmatprep.subr.mxu0 0.0
    %7343 = vmatpush1.xpose.msra.mxu0 0.0
    %7344 = vmatprep.subr.mxu0 0.0
    %7345 = vmatpush1.xpose.msra.mxu0 0.0
    %7346 = vmatprep.subr.mxu0 0.0
    %7347 = vmatpush1.xpose.msra.mxu0 0.0
    %7348 = vmatprep.subr.mxu0 0.0
    %7349 = vmatpush1.xpose.msra.mxu0 0.0
    %7350 = vmatprep.subr.mxu0 0.0
    %7351 = vmatpush1.xpose.msra.mxu0 0.0
    %7352 = vmatprep.subr.mxu0 0.0
    %7353 = vmatpush1.xpose.msra.mxu0 0.0
    %7354 = vmatprep.subr.mxu0 0.0
    %7355 = vmatpush1.xpose.msra.mxu0 0.0
    %7356 = vmatprep.subr.mxu0 0.0
    %7357 = vmatpush1.xpose.msra.mxu0 0.0
    %7358 = vmatprep.subr.mxu0 0.0
    %7359 = vmatpush1.xpose.msra.mxu0 0.0
    %7360 = vmatprep.subr.mxu0 0.0
    %7361 = vmatpush1.xpose.msra.mxu0 0.0
    %7362 = vmatprep.subr.mxu0 0.0
    %7363 = vmatpush1.xpose.msra.mxu0 0.0
    %7364 = vmatprep.subr.mxu0 0.0
    %7365 = vmatpush1.xpose.msra.mxu0 0.0
    %7366 = vmatprep.subr.mxu0 0.0
    %7367 = vmatpush1.xpose.msra.mxu0 0.0
    %7368 = vmatprep.subr.mxu0 0.0
    %7369 = vmatpush1.xpose.msra.mxu0 0.0
    %7370 = vmatprep.subr.mxu0 0.0
    %7371 = vmatpush1.xpose.msra.mxu0 0.0
    %7372 = vmatprep.subr.mxu0 0.0
    %7373 = vmatpush1.xpose.msra.mxu0 0.0
    %7374 = vmatprep.subr.mxu0 0.0
    %7375 = vmatpush1.xpose.msra.mxu0 0.0
    %7376 = vmatprep.subr.mxu0 0.0
    %7377 = vmatpush1.xpose.msra.mxu0 0.0
    %7378 = vmatprep.subr.mxu0 0.0
    %7379 = vmatpush1.xpose.msra.mxu0 0.0
    %7380 = vmatprep.subr.mxu0 0.0
    %7381 = vmatpush1.xpose.msra.mxu0 0.0
    %7382 = vmatprep.subr.mxu0 0.0
    %7383 = vmatpush1.xpose.msra.mxu0 0.0
    %7384 = vmatprep.subr.mxu0 0.0
    %7385 = vmatpush1.xpose.msra.mxu0 0.0
    %7386 = vmatprep.subr.mxu0 0.0
    %7387 = vmatpush1.xpose.msra.mxu0 0.0
    %7388 = vmatprep.subr.mxu0 0.0
    %7389 = vmatpush1.xpose.msra.mxu0 0.0
    %7390 = vmatprep.subr.mxu0 0.0
    %7391 = vmatpush1.xpose.msra.mxu0 0.0
    %7392 = vmatprep.subr.mxu0 0.0
    %7393 = vmatpush1.xpose.msra.mxu0 0.0
    %7394 = vmatprep.mubr.f32.mxu0 %v7231
    %7395 = vmatmul.mubr.f32.gmra.mrb[0].mxu0 %v7230
    %v7396 = vpop.f32.mrb[0].mxu0
    %v7397 = vadd.f32 %v7327, %v7396
    %v7398 = vpop.f32.mrb[0].mxu0
    %7399 = vdwg.mxu0
    %7400 = vmatprep.subr.mxu0 %v7233
    %7401 = vmatpush1.xpose.msra.mxu0 %v7232
    %7402 = vmatprep.subr.mxu0 0.0
    %7403 = vmatpush1.xpose.msra.mxu0 0.0
    %7404 = vmatprep.subr.mxu0 0.0
    %7405 = vmatpush1.xpose.msra.mxu0 0.0
    %7406 = vmatprep.subr.mxu0 0.0
    %7407 = vmatpush1.xpose.msra.mxu0 0.0
    %7408 = vmatprep.subr.mxu0 0.0
    %7409 = vmatpush1.xpose.msra.mxu0 0.0
    %7410 = vmatprep.subr.mxu0 0.0
    %7411 = vmatpush1.xpose.msra.mxu0 0.0
    %7412 = vmatprep.subr.mxu0 0.0
    %7413 = vmatpush1.xpose.msra.mxu0 0.0
    %7414 = vmatprep.subr.mxu0 0.0
    %7415 = vmatpush1.xpose.msra.mxu0 0.0
    %7416 = vmatprep.subr.mxu0 0.0
    %7417 = vmatpush1.xpose.msra.mxu0 0.0
    %7418 = vmatprep.subr.mxu0 0.0
    %7419 = vmatpush1.xpose.msra.mxu0 0.0
    %7420 = vmatprep.subr.mxu0 0.0
    %7421 = vmatpush1.xpose.msra.mxu0 0.0
    %7422 = vmatprep.subr.mxu0 0.0
    %7423 = vmatpush1.xpose.msra.mxu0 0.0
    %7424 = vmatprep.subr.mxu0 0.0
    %7425 = vmatpush1.xpose.msra.mxu0 0.0
    %7426 = vmatprep.subr.mxu0 0.0
    %7427 = vmatpush1.xpose.msra.mxu0 0.0
    %7428 = vmatprep.subr.mxu0 0.0
    %7429 = vmatpush1.xpose.msra.mxu0 0.0
    %7430 = vmatprep.subr.mxu0 0.0
    %7431 = vmatpush1.xpose.msra.mxu0 0.0
    %7432 = vmatprep.subr.mxu0 0.0
    %7433 = vmatpush1.xpose.msra.mxu0 0.0
    %7434 = vmatprep.subr.mxu0 0.0
    %7435 = vmatpush1.xpose.msra.mxu0 0.0
    %7436 = vmatprep.subr.mxu0 0.0
    %7437 = vmatpush1.xpose.msra.mxu0 0.0
    %7438 = vmatprep.subr.mxu0 0.0
    %7439 = vmatpush1.xpose.msra.mxu0 0.0
    %7440 = vmatprep.subr.mxu0 0.0
    %7441 = vmatpush1.xpose.msra.mxu0 0.0
    %7442 = vmatprep.subr.mxu0 0.0
    %7443 = vmatpush1.xpose.msra.mxu0 0.0
    %7444 = vmatprep.subr.mxu0 0.0
    %7445 = vmatpush1.xpose.msra.mxu0 0.0
    %7446 = vmatprep.subr.mxu0 0.0
    %7447 = vmatpush1.xpose.msra.mxu0 0.0
    %7448 = vmatprep.subr.mxu0 0.0
    %7449 = vmatpush1.xpose.msra.mxu0 0.0
    %7450 = vmatprep.subr.mxu0 0.0
    %7451 = vmatpush1.xpose.msra.mxu0 0.0
    %7452 = vmatprep.subr.mxu0 0.0
    %7453 = vmatpush1.xpose.msra.mxu0 0.0
    %7454 = vmatprep.subr.mxu0 0.0
    %7455 = vmatpush1.xpose.msra.mxu0 0.0
    %7456 = vmatprep.subr.mxu0 0.0
    %7457 = vmatpush1.xpose.msra.mxu0 0.0
    %7458 = vmatprep.subr.mxu0 0.0
    %7459 = vmatpush1.xpose.msra.mxu0 0.0
    %7460 = vmatprep.subr.mxu0 0.0
    %7461 = vmatpush1.xpose.msra.mxu0 0.0
    %7462 = vmatprep.subr.mxu0 0.0
    %7463 = vmatpush1.xpose.msra.mxu0 0.0
    %7464 = vmatprep.mubr.f32.mxu0 %v7233
    %7465 = vmatmul.mubr.f32.gmra.mrb[0].mxu0 %v7232
    %v7466 = vpop.f32.mrb[0].mxu0
    %v7467 = vadd.f32 %v7397, %v7466
    %v7468 = vpop.f32.mrb[0].mxu0
    %7469 = vdwg.mxu0
    %7470 = vmatprep.subr.mxu0 %v7235
    %7471 = vmatpush1.xpose.msra.mxu0 %v7234
    %7472 = vmatprep.subr.mxu0 0.0
    %7473 = vmatpush1.xpose.msra.mxu0 0.0
    %7474 = vmatprep.subr.mxu0 0.0
    %7475 = vmatpush1.xpose.msra.mxu0 0.0
    %7476 = vmatprep.subr.mxu0 0.0
    %7477 = vmatpush1.xpose.msra.mxu0 0.0
    %7478 = vmatprep.subr.mxu0 0.0
    %7479 = vmatpush1.xpose.msra.mxu0 0.0
    %7480 = vmatprep.subr.mxu0 0.0
    %7481 = vmatpush1.xpose.msra.mxu0 0.0
    %7482 = vmatprep.subr.mxu0 0.0
    %7483 = vmatpush1.xpose.msra.mxu0 0.0
    %7484 = vmatprep.subr.mxu0 0.0
    %7485 = vmatpush1.xpose.msra.mxu0 0.0
    %7486 = vmatprep.subr.mxu0 0.0
    %7487 = vmatpush1.xpose.msra.mxu0 0.0
    %7488 = vmatprep.subr.mxu0 0.0
    %7489 = vmatpush1.xpose.msra.mxu0 0.0
    %7490 = vmatprep.subr.mxu0 0.0
    %7491 = vmatpush1.xpose.msra.mxu0 0.0
    %7492 = vmatprep.subr.mxu0 0.0
    %7493 = vmatpush1.xpose.msra.mxu0 0.0
    %7494 = vmatprep.subr.mxu0 0.0
    %7495 = vmatpush1.xpose.msra.mxu0 0.0
    %7496 = vmatprep.subr.mxu0 0.0
    %7497 = vmatpush1.xpose.msra.mxu0 0.0
    %7498 = vmatprep.subr.mxu0 0.0
    %7499 = vmatpush1.xpose.msra.mxu0 0.0
    %7500 = vmatprep.subr.mxu0 0.0
    %7501 = vmatpush1.xpose.msra.mxu0 0.0
    %7502 = vmatprep.subr.mxu0 0.0
    %7503 = vmatpush1.xpose.msra.mxu0 0.0
    %7504 = vmatprep.subr.mxu0 0.0
    %7505 = vmatpush1.xpose.msra.mxu0 0.0
    %7506 = vmatprep.subr.mxu0 0.0
    %7507 = vmatpush1.xpose.msra.mxu0 0.0
    %7508 = vmatprep.subr.mxu0 0.0
    %7509 = vmatpush1.xpose.msra.mxu0 0.0
    %7510 = vmatprep.subr.mxu0 0.0
    %7511 = vmatpush1.xpose.msra.mxu0 0.0
    %7512 = vmatprep.subr.mxu0 0.0
    %7513 = vmatpush1.xpose.msra.mxu0 0.0
    %7514 = vmatprep.subr.mxu0 0.0
    %7515 = vmatpush1.xpose.msra.mxu0 0.0
    %7516 = vmatprep.subr.mxu0 0.0
    %7517 = vmatpush1.xpose.msra.mxu0 0.0
    %7518 = vmatprep.subr.mxu0 0.0
    %7519 = vmatpush1.xpose.msra.mxu0 0.0
    %7520 = vmatprep.subr.mxu0 0.0
    %7521 = vmatpush1.xpose.msra.mxu0 0.0
    %7522 = vmatprep.subr.mxu0 0.0
    %7523 = vmatpush1.xpose.msra.mxu0 0.0
    %7524 = vmatprep.subr.mxu0 0.0
    %7525 = vmatpush1.xpose.msra.mxu0 0.0
    %7526 = vmatprep.subr.mxu0 0.0
    %7527 = vmatpush1.xpose.msra.mxu0 0.0
    %7528 = vmatprep.subr.mxu0 0.0
    %7529 = vmatpush1.xpose.msra.mxu0 0.0
    %7530 = vmatprep.subr.mxu0 0.0
    %7531 = vmatpush1.xpose.msra.mxu0 0.0
    %7532 = vmatprep.subr.mxu0 0.0
    %7533 = vmatpush1.xpose.msra.mxu0 0.0
    %7534 = vmatprep.mubr.f32.mxu0 %v7235
    %7535 = vmatmul.mubr.f32.gmra.mrb[0].mxu0 %v7234
    %v7536 = vpop.f32.mrb[0].mxu0
    %v7537 = vadd.f32 %v7467, %v7536
    %v7538 = vpop.f32.mrb[0].mxu0
    %7539 = vdwg.mxu0
    %7540 = vmatprep.subr.mxu0 %v7237
    %7541 = vmatpush1.xpose.msra.mxu0 %v7236
    %7542 = vmatprep.subr.mxu0 0.0
    %7543 = vmatpush1.xpose.msra.mxu0 0.0
    %7544 = vmatprep.subr.mxu0 0.0
    %7545 = vmatpush1.xpose.msra.mxu0 0.0
    %7546 = vmatprep.subr.mxu0 0.0
    %7547 = vmatpush1.xpose.msra.mxu0 0.0
    %7548 = vmatprep.subr.mxu0 0.0
    %7549 = vmatpush1.xpose.msra.mxu0 0.0
    %7550 = vmatprep.subr.mxu0 0.0
    %7551 = vmatpush1.xpose.msra.mxu0 0.0
    %7552 = vmatprep.subr.mxu0 0.0
    %7553 = vmatpush1.xpose.msra.mxu0 0.0
    %7554 = vmatprep.subr.mxu0 0.0
    %7555 = vmatpush1.xpose.msra.mxu0 0.0
    %7556 = vmatprep.subr.mxu0 0.0
    %7557 = vmatpush1.xpose.msra.mxu0 0.0
    %7558 = vmatprep.subr.mxu0 0.0
    %7559 = vmatpush1.xpose.msra.mxu0 0.0
    %7560 = vmatprep.subr.mxu0 0.0
    %7561 = vmatpush1.xpose.msra.mxu0 0.0
    %7562 = vmatprep.subr.mxu0 0.0
    %7563 = vmatpush1.xpose.msra.mxu0 0.0
    %7564 = vmatprep.subr.mxu0 0.0
    %7565 = vmatpush1.xpose.msra.mxu0 0.0
    %7566 = vmatprep.subr.mxu0 0.0
    %7567 = vmatpush1.xpose.msra.mxu0 0.0
    %7568 = vmatprep.subr.mxu0 0.0
    %7569 = vmatpush1.xpose.msra.mxu0 0.0
    %7570 = vmatprep.subr.mxu0 0.0
    %7571 = vmatpush1.xpose.msra.mxu0 0.0
    %7572 = vmatprep.subr.mxu0 0.0
    %7573 = vmatpush1.xpose.msra.mxu0 0.0
    %7574 = vmatprep.subr.mxu0 0.0
    %7575 = vmatpush1.xpose.msra.mxu0 0.0
    %7576 = vmatprep.subr.mxu0 0.0
    %7577 = vmatpush1.xpose.msra.mxu0 0.0
    %7578 = vmatprep.subr.mxu0 0.0
    %7579 = vmatpush1.xpose.msra.mxu0 0.0
    %7580 = vmatprep.subr.mxu0 0.0
    %7581 = vmatpush1.xpose.msra.mxu0 0.0
    %7582 = vmatprep.subr.mxu0 0.0
    %7583 = vmatpush1.xpose.msra.mxu0 0.0
    %7584 = vmatprep.subr.mxu0 0.0
    %7585 = vmatpush1.xpose.msra.mxu0 0.0
    %7586 = vmatprep.subr.mxu0 0.0
    %7587 = vmatpush1.xpose.msra.mxu0 0.0
    %7588 = vmatprep.subr.mxu0 0.0
    %7589 = vmatpush1.xpose.msra.mxu0 0.0
    %7590 = vmatprep.subr.mxu0 0.0
    %7591 = vmatpush1.xpose.msra.mxu0 0.0
    %7592 = vmatprep.subr.mxu0 0.0
    %7593 = vmatpush1.xpose.msra.mxu0 0.0
    %7594 = vmatprep.subr.mxu0 0.0
    %7595 = vmatpush1.xpose.msra.mxu0 0.0
    %7596 = vmatprep.subr.mxu0 0.0
    %7597 = vmatpush1.xpose.msra.mxu0 0.0
    %7598 = vmatprep.subr.mxu0 0.0
    %7599 = vmatpush1.xpose.msra.mxu0 0.0
    %7600 = vmatprep.subr.mxu0 0.0
    %7601 = vmatpush1.xpose.msra.mxu0 0.0
    %7602 = vmatprep.subr.mxu0 0.0
    %7603 = vmatpush1.xpose.msra.mxu0 0.0
    %7604 = vmatprep.mubr.f32.mxu0 %v7237
    %7605 = vmatmul.mubr.f32.gmra.mrb[0].mxu0 %v7236
    %v7606 = vpop.f32.mrb[0].mxu0
    %v7607 = vadd.f32 %v7537, %v7606
    %v7608 = vpop.f32.mrb[0].mxu0
    %7609 = vdwg.mxu0
    %7610 = vmatprep.subr.mxu0 %v7239
    %7611 = vmatpush1.xpose.msra.mxu0 %v7238
    %7612 = vmatprep.subr.mxu0 0.0
    %7613 = vmatpush1.xpose.msra.mxu0 0.0
    %7614 = vmatprep.subr.mxu0 0.0
    %7615 = vmatpush1.xpose.msra.mxu0 0.0
    %7616 = vmatprep.subr.mxu0 0.0
    %7617 = vmatpush1.xpose.msra.mxu0 0.0
    %7618 = vmatprep.subr.mxu0 0.0
    %7619 = vmatpush1.xpose.msra.mxu0 0.0
    %7620 = vmatprep.subr.mxu0 0.0
    %7621 = vmatpush1.xpose.msra.mxu0 0.0
    %7622 = vmatprep.subr.mxu0 0.0
    %7623 = vmatpush1.xpose.msra.mxu0 0.0
    %7624 = vmatprep.subr.mxu0 0.0
    %7625 = vmatpush1.xpose.msra.mxu0 0.0
    %7626 = vmatprep.subr.mxu0 0.0
    %7627 = vmatpush1.xpose.msra.mxu0 0.0
    %7628 = vmatprep.subr.mxu0 0.0
    %7629 = vmatpush1.xpose.msra.mxu0 0.0
    %7630 = vmatprep.subr.mxu0 0.0
    %7631 = vmatpush1.xpose.msra.mxu0 0.0
    %7632 = vmatprep.subr.mxu0 0.0
    %7633 = vmatpush1.xpose.msra.mxu0 0.0
    %7634 = vmatprep.subr.mxu0 0.0
    %7635 = vmatpush1.xpose.msra.mxu0 0.0
    %7636 = vmatprep.subr.mxu0 0.0
    %7637 = vmatpush1.xpose.msra.mxu0 0.0
    %7638 = vmatprep.subr.mxu0 0.0
    %7639 = vmatpush1.xpose.msra.mxu0 0.0
    %7640 = vmatprep.subr.mxu0 0.0
    %7641 = vmatpush1.xpose.msra.mxu0 0.0
    %7642 = vmatprep.subr.mxu0 0.0
    %7643 = vmatpush1.xpose.msra.mxu0 0.0
    %7644 = vmatprep.subr.mxu0 0.0
    %7645 = vmatpush1.xpose.msra.mxu0 0.0
    %7646 = vmatprep.subr.mxu0 0.0
    %7647 = vmatpush1.xpose.msra.mxu0 0.0
    %7648 = vmatprep.subr.mxu0 0.0
    %7649 = vmatpush1.xpose.msra.mxu0 0.0
    %7650 = vmatprep.subr.mxu0 0.0
    %7651 = vmatpush1.xpose.msra.mxu0 0.0
    %7652 = vmatprep.subr.mxu0 0.0
    %7653 = vmatpush1.xpose.msra.mxu0 0.0
    %7654 = vmatprep.subr.mxu0 0.0
    %7655 = vmatpush1.xpose.msra.mxu0 0.0
    %7656 = vmatprep.subr.mxu0 0.0
    %7657 = vmatpush1.xpose.msra.mxu0 0.0
    %7658 = vmatprep.subr.mxu0 0.0
    %7659 = vmatpush1.xpose.msra.mxu0 0.0
    %7660 = vmatprep.subr.mxu0 0.0
    %7661 = vmatpush1.xpose.msra.mxu0 0.0
    %7662 = vmatprep.subr.mxu0 0.0
    %7663 = vmatpush1.xpose.msra.mxu0 0.0
    %7664 = vmatprep.subr.mxu0 0.0
    %7665 = vmatpush1.xpose.msra.mxu0 0.0
    %7666 = vmatprep.subr.mxu0 0.0
    %7667 = vmatpush1.xpose.msra.mxu0 0.0
    %7668 = vmatprep.subr.mxu0 0.0
    %7669 = vmatpush1.xpose.msra.mxu0 0.0
    %7670 = vmatprep.subr.mxu0 0.0
    %7671 = vmatpush1.xpose.msra.mxu0 0.0
    %7672 = vmatprep.subr.mxu0 0.0
    %7673 = vmatpush1.xpose.msra.mxu0 0.0
    %7674 = vmatprep.mubr.f32.mxu0 %v7239
    %7675 = vmatmul.mubr.f32.gmra.mrb[0].mxu0 %v7238
    %v7676 = vpop.f32.mrb[0].mxu0
    %v7677 = vadd.f32 %v7607, %v7676
    %v7678 = vpop.f32.mrb[0].mxu0
    %7679 = vdwg.mxu0
    %7680 = vmatprep.subr.mxu0 %v7241
    %7681 = vmatpush1.xpose.msra.mxu0 %v7240
    %7682 = vmatprep.subr.mxu0 0.0
    %7683 = vmatpush1.xpose.msra.mxu0 0.0
    %7684 = vmatprep.subr.mxu0 0.0
    %7685 = vmatpush1.xpose.msra.mxu0 0.0
    %7686 = vmatprep.subr.mxu0 0.0
    %7687 = vmatpush1.xpose.msra.mxu0 0.0
    %7688 = vmatprep.subr.mxu0 0.0
    %7689 = vmatpush1.xpose.msra.mxu0 0.0
    %7690 = vmatprep.subr.mxu0 0.0
    %7691 = vmatpush1.xpose.msra.mxu0 0.0
    %7692 = vmatprep.subr.mxu0 0.0
    %7693 = vmatpush1.xpose.msra.mxu0 0.0
    %7694 = vmatprep.subr.mxu0 0.0
    %7695 = vmatpush1.xpose.msra.mxu0 0.0
    %7696 = vmatprep.subr.mxu0 0.0
    %7697 = vmatpush1.xpose.msra.mxu0 0.0
    %7698 = vmatprep.subr.mxu0 0.0
    %7699 = vmatpush1.xpose.msra.mxu0 0.0
    %7700 = vmatprep.subr.mxu0 0.0
    %7701 = vmatpush1.xpose.msra.mxu0 0.0
    %7702 = vmatprep.subr.mxu0 0.0
    %7703 = vmatpush1.xpose.msra.mxu0 0.0
    %7704 = vmatprep.subr.mxu0 0.0
    %7705 = vmatpush1.xpose.msra.mxu0 0.0
    %7706 = vmatprep.subr.mxu0 0.0
    %7707 = vmatpush1.xpose.msra.mxu0 0.0
    %7708 = vmatprep.subr.mxu0 0.0
    %7709 = vmatpush1.xpose.msra.mxu0 0.0
    %7710 = vmatprep.subr.mxu0 0.0
    %7711 = vmatpush1.xpose.msra.mxu0 0.0
    %7712 = vmatprep.subr.mxu0 0.0
    %7713 = vmatpush1.xpose.msra.mxu0 0.0
    %7714 = vmatprep.subr.mxu0 0.0
    %7715 = vmatpush1.xpose.msra.mxu0 0.0
    %7716 = vmatprep.subr.mxu0 0.0
    %7717 = vmatpush1.xpose.msra.mxu0 0.0
    %7718 = vmatprep.subr.mxu0 0.0
    %7719 = vmatpush1.xpose.msra.mxu0 0.0
    %7720 = vmatprep.subr.mxu0 0.0
    %7721 = vmatpush1.xpose.msra.mxu0 0.0
    %7722 = vmatprep.subr.mxu0 0.0
    %7723 = vmatpush1.xpose.msra.mxu0 0.0
    %7724 = vmatprep.subr.mxu0 0.0
    %7725 = vmatpush1.xpose.msra.mxu0 0.0
    %7726 = vmatprep.subr.mxu0 0.0
    %7727 = vmatpush1.xpose.msra.mxu0 0.0
    %7728 = vmatprep.subr.mxu0 0.0
    %7729 = vmatpush1.xpose.msra.mxu0 0.0
    %7730 = vmatprep.subr.mxu0 0.0
    %7731 = vmatpush1.xpose.msra.mxu0 0.0
    %7732 = vmatprep.subr.mxu0 0.0
    %7733 = vmatpush1.xpose.msra.mxu0 0.0
    %7734 = vmatprep.subr.mxu0 0.0
    %7735 = vmatpush1.xpose.msra.mxu0 0.0
    %7736 = vmatprep.subr.mxu0 0.0
    %7737 = vmatpush1.xpose.msra.mxu0 0.0
    %7738 = vmatprep.subr.mxu0 0.0
    %7739 = vmatpush1.xpose.msra.mxu0 0.0
    %7740 = vmatprep.subr.mxu0 0.0
    %7741 = vmatpush1.xpose.msra.mxu0 0.0
    %7742 = vmatprep.subr.mxu0 0.0
    %7743 = vmatpush1.xpose.msra.mxu0 0.0
    %7744 = vmatprep.mubr.f32.mxu0 %v7241
    %7745 = vmatmul.mubr.f32.gmra.mrb[0].mxu0 %v7240
    %v7746 = vpop.f32.mrb[0].mxu0
    %v7747 = vadd.f32 %v7677, %v7746
    %v7748 = vpop.f32.mrb[0].mxu0
    %7749 = vdwg.mxu0
    %7750 = vmatprep.subr.mxu0 %v7243
    %7751 = vmatpush1.xpose.msra.mxu0 %v7242
    %7752 = vmatprep.subr.mxu0 0.0
    %7753 = vmatpush1.xpose.msra.mxu0 0.0
    %7754 = vmatprep.subr.mxu0 0.0
    %7755 = vmatpush1.xpose.msra.mxu0 0.0
    %7756 = vmatprep.subr.mxu0 0.0
    %7757 = vmatpush1.xpose.msra.mxu0 0.0
    %7758 = vmatprep.subr.mxu0 0.0
    %7759 = vmatpush1.xpose.msra.mxu0 0.0
    %7760 = vmatprep.subr.mxu0 0.0
    %7761 = vmatpush1.xpose.msra.mxu0 0.0
    %7762 = vmatprep.subr.mxu0 0.0
    %7763 = vmatpush1.xpose.msra.mxu0 0.0
    %7764 = vmatprep.subr.mxu0 0.0
    %7765 = vmatpush1.xpose.msra.mxu0 0.0
    %7766 = vmatprep.subr.mxu0 0.0
    %7767 = vmatpush1.xpose.msra.mxu0 0.0
    %7768 = vmatprep.subr.mxu0 0.0
    %7769 = vmatpush1.xpose.msra.mxu0 0.0
    %7770 = vmatprep.subr.mxu0 0.0
    %7771 = vmatpush1.xpose.msra.mxu0 0.0
    %7772 = vmatprep.subr.mxu0 0.0
    %7773 = vmatpush1.xpose.msra.mxu0 0.0
    %7774 = vmatprep.subr.mxu0 0.0
    %7775 = vmatpush1.xpose.msra.mxu0 0.0
    %7776 = vmatprep.subr.mxu0 0.0
    %7777 = vmatpush1.xpose.msra.mxu0 0.0
    %7778 = vmatprep.subr.mxu0 0.0
    %7779 = vmatpush1.xpose.msra.mxu0 0.0
    %7780 = vmatprep.subr.mxu0 0.0
    %7781 = vmatpush1.xpose.msra.mxu0 0.0
    %7782 = vmatprep.subr.mxu0 0.0
    %7783 = vmatpush1.xpose.msra.mxu0 0.0
    %7784 = vmatprep.subr.mxu0 0.0
    %7785 = vmatpush1.xpose.msra.mxu0 0.0
    %7786 = vmatprep.subr.mxu0 0.0
    %7787 = vmatpush1.xpose.msra.mxu0 0.0
    %7788 = vmatprep.subr.mxu0 0.0
    %7789 = vmatpush1.xpose.msra.mxu0 0.0
    %7790 = vmatprep.subr.mxu0 0.0
    %7791 = vmatpush1.xpose.msra.mxu0 0.0
    %7792 = vmatprep.subr.mxu0 0.0
    %7793 = vmatpush1.xpose.msra.mxu0 0.0
    %7794 = vmatprep.subr.mxu0 0.0
    %7795 = vmatpush1.xpose.msra.mxu0 0.0
    %7796 = vmatprep.subr.mxu0 0.0
    %7797 = vmatpush1.xpose.msra.mxu0 0.0
    %7798 = vmatprep.subr.mxu0 0.0
    %7799 = vmatpush1.xpose.msra.mxu0 0.0
    %7800 = vmatprep.subr.mxu0 0.0
    %7801 = vmatpush1.xpose.msra.mxu0 0.0
    %7802 = vmatprep.subr.mxu0 0.0
    %7803 = vmatpush1.xpose.msra.mxu0 0.0
    %7804 = vmatprep.subr.mxu0 0.0
    %7805 = vmatpush1.xpose.msra.mxu0 0.0
    %7806 = vmatprep.subr.mxu0 0.0
    %7807 = vmatpush1.xpose.msra.mxu0 0.0
    %7808 = vmatprep.subr.mxu0 0.0
    %7809 = vmatpush1.xpose.msra.mxu0 0.0
    %7810 = vmatprep.subr.mxu0 0.0
    %7811 = vmatpush1.xpose.msra.mxu0 0.0
    %7812 = vmatprep.subr.mxu0 0.0
    %7813 = vmatpush1.xpose.msra.mxu0 0.0
    %7814 = vmatprep.mubr.f32.mxu0 %v7243
    %7815 = vmatmul.mubr.f32.gmra.mrb[0].mxu0 %v7242
    %v7816 = vpop.f32.mrb[0].mxu0
    %v7817 = vadd.f32 %v7747, %v7816
    %v7818 = vpop.f32.mrb[0].mxu0
    %7819 = vdwg.mxu0
    %7820 = vmatprep.subr.mxu0 %v7245
    %7821 = vmatpush1.xpose.msra.mxu0 %v7244
    %7822 = vmatprep.subr.mxu0 0.0
    %7823 = vmatpush1.xpose.msra.mxu0 0.0
    %7824 = vmatprep.subr.mxu0 0.0
    %7825 = vmatpush1.xpose.msra.mxu0 0.0
    %7826 = vmatprep.subr.mxu0 0.0
    %7827 = vmatpush1.xpose.msra.mxu0 0.0
    %7828 = vmatprep.subr.mxu0 0.0
    %7829 = vmatpush1.xpose.msra.mxu0 0.0
    %7830 = vmatprep.subr.mxu0 0.0
    %7831 = vmatpush1.xpose.msra.mxu0 0.0
    %7832 = vmatprep.subr.mxu0 0.0
    %7833 = vmatpush1.xpose.msra.mxu0 0.0
    %7834 = vmatprep.subr.mxu0 0.0
    %7835 = vmatpush1.xpose.msra.mxu0 0.0
    %7836 = vmatprep.subr.mxu0 0.0
    %7837 = vmatpush1.xpose.msra.mxu0 0.0
    %7838 = vmatprep.subr.mxu0 0.0
    %7839 = vmatpush1.xpose.msra.mxu0 0.0
    %7840 = vmatprep.subr.mxu0 0.0
    %7841 = vmatpush1.xpose.msra.mxu0 0.0
    %7842 = vmatprep.subr.mxu0 0.0
    %7843 = vmatpush1.xpose.msra.mxu0 0.0
    %7844 = vmatprep.subr.mxu0 0.0
    %7845 = vmatpush1.xpose.msra.mxu0 0.0
    %7846 = vmatprep.subr.mxu0 0.0
    %7847 = vmatpush1.xpose.msra.mxu0 0.0
    %7848 = vmatprep.subr.mxu0 0.0
    %7849 = vmatpush1.xpose.msra.mxu0 0.0
    %7850 = vmatprep.subr.mxu0 0.0
    %7851 = vmatpush1.xpose.msra.mxu0 0.0
    %7852 = vmatprep.subr.mxu0 0.0
    %7853 = vmatpush1.xpose.msra.mxu0 0.0
    %7854 = vmatprep.subr.mxu0 0.0
    %7855 = vmatpush1.xpose.msra.mxu0 0.0
    %7856 = vmatprep.subr.mxu0 0.0
    %7857 = vmatpush1.xpose.msra.mxu0 0.0
    %7858 = vmatprep.subr.mxu0 0.0
    %7859 = vmatpush1.xpose.msra.mxu0 0.0
    %7860 = vmatprep.subr.mxu0 0.0
    %7861 = vmatpush1.xpose.msra.mxu0 0.0
    %7862 = vmatprep.subr.mxu0 0.0
    %7863 = vmatpush1.xpose.msra.mxu0 0.0
    %7864 = vmatprep.subr.mxu0 0.0
    %7865 = vmatpush1.xpose.msra.mxu0 0.0
    %7866 = vmatprep.subr.mxu0 0.0
    %7867 = vmatpush1.xpose.msra.mxu0 0.0
    %7868 = vmatprep.subr.mxu0 0.0
    %7869 = vmatpush1.xpose.msra.mxu0 0.0
    %7870 = vmatprep.subr.mxu0 0.0
    %7871 = vmatpush1.xpose.msra.mxu0 0.0
    %7872 = vmatprep.subr.mxu0 0.0
    %7873 = vmatpush1.xpose.msra.mxu0 0.0
    %7874 = vmatprep.subr.mxu0 0.0
    %7875 = vmatpush1.xpose.msra.mxu0 0.0
    %7876 = vmatprep.subr.mxu0 0.0
    %7877 = vmatpush1.xpose.msra.mxu0 0.0
    %7878 = vmatprep.subr.mxu0 0.0
    %7879 = vmatpush1.xpose.msra.mxu0 0.0
    %7880 = vmatprep.subr.mxu0 0.0
    %7881 = vmatpush1.xpose.msra.mxu0 0.0
    %7882 = vmatprep.subr.mxu0 0.0
    %7883 = vmatpush1.xpose.msra.mxu0 0.0
    %7884 = vmatprep.mubr.f32.mxu0 %v7245
    %7885 = vmatmul.mubr.f32.gmra.mrb[0].mxu0 %v7244
    %v7886 = vpop.f32.mrb[0].mxu0
    %v7887 = vadd.f32 %v7817, %v7886
    %v7888 = vpop.f32.mrb[0].mxu0
    %7889 = vdwg.mxu0
    %7890 = vmatprep.subr.mxu0 %v7247
    %7891 = vmatpush1.xpose.msra.mxu0 %v7246
    %7892 = vmatprep.subr.mxu0 0.0
    %7893 = vmatpush1.xpose.msra.mxu0 0.0
    %7894 = vmatprep.subr.mxu0 0.0
    %7895 = vmatpush1.xpose.msra.mxu0 0.0
    %7896 = vmatprep.subr.mxu0 0.0
    %7897 = vmatpush1.xpose.msra.mxu0 0.0
    %7898 = vmatprep.subr.mxu0 0.0
    %7899 = vmatpush1.xpose.msra.mxu0 0.0
    %7900 = vmatprep.subr.mxu0 0.0
    %7901 = vmatpush1.xpose.msra.mxu0 0.0
    %7902 = vmatprep.subr.mxu0 0.0
    %7903 = vmatpush1.xpose.msra.mxu0 0.0
    %7904 = vmatprep.subr.mxu0 0.0
    %7905 = vmatpush1.xpose.msra.mxu0 0.0
    %7906 = vmatprep.subr.mxu0 0.0
    %7907 = vmatpush1.xpose.msra.mxu0 0.0
    %7908 = vmatprep.subr.mxu0 0.0
    %7909 = vmatpush1.xpose.msra.mxu0 0.0
    %7910 = vmatprep.subr.mxu0 0.0
    %7911 = vmatpush1.xpose.msra.mxu0 0.0
    %7912 = vmatprep.subr.mxu0 0.0
    %7913 = vmatpush1.xpose.msra.mxu0 0.0
    %7914 = vmatprep.subr.mxu0 0.0
    %7915 = vmatpush1.xpose.msra.mxu0 0.0
    %7916 = vmatprep.subr.mxu0 0.0
    %7917 = vmatpush1.xpose.msra.mxu0 0.0
    %7918 = vmatprep.subr.mxu0 0.0
    %7919 = vmatpush1.xpose.msra.mxu0 0.0
    %7920 = vmatprep.subr.mxu0 0.0
    %7921 = vmatpush1.xpose.msra.mxu0 0.0
    %7922 = vmatprep.subr.mxu0 0.0
    %7923 = vmatpush1.xpose.msra.mxu0 0.0
    %7924 = vmatprep.subr.mxu0 0.0
    %7925 = vmatpush1.xpose.msra.mxu0 0.0
    %7926 = vmatprep.subr.mxu0 0.0
    %7927 = vmatpush1.xpose.msra.mxu0 0.0
    %7928 = vmatprep.subr.mxu0 0.0
    %7929 = vmatpush1.xpose.msra.mxu0 0.0
    %7930 = vmatprep.subr.mxu0 0.0
    %7931 = vmatpush1.xpose.msra.mxu0 0.0
    %7932 = vmatprep.subr.mxu0 0.0
    %7933 = vmatpush1.xpose.msra.mxu0 0.0
    %7934 = vmatprep.subr.mxu0 0.0
    %7935 = vmatpush1.xpose.msra.mxu0 0.0
    %7936 = vmatprep.subr.mxu0 0.0
    %7937 = vmatpush1.xpose.msra.mxu0 0.0
    %7938 = vmatprep.subr.mxu0 0.0
    %7939 = vmatpush1.xpose.msra.mxu0 0.0
    %7940 = vmatprep.subr.mxu0 0.0
    %7941 = vmatpush1.xpose.msra.mxu0 0.0
    %7942 = vmatprep.subr.mxu0 0.0
    %7943 = vmatpush1.xpose.msra.mxu0 0.0
    %7944 = vmatprep.subr.mxu0 0.0
    %7945 = vmatpush1.xpose.msra.mxu0 0.0
    %7946 = vmatprep.subr.mxu0 0.0
    %7947 = vmatpush1.xpose.msra.mxu0 0.0
    %7948 = vmatprep.subr.mxu0 0.0
    %7949 = vmatpush1.xpose.msra.mxu0 0.0
    %7950 = vmatprep.subr.mxu0 0.0
    %7951 = vmatpush1.xpose.msra.mxu0 0.0
    %7952 = vmatprep.subr.mxu0 0.0
    %7953 = vmatpush1.xpose.msra.mxu0 0.0
    %7954 = vmatprep.mubr.f32.mxu0 %v7247
    %7955 = vmatmul.mubr.f32.gmra.mrb[0].mxu0 %v7246
    %v7956 = vpop.f32.mrb[0].mxu0
    %v7957 = vadd.f32 %v7887, %v7956
    %v7958 = vpop.f32.mrb[0].mxu0
    %7959 = vdwg.mxu0
    %7960 = vmatprep.subr.mxu0 %v7249
    %7961 = vmatpush1.xpose.msra.mxu0 %v7248
    %7962 = vmatprep.subr.mxu0 0.0
    %7963 = vmatpush1.xpose.msra.mxu0 0.0
    %7964 = vmatprep.subr.mxu0 0.0
    %7965 = vmatpush1.xpose.msra.mxu0 0.0
    %7966 = vmatprep.subr.mxu0 0.0
    %7967 = vmatpush1.xpose.msra.mxu0 0.0
    %7968 = vmatprep.subr.mxu0 0.0
    %7969 = vmatpush1.xpose.msra.mxu0 0.0
    %7970 = vmatprep.subr.mxu0 0.0
    %7971 = vmatpush1.xpose.msra.mxu0 0.0
    %7972 = vmatprep.subr.mxu0 0.0
    %7973 = vmatpush1.xpose.msra.mxu0 0.0
    %7974 = vmatprep.subr.mxu0 0.0
    %7975 = vmatpush1.xpose.msra.mxu0 0.0
    %7976 = vmatprep.subr.mxu0 0.0
    %7977 = vmatpush1.xpose.msra.mxu0 0.0
    %7978 = vmatprep.subr.mxu0 0.0
    %7979 = vmatpush1.xpose.msra.mxu0 0.0
    %7980 = vmatprep.subr.mxu0 0.0
    %7981 = vmatpush1.xpose.msra.mxu0 0.0
    %7982 = vmatprep.subr.mxu0 0.0
    %7983 = vmatpush1.xpose.msra.mxu0 0.0
    %7984 = vmatprep.subr.mxu0 0.0
    %7985 = vmatpush1.xpose.msra.mxu0 0.0
    %7986 = vmatprep.subr.mxu0 0.0
    %7987 = vmatpush1.xpose.msra.mxu0 0.0
    %7988 = vmatprep.subr.mxu0 0.0
    %7989 = vmatpush1.xpose.msra.mxu0 0.0
    %7990 = vmatprep.subr.mxu0 0.0
    %7991 = vmatpush1.xpose.msra.mxu0 0.0
    %7992 = vmatprep.subr.mxu0 0.0
    %7993 = vmatpush1.xpose.msra.mxu0 0.0
    %7994 = vmatprep.subr.mxu0 0.0
    %7995 = vmatpush1.xpose.msra.mxu0 0.0
    %7996 = vmatprep.subr.mxu0 0.0
    %7997 = vmatpush1.xpose.msra.mxu0 0.0
    %7998 = vmatprep.subr.mxu0 0.0
    %7999 = vmatpush1.xpose.msra.mxu0 0.0
    %8000 = vmatprep.subr.mxu0 0.0
    %8001 = vmatpush1.xpose.msra.mxu0 0.0
    %8002 = vmatprep.subr.mxu0 0.0
    %8003 = vmatpush1.xpose.msra.mxu0 0.0
    %8004 = vmatprep.subr.mxu0 0.0
    %8005 = vmatpush1.xpose.msra.mxu0 0.0
    %8006 = vmatprep.subr.mxu0 0.0
    %8007 = vmatpush1.xpose.msra.mxu0 0.0
    %8008 = vmatprep.subr.mxu0 0.0
    %8009 = vmatpush1.xpose.msra.mxu0 0.0
    %8010 = vmatprep.subr.mxu0 0.0
    %8011 = vmatpush1.xpose.msra.mxu0 0.0
    %8012 = vmatprep.subr.mxu0 0.0
    %8013 = vmatpush1.xpose.msra.mxu0 0.0
    %8014 = vmatprep.subr.mxu0 0.0
    %8015 = vmatpush1.xpose.msra.mxu0 0.0
    %8016 = vmatprep.subr.mxu0 0.0
    %8017 = vmatpush1.xpose.msra.mxu0 0.0
    %8018 = vmatprep.subr.mxu0 0.0
    %8019 = vmatpush1.xpose.msra.mxu0 0.0
    %8020 = vmatprep.subr.mxu0 0.0
    %8021 = vmatpush1.xpose.msra.mxu0 0.0
    %8022 = vmatprep.subr.mxu0 0.0
    %8023 = vmatpush1.xpose.msra.mxu0 0.0
    %8024 = vmatprep.mubr.f32.mxu0 %v7249
    %8025 = vmatmul.mubr.f32.gmra.mrb[0].mxu0 %v7248
    %v8026 = vpop.f32.mrb[0].mxu0
    %v8027 = vadd.f32 %v7957, %v8026
    %v8028 = vpop.f32.mrb[0].mxu0
    %8029 = vdwg.mxu0
    %8030 = vmatprep.subr.mxu0 %v7251
    %8031 = vmatpush1.xpose.msra.mxu0 %v7250
    %8032 = vmatprep.subr.mxu0 0.0
    %8033 = vmatpush1.xpose.msra.mxu0 0.0
    %8034 = vmatprep.subr.mxu0 0.0
    %8035 = vmatpush1.xpose.msra.mxu0 0.0
    %8036 = vmatprep.subr.mxu0 0.0
    %8037 = vmatpush1.xpose.msra.mxu0 0.0
    %8038 = vmatprep.subr.mxu0 0.0
    %8039 = vmatpush1.xpose.msra.mxu0 0.0
    %8040 = vmatprep.subr.mxu0 0.0
    %8041 = vmatpush1.xpose.msra.mxu0 0.0
    %8042 = vmatprep.subr.mxu0 0.0
    %8043 = vmatpush1.xpose.msra.mxu0 0.0
    %8044 = vmatprep.subr.mxu0 0.0
    %8045 = vmatpush1.xpose.msra.mxu0 0.0
    %8046 = vmatprep.subr.mxu0 0.0
    %8047 = vmatpush1.xpose.msra.mxu0 0.0
    %8048 = vmatprep.subr.mxu0 0.0
    %8049 = vmatpush1.xpose.msra.mxu0 0.0
    %8050 = vmatprep.subr.mxu0 0.0
    %8051 = vmatpush1.xpose.msra.mxu0 0.0
    %8052 = vmatprep.subr.mxu0 0.0
    %8053 = vmatpush1.xpose.msra.mxu0 0.0
    %8054 = vmatprep.subr.mxu0 0.0
    %8055 = vmatpush1.xpose.msra.mxu0 0.0
    %8056 = vmatprep.subr.mxu0 0.0
    %8057 = vmatpush1.xpose.msra.mxu0 0.0
    %8058 = vmatprep.subr.mxu0 0.0
    %8059 = vmatpush1.xpose.msra.mxu0 0.0
    %8060 = vmatprep.subr.mxu0 0.0
    %8061 = vmatpush1.xpose.msra.mxu0 0.0
    %8062 = vmatprep.subr.mxu0 0.0
    %8063 = vmatpush1.xpose.msra.mxu0 0.0
    %8064 = vmatprep.subr.mxu0 0.0
    %8065 = vmatpush1.xpose.msra.mxu0 0.0
    %8066 = vmatprep.subr.mxu0 0.0
    %8067 = vmatpush1.xpose.msra.mxu0 0.0
    %8068 = vmatprep.subr.mxu0 0.0
    %8069 = vmatpush1.xpose.msra.mxu0 0.0
    %8070 = vmatprep.subr.mxu0 0.0
    %8071 = vmatpush1.xpose.msra.mxu0 0.0
    %8072 = vmatprep.subr.mxu0 0.0
    %8073 = vmatpush1.xpose.msra.mxu0 0.0
    %8074 = vmatprep.subr.mxu0 0.0
    %8075 = vmatpush1.xpose.msra.mxu0 0.0
    %8076 = vmatprep.subr.mxu0 0.0
    %8077 = vmatpush1.xpose.msra.mxu0 0.0
    %8078 = vmatprep.subr.mxu0 0.0
    %8079 = vmatpush1.xpose.msra.mxu0 0.0
    %8080 = vmatprep.subr.mxu0 0.0
    %8081 = vmatpush1.xpose.msra.mxu0 0.0
    %8082 = vmatprep.subr.mxu0 0.0
    %8083 = vmatpush1.xpose.msra.mxu0 0.0
    %8084 = vmatprep.subr.mxu0 0.0
    %8085 = vmatpush1.xpose.msra.mxu0 0.0
    %8086 = vmatprep.subr.mxu0 0.0
    %8087 = vmatpush1.xpose.msra.mxu0 0.0
    %8088 = vmatprep.subr.mxu0 0.0
    %8089 = vmatpush1.xpose.msra.mxu0 0.0
    %8090 = vmatprep.subr.mxu0 0.0
    %8091 = vmatpush1.xpose.msra.mxu0 0.0
    %8092 = vmatprep.subr.mxu0 0.0
    %8093 = vmatpush1.xpose.msra.mxu0 0.0
    %8094 = vmatprep.mubr.f32.mxu0 %v7251
    %8095 = vmatmul.mubr.f32.gmra.mrb[0].mxu0 %v7250
    %v8096 = vpop.f32.mrb[0].mxu0
    %v8097 = vadd.f32 %v8027, %v8096
    %v8098 = vpop.f32.mrb[0].mxu0
    %8099 = vdwg.mxu0
    %8100 = vmatprep.subr.mxu0 %v7253
    %8101 = vmatpush1.xpose.msra.mxu0 %v7252
    %8102 = vmatprep.subr.mxu0 0.0
    %8103 = vmatpush1.xpose.msra.mxu0 0.0
    %8104 = vmatprep.subr.mxu0 0.0
    %8105 = vmatpush1.xpose.msra.mxu0 0.0
    %8106 = vmatprep.subr.mxu0 0.0
    %8107 = vmatpush1.xpose.msra.mxu0 0.0
    %8108 = vmatprep.subr.mxu0 0.0
    %8109 = vmatpush1.xpose.msra.mxu0 0.0
    %8110 = vmatprep.subr.mxu0 0.0
    %8111 = vmatpush1.xpose.msra.mxu0 0.0
    %8112 = vmatprep.subr.mxu0 0.0
    %8113 = vmatpush1.xpose.msra.mxu0 0.0
    %8114 = vmatprep.subr.mxu0 0.0
    %8115 = vmatpush1.xpose.msra.mxu0 0.0
    %8116 = vmatprep.subr.mxu0 0.0
    %8117 = vmatpush1.xpose.msra.mxu0 0.0
    %8118 = vmatprep.subr.mxu0 0.0
    %8119 = vmatpush1.xpose.msra.mxu0 0.0
    %8120 = vmatprep.subr.mxu0 0.0
    %8121 = vmatpush1.xpose.msra.mxu0 0.0
    %8122 = vmatprep.subr.mxu0 0.0
    %8123 = vmatpush1.xpose.msra.mxu0 0.0
    %8124 = vmatprep.subr.mxu0 0.0
    %8125 = vmatpush1.xpose.msra.mxu0 0.0
    %8126 = vmatprep.subr.mxu0 0.0
    %8127 = vmatpush1.xpose.msra.mxu0 0.0
    %8128 = vmatprep.subr.mxu0 0.0
    %8129 = vmatpush1.xpose.msra.mxu0 0.0
    %8130 = vmatprep.subr.mxu0 0.0
    %8131 = vmatpush1.xpose.msra.mxu0 0.0
    %8132 = vmatprep.subr.mxu0 0.0
    %8133 = vmatpush1.xpose.msra.mxu0 0.0
    %8134 = vmatprep.subr.mxu0 0.0
    %8135 = vmatpush1.xpose.msra.mxu0 0.0
    %8136 = vmatprep.subr.mxu0 0.0
    %8137 = vmatpush1.xpose.msra.mxu0 0.0
    %8138 = vmatprep.subr.mxu0 0.0
    %8139 = vmatpush1.xpose.msra.mxu0 0.0
    %8140 = vmatprep.subr.mxu0 0.0
    %8141 = vmatpush1.xpose.msra.mxu0 0.0
    %8142 = vmatprep.subr.mxu0 0.0
    %8143 = vmatpush1.xpose.msra.mxu0 0.0
    %8144 = vmatprep.subr.mxu0 0.0
    %8145 = vmatpush1.xpose.msra.mxu0 0.0
    %8146 = vmatprep.subr.mxu0 0.0
    %8147 = vmatpush1.xpose.msra.mxu0 0.0
    %8148 = vmatprep.subr.mxu0 0.0
    %8149 = vmatpush1.xpose.msra.mxu0 0.0
    %8150 = vmatprep.subr.mxu0 0.0
    %8151 = vmatpush1.xpose.msra.mxu0 0.0
    %8152 = vmatprep.subr.mxu0 0.0
    %8153 = vmatpush1.xpose.msra.mxu0 0.0
    %8154 = vmatprep.subr.mxu0 0.0
    %8155 = vmatpush1.xpose.msra.mxu0 0.0
    %8156 = vmatprep.subr.mxu0 0.0
    %8157 = vmatpush1.xpose.msra.mxu0 0.0
    %8158 = vmatprep.subr.mxu0 0.0
    %8159 = vmatpush1.xpose.msra.mxu0 0.0
    %8160 = vmatprep.subr.mxu0 0.0
    %8161 = vmatpush1.xpose.msra.mxu0 0.0
    %8162 = vmatprep.subr.mxu0 0.0
    %8163 = vmatpush1.xpose.msra.mxu0 0.0
    %8164 = vmatprep.mubr.f32.mxu0 %v7253
    %8165 = vmatmul.mubr.f32.gmra.mrb[0].mxu0 %v7252
    %v8166 = vpop.f32.mrb[0].mxu0
    %v8167 = vadd.f32 %v8097, %v8166
    %v8168 = vpop.f32.mrb[0].mxu0
    %8169 = vdwg.mxu0
    %8170 = vmatprep.subr.mxu0 %v7255
    %8171 = vmatpush1.xpose.msra.mxu0 %v7254
    %8172 = vmatprep.subr.mxu0 0.0
    %8173 = vmatpush1.xpose.msra.mxu0 0.0
    %8174 = vmatprep.subr.mxu0 0.0
    %8175 = vmatpush1.xpose.msra.mxu0 0.0
    %8176 = vmatprep.subr.mxu0 0.0
    %8177 = vmatpush1.xpose.msra.mxu0 0.0
    %8178 = vmatprep.subr.mxu0 0.0
    %8179 = vmatpush1.xpose.msra.mxu0 0.0
    %8180 = vmatprep.subr.mxu0 0.0
    %8181 = vmatpush1.xpose.msra.mxu0 0.0
    %8182 = vmatprep.subr.mxu0 0.0
    %8183 = vmatpush1.xpose.msra.mxu0 0.0
    %8184 = vmatprep.subr.mxu0 0.0
    %8185 = vmatpush1.xpose.msra.mxu0 0.0
    %8186 = vmatprep.subr.mxu0 0.0
    %8187 = vmatpush1.xpose.msra.mxu0 0.0
    %8188 = vmatprep.subr.mxu0 0.0
    %8189 = vmatpush1.xpose.msra.mxu0 0.0
    %8190 = vmatprep.subr.mxu0 0.0
    %8191 = vmatpush1.xpose.msra.mxu0 0.0
    %8192 = vmatprep.subr.mxu0 0.0
    %8193 = vmatpush1.xpose.msra.mxu0 0.0
    %8194 = vmatprep.subr.mxu0 0.0
    %8195 = vmatpush1.xpose.msra.mxu0 0.0
    %8196 = vmatprep.subr.mxu0 0.0
    %8197 = vmatpush1.xpose.msra.mxu0 0.0
    %8198 = vmatprep.subr.mxu0 0.0
    %8199 = vmatpush1.xpose.msra.mxu0 0.0
    %8200 = vmatprep.subr.mxu0 0.0
    %8201 = vmatpush1.xpose.msra.mxu0 0.0
    %8202 = vmatprep.subr.mxu0 0.0
    %8203 = vmatpush1.xpose.msra.mxu0 0.0
    %8204 = vmatprep.subr.mxu0 0.0
    %8205 = vmatpush1.xpose.msra.mxu0 0.0
    %8206 = vmatprep.subr.mxu0 0.0
    %8207 = vmatpush1.xpose.msra.mxu0 0.0
    %8208 = vmatprep.subr.mxu0 0.0
    %8209 = vmatpush1.xpose.msra.mxu0 0.0
    %8210 = vmatprep.subr.mxu0 0.0
    %8211 = vmatpush1.xpose.msra.mxu0 0.0
    %8212 = vmatprep.subr.mxu0 0.0
    %8213 = vmatpush1.xpose.msra.mxu0 0.0
    %8214 = vmatprep.subr.mxu0 0.0
    %8215 = vmatpush1.xpose.msra.mxu0 0.0
    %8216 = vmatprep.subr.mxu0 0.0
    %8217 = vmatpush1.xpose.msra.mxu0 0.0
    %8218 = vmatprep.subr.mxu0 0.0
    %8219 = vmatpush1.xpose.msra.mxu0 0.0
    %8220 = vmatprep.subr.mxu0 0.0
    %8221 = vmatpush1.xpose.msra.mxu0 0.0
    %8222 = vmatprep.subr.mxu0 0.0
    %8223 = vmatpush1.xpose.msra.mxu0 0.0
    %8224 = vmatprep.subr.mxu0 0.0
    %8225 = vmatpush1.xpose.msra.mxu0 0.0
    %8226 = vmatprep.subr.mxu0 0.0
    %8227 = vmatpush1.xpose.msra.mxu0 0.0
    %8228 = vmatprep.subr.mxu0 0.0
    %8229 = vmatpush1.xpose.msra.mxu0 0.0
    %8230 = vmatprep.subr.mxu0 0.0
    %8231 = vmatpush1.xpose.msra.mxu0 0.0
    %8232 = vmatprep.subr.mxu0 0.0
    %8233 = vmatpush1.xpose.msra.mxu0 0.0
    %8234 = vmatprep.mubr.f32.mxu0 %v7255
    %8235 = vmatmul.mubr.f32.gmra.mrb[0].mxu0 %v7254
    %v8236 = vpop.f32.mrb[0].mxu0
    %v8237 = vadd.f32 %v8167, %v8236
    %v8238 = vpop.f32.mrb[0].mxu0
    %8239 = vdwg.mxu0
    %8240 = vmatprep.subr.mxu0 %v7257
    %8241 = vmatpush1.xpose.msra.mxu0 %v7256
    %8242 = vmatprep.subr.mxu0 0.0
    %8243 = vmatpush1.xpose.msra.mxu0 0.0
    %8244 = vmatprep.subr.mxu0 0.0
    %8245 = vmatpush1.xpose.msra.mxu0 0.0
    %8246 = vmatprep.subr.mxu0 0.0
    %8247 = vmatpush1.xpose.msra.mxu0 0.0
    %8248 = vmatprep.subr.mxu0 0.0
    %8249 = vmatpush1.xpose.msra.mxu0 0.0
    %8250 = vmatprep.subr.mxu0 0.0
    %8251 = vmatpush1.xpose.msra.mxu0 0.0
    %8252 = vmatprep.subr.mxu0 0.0
    %8253 = vmatpush1.xpose.msra.mxu0 0.0
    %8254 = vmatprep.subr.mxu0 0.0
    %8255 = vmatpush1.xpose.msra.mxu0 0.0
    %8256 = vmatprep.subr.mxu0 0.0
    %8257 = vmatpush1.xpose.msra.mxu0 0.0
    %8258 = vmatprep.subr.mxu0 0.0
    %8259 = vmatpush1.xpose.msra.mxu0 0.0
    %8260 = vmatprep.subr.mxu0 0.0
    %8261 = vmatpush1.xpose.msra.mxu0 0.0
    %8262 = vmatprep.subr.mxu0 0.0
    %8263 = vmatpush1.xpose.msra.mxu0 0.0
    %8264 = vmatprep.subr.mxu0 0.0
    %8265 = vmatpush1.xpose.msra.mxu0 0.0
    %8266 = vmatprep.subr.mxu0 0.0
    %8267 = vmatpush1.xpose.msra.mxu0 0.0
    %8268 = vmatprep.subr.mxu0 0.0
    %8269 = vmatpush1.xpose.msra.mxu0 0.0
    %8270 = vmatprep.subr.mxu0 0.0
    %8271 = vmatpush1.xpose.msra.mxu0 0.0
    %8272 = vmatprep.subr.mxu0 0.0
    %8273 = vmatpush1.xpose.msra.mxu0 0.0
    %8274 = vmatprep.subr.mxu0 0.0
    %8275 = vmatpush1.xpose.msra.mxu0 0.0
    %8276 = vmatprep.subr.mxu0 0.0
    %8277 = vmatpush1.xpose.msra.mxu0 0.0
    %8278 = vmatprep.subr.mxu0 0.0
    %8279 = vmatpush1.xpose.msra.mxu0 0.0
    %8280 = vmatprep.subr.mxu0 0.0
    %8281 = vmatpush1.xpose.msra.mxu0 0.0
    %8282 = vmatprep.subr.mxu0 0.0
    %8283 = vmatpush1.xpose.msra.mxu0 0.0
    %8284 = vmatprep.subr.mxu0 0.0
    %8285 = vmatpush1.xpose.msra.mxu0 0.0
    %8286 = vmatprep.subr.mxu0 0.0
    %8287 = vmatpush1.xpose.msra.mxu0 0.0
    %8288 = vmatprep.subr.mxu0 0.0
    %8289 = vmatpush1.xpose.msra.mxu0 0.0
    %8290 = vmatprep.subr.mxu0 0.0
    %8291 = vmatpush1.xpose.msra.mxu0 0.0
    %8292 = vmatprep.subr.mxu0 0.0
    %8293 = vmatpush1.xpose.msra.mxu0 0.0
    %8294 = vmatprep.subr.mxu0 0.0
    %8295 = vmatpush1.xpose.msra.mxu0 0.0
    %8296 = vmatprep.subr.mxu0 0.0
    %8297 = vmatpush1.xpose.msra.mxu0 0.0
    %8298 = vmatprep.subr.mxu0 0.0
    %8299 = vmatpush1.xpose.msra.mxu0 0.0
    %8300 = vmatprep.subr.mxu0 0.0
    %8301 = vmatpush1.xpose.msra.mxu0 0.0
    %8302 = vmatprep.subr.mxu0 0.0
    %8303 = vmatpush1.xpose.msra.mxu0 0.0
    %8304 = vmatprep.mubr.f32.mxu0 %v7257
    %8305 = vmatmul.mubr.f32.gmra.mrb[0].mxu0 %v7256
    %v8306 = vpop.f32.mrb[0].mxu0
    %v8307 = vadd.f32 %v8237, %v8306
    %v8308 = vpop.f32.mrb[0].mxu0
    %8309 = vdwg.mxu0
    %8310 = vmatprep.subr.mxu0 %v7259
    %8311 = vmatpush1.xpose.msra.mxu0 %v7258
    %8312 = vmatprep.subr.mxu0 0.0
    %8313 = vmatpush1.xpose.msra.mxu0 0.0
    %8314 = vmatprep.subr.mxu0 0.0
    %8315 = vmatpush1.xpose.msra.mxu0 0.0
    %8316 = vmatprep.subr.mxu0 0.0
    %8317 = vmatpush1.xpose.msra.mxu0 0.0
    %8318 = vmatprep.subr.mxu0 0.0
    %8319 = vmatpush1.xpose.msra.mxu0 0.0
    %8320 = vmatprep.subr.mxu0 0.0
    %8321 = vmatpush1.xpose.msra.mxu0 0.0
    %8322 = vmatprep.subr.mxu0 0.0
    %8323 = vmatpush1.xpose.msra.mxu0 0.0
    %8324 = vmatprep.subr.mxu0 0.0
    %8325 = vmatpush1.xpose.msra.mxu0 0.0
    %8326 = vmatprep.subr.mxu0 0.0
    %8327 = vmatpush1.xpose.msra.mxu0 0.0
    %8328 = vmatprep.subr.mxu0 0.0
    %8329 = vmatpush1.xpose.msra.mxu0 0.0
    %8330 = vmatprep.subr.mxu0 0.0
    %8331 = vmatpush1.xpose.msra.mxu0 0.0
    %8332 = vmatprep.subr.mxu0 0.0
    %8333 = vmatpush1.xpose.msra.mxu0 0.0
    %8334 = vmatprep.subr.mxu0 0.0
    %8335 = vmatpush1.xpose.msra.mxu0 0.0
    %8336 = vmatprep.subr.mxu0 0.0
    %8337 = vmatpush1.xpose.msra.mxu0 0.0
    %8338 = vmatprep.subr.mxu0 0.0
    %8339 = vmatpush1.xpose.msra.mxu0 0.0
    %8340 = vmatprep.subr.mxu0 0.0
    %8341 = vmatpush1.xpose.msra.mxu0 0.0
    %8342 = vmatprep.subr.mxu0 0.0
    %8343 = vmatpush1.xpose.msra.mxu0 0.0
    %8344 = vmatprep.subr.mxu0 0.0
    %8345 = vmatpush1.xpose.msra.mxu0 0.0
    %8346 = vmatprep.subr.mxu0 0.0
    %8347 = vmatpush1.xpose.msra.mxu0 0.0
    %8348 = vmatprep.subr.mxu0 0.0
    %8349 = vmatpush1.xpose.msra.mxu0 0.0
    %8350 = vmatprep.subr.mxu0 0.0
    %8351 = vmatpush1.xpose.msra.mxu0 0.0
    %8352 = vmatprep.subr.mxu0 0.0
    %8353 = vmatpush1.xpose.msra.mxu0 0.0
    %8354 = vmatprep.subr.mxu0 0.0
    %8355 = vmatpush1.xpose.msra.mxu0 0.0
    %8356 = vmatprep.subr.mxu0 0.0
    %8357 = vmatpush1.xpose.msra.mxu0 0.0
    %8358 = vmatprep.subr.mxu0 0.0
    %8359 = vmatpush1.xpose.msra.mxu0 0.0
    %8360 = vmatprep.subr.mxu0 0.0
    %8361 = vmatpush1.xpose.msra.mxu0 0.0
    %8362 = vmatprep.subr.mxu0 0.0
    %8363 = vmatpush1.xpose.msra.mxu0 0.0
    %8364 = vmatprep.subr.mxu0 0.0
    %8365 = vmatpush1.xpose.msra.mxu0 0.0
    %8366 = vmatprep.subr.mxu0 0.0
    %8367 = vmatpush1.xpose.msra.mxu0 0.0
    %8368 = vmatprep.subr.mxu0 0.0
    %8369 = vmatpush1.xpose.msra.mxu0 0.0
    %8370 = vmatprep.subr.mxu0 0.0
    %8371 = vmatpush1.xpose.msra.mxu0 0.0
    %8372 = vmatprep.subr.mxu0 0.0
    %8373 = vmatpush1.xpose.msra.mxu0 0.0
    %8374 = vmatprep.mubr.f32.mxu0 %v7259
    %8375 = vmatmul.mubr.f32.gmra.mrb[0].mxu0 %v7258
    %v8376 = vpop.f32.mrb[0].mxu0
    %v8377 = vadd.f32 %v8307, %v8376
    %v8378 = vpop.f32.mrb[0].mxu0
    %8379 = vdwg.mxu0
    %v8412 = vrot.slane %v7228, 7
    %v8413 = vrot.slane %v7229, 7
    %v8414 = vrot.slane %v7230, 7
    %v8415 = vrot.slane %v7231, 7
    %v8416 = vrot.slane %v7232, 7
    %v8417 = vrot.slane %v7233, 7
    %v8418 = vrot.slane %v7234, 7
    %v8419 = vrot.slane %v7235, 7
    %v8420 = vrot.slane %v7236, 7
    %v8421 = vrot.slane %v7237, 7
    %v8422 = vrot.slane %v7238, 7
    %v8423 = vrot.slane %v7239, 7
    %v8424 = vrot.slane %v7240, 7
    %v8425 = vrot.slane %v7241, 7
    %v8426 = vrot.slane %v7242, 7
    %v8427 = vrot.slane %v7243, 7
    %v8428 = vrot.slane %v7244, 7
    %v8429 = vrot.slane %v7245, 7
    %v8430 = vrot.slane %v7246, 7
    %v8431 = vrot.slane %v7247, 7
    %v8432 = vrot.slane %v7248, 7
    %v8433 = vrot.slane %v7249, 7
    %v8434 = vrot.slane %v7250, 7
    %v8435 = vrot.slane %v7251, 7
    %v8436 = vrot.slane %v7252, 7
    %v8437 = vrot.slane %v7253, 7
    %v8438 = vrot.slane %v7254, 7
    %v8439 = vrot.slane %v7255, 7
    %v8440 = vrot.slane %v7256, 7
    %v8441 = vrot.slane %v7257, 7
    %v8442 = vrot.slane %v7258, 7
    %v8443 = vrot.slane %v7259, 7
    %8476 = vmatprep.subr.mxu0 %v7229
    %8477 = vmatpush1.xpose.msra.mxu0 %v7228
    %8478 = vmatprep.subr.mxu0 0.0
    %8479 = vmatpush1.xpose.msra.mxu0 0.0
    %8480 = vmatprep.subr.mxu0 0.0
    %8481 = vmatpush1.xpose.msra.mxu0 0.0
    %8482 = vmatprep.subr.mxu0 0.0
    %8483 = vmatpush1.xpose.msra.mxu0 0.0
    %8484 = vmatprep.subr.mxu0 0.0
    %8485 = vmatpush1.xpose.msra.mxu0 0.0
    %8486 = vmatprep.subr.mxu0 0.0
    %8487 = vmatpush1.xpose.msra.mxu0 0.0
    %8488 = vmatprep.subr.mxu0 0.0
    %8489 = vmatpush1.xpose.msra.mxu0 0.0
    %8490 = vmatprep.subr.mxu0 0.0
    %8491 = vmatpush1.xpose.msra.mxu0 0.0
    %8492 = vmatprep.subr.mxu0 0.0
    %8493 = vmatpush1.xpose.msra.mxu0 0.0
    %8494 = vmatprep.subr.mxu0 0.0
    %8495 = vmatpush1.xpose.msra.mxu0 0.0
    %8496 = vmatprep.subr.mxu0 0.0
    %8497 = vmatpush1.xpose.msra.mxu0 0.0
    %8498 = vmatprep.subr.mxu0 0.0
    %8499 = vmatpush1.xpose.msra.mxu0 0.0
    %8500 = vmatprep.subr.mxu0 0.0
    %8501 = vmatpush1.xpose.msra.mxu0 0.0
    %8502 = vmatprep.subr.mxu0 0.0
    %8503 = vmatpush1.xpose.msra.mxu0 0.0
    %8504 = vmatprep.subr.mxu0 0.0
    %8505 = vmatpush1.xpose.msra.mxu0 0.0
    %8506 = vmatprep.subr.mxu0 0.0
    %8507 = vmatpush1.xpose.msra.mxu0 0.0
    %8508 = vmatprep.subr.mxu0 0.0
    %8509 = vmatpush1.xpose.msra.mxu0 0.0
    %8510 = vmatprep.subr.mxu0 0.0
    %8511 = vmatpush1.xpose.msra.mxu0 0.0
    %8512 = vmatprep.subr.mxu0 0.0
    %8513 = vmatpush1.xpose.msra.mxu0 0.0
    %8514 = vmatprep.subr.mxu0 0.0
    %8515 = vmatpush1.xpose.msra.mxu0 0.0
    %8516 = vmatprep.subr.mxu0 0.0
    %8517 = vmatpush1.xpose.msra.mxu0 0.0
    %8518 = vmatprep.subr.mxu0 0.0
    %8519 = vmatpush1.xpose.msra.mxu0 0.0
    %8520 = vmatprep.subr.mxu0 0.0
    %8521 = vmatpush1.xpose.msra.mxu0 0.0
    %8522 = vmatprep.subr.mxu0 0.0
    %8523 = vmatpush1.xpose.msra.mxu0 0.0
    %8524 = vmatprep.subr.mxu0 0.0
    %8525 = vmatpush1.xpose.msra.mxu0 0.0
    %8526 = vmatprep.subr.mxu0 0.0
    %8527 = vmatpush1.xpose.msra.mxu0 0.0
    %8528 = vmatprep.subr.mxu0 0.0
    %8529 = vmatpush1.xpose.msra.mxu0 0.0
    %8530 = vmatprep.subr.mxu0 0.0
    %8531 = vmatpush1.xpose.msra.mxu0 0.0
    %8532 = vmatprep.subr.mxu0 0.0
    %8533 = vmatpush1.xpose.msra.mxu0 0.0
    %8534 = vmatprep.subr.mxu0 0.0
    %8535 = vmatpush1.xpose.msra.mxu0 0.0
    %8536 = vmatprep.subr.mxu0 0.0
    %8537 = vmatpush1.xpose.msra.mxu0 0.0
    %8538 = vmatprep.subr.mxu0 0.0
    %8539 = vmatpush1.xpose.msra.mxu0 0.0
    %8540 = vmatprep.mubr.f32.mxu0 %v8413
    %8541 = vmatmul.mubr.f32.gmra.mrb[0].mxu0 %v8412
    %v8542 = vpop.f32.mrb[0].mxu0
    %v8543 = vadd.f32 0.0, %v8542
    %v8544 = vpop.f32.mrb[0].mxu0
    %8545 = vdwg.mxu0
    %8546 = vmatprep.subr.mxu0 %v7231
    %8547 = vmatpush1.xpose.msra.mxu0 %v7230
    %8548 = vmatprep.subr.mxu0 0.0
    %8549 = vmatpush1.xpose.msra.mxu0 0.0
    %8550 = vmatprep.subr.mxu0 0.0
    %8551 = vmatpush1.xpose.msra.mxu0 0.0
    %8552 = vmatprep.subr.mxu0 0.0
    %8553 = vmatpush1.xpose.msra.mxu0 0.0
    %8554 = vmatprep.subr.mxu0 0.0
    %8555 = vmatpush1.xpose.msra.mxu0 0.0
    %8556 = vmatprep.subr.mxu0 0.0
    %8557 = vmatpush1.xpose.msra.mxu0 0.0
    %8558 = vmatprep.subr.mxu0 0.0
    %8559 = vmatpush1.xpose.msra.mxu0 0.0
    %8560 = vmatprep.subr.mxu0 0.0
    %8561 = vmatpush1.xpose.msra.mxu0 0.0
    %8562 = vmatprep.subr.mxu0 0.0
    %8563 = vmatpush1.xpose.msra.mxu0 0.0
    %8564 = vmatprep.subr.mxu0 0.0
    %8565 = vmatpush1.xpose.msra.mxu0 0.0
    %8566 = vmatprep.subr.mxu0 0.0
    %8567 = vmatpush1.xpose.msra.mxu0 0.0
    %8568 = vmatprep.subr.mxu0 0.0
    %8569 = vmatpush1.xpose.msra.mxu0 0.0
    %8570 = vmatprep.subr.mxu0 0.0
    %8571 = vmatpush1.xpose.msra.mxu0 0.0
    %8572 = vmatprep.subr.mxu0 0.0
    %8573 = vmatpush1.xpose.msra.mxu0 0.0
    %8574 = vmatprep.subr.mxu0 0.0
    %8575 = vmatpush1.xpose.msra.mxu0 0.0
    %8576 = vmatprep.subr.mxu0 0.0
    %8577 = vmatpush1.xpose.msra.mxu0 0.0
    %8578 = vmatprep.subr.mxu0 0.0
    %8579 = vmatpush1.xpose.msra.mxu0 0.0
    %8580 = vmatprep.subr.mxu0 0.0
    %8581 = vmatpush1.xpose.msra.mxu0 0.0
    %8582 = vmatprep.subr.mxu0 0.0
    %8583 = vmatpush1.xpose.msra.mxu0 0.0
    %8584 = vmatprep.subr.mxu0 0.0
    %8585 = vmatpush1.xpose.msra.mxu0 0.0
    %8586 = vmatprep.subr.mxu0 0.0
    %8587 = vmatpush1.xpose.msra.mxu0 0.0
    %8588 = vmatprep.subr.mxu0 0.0
    %8589 = vmatpush1.xpose.msra.mxu0 0.0
    %8590 = vmatprep.subr.mxu0 0.0
    %8591 = vmatpush1.xpose.msra.mxu0 0.0
    %8592 = vmatprep.subr.mxu0 0.0
    %8593 = vmatpush1.xpose.msra.mxu0 0.0
    %8594 = vmatprep.subr.mxu0 0.0
    %8595 = vmatpush1.xpose.msra.mxu0 0.0
    %8596 = vmatprep.subr.mxu0 0.0
    %8597 = vmatpush1.xpose.msra.mxu0 0.0
    %8598 = vmatprep.subr.mxu0 0.0
    %8599 = vmatpush1.xpose.msra.mxu0 0.0
    %8600 = vmatprep.subr.mxu0 0.0
    %8601 = vmatpush1.xpose.msra.mxu0 0.0
    %8602 = vmatprep.subr.mxu0 0.0
    %8603 = vmatpush1.xpose.msra.mxu0 0.0
    %8604 = vmatprep.subr.mxu0 0.0
    %8605 = vmatpush1.xpose.msra.mxu0 0.0
    %8606 = vmatprep.subr.mxu0 0.0
    %8607 = vmatpush1.xpose.msra.mxu0 0.0
    %8608 = vmatprep.subr.mxu0 0.0
    %8609 = vmatpush1.xpose.msra.mxu0 0.0
    %8610 = vmatprep.mubr.f32.mxu0 %v8415
    %8611 = vmatmul.mubr.f32.gmra.mrb[0].mxu0 %v8414
    %v8612 = vpop.f32.mrb[0].mxu0
    %v8613 = vadd.f32 %v8543, %v8612
    %v8614 = vpop.f32.mrb[0].mxu0
    %8615 = vdwg.mxu0
    %8616 = vmatprep.subr.mxu0 %v7233
    %8617 = vmatpush1.xpose.msra.mxu0 %v7232
    %8618 = vmatprep.subr.mxu0 0.0
    %8619 = vmatpush1.xpose.msra.mxu0 0.0
    %8620 = vmatprep.subr.mxu0 0.0
    %8621 = vmatpush1.xpose.msra.mxu0 0.0
    %8622 = vmatprep.subr.mxu0 0.0
    %8623 = vmatpush1.xpose.msra.mxu0 0.0
    %8624 = vmatprep.subr.mxu0 0.0
    %8625 = vmatpush1.xpose.msra.mxu0 0.0
    %8626 = vmatprep.subr.mxu0 0.0
    %8627 = vmatpush1.xpose.msra.mxu0 0.0
    %8628 = vmatprep.subr.mxu0 0.0
    %8629 = vmatpush1.xpose.msra.mxu0 0.0
    %8630 = vmatprep.subr.mxu0 0.0
    %8631 = vmatpush1.xpose.msra.mxu0 0.0
    %8632 = vmatprep.subr.mxu0 0.0
    %8633 = vmatpush1.xpose.msra.mxu0 0.0
    %8634 = vmatprep.subr.mxu0 0.0
    %8635 = vmatpush1.xpose.msra.mxu0 0.0
    %8636 = vmatprep.subr.mxu0 0.0
    %8637 = vmatpush1.xpose.msra.mxu0 0.0
    %8638 = vmatprep.subr.mxu0 0.0
    %8639 = vmatpush1.xpose.msra.mxu0 0.0
    %8640 = vmatprep.subr.mxu0 0.0
    %8641 = vmatpush1.xpose.msra.mxu0 0.0
    %8642 = vmatprep.subr.mxu0 0.0
    %8643 = vmatpush1.xpose.msra.mxu0 0.0
    %8644 = vmatprep.subr.mxu0 0.0
    %8645 = vmatpush1.xpose.msra.mxu0 0.0
    %8646 = vmatprep.subr.mxu0 0.0
    %8647 = vmatpush1.xpose.msra.mxu0 0.0
    %8648 = vmatprep.subr.mxu0 0.0
    %8649 = vmatpush1.xpose.msra.mxu0 0.0
    %8650 = vmatprep.subr.mxu0 0.0
    %8651 = vmatpush1.xpose.msra.mxu0 0.0
    %8652 = vmatprep.subr.mxu0 0.0
    %8653 = vmatpush1.xpose.msra.mxu0 0.0
    %8654 = vmatprep.subr.mxu0 0.0
    %8655 = vmatpush1.xpose.msra.mxu0 0.0
    %8656 = vmatprep.subr.mxu0 0.0
    %8657 = vmatpush1.xpose.msra.mxu0 0.0
    %8658 = vmatprep.subr.mxu0 0.0
    %8659 = vmatpush1.xpose.msra.mxu0 0.0
    %8660 = vmatprep.subr.mxu0 0.0
    %8661 = vmatpush1.xpose.msra.mxu0 0.0
    %8662 = vmatprep.subr.mxu0 0.0
    %8663 = vmatpush1.xpose.msra.mxu0 0.0
    %8664 = vmatprep.subr.mxu0 0.0
    %8665 = vmatpush1.xpose.msra.mxu0 0.0
    %8666 = vmatprep.subr.mxu0 0.0
    %8667 = vmatpush1.xpose.msra.mxu0 0.0
    %8668 = vmatprep.subr.mxu0 0.0
    %8669 = vmatpush1.xpose.msra.mxu0 0.0
    %8670 = vmatprep.subr.mxu0 0.0
    %8671 = vmatpush1.xpose.msra.mxu0 0.0
    %8672 = vmatprep.subr.mxu0 0.0
    %8673 = vmatpush1.xpose.msra.mxu0 0.0
    %8674 = vmatprep.subr.mxu0 0.0
    %8675 = vmatpush1.xpose.msra.mxu0 0.0
    %8676 = vmatprep.subr.mxu0 0.0
    %8677 = vmatpush1.xpose.msra.mxu0 0.0
    %8678 = vmatprep.subr.mxu0 0.0
    %8679 = vmatpush1.xpose.msra.mxu0 0.0
    %8680 = vmatprep.mubr.f32.mxu0 %v8417
    %8681 = vmatmul.mubr.f32.gmra.mrb[0].mxu0 %v8416
    %v8682 = vpop.f32.mrb[0].mxu0
    %v8683 = vadd.f32 %v8613, %v8682
    %v8684 = vpop.f32.mrb[0].mxu0
    %8685 = vdwg.mxu0
    %8686 = vmatprep.subr.mxu0 %v7235
    %8687 = vmatpush1.xpose.msra.mxu0 %v7234
    %8688 = vmatprep.subr.mxu0 0.0
    %8689 = vmatpush1.xpose.msra.mxu0 0.0
    %8690 = vmatprep.subr.mxu0 0.0
    %8691 = vmatpush1.xpose.msra.mxu0 0.0
    %8692 = vmatprep.subr.mxu0 0.0
    %8693 = vmatpush1.xpose.msra.mxu0 0.0
    %8694 = vmatprep.subr.mxu0 0.0
    %8695 = vmatpush1.xpose.msra.mxu0 0.0
    %8696 = vmatprep.subr.mxu0 0.0
    %8697 = vmatpush1.xpose.msra.mxu0 0.0
    %8698 = vmatprep.subr.mxu0 0.0
    %8699 = vmatpush1.xpose.msra.mxu0 0.0
    %8700 = vmatprep.subr.mxu0 0.0
    %8701 = vmatpush1.xpose.msra.mxu0 0.0
    %8702 = vmatprep.subr.mxu0 0.0
    %8703 = vmatpush1.xpose.msra.mxu0 0.0
    %8704 = vmatprep.subr.mxu0 0.0
    %8705 = vmatpush1.xpose.msra.mxu0 0.0
    %8706 = vmatprep.subr.mxu0 0.0
    %8707 = vmatpush1.xpose.msra.mxu0 0.0
    %8708 = vmatprep.subr.mxu0 0.0
    %8709 = vmatpush1.xpose.msra.mxu0 0.0
    %8710 = vmatprep.subr.mxu0 0.0
    %8711 = vmatpush1.xpose.msra.mxu0 0.0
    %8712 = vmatprep.subr.mxu0 0.0
    %8713 = vmatpush1.xpose.msra.mxu0 0.0
    %8714 = vmatprep.subr.mxu0 0.0
    %8715 = vmatpush1.xpose.msra.mxu0 0.0
    %8716 = vmatprep.subr.mxu0 0.0
    %8717 = vmatpush1.xpose.msra.mxu0 0.0
    %8718 = vmatprep.subr.mxu0 0.0
    %8719 = vmatpush1.xpose.msra.mxu0 0.0
    %8720 = vmatprep.subr.mxu0 0.0
    %8721 = vmatpush1.xpose.msra.mxu0 0.0
    %8722 = vmatprep.subr.mxu0 0.0
    %8723 = vmatpush1.xpose.msra.mxu0 0.0
    %8724 = vmatprep.subr.mxu0 0.0
    %8725 = vmatpush1.xpose.msra.mxu0 0.0
    %8726 = vmatprep.subr.mxu0 0.0
    %8727 = vmatpush1.xpose.msra.mxu0 0.0
    %8728 = vmatprep.subr.mxu0 0.0
    %8729 = vmatpush1.xpose.msra.mxu0 0.0
    %8730 = vmatprep.subr.mxu0 0.0
    %8731 = vmatpush1.xpose.msra.mxu0 0.0
    %8732 = vmatprep.subr.mxu0 0.0
    %8733 = vmatpush1.xpose.msra.mxu0 0.0
    %8734 = vmatprep.subr.mxu0 0.0
    %8735 = vmatpush1.xpose.msra.mxu0 0.0
    %8736 = vmatprep.subr.mxu0 0.0
    %8737 = vmatpush1.xpose.msra.mxu0 0.0
    %8738 = vmatprep.subr.mxu0 0.0
    %8739 = vmatpush1.xpose.msra.mxu0 0.0
    %8740 = vmatprep.subr.mxu0 0.0
    %8741 = vmatpush1.xpose.msra.mxu0 0.0
    %8742 = vmatprep.subr.mxu0 0.0
    %8743 = vmatpush1.xpose.msra.mxu0 0.0
    %8744 = vmatprep.subr.mxu0 0.0
    %8745 = vmatpush1.xpose.msra.mxu0 0.0
    %8746 = vmatprep.subr.mxu0 0.0
    %8747 = vmatpush1.xpose.msra.mxu0 0.0
    %8748 = vmatprep.subr.mxu0 0.0
    %8749 = vmatpush1.xpose.msra.mxu0 0.0
    %8750 = vmatprep.mubr.f32.mxu0 %v8419
    %8751 = vmatmul.mubr.f32.gmra.mrb[0].mxu0 %v8418
    %v8752 = vpop.f32.mrb[0].mxu0
    %v8753 = vadd.f32 %v8683, %v8752
    %v8754 = vpop.f32.mrb[0].mxu0
    %8755 = vdwg.mxu0
    %8756 = vmatprep.subr.mxu0 %v7237
    %8757 = vmatpush1.xpose.msra.mxu0 %v7236
    %8758 = vmatprep.subr.mxu0 0.0
    %8759 = vmatpush1.xpose.msra.mxu0 0.0
    %8760 = vmatprep.subr.mxu0 0.0
    %8761 = vmatpush1.xpose.msra.mxu0 0.0
    %8762 = vmatprep.subr.mxu0 0.0
    %8763 = vmatpush1.xpose.msra.mxu0 0.0
    %8764 = vmatprep.subr.mxu0 0.0
    %8765 = vmatpush1.xpose.msra.mxu0 0.0
    %8766 = vmatprep.subr.mxu0 0.0
    %8767 = vmatpush1.xpose.msra.mxu0 0.0
    %8768 = vmatprep.subr.mxu0 0.0
    %8769 = vmatpush1.xpose.msra.mxu0 0.0
    %8770 = vmatprep.subr.mxu0 0.0
    %8771 = vmatpush1.xpose.msra.mxu0 0.0
    %8772 = vmatprep.subr.mxu0 0.0
    %8773 = vmatpush1.xpose.msra.mxu0 0.0
    %8774 = vmatprep.subr.mxu0 0.0
    %8775 = vmatpush1.xpose.msra.mxu0 0.0
    %8776 = vmatprep.subr.mxu0 0.0
    %8777 = vmatpush1.xpose.msra.mxu0 0.0
    %8778 = vmatprep.subr.mxu0 0.0
    %8779 = vmatpush1.xpose.msra.mxu0 0.0
    %8780 = vmatprep.subr.mxu0 0.0
    %8781 = vmatpush1.xpose.msra.mxu0 0.0
    %8782 = vmatprep.subr.mxu0 0.0
    %8783 = vmatpush1.xpose.msra.mxu0 0.0
    %8784 = vmatprep.subr.mxu0 0.0
    %8785 = vmatpush1.xpose.msra.mxu0 0.0
    %8786 = vmatprep.subr.mxu0 0.0
    %8787 = vmatpush1.xpose.msra.mxu0 0.0
    %8788 = vmatprep.subr.mxu0 0.0
    %8789 = vmatpush1.xpose.msra.mxu0 0.0
    %8790 = vmatprep.subr.mxu0 0.0
    %8791 = vmatpush1.xpose.msra.mxu0 0.0
    %8792 = vmatprep.subr.mxu0 0.0
    %8793 = vmatpush1.xpose.msra.mxu0 0.0
    %8794 = vmatprep.subr.mxu0 0.0
    %8795 = vmatpush1.xpose.msra.mxu0 0.0
    %8796 = vmatprep.subr.mxu0 0.0
    %8797 = vmatpush1.xpose.msra.mxu0 0.0
    %8798 = vmatprep.subr.mxu0 0.0
    %8799 = vmatpush1.xpose.msra.mxu0 0.0
    %8800 = vmatprep.subr.mxu0 0.0
    %8801 = vmatpush1.xpose.msra.mxu0 0.0
    %8802 = vmatprep.subr.mxu0 0.0
    %8803 = vmatpush1.xpose.msra.mxu0 0.0
    %8804 = vmatprep.subr.mxu0 0.0
    %8805 = vmatpush1.xpose.msra.mxu0 0.0
    %8806 = vmatprep.subr.mxu0 0.0
    %8807 = vmatpush1.xpose.msra.mxu0 0.0
    %8808 = vmatprep.subr.mxu0 0.0
    %8809 = vmatpush1.xpose.msra.mxu0 0.0
    %8810 = vmatprep.subr.mxu0 0.0
    %8811 = vmatpush1.xpose.msra.mxu0 0.0
    %8812 = vmatprep.subr.mxu0 0.0
    %8813 = vmatpush1.xpose.msra.mxu0 0.0
    %8814 = vmatprep.subr.mxu0 0.0
    %8815 = vmatpush1.xpose.msra.mxu0 0.0
    %8816 = vmatprep.subr.mxu0 0.0
    %8817 = vmatpush1.xpose.msra.mxu0 0.0
    %8818 = vmatprep.subr.mxu0 0.0
    %8819 = vmatpush1.xpose.msra.mxu0 0.0
    %8820 = vmatprep.mubr.f32.mxu0 %v8421
    %8821 = vmatmul.mubr.f32.gmra.mrb[0].mxu0 %v8420
    %v8822 = vpop.f32.mrb[0].mxu0
    %v8823 = vadd.f32 %v8753, %v8822
    %v8824 = vpop.f32.mrb[0].mxu0
    %8825 = vdwg.mxu0
    %8826 = vmatprep.subr.mxu0 %v7239
    %8827 = vmatpush1.xpose.msra.mxu0 %v7238
    %8828 = vmatprep.subr.mxu0 0.0
    %8829 = vmatpush1.xpose.msra.mxu0 0.0
    %8830 = vmatprep.subr.mxu0 0.0
    %8831 = vmatpush1.xpose.msra.mxu0 0.0
    %8832 = vmatprep.subr.mxu0 0.0
    %8833 = vmatpush1.xpose.msra.mxu0 0.0
    %8834 = vmatprep.subr.mxu0 0.0
    %8835 = vmatpush1.xpose.msra.mxu0 0.0
    %8836 = vmatprep.subr.mxu0 0.0
    %8837 = vmatpush1.xpose.msra.mxu0 0.0
    %8838 = vmatprep.subr.mxu0 0.0
    %8839 = vmatpush1.xpose.msra.mxu0 0.0
    %8840 = vmatprep.subr.mxu0 0.0
    %8841 = vmatpush1.xpose.msra.mxu0 0.0
    %8842 = vmatprep.subr.mxu0 0.0
    %8843 = vmatpush1.xpose.msra.mxu0 0.0
    %8844 = vmatprep.subr.mxu0 0.0
    %8845 = vmatpush1.xpose.msra.mxu0 0.0
    %8846 = vmatprep.subr.mxu0 0.0
    %8847 = vmatpush1.xpose.msra.mxu0 0.0
    %8848 = vmatprep.subr.mxu0 0.0
    %8849 = vmatpush1.xpose.msra.mxu0 0.0
    %8850 = vmatprep.subr.mxu0 0.0
    %8851 = vmatpush1.xpose.msra.mxu0 0.0
    %8852 = vmatprep.subr.mxu0 0.0
    %8853 = vmatpush1.xpose.msra.mxu0 0.0
    %8854 = vmatprep.subr.mxu0 0.0
    %8855 = vmatpush1.xpose.msra.mxu0 0.0
    %8856 = vmatprep.subr.mxu0 0.0
    %8857 = vmatpush1.xpose.msra.mxu0 0.0
    %8858 = vmatprep.subr.mxu0 0.0
    %8859 = vmatpush1.xpose.msra.mxu0 0.0
    %8860 = vmatprep.subr.mxu0 0.0
    %8861 = vmatpush1.xpose.msra.mxu0 0.0
    %8862 = vmatprep.subr.mxu0 0.0
    %8863 = vmatpush1.xpose.msra.mxu0 0.0
    %8864 = vmatprep.subr.mxu0 0.0
    %8865 = vmatpush1.xpose.msra.mxu0 0.0
    %8866 = vmatprep.subr.mxu0 0.0
    %8867 = vmatpush1.xpose.msra.mxu0 0.0
    %8868 = vmatprep.subr.mxu0 0.0
    %8869 = vmatpush1.xpose.msra.mxu0 0.0
    %8870 = vmatprep.subr.mxu0 0.0
    %8871 = vmatpush1.xpose.msra.mxu0 0.0
    %8872 = vmatprep.subr.mxu0 0.0
    %8873 = vmatpush1.xpose.msra.mxu0 0.0
    %8874 = vmatprep.subr.mxu0 0.0
    %8875 = vmatpush1.xpose.msra.mxu0 0.0
    %8876 = vmatprep.subr.mxu0 0.0
    %8877 = vmatpush1.xpose.msra.mxu0 0.0
    %8878 = vmatprep.subr.mxu0 0.0
    %8879 = vmatpush1.xpose.msra.mxu0 0.0
    %8880 = vmatprep.subr.mxu0 0.0
    %8881 = vmatpush1.xpose.msra.mxu0 0.0
    %8882 = vmatprep.subr.mxu0 0.0
    %8883 = vmatpush1.xpose.msra.mxu0 0.0
    %8884 = vmatprep.subr.mxu0 0.0
    %8885 = vmatpush1.xpose.msra.mxu0 0.0
    %8886 = vmatprep.subr.mxu0 0.0
    %8887 = vmatpush1.xpose.msra.mxu0 0.0
    %8888 = vmatprep.subr.mxu0 0.0
    %8889 = vmatpush1.xpose.msra.mxu0 0.0
    %8890 = vmatprep.mubr.f32.mxu0 %v8423
    %8891 = vmatmul.mubr.f32.gmra.mrb[0].mxu0 %v8422
    %v8892 = vpop.f32.mrb[0].mxu0
    %v8893 = vadd.f32 %v8823, %v8892
    %v8894 = vpop.f32.mrb[0].mxu0
    %8895 = vdwg.mxu0
    %8896 = vmatprep.subr.mxu0 %v7241
    %8897 = vmatpush1.xpose.msra.mxu0 %v7240
    %8898 = vmatprep.subr.mxu0 0.0
    %8899 = vmatpush1.xpose.msra.mxu0 0.0
    %8900 = vmatprep.subr.mxu0 0.0
    %8901 = vmatpush1.xpose.msra.mxu0 0.0
    %8902 = vmatprep.subr.mxu0 0.0
    %8903 = vmatpush1.xpose.msra.mxu0 0.0
    %8904 = vmatprep.subr.mxu0 0.0
    %8905 = vmatpush1.xpose.msra.mxu0 0.0
    %8906 = vmatprep.subr.mxu0 0.0
    %8907 = vmatpush1.xpose.msra.mxu0 0.0
    %8908 = vmatprep.subr.mxu0 0.0
    %8909 = vmatpush1.xpose.msra.mxu0 0.0
    %8910 = vmatprep.subr.mxu0 0.0
    %8911 = vmatpush1.xpose.msra.mxu0 0.0
    %8912 = vmatprep.subr.mxu0 0.0
    %8913 = vmatpush1.xpose.msra.mxu0 0.0
    %8914 = vmatprep.subr.mxu0 0.0
    %8915 = vmatpush1.xpose.msra.mxu0 0.0
    %8916 = vmatprep.subr.mxu0 0.0
    %8917 = vmatpush1.xpose.msra.mxu0 0.0
    %8918 = vmatprep.subr.mxu0 0.0
    %8919 = vmatpush1.xpose.msra.mxu0 0.0
    %8920 = vmatprep.subr.mxu0 0.0
    %8921 = vmatpush1.xpose.msra.mxu0 0.0
    %8922 = vmatprep.subr.mxu0 0.0
    %8923 = vmatpush1.xpose.msra.mxu0 0.0
    %8924 = vmatprep.subr.mxu0 0.0
    %8925 = vmatpush1.xpose.msra.mxu0 0.0
    %8926 = vmatprep.subr.mxu0 0.0
    %8927 = vmatpush1.xpose.msra.mxu0 0.0
    %8928 = vmatprep.subr.mxu0 0.0
    %8929 = vmatpush1.xpose.msra.mxu0 0.0
    %8930 = vmatprep.subr.mxu0 0.0
    %8931 = vmatpush1.xpose.msra.mxu0 0.0
    %8932 = vmatprep.subr.mxu0 0.0
    %8933 = vmatpush1.xpose.msra.mxu0 0.0
    %8934 = vmatprep.subr.mxu0 0.0
    %8935 = vmatpush1.xpose.msra.mxu0 0.0
    %8936 = vmatprep.subr.mxu0 0.0
    %8937 = vmatpush1.xpose.msra.mxu0 0.0
    %8938 = vmatprep.subr.mxu0 0.0
    %8939 = vmatpush1.xpose.msra.mxu0 0.0
    %8940 = vmatprep.subr.mxu0 0.0
    %8941 = vmatpush1.xpose.msra.mxu0 0.0
    %8942 = vmatprep.subr.mxu0 0.0
    %8943 = vmatpush1.xpose.msra.mxu0 0.0
    %8944 = vmatprep.subr.mxu0 0.0
    %8945 = vmatpush1.xpose.msra.mxu0 0.0
    %8946 = vmatprep.subr.mxu0 0.0
    %8947 = vmatpush1.xpose.msra.mxu0 0.0
    %8948 = vmatprep.subr.mxu0 0.0
    %8949 = vmatpush1.xpose.msra.mxu0 0.0
    %8950 = vmatprep.subr.mxu0 0.0
    %8951 = vmatpush1.xpose.msra.mxu0 0.0
    %8952 = vmatprep.subr.mxu0 0.0
    %8953 = vmatpush1.xpose.msra.mxu0 0.0
    %8954 = vmatprep.subr.mxu0 0.0
    %8955 = vmatpush1.xpose.msra.mxu0 0.0
    %8956 = vmatprep.subr.mxu0 0.0
    %8957 = vmatpush1.xpose.msra.mxu0 0.0
    %8958 = vmatprep.subr.mxu0 0.0
    %8959 = vmatpush1.xpose.msra.mxu0 0.0
    %8960 = vmatprep.mubr.f32.mxu0 %v8425
    %8961 = vmatmul.mubr.f32.gmra.mrb[0].mxu0 %v8424
    %v8962 = vpop.f32.mrb[0].mxu0
    %v8963 = vadd.f32 %v8893, %v8962
    %v8964 = vpop.f32.mrb[0].mxu0
    %8965 = vdwg.mxu0
    %8966 = vmatprep.subr.mxu0 %v7243
    %8967 = vmatpush1.xpose.msra.mxu0 %v7242
    %8968 = vmatprep.subr.mxu0 0.0
    %8969 = vmatpush1.xpose.msra.mxu0 0.0
    %8970 = vmatprep.subr.mxu0 0.0
    %8971 = vmatpush1.xpose.msra.mxu0 0.0
    %8972 = vmatprep.subr.mxu0 0.0
    %8973 = vmatpush1.xpose.msra.mxu0 0.0
    %8974 = vmatprep.subr.mxu0 0.0
    %8975 = vmatpush1.xpose.msra.mxu0 0.0
    %8976 = vmatprep.subr.mxu0 0.0
    %8977 = vmatpush1.xpose.msra.mxu0 0.0
    %8978 = vmatprep.subr.mxu0 0.0
    %8979 = vmatpush1.xpose.msra.mxu0 0.0
    %8980 = vmatprep.subr.mxu0 0.0
    %8981 = vmatpush1.xpose.msra.mxu0 0.0
    %8982 = vmatprep.subr.mxu0 0.0
    %8983 = vmatpush1.xpose.msra.mxu0 0.0
    %8984 = vmatprep.subr.mxu0 0.0
    %8985 = vmatpush1.xpose.msra.mxu0 0.0
    %8986 = vmatprep.subr.mxu0 0.0
    %8987 = vmatpush1.xpose.msra.mxu0 0.0
    %8988 = vmatprep.subr.mxu0 0.0
    %8989 = vmatpush1.xpose.msra.mxu0 0.0
    %8990 = vmatprep.subr.mxu0 0.0
    %8991 = vmatpush1.xpose.msra.mxu0 0.0
    %8992 = vmatprep.subr.mxu0 0.0
    %8993 = vmatpush1.xpose.msra.mxu0 0.0
    %8994 = vmatprep.subr.mxu0 0.0
    %8995 = vmatpush1.xpose.msra.mxu0 0.0
    %8996 = vmatprep.subr.mxu0 0.0
    %8997 = vmatpush1.xpose.msra.mxu0 0.0
    %8998 = vmatprep.subr.mxu0 0.0
    %8999 = vmatpush1.xpose.msra.mxu0 0.0
    %9000 = vmatprep.subr.mxu0 0.0
    %9001 = vmatpush1.xpose.msra.mxu0 0.0
    %9002 = vmatprep.subr.mxu0 0.0
    %9003 = vmatpush1.xpose.msra.mxu0 0.0
    %9004 = vmatprep.subr.mxu0 0.0
    %9005 = vmatpush1.xpose.msra.mxu0 0.0
    %9006 = vmatprep.subr.mxu0 0.0
    %9007 = vmatpush1.xpose.msra.mxu0 0.0
    %9008 = vmatprep.subr.mxu0 0.0
    %9009 = vmatpush1.xpose.msra.mxu0 0.0
    %9010 = vmatprep.subr.mxu0 0.0
    %9011 = vmatpush1.xpose.msra.mxu0 0.0
    %9012 = vmatprep.subr.mxu0 0.0
    %9013 = vmatpush1.xpose.msra.mxu0 0.0
    %9014 = vmatprep.subr.mxu0 0.0
    %9015 = vmatpush1.xpose.msra.mxu0 0.0
    %9016 = vmatprep.subr.mxu0 0.0
    %9017 = vmatpush1.xpose.msra.mxu0 0.0
    %9018 = vmatprep.subr.mxu0 0.0
    %9019 = vmatpush1.xpose.msra.mxu0 0.0
    %9020 = vmatprep.subr.mxu0 0.0
    %9021 = vmatpush1.xpose.msra.mxu0 0.0
    %9022 = vmatprep.subr.mxu0 0.0
    %9023 = vmatpush1.xpose.msra.mxu0 0.0
    %9024 = vmatprep.subr.mxu0 0.0
    %9025 = vmatpush1.xpose.msra.mxu0 0.0
    %9026 = vmatprep.subr.mxu0 0.0
    %9027 = vmatpush1.xpose.msra.mxu0 0.0
    %9028 = vmatprep.subr.mxu0 0.0
    %9029 = vmatpush1.xpose.msra.mxu0 0.0
    %9030 = vmatprep.mubr.f32.mxu0 %v8427
    %9031 = vmatmul.mubr.f32.gmra.mrb[0].mxu0 %v8426
    %v9032 = vpop.f32.mrb[0].mxu0
    %v9033 = vadd.f32 %v8963, %v9032
    %v9034 = vpop.f32.mrb[0].mxu0
    %9035 = vdwg.mxu0
    %9036 = vmatprep.subr.mxu0 %v7245
    %9037 = vmatpush1.xpose.msra.mxu0 %v7244
    %9038 = vmatprep.subr.mxu0 0.0
    %9039 = vmatpush1.xpose.msra.mxu0 0.0
    %9040 = vmatprep.subr.mxu0 0.0
    %9041 = vmatpush1.xpose.msra.mxu0 0.0
    %9042 = vmatprep.subr.mxu0 0.0
    %9043 = vmatpush1.xpose.msra.mxu0 0.0
    %9044 = vmatprep.subr.mxu0 0.0
    %9045 = vmatpush1.xpose.msra.mxu0 0.0
    %9046 = vmatprep.subr.mxu0 0.0
    %9047 = vmatpush1.xpose.msra.mxu0 0.0
    %9048 = vmatprep.subr.mxu0 0.0
    %9049 = vmatpush1.xpose.msra.mxu0 0.0
    %9050 = vmatprep.subr.mxu0 0.0
    %9051 = vmatpush1.xpose.msra.mxu0 0.0
    %9052 = vmatprep.subr.mxu0 0.0
    %9053 = vmatpush1.xpose.msra.mxu0 0.0
    %9054 = vmatprep.subr.mxu0 0.0
    %9055 = vmatpush1.xpose.msra.mxu0 0.0
    %9056 = vmatprep.subr.mxu0 0.0
    %9057 = vmatpush1.xpose.msra.mxu0 0.0
    %9058 = vmatprep.subr.mxu0 0.0
    %9059 = vmatpush1.xpose.msra.mxu0 0.0
    %9060 = vmatprep.subr.mxu0 0.0
    %9061 = vmatpush1.xpose.msra.mxu0 0.0
    %9062 = vmatprep.subr.mxu0 0.0
    %9063 = vmatpush1.xpose.msra.mxu0 0.0
    %9064 = vmatprep.subr.mxu0 0.0
    %9065 = vmatpush1.xpose.msra.mxu0 0.0
    %9066 = vmatprep.subr.mxu0 0.0
    %9067 = vmatpush1.xpose.msra.mxu0 0.0
    %9068 = vmatprep.subr.mxu0 0.0
    %9069 = vmatpush1.xpose.msra.mxu0 0.0
    %9070 = vmatprep.subr.mxu0 0.0
    %9071 = vmatpush1.xpose.msra.mxu0 0.0
    %9072 = vmatprep.subr.mxu0 0.0
    %9073 = vmatpush1.xpose.msra.mxu0 0.0
    %9074 = vmatprep.subr.mxu0 0.0
    %9075 = vmatpush1.xpose.msra.mxu0 0.0
    %9076 = vmatprep.subr.mxu0 0.0
    %9077 = vmatpush1.xpose.msra.mxu0 0.0
    %9078 = vmatprep.subr.mxu0 0.0
    %9079 = vmatpush1.xpose.msra.mxu0 0.0
    %9080 = vmatprep.subr.mxu0 0.0
    %9081 = vmatpush1.xpose.msra.mxu0 0.0
    %9082 = vmatprep.subr.mxu0 0.0
    %9083 = vmatpush1.xpose.msra.mxu0 0.0
    %9084 = vmatprep.subr.mxu0 0.0
    %9085 = vmatpush1.xpose.msra.mxu0 0.0
    %9086 = vmatprep.subr.mxu0 0.0
    %9087 = vmatpush1.xpose.msra.mxu0 0.0
    %9088 = vmatprep.subr.mxu0 0.0
    %9089 = vmatpush1.xpose.msra.mxu0 0.0
    %9090 = vmatprep.subr.mxu0 0.0
    %9091 = vmatpush1.xpose.msra.mxu0 0.0
    %9092 = vmatprep.subr.mxu0 0.0
    %9093 = vmatpush1.xpose.msra.mxu0 0.0
    %9094 = vmatprep.subr.mxu0 0.0
    %9095 = vmatpush1.xpose.msra.mxu0 0.0
    %9096 = vmatprep.subr.mxu0 0.0
    %9097 = vmatpush1.xpose.msra.mxu0 0.0
    %9098 = vmatprep.subr.mxu0 0.0
    %9099 = vmatpush1.xpose.msra.mxu0 0.0
    %9100 = vmatprep.mubr.f32.mxu0 %v8429
    %9101 = vmatmul.mubr.f32.gmra.mrb[0].mxu0 %v8428
    %v9102 = vpop.f32.mrb[0].mxu0
    %v9103 = vadd.f32 %v9033, %v9102
    %v9104 = vpop.f32.mrb[0].mxu0
    %9105 = vdwg.mxu0
    %9106 = vmatprep.subr.mxu0 %v7247
    %9107 = vmatpush1.xpose.msra.mxu0 %v7246
    %9108 = vmatprep.subr.mxu0 0.0
    %9109 = vmatpush1.xpose.msra.mxu0 0.0
    %9110 = vmatprep.subr.mxu0 0.0
    %9111 = vmatpush1.xpose.msra.mxu0 0.0
    %9112 = vmatprep.subr.mxu0 0.0
    %9113 = vmatpush1.xpose.msra.mxu0 0.0
    %9114 = vmatprep.subr.mxu0 0.0
    %9115 = vmatpush1.xpose.msra.mxu0 0.0
    %9116 = vmatprep.subr.mxu0 0.0
    %9117 = vmatpush1.xpose.msra.mxu0 0.0
    %9118 = vmatprep.subr.mxu0 0.0
    %9119 = vmatpush1.xpose.msra.mxu0 0.0
    %9120 = vmatprep.subr.mxu0 0.0
    %9121 = vmatpush1.xpose.msra.mxu0 0.0
    %9122 = vmatprep.subr.mxu0 0.0
    %9123 = vmatpush1.xpose.msra.mxu0 0.0
    %9124 = vmatprep.subr.mxu0 0.0
    %9125 = vmatpush1.xpose.msra.mxu0 0.0
    %9126 = vmatprep.subr.mxu0 0.0
    %9127 = vmatpush1.xpose.msra.mxu0 0.0
    %9128 = vmatprep.subr.mxu0 0.0
    %9129 = vmatpush1.xpose.msra.mxu0 0.0
    %9130 = vmatprep.subr.mxu0 0.0
    %9131 = vmatpush1.xpose.msra.mxu0 0.0
    %9132 = vmatprep.subr.mxu0 0.0
    %9133 = vmatpush1.xpose.msra.mxu0 0.0
    %9134 = vmatprep.subr.mxu0 0.0
    %9135 = vmatpush1.xpose.msra.mxu0 0.0
    %9136 = vmatprep.subr.mxu0 0.0
    %9137 = vmatpush1.xpose.msra.mxu0 0.0
    %9138 = vmatprep.subr.mxu0 0.0
    %9139 = vmatpush1.xpose.msra.mxu0 0.0
    %9140 = vmatprep.subr.mxu0 0.0
    %9141 = vmatpush1.xpose.msra.mxu0 0.0
    %9142 = vmatprep.subr.mxu0 0.0
    %9143 = vmatpush1.xpose.msra.mxu0 0.0
    %9144 = vmatprep.subr.mxu0 0.0
    %9145 = vmatpush1.xpose.msra.mxu0 0.0
    %9146 = vmatprep.subr.mxu0 0.0
    %9147 = vmatpush1.xpose.msra.mxu0 0.0
    %9148 = vmatprep.subr.mxu0 0.0
    %9149 = vmatpush1.xpose.msra.mxu0 0.0
    %9150 = vmatprep.subr.mxu0 0.0
    %9151 = vmatpush1.xpose.msra.mxu0 0.0
    %9152 = vmatprep.subr.mxu0 0.0
    %9153 = vmatpush1.xpose.msra.mxu0 0.0
    %9154 = vmatprep.subr.mxu0 0.0
    %9155 = vmatpush1.xpose.msra.mxu0 0.0
    %9156 = vmatprep.subr.mxu0 0.0
    %9157 = vmatpush1.xpose.msra.mxu0 0.0
    %9158 = vmatprep.subr.mxu0 0.0
    %9159 = vmatpush1.xpose.msra.mxu0 0.0
    %9160 = vmatprep.subr.mxu0 0.0
    %9161 = vmatpush1.xpose.msra.mxu0 0.0
    %9162 = vmatprep.subr.mxu0 0.0
    %9163 = vmatpush1.xpose.msra.mxu0 0.0
    %9164 = vmatprep.subr.mxu0 0.0
    %9165 = vmatpush1.xpose.msra.mxu0 0.0
    %9166 = vmatprep.subr.mxu0 0.0
    %9167 = vmatpush1.xpose.msra.mxu0 0.0
    %9168 = vmatprep.subr.mxu0 0.0
    %9169 = vmatpush1.xpose.msra.mxu0 0.0
    %9170 = vmatprep.mubr.f32.mxu0 %v8431
    %9171 = vmatmul.mubr.f32.gmra.mrb[0].mxu0 %v8430
    %v9172 = vpop.f32.mrb[0].mxu0
    %v9173 = vadd.f32 %v9103, %v9172
    %v9174 = vpop.f32.mrb[0].mxu0
    %9175 = vdwg.mxu0
    %9176 = vmatprep.subr.mxu0 %v7249
    %9177 = vmatpush1.xpose.msra.mxu0 %v7248
    %9178 = vmatprep.subr.mxu0 0.0
    %9179 = vmatpush1.xpose.msra.mxu0 0.0
    %9180 = vmatprep.subr.mxu0 0.0
    %9181 = vmatpush1.xpose.msra.mxu0 0.0
    %9182 = vmatprep.subr.mxu0 0.0
    %9183 = vmatpush1.xpose.msra.mxu0 0.0
    %9184 = vmatprep.subr.mxu0 0.0
    %9185 = vmatpush1.xpose.msra.mxu0 0.0
    %9186 = vmatprep.subr.mxu0 0.0
    %9187 = vmatpush1.xpose.msra.mxu0 0.0
    %9188 = vmatprep.subr.mxu0 0.0
    %9189 = vmatpush1.xpose.msra.mxu0 0.0
    %9190 = vmatprep.subr.mxu0 0.0
    %9191 = vmatpush1.xpose.msra.mxu0 0.0
    %9192 = vmatprep.subr.mxu0 0.0
    %9193 = vmatpush1.xpose.msra.mxu0 0.0
    %9194 = vmatprep.subr.mxu0 0.0
    %9195 = vmatpush1.xpose.msra.mxu0 0.0
    %9196 = vmatprep.subr.mxu0 0.0
    %9197 = vmatpush1.xpose.msra.mxu0 0.0
    %9198 = vmatprep.subr.mxu0 0.0
    %9199 = vmatpush1.xpose.msra.mxu0 0.0
    %9200 = vmatprep.subr.mxu0 0.0
    %9201 = vmatpush1.xpose.msra.mxu0 0.0
    %9202 = vmatprep.subr.mxu0 0.0
    %9203 = vmatpush1.xpose.msra.mxu0 0.0
    %9204 = vmatprep.subr.mxu0 0.0
    %9205 = vmatpush1.xpose.msra.mxu0 0.0
    %9206 = vmatprep.subr.mxu0 0.0
    %9207 = vmatpush1.xpose.msra.mxu0 0.0
    %9208 = vmatprep.subr.mxu0 0.0
    %9209 = vmatpush1.xpose.msra.mxu0 0.0
    %9210 = vmatprep.subr.mxu0 0.0
    %9211 = vmatpush1.xpose.msra.mxu0 0.0
    %9212 = vmatprep.subr.mxu0 0.0
    %9213 = vmatpush1.xpose.msra.mxu0 0.0
    %9214 = vmatprep.subr.mxu0 0.0
    %9215 = vmatpush1.xpose.msra.mxu0 0.0
    %9216 = vmatprep.subr.mxu0 0.0
    %9217 = vmatpush1.xpose.msra.mxu0 0.0
    %9218 = vmatprep.subr.mxu0 0.0
    %9219 = vmatpush1.xpose.msra.mxu0 0.0
    %9220 = vmatprep.subr.mxu0 0.0
    %9221 = vmatpush1.xpose.msra.mxu0 0.0
    %9222 = vmatprep.subr.mxu0 0.0
    %9223 = vmatpush1.xpose.msra.mxu0 0.0
    %9224 = vmatprep.subr.mxu0 0.0
    %9225 = vmatpush1.xpose.msra.mxu0 0.0
    %9226 = vmatprep.subr.mxu0 0.0
    %9227 = vmatpush1.xpose.msra.mxu0 0.0
    %9228 = vmatprep.subr.mxu0 0.0
    %9229 = vmatpush1.xpose.msra.mxu0 0.0
    %9230 = vmatprep.subr.mxu0 0.0
    %9231 = vmatpush1.xpose.msra.mxu0 0.0
    %9232 = vmatprep.subr.mxu0 0.0
    %9233 = vmatpush1.xpose.msra.mxu0 0.0
    %9234 = vmatprep.subr.mxu0 0.0
    %9235 = vmatpush1.xpose.msra.mxu0 0.0
    %9236 = vmatprep.subr.mxu0 0.0
    %9237 = vmatpush1.xpose.msra.mxu0 0.0
    %9238 = vmatprep.subr.mxu0 0.0
    %9239 = vmatpush1.xpose.msra.mxu0 0.0
    %9240 = vmatprep.mubr.f32.mxu0 %v8433
    %9241 = vmatmul.mubr.f32.gmra.mrb[0].mxu0 %v8432
    %v9242 = vpop.f32.mrb[0].mxu0
    %v9243 = vadd.f32 %v9173, %v9242
    %v9244 = vpop.f32.mrb[0].mxu0
    %9245 = vdwg.mxu0
    %9246 = vmatprep.subr.mxu0 %v7251
    %9247 = vmatpush1.xpose.msra.mxu0 %v7250
    %9248 = vmatprep.subr.mxu0 0.0
    %9249 = vmatpush1.xpose.msra.mxu0 0.0
    %9250 = vmatprep.subr.mxu0 0.0
    %9251 = vmatpush1.xpose.msra.mxu0 0.0
    %9252 = vmatprep.subr.mxu0 0.0
    %9253 = vmatpush1.xpose.msra.mxu0 0.0
    %9254 = vmatprep.subr.mxu0 0.0
    %9255 = vmatpush1.xpose.msra.mxu0 0.0
    %9256 = vmatprep.subr.mxu0 0.0
    %9257 = vmatpush1.xpose.msra.mxu0 0.0
    %9258 = vmatprep.subr.mxu0 0.0
    %9259 = vmatpush1.xpose.msra.mxu0 0.0
    %9260 = vmatprep.subr.mxu0 0.0
    %9261 = vmatpush1.xpose.msra.mxu0 0.0
    %9262 = vmatprep.subr.mxu0 0.0
    %9263 = vmatpush1.xpose.msra.mxu0 0.0
    %9264 = vmatprep.subr.mxu0 0.0
    %9265 = vmatpush1.xpose.msra.mxu0 0.0
    %9266 = vmatprep.subr.mxu0 0.0
    %9267 = vmatpush1.xpose.msra.mxu0 0.0
    %9268 = vmatprep.subr.mxu0 0.0
    %9269 = vmatpush1.xpose.msra.mxu0 0.0
    %9270 = vmatprep.subr.mxu0 0.0
    %9271 = vmatpush1.xpose.msra.mxu0 0.0
    %9272 = vmatprep.subr.mxu0 0.0
    %9273 = vmatpush1.xpose.msra.mxu0 0.0
    %9274 = vmatprep.subr.mxu0 0.0
    %9275 = vmatpush1.xpose.msra.mxu0 0.0
    %9276 = vmatprep.subr.mxu0 0.0
    %9277 = vmatpush1.xpose.msra.mxu0 0.0
    %9278 = vmatprep.subr.mxu0 0.0
    %9279 = vmatpush1.xpose.msra.mxu0 0.0
    %9280 = vmatprep.subr.mxu0 0.0
    %9281 = vmatpush1.xpose.msra.mxu0 0.0
    %9282 = vmatprep.subr.mxu0 0.0
    %9283 = vmatpush1.xpose.msra.mxu0 0.0
    %9284 = vmatprep.subr.mxu0 0.0
    %9285 = vmatpush1.xpose.msra.mxu0 0.0
    %9286 = vmatprep.subr.mxu0 0.0
    %9287 = vmatpush1.xpose.msra.mxu0 0.0
    %9288 = vmatprep.subr.mxu0 0.0
    %9289 = vmatpush1.xpose.msra.mxu0 0.0
    %9290 = vmatprep.subr.mxu0 0.0
    %9291 = vmatpush1.xpose.msra.mxu0 0.0
    %9292 = vmatprep.subr.mxu0 0.0
    %9293 = vmatpush1.xpose.msra.mxu0 0.0
    %9294 = vmatprep.subr.mxu0 0.0
    %9295 = vmatpush1.xpose.msra.mxu0 0.0
    %9296 = vmatprep.subr.mxu0 0.0
    %9297 = vmatpush1.xpose.msra.mxu0 0.0
    %9298 = vmatprep.subr.mxu0 0.0
    %9299 = vmatpush1.xpose.msra.mxu0 0.0
    %9300 = vmatprep.subr.mxu0 0.0
    %9301 = vmatpush1.xpose.msra.mxu0 0.0
    %9302 = vmatprep.subr.mxu0 0.0
    %9303 = vmatpush1.xpose.msra.mxu0 0.0
    %9304 = vmatprep.subr.mxu0 0.0
    %9305 = vmatpush1.xpose.msra.mxu0 0.0
    %9306 = vmatprep.subr.mxu0 0.0
    %9307 = vmatpush1.xpose.msra.mxu0 0.0
    %9308 = vmatprep.subr.mxu0 0.0
    %9309 = vmatpush1.xpose.msra.mxu0 0.0
    %9310 = vmatprep.mubr.f32.mxu0 %v8435
    %9311 = vmatmul.mubr.f32.gmra.mrb[0].mxu0 %v8434
    %v9312 = vpop.f32.mrb[0].mxu0
    %v9313 = vadd.f32 %v9243, %v9312
    %v9314 = vpop.f32.mrb[0].mxu0
    %9315 = vdwg.mxu0
    %9316 = vmatprep.subr.mxu0 %v7253
    %9317 = vmatpush1.xpose.msra.mxu0 %v7252
    %9318 = vmatprep.subr.mxu0 0.0
    %9319 = vmatpush1.xpose.msra.mxu0 0.0
    %9320 = vmatprep.subr.mxu0 0.0
    %9321 = vmatpush1.xpose.msra.mxu0 0.0
    %9322 = vmatprep.subr.mxu0 0.0
    %9323 = vmatpush1.xpose.msra.mxu0 0.0
    %9324 = vmatprep.subr.mxu0 0.0
    %9325 = vmatpush1.xpose.msra.mxu0 0.0
    %9326 = vmatprep.subr.mxu0 0.0
    %9327 = vmatpush1.xpose.msra.mxu0 0.0
    %9328 = vmatprep.subr.mxu0 0.0
    %9329 = vmatpush1.xpose.msra.mxu0 0.0
    %9330 = vmatprep.subr.mxu0 0.0
    %9331 = vmatpush1.xpose.msra.mxu0 0.0
    %9332 = vmatprep.subr.mxu0 0.0
    %9333 = vmatpush1.xpose.msra.mxu0 0.0
    %9334 = vmatprep.subr.mxu0 0.0
    %9335 = vmatpush1.xpose.msra.mxu0 0.0
    %9336 = vmatprep.subr.mxu0 0.0
    %9337 = vmatpush1.xpose.msra.mxu0 0.0
    %9338 = vmatprep.subr.mxu0 0.0
    %9339 = vmatpush1.xpose.msra.mxu0 0.0
    %9340 = vmatprep.subr.mxu0 0.0
    %9341 = vmatpush1.xpose.msra.mxu0 0.0
    %9342 = vmatprep.subr.mxu0 0.0
    %9343 = vmatpush1.xpose.msra.mxu0 0.0
    %9344 = vmatprep.subr.mxu0 0.0
    %9345 = vmatpush1.xpose.msra.mxu0 0.0
    %9346 = vmatprep.subr.mxu0 0.0
    %9347 = vmatpush1.xpose.msra.mxu0 0.0
    %9348 = vmatprep.subr.mxu0 0.0
    %9349 = vmatpush1.xpose.msra.mxu0 0.0
    %9350 = vmatprep.subr.mxu0 0.0
    %9351 = vmatpush1.xpose.msra.mxu0 0.0
    %9352 = vmatprep.subr.mxu0 0.0
    %9353 = vmatpush1.xpose.msra.mxu0 0.0
    %9354 = vmatprep.subr.mxu0 0.0
    %9355 = vmatpush1.xpose.msra.mxu0 0.0
    %9356 = vmatprep.subr.mxu0 0.0
    %9357 = vmatpush1.xpose.msra.mxu0 0.0
    %9358 = vmatprep.subr.mxu0 0.0
    %9359 = vmatpush1.xpose.msra.mxu0 0.0
    %9360 = vmatprep.subr.mxu0 0.0
    %9361 = vmatpush1.xpose.msra.mxu0 0.0
    %9362 = vmatprep.subr.mxu0 0.0
    %9363 = vmatpush1.xpose.msra.mxu0 0.0
    %9364 = vmatprep.subr.mxu0 0.0
    %9365 = vmatpush1.xpose.msra.mxu0 0.0
    %9366 = vmatprep.subr.mxu0 0.0
    %9367 = vmatpush1.xpose.msra.mxu0 0.0
    %9368 = vmatprep.subr.mxu0 0.0
    %9369 = vmatpush1.xpose.msra.mxu0 0.0
    %9370 = vmatprep.subr.mxu0 0.0
    %9371 = vmatpush1.xpose.msra.mxu0 0.0
    %9372 = vmatprep.subr.mxu0 0.0
    %9373 = vmatpush1.xpose.msra.mxu0 0.0
    %9374 = vmatprep.subr.mxu0 0.0
    %9375 = vmatpush1.xpose.msra.mxu0 0.0
    %9376 = vmatprep.subr.mxu0 0.0
    %9377 = vmatpush1.xpose.msra.mxu0 0.0
    %9378 = vmatprep.subr.mxu0 0.0
    %9379 = vmatpush1.xpose.msra.mxu0 0.0
    %9380 = vmatprep.mubr.f32.mxu0 %v8437
    %9381 = vmatmul.mubr.f32.gmra.mrb[0].mxu0 %v8436
    %v9382 = vpop.f32.mrb[0].mxu0
    %v9383 = vadd.f32 %v9313, %v9382
    %v9384 = vpop.f32.mrb[0].mxu0
    %9385 = vdwg.mxu0
    %9386 = vmatprep.subr.mxu0 %v7255
    %9387 = vmatpush1.xpose.msra.mxu0 %v7254
    %9388 = vmatprep.subr.mxu0 0.0
    %9389 = vmatpush1.xpose.msra.mxu0 0.0
    %9390 = vmatprep.subr.mxu0 0.0
    %9391 = vmatpush1.xpose.msra.mxu0 0.0
    %9392 = vmatprep.subr.mxu0 0.0
    %9393 = vmatpush1.xpose.msra.mxu0 0.0
    %9394 = vmatprep.subr.mxu0 0.0
    %9395 = vmatpush1.xpose.msra.mxu0 0.0
    %9396 = vmatprep.subr.mxu0 0.0
    %9397 = vmatpush1.xpose.msra.mxu0 0.0
    %9398 = vmatprep.subr.mxu0 0.0
    %9399 = vmatpush1.xpose.msra.mxu0 0.0
    %9400 = vmatprep.subr.mxu0 0.0
    %9401 = vmatpush1.xpose.msra.mxu0 0.0
    %9402 = vmatprep.subr.mxu0 0.0
    %9403 = vmatpush1.xpose.msra.mxu0 0.0
    %9404 = vmatprep.subr.mxu0 0.0
    %9405 = vmatpush1.xpose.msra.mxu0 0.0
    %9406 = vmatprep.subr.mxu0 0.0
    %9407 = vmatpush1.xpose.msra.mxu0 0.0
    %9408 = vmatprep.subr.mxu0 0.0
    %9409 = vmatpush1.xpose.msra.mxu0 0.0
    %9410 = vmatprep.subr.mxu0 0.0
    %9411 = vmatpush1.xpose.msra.mxu0 0.0
    %9412 = vmatprep.subr.mxu0 0.0
    %9413 = vmatpush1.xpose.msra.mxu0 0.0
    %9414 = vmatprep.subr.mxu0 0.0
    %9415 = vmatpush1.xpose.msra.mxu0 0.0
    %9416 = vmatprep.subr.mxu0 0.0
    %9417 = vmatpush1.xpose.msra.mxu0 0.0
    %9418 = vmatprep.subr.mxu0 0.0
    %9419 = vmatpush1.xpose.msra.mxu0 0.0
    %9420 = vmatprep.subr.mxu0 0.0
    %9421 = vmatpush1.xpose.msra.mxu0 0.0
    %9422 = vmatprep.subr.mxu0 0.0
    %9423 = vmatpush1.xpose.msra.mxu0 0.0
    %9424 = vmatprep.subr.mxu0 0.0
    %9425 = vmatpush1.xpose.msra.mxu0 0.0
    %9426 = vmatprep.subr.mxu0 0.0
    %9427 = vmatpush1.xpose.msra.mxu0 0.0
    %9428 = vmatprep.subr.mxu0 0.0
    %9429 = vmatpush1.xpose.msra.mxu0 0.0
    %9430 = vmatprep.subr.mxu0 0.0
    %9431 = vmatpush1.xpose.msra.mxu0 0.0
    %9432 = vmatprep.subr.mxu0 0.0
    %9433 = vmatpush1.xpose.msra.mxu0 0.0
    %9434 = vmatprep.subr.mxu0 0.0
    %9435 = vmatpush1.xpose.msra.mxu0 0.0
    %9436 = vmatprep.subr.mxu0 0.0
    %9437 = vmatpush1.xpose.msra.mxu0 0.0
    %9438 = vmatprep.subr.mxu0 0.0
    %9439 = vmatpush1.xpose.msra.mxu0 0.0
    %9440 = vmatprep.subr.mxu0 0.0
    %9441 = vmatpush1.xpose.msra.mxu0 0.0
    %9442 = vmatprep.subr.mxu0 0.0
    %9443 = vmatpush1.xpose.msra.mxu0 0.0
    %9444 = vmatprep.subr.mxu0 0.0
    %9445 = vmatpush1.xpose.msra.mxu0 0.0
    %9446 = vmatprep.subr.mxu0 0.0
    %9447 = vmatpush1.xpose.msra.mxu0 0.0
    %9448 = vmatprep.subr.mxu0 0.0
    %9449 = vmatpush1.xpose.msra.mxu0 0.0
    %9450 = vmatprep.mubr.f32.mxu0 %v8439
    %9451 = vmatmul.mubr.f32.gmra.mrb[0].mxu0 %v8438
    %v9452 = vpop.f32.mrb[0].mxu0
    %v9453 = vadd.f32 %v9383, %v9452
    %v9454 = vpop.f32.mrb[0].mxu0
    %9455 = vdwg.mxu0
    %9456 = vmatprep.subr.mxu0 %v7257
    %9457 = vmatpush1.xpose.msra.mxu0 %v7256
    %9458 = vmatprep.subr.mxu0 0.0
    %9459 = vmatpush1.xpose.msra.mxu0 0.0
    %9460 = vmatprep.subr.mxu0 0.0
    %9461 = vmatpush1.xpose.msra.mxu0 0.0
    %9462 = vmatprep.subr.mxu0 0.0
    %9463 = vmatpush1.xpose.msra.mxu0 0.0
    %9464 = vmatprep.subr.mxu0 0.0
    %9465 = vmatpush1.xpose.msra.mxu0 0.0
    %9466 = vmatprep.subr.mxu0 0.0
    %9467 = vmatpush1.xpose.msra.mxu0 0.0
    %9468 = vmatprep.subr.mxu0 0.0
    %9469 = vmatpush1.xpose.msra.mxu0 0.0
    %9470 = vmatprep.subr.mxu0 0.0
    %9471 = vmatpush1.xpose.msra.mxu0 0.0
    %9472 = vmatprep.subr.mxu0 0.0
    %9473 = vmatpush1.xpose.msra.mxu0 0.0
    %9474 = vmatprep.subr.mxu0 0.0
    %9475 = vmatpush1.xpose.msra.mxu0 0.0
    %9476 = vmatprep.subr.mxu0 0.0
    %9477 = vmatpush1.xpose.msra.mxu0 0.0
    %9478 = vmatprep.subr.mxu0 0.0
    %9479 = vmatpush1.xpose.msra.mxu0 0.0
    %9480 = vmatprep.subr.mxu0 0.0
    %9481 = vmatpush1.xpose.msra.mxu0 0.0
    %9482 = vmatprep.subr.mxu0 0.0
    %9483 = vmatpush1.xpose.msra.mxu0 0.0
    %9484 = vmatprep.subr.mxu0 0.0
    %9485 = vmatpush1.xpose.msra.mxu0 0.0
    %9486 = vmatprep.subr.mxu0 0.0
    %9487 = vmatpush1.xpose.msra.mxu0 0.0
    %9488 = vmatprep.subr.mxu0 0.0
    %9489 = vmatpush1.xpose.msra.mxu0 0.0
    %9490 = vmatprep.subr.mxu0 0.0
    %9491 = vmatpush1.xpose.msra.mxu0 0.0
    %9492 = vmatprep.subr.mxu0 0.0
    %9493 = vmatpush1.xpose.msra.mxu0 0.0
    %9494 = vmatprep.subr.mxu0 0.0
    %9495 = vmatpush1.xpose.msra.mxu0 0.0
    %9496 = vmatprep.subr.mxu0 0.0
    %9497 = vmatpush1.xpose.msra.mxu0 0.0
    %9498 = vmatprep.subr.mxu0 0.0
    %9499 = vmatpush1.xpose.msra.mxu0 0.0
    %9500 = vmatprep.subr.mxu0 0.0
    %9501 = vmatpush1.xpose.msra.mxu0 0.0
    %9502 = vmatprep.subr.mxu0 0.0
    %9503 = vmatpush1.xpose.msra.mxu0 0.0
    %9504 = vmatprep.subr.mxu0 0.0
    %9505 = vmatpush1.xpose.msra.mxu0 0.0
    %9506 = vmatprep.subr.mxu0 0.0
    %9507 = vmatpush1.xpose.msra.mxu0 0.0
    %9508 = vmatprep.subr.mxu0 0.0
    %9509 = vmatpush1.xpose.msra.mxu0 0.0
    %9510 = vmatprep.subr.mxu0 0.0
    %9511 = vmatpush1.xpose.msra.mxu0 0.0
    %9512 = vmatprep.subr.mxu0 0.0
    %9513 = vmatpush1.xpose.msra.mxu0 0.0
    %9514 = vmatprep.subr.mxu0 0.0
    %9515 = vmatpush1.xpose.msra.mxu0 0.0
    %9516 = vmatprep.subr.mxu0 0.0
    %9517 = vmatpush1.xpose.msra.mxu0 0.0
    %9518 = vmatprep.subr.mxu0 0.0
    %9519 = vmatpush1.xpose.msra.mxu0 0.0
    %9520 = vmatprep.mubr.f32.mxu0 %v8441
    %9521 = vmatmul.mubr.f32.gmra.mrb[0].mxu0 %v8440
    %v9522 = vpop.f32.mrb[0].mxu0
    %v9523 = vadd.f32 %v9453, %v9522
    %v9524 = vpop.f32.mrb[0].mxu0
    %9525 = vdwg.mxu0
    %9526 = vmatprep.subr.mxu0 %v7259
    %9527 = vmatpush1.xpose.msra.mxu0 %v7258
    %9528 = vmatprep.subr.mxu0 0.0
    %9529 = vmatpush1.xpose.msra.mxu0 0.0
    %9530 = vmatprep.subr.mxu0 0.0
    %9531 = vmatpush1.xpose.msra.mxu0 0.0
    %9532 = vmatprep.subr.mxu0 0.0
    %9533 = vmatpush1.xpose.msra.mxu0 0.0
    %9534 = vmatprep.subr.mxu0 0.0
    %9535 = vmatpush1.xpose.msra.mxu0 0.0
    %9536 = vmatprep.subr.mxu0 0.0
    %9537 = vmatpush1.xpose.msra.mxu0 0.0
    %9538 = vmatprep.subr.mxu0 0.0
    %9539 = vmatpush1.xpose.msra.mxu0 0.0
    %9540 = vmatprep.subr.mxu0 0.0
    %9541 = vmatpush1.xpose.msra.mxu0 0.0
    %9542 = vmatprep.subr.mxu0 0.0
    %9543 = vmatpush1.xpose.msra.mxu0 0.0
    %9544 = vmatprep.subr.mxu0 0.0
    %9545 = vmatpush1.xpose.msra.mxu0 0.0
    %9546 = vmatprep.subr.mxu0 0.0
    %9547 = vmatpush1.xpose.msra.mxu0 0.0
    %9548 = vmatprep.subr.mxu0 0.0
    %9549 = vmatpush1.xpose.msra.mxu0 0.0
    %9550 = vmatprep.subr.mxu0 0.0
    %9551 = vmatpush1.xpose.msra.mxu0 0.0
    %9552 = vmatprep.subr.mxu0 0.0
    %9553 = vmatpush1.xpose.msra.mxu0 0.0
    %9554 = vmatprep.subr.mxu0 0.0
    %9555 = vmatpush1.xpose.msra.mxu0 0.0
    %9556 = vmatprep.subr.mxu0 0.0
    %9557 = vmatpush1.xpose.msra.mxu0 0.0
    %9558 = vmatprep.subr.mxu0 0.0
    %9559 = vmatpush1.xpose.msra.mxu0 0.0
    %9560 = vmatprep.subr.mxu0 0.0
    %9561 = vmatpush1.xpose.msra.mxu0 0.0
    %9562 = vmatprep.subr.mxu0 0.0
    %9563 = vmatpush1.xpose.msra.mxu0 0.0
    %9564 = vmatprep.subr.mxu0 0.0
    %9565 = vmatpush1.xpose.msra.mxu0 0.0
    %9566 = vmatprep.subr.mxu0 0.0
    %9567 = vmatpush1.xpose.msra.mxu0 0.0
    %9568 = vmatprep.subr.mxu0 0.0
    %9569 = vmatpush1.xpose.msra.mxu0 0.0
    %9570 = vmatprep.subr.mxu0 0.0
    %9571 = vmatpush1.xpose.msra.mxu0 0.0
    %9572 = vmatprep.subr.mxu0 0.0
    %9573 = vmatpush1.xpose.msra.mxu0 0.0
    %9574 = vmatprep.subr.mxu0 0.0
    %9575 = vmatpush1.xpose.msra.mxu0 0.0
    %9576 = vmatprep.subr.mxu0 0.0
    %9577 = vmatpush1.xpose.msra.mxu0 0.0
    %9578 = vmatprep.subr.mxu0 0.0
    %9579 = vmatpush1.xpose.msra.mxu0 0.0
    %9580 = vmatprep.subr.mxu0 0.0
    %9581 = vmatpush1.xpose.msra.mxu0 0.0
    %9582 = vmatprep.subr.mxu0 0.0
    %9583 = vmatpush1.xpose.msra.mxu0 0.0
    %9584 = vmatprep.subr.mxu0 0.0
    %9585 = vmatpush1.xpose.msra.mxu0 0.0
    %9586 = vmatprep.subr.mxu0 0.0
    %9587 = vmatpush1.xpose.msra.mxu0 0.0
    %9588 = vmatprep.subr.mxu0 0.0
    %9589 = vmatpush1.xpose.msra.mxu0 0.0
    %9590 = vmatprep.mubr.f32.mxu0 %v8443
    %9591 = vmatmul.mubr.f32.gmra.mrb[0].mxu0 %v8442
    %v9592 = vpop.f32.mrb[0].mxu0
    %v9593 = vadd.f32 %v9523, %v9592
    %v9594 = vpop.f32.mrb[0].mxu0
    %9595 = vdwg.mxu0
    %v9596 = vmul.f32 %v7228, %v7228
    %v9597 = vmul.f32 %v7229, %v7229
    %v9598 = vmul.f32 %v7230, %v7230
    %v9599 = vmul.f32 %v7231, %v7231
    %v9600 = vmul.f32 %v7232, %v7232
    %v9601 = vmul.f32 %v7233, %v7233
    %v9602 = vmul.f32 %v7234, %v7234
    %v9603 = vmul.f32 %v7235, %v7235
    %v9604 = vmul.f32 %v7236, %v7236
    %v9605 = vmul.f32 %v7237, %v7237
    %v9606 = vmul.f32 %v7238, %v7238
    %v9607 = vmul.f32 %v7239, %v7239
    %v9608 = vmul.f32 %v7240, %v7240
    %v9609 = vmul.f32 %v7241, %v7241
    %v9610 = vmul.f32 %v7242, %v7242
    %v9611 = vmul.f32 %v7243, %v7243
    %v9612 = vmul.f32 %v7244, %v7244
    %v9613 = vmul.f32 %v7245, %v7245
    %v9614 = vmul.f32 %v7246, %v7246
    %v9615 = vmul.f32 %v7247, %v7247
    %v9616 = vmul.f32 %v7248, %v7248
    %v9617 = vmul.f32 %v7249, %v7249
    %v9618 = vmul.f32 %v7250, %v7250
    %v9619 = vmul.f32 %v7251, %v7251
    %v9620 = vmul.f32 %v7252, %v7252
    %v9621 = vmul.f32 %v7253, %v7253
    %v9622 = vmul.f32 %v7254, %v7254
    %v9623 = vmul.f32 %v7255, %v7255
    %v9624 = vmul.f32 %v7256, %v7256
    %v9625 = vmul.f32 %v7257, %v7257
    %v9626 = vmul.f32 %v7258, %v7258
    %v9627 = vmul.f32 %v7259, %v7259
    %v9628 = vadd.f32 %v9596, %v9597
    %v9629 = vadd.f32 %v9628, %v9598
    %v9630 = vadd.f32 %v9629, %v9599
    %v9631 = vadd.f32 %v9630, %v9600
    %v9632 = vadd.f32 %v9631, %v9601
    %v9633 = vadd.f32 %v9632, %v9602
    %v9634 = vadd.f32 %v9633, %v9603
    %v9635 = vadd.f32 %v9634, %v9604
    %v9636 = vadd.f32 %v9635, %v9605
    %v9637 = vadd.f32 %v9636, %v9606
    %v9638 = vadd.f32 %v9637, %v9607
    %v9639 = vadd.f32 %v9638, %v9608
    %v9640 = vadd.f32 %v9639, %v9609
    %v9641 = vadd.f32 %v9640, %v9610
    %v9642 = vadd.f32 %v9641, %v9611
    %v9643 = vadd.f32 %v9642, %v9612
    %v9644 = vadd.f32 %v9643, %v9613
    %v9645 = vadd.f32 %v9644, %v9614
    %v9646 = vadd.f32 %v9645, %v9615
    %v9647 = vadd.f32 %v9646, %v9616
    %v9648 = vadd.f32 %v9647, %v9617
    %v9649 = vadd.f32 %v9648, %v9618
    %v9650 = vadd.f32 %v9649, %v9619
    %v9651 = vadd.f32 %v9650, %v9620
    %v9652 = vadd.f32 %v9651, %v9621
    %v9653 = vadd.f32 %v9652, %v9622
    %v9654 = vadd.f32 %v9653, %v9623
    %v9655 = vadd.f32 %v9654, %v9624
    %v9656 = vadd.f32 %v9655, %v9625
    %v9657 = vadd.f32 %v9656, %v9626
    %v9658 = vadd.f32 %v9657, %v9627
    %9659 = vadd.xlane.f32.xlu0 %v9658
    %v9660 = vpop.xlane.xlu0 %9659
    %v9661 = vrsqrt.pop %v5464
    %v9662 = vmul.f32 %v5464, %v9661
    %vm9663 = vcmp.eq.f32.partialorder %v5464, inf
    %v9664 = vsel %vm9663, %v5464, %v9662
    %vm9665 = vcmp.eq.f32.partialorder %v5464, 0.0
    %v9666 = vand.u32 %v5464, 2147483648
    %v9667 = vsel %vm9665, %v9666, %v9664
    %v9668 = vmax.f32 %v9667, 1e-12
    %v9669 = vrcp.pop %v9668
    %v9670 = vmul.f32 1.0, %v9669
    %v9671 = vrsqrt.pop %v9660
    %v9672 = vmul.f32 %v9660, %v9671
    %vm9673 = vcmp.eq.f32.partialorder %v9660, inf
    %v9674 = vsel %vm9673, %v9660, %v9672
    %vm9675 = vcmp.eq.f32.partialorder %v9660, 0.0
    %v9676 = vand.u32 %v9660, 2147483648
    %v9677 = vsel %vm9675, %v9676, %v9674
    %v9678 = vmax.f32 %v9677, 1e-12
    %v9679 = vrcp.pop %v9678
    %v9680 = vmul.f32 1.0, %v9679
    %v9681 = vlaneseq
    %v9682 = vshrl.u32 %v9681, 7
    %v9683 = vlaneseq
    %v9684 = vand.u32 %v9683, 127
    %vm9685 = vcmp.eq.s32.totalorder %v9682, %v9684
    %v9686 = vsel %vm9685, %v9670, 0.0
    %v9687 = vsel %vm732, %v9686, 0.0
    %v9688 = vrot.slane %v9687, 4
    %v9689 = vadd.f32 %v9687, %v9688
    %v9690 = vrot.slane %v9689, 2
    %v9691 = vadd.f32 %v9689, %v9690
    %v9692 = vrot.slane %v9691, 1
    %v9693 = vadd.f32 %v9691, %v9692
    %v9694 = vsel %vm9685, %v9680, 0.0
    %v9695 = vsel %vm732, %v9694, 0.0
    %v9696 = vrot.slane %v9695, 4
    %v9697 = vadd.f32 %v9695, %v9696
    %v9698 = vrot.slane %v9697, 2
    %v9699 = vadd.f32 %v9697, %v9698
    %v9700 = vrot.slane %v9699, 1
    %v9701 = vadd.f32 %v9699, %v9700
    %v9702 = vmul.f32 %v5464, %v9670
    %v9703 = vmul.f32 %v9702, %v9670
    %v9704 = vmul.f32 %v9660, %v9680
    %v9705 = vmul.f32 %v9704, %v9680
    %v9706 = vadd.f32 %v9703, %v9705
    %v9707 = vrsqrt.pop %v9706
    %v9708 = vmul.f32 %v9706, %v9707
    %vm9709 = vcmp.eq.f32.partialorder %v9706, inf
    %v9710 = vsel %vm9709, %v9706, %v9708
    %vm9711 = vcmp.eq.f32.partialorder %v9706, 0.0
    %v9712 = vand.u32 %v9706, 2147483648
    %v9713 = vsel %vm9711, %v9712, %v9710
    %v9714 = vsel %vm9685, %v9713, 0.0
    %v9715 = vsel %vm732, %v9714, 0.0
    %v9716 = vrot.slane %v9715, 4
    %v9717 = vadd.f32 %v9715, %v9716
    %v9718 = vrot.slane %v9717, 2
    %v9719 = vadd.f32 %v9717, %v9718
    %v9720 = vrot.slane %v9719, 1
    %v9721 = vadd.f32 %v9719, %v9720
    %v9722 = vmul.f32 %v4181, %v9670
    %v9723 = vmul.f32 %v9722, %v9693
    %v9724 = vmul.f32 %v8377, %v9680
    %v9725 = vmul.f32 %v9724, %v9701
    %v9726 = vadd.f32 %v9723, %v9725
    %v9728 = vrot.slane %v9670, 7
    %v9730 = vmul.f32 %v5397, %v9728
    %v9731 = vmul.f32 %v9730, %v9693
    %v9733 = vrot.slane %v9680, 7
    %v9735 = vmul.f32 %v9593, %v9733
    %v9736 = vmul.f32 %v9735, %v9701
    %v9737 = vadd.f32 %v9731, %v9736
    %v9738 = vmul.f32 %v9713, %v9721
    %v9739 = vmax.f32 %v9738, 1e-08
    %v9740 = vrcp.pop %v9739
    %v9741 = vmul.f32 %v9726, %v9740
    %v9743 = vrot.slane %v9739, 7
    %v9745 = vrcp.pop %v9743
    %v9746 = vmul.f32 %v9737, %v9745
    %v9747 = vadd.s32 %v9682, 8
    %vm9748 = vcmp.ge.s32.totalorder %v9682, 8
    %vm9749 = vcmp.ge.s32.totalorder %v9747, 8
    %v9750 = vsub.s32 %v9682, 8
    %v9751 = vsel %vm9748, %v9750, %v9682
    %v9752 = vsel %vm9749, %v9682, %v9747
    %vm9753 = vcmp.eq.s32.totalorder %v9684, %v9751
    %vm9754 = vcmp.eq.s32.totalorder %v9684, %v9752
    %v9755 = vlaneseq
    %v9756 = vshrl.u32 %v9755, 7
    %v9757 = vsub.s32 0, %v9756
    %v9758 = vrot.slane %v9746, %v9757
    %v9759 = vsel %vm9753, %v9758, 0.0
    %v9760 = vsel %vm9754, %v9758, 0.0
    %v9761 = vsel %vm732, %v9759, 0.0
    %9762 = vadd.xlane.f32.xlu0 %v9761
    %v9763 = vpop.xlane.xlu0 %9762
    %v9764 = vsel %vm732, %v9760, 0.0
    %9765 = vadd.xlane.f32.xlu0 %v9764
    %v9766 = vpop.xlane.xlu0 %9765
    %vm9767 = vcmp.ge.s32.totalorder %v9682, 7
    %vm9768 = vcmp.ge.s32.totalorder %v9747, 7
    %v9769 = vsel %vm9767, 1, 0
    %v9770 = vsel %vm9768, 1, 0
    %vm9771 = vcmp.ge.s32.totalorder %v9682, 14
    %vm9772 = vcmp.ge.s32.totalorder %v9747, 14
    %v9773 = vsel %vm9771, 1, 0
    %v9774 = vsel %vm9772, 1, 0
    %v9775 = vadd.s32 %v9769, %v9773
    %v9776 = vadd.s32 %v9770, %v9774
    %v9777 = vmul.u32 %v9775, 7
    %v9778 = vmul.u32 %v9776, 7
    %v9779 = vsub.s32 %v9682, %v9777
    %v9780 = vsub.s32 %v9747, %v9778
    %vm9781 = vcmp.ge.s32.totalorder %v9779, %v9775
    %vm9782 = vcmp.ge.s32.totalorder %v9780, %v9776
    %v9783 = vsel %vm9781, 1, 0
    %v9784 = vsel %vm9782, 1, 0
    %v9785 = vadd.s32 %v9779, %v9783
    %v9786 = vadd.s32 %v9780, %v9784
    %vm9787 = vcmp.eq.s32.totalorder %v9775, 0
    %vm9788 = vcmp.eq.s32.totalorder %v9776, 0
    %v9789 = vsel %vm9787, 1, 0
    %v9790 = vsel %vm9788, 1, 0
    %vm9791 = vcmp.eq.s32.totalorder %v9789, 1
    %vm9792 = vcmp.eq.s32.totalorder %v9790, 1
    %v9793 = vlaneseq
    %v9794 = vshrl.u32 %v9793, 7
    %v9795 = vsub.s32 0, %v9794
    %v9796 = vrot.slane %v9741, %v9795
    %v9797 = vsel %vm9791, %v9796, 0.0
    %v9798 = vsel %vm9792, %v9796, 0.0
    %vm9799 = vcmp.eq.s32.totalorder %v9775, 1
    %vm9800 = vcmp.eq.s32.totalorder %v9776, 1
    %v9801 = vsel %vm9799, 1, 0
    %v9802 = vsel %vm9800, 1, 0
    %vm9803 = vcmp.eq.s32.totalorder %v9801, 1
    %vm9804 = vcmp.eq.s32.totalorder %v9802, 1
    %v9805 = vlaneseq
    %v9806 = vshrl.u32 %v9805, 7
    %v9807 = vsub.s32 1, %v9806
    %v9808 = vrot.slane %v9741, %v9807
    %v9809 = vsel %vm9803, %v9808, 0.0
    %v9810 = vsel %vm9804, %v9808, 0.0
    %v9811 = vadd.f32 %v9797, %v9809
    %v9812 = vadd.f32 %v9798, %v9810
    %vm9813 = vcmp.eq.s32.totalorder %v9775, 2
    %vm9814 = vcmp.eq.s32.totalorder %v9776, 2
    %v9815 = vsel %vm9813, 1, 0
    %v9816 = vsel %vm9814, 1, 0
    %vm9817 = vcmp.eq.s32.totalorder %v9815, 1
    %vm9818 = vcmp.eq.s32.totalorder %v9816, 1
    %v9819 = vlaneseq
    %v9820 = vshrl.u32 %v9819, 7
    %v9821 = vsub.s32 2, %v9820
    %v9822 = vrot.slane %v9741, %v9821
    %v9823 = vsel %vm9817, %v9822, 0.0
    %v9824 = vsel %vm9818, %v9822, 0.0
    %v9825 = vadd.f32 %v9811, %v9823
    %v9826 = vadd.f32 %v9812, %v9824
    %vm9827 = vcmp.eq.s32.totalorder %v9684, %v9785
    %vm9828 = vcmp.eq.s32.totalorder %v9684, %v9786
    %v9829 = vsel %vm9827, %v9825, 0.0
    %v9830 = vsel %vm9828, %v9826, 0.0
    %v9831 = vsel %vm732, %v9829, 0.0
    %9832 = vadd.xlane.f32.xlu0 %v9831
    %v9833 = vpop.xlane.xlu0 %9832
    %v9834 = vsel %vm732, %v9830, 0.0
    %9835 = vadd.xlane.f32.xlu0 %v9834
    %v9836 = vpop.xlane.xlu0 %9835
    %v9837 = vrcp.pop 2.0
    %v9838 = vmul.f32 %v9763, %v9837
    %v9839 = vmul.f32 %v9766, %v9837
    %v9840 = vmul.f32 %v9833, %v9837
    %v9841 = vmul.f32 %v9836, %v9837
    %v9842 = vmax.f32 %v9838, %v9840
    %v9843 = vmax.f32 %v9839, %v9841
    %v9844 = vsub.f32 %v9838, %v9842
    %v9845 = vsub.f32 %v9839, %v9843
    %v9846 = vmul.f32 %v9844, 1.442695
    %v9847 = vpow.pop %v9846
    %v9848 = vmul.f32 %v9845, 1.442695
    %v9849 = vpow.pop %v9848
    %v9850 = vsub.f32 %v9840, %v9842
    %v9851 = vsub.f32 %v9841, %v9843
    %v9852 = vmul.f32 %v9850, 1.442695
    %v9853 = vpow.pop %v9852
    %v9854 = vmul.f32 %v9851, 1.442695
    %v9855 = vpow.pop %v9854
    %v9856 = vadd.f32 %v9847, %v9853
    %v9857 = vadd.f32 %v9849, %v9855
    %v9858 = vlog2.pop %v9856
    %v9859 = vmul.f32 %v9858, 0.6931472
    %v9860 = vlog2.pop %v9857
    %v9861 = vmul.f32 %v9860, 0.6931472
    %v9862 = vadd.f32 %v9842, %v9859
    %v9863 = vadd.f32 %v9843, %v9861
    %v9864 = vsub.f32 %v9862, %v9838
    %v9865 = vsub.f32 %v9863, %v9839
    %v9866 = vadd.f32 %v9864, %v9865
    %v9867 = vrot.slane %v9866, 4
    %v9868 = vadd.f32 %v9866, %v9867
    %v9869 = vrot.slane %v9868, 2
    %v9870 = vadd.f32 %v9868, %v9869
    %v9871 = vrot.slane %v9870, 1
    %v9872 = vadd.f32 %v9870, %v9871
    %v9873 = vrcp.pop 16.0
    %v9874 = vmul.f32 %v9872, %v9873
    %vm9875 = vcmask 0
    %9876 = vst.msk [vmem:[#allocation2] sm:$0x1] %vm9875, %v9874
    // Predicated region
    $region42: #{tpu_custom_call.1} parent=1 // pred_check
      _
    $region43: #{tpu_custom_call.1} parent=1 // pred_check_branch
      %9878 = sbr.rel (0) target = $region45
    $region44: #{tpu_custom_call.1} parent=1 // pred_region
      %s9880 = ssub.s32 16, 16
      %9881 = vsyncadd [#allocation3], %s9880
      %s9883 = sshll.u32 [#allocation2], 4
      %s9884 = int_to_ptr.vmem [resolvable:$true] %s9883
      %9886 = dma.vmem_to_hbm [thread:$0]  %s9884, 16, %s10, [#allocation3]
    $region45: #{tpu_custom_call.1} parent=1 // pred_fallthru
      _
    // Predicated region
    $region46: #{tpu_custom_call.1} parent=1 // pred_check
      _
    $region47: #{tpu_custom_call.1} parent=1 // pred_check_branch
      %9888 = sbr.rel (0) target = $region49
    $region48: #{tpu_custom_call.1} parent=1 // pred_region
      %9889 = dma.done [#allocation3], 16
    $region49: #{tpu_custom_call.1} parent=1 // pred_fallthru
      _
    %9890 = vsyncpa [#allocation3], 1

</llo_original>
